<compile_context>
chip_gen: v5e
topology: v5e:2x2
jax: 0.10.0
libtpu: 0.0.40
codegen_flags: <defaults>
</compile_context>

<pallas_src>
import jax
import jax.numpy as jnp
from jax.experimental import pallas as pl
from jax.experimental.pallas import tpu as pltpu

EPS = 1e-5  # BatchNorm2d default eps


# ----------------------------- Pallas kernels ------------------------------


def _l12a_kernel(x0_ref, w1_ref, g1_ref, b1_ref, w2_ref,
                 y_ref, sum_ref, ssq_ref, a1_sc):
    """Fused layer 1 (14->1024 matmul + BN + ReLU, done once at step 0) and the matmul
    part of layer 2 (ConvTranspose2d(1024,128,7,1) on a 1x1 input).

    grid = (7,) over the 7 output rows (kh).  w2_ref block is (1, 1024, 896) holding
    W2[:, :, kh, :] with columns ordered (kw*128 + co).  Each step writes one contiguous
    (N, 896) bf16 block of the (N, 7*896) pre-BN output plus (1, 896) f32 sum / sumsq
    partials; BN-2 is finalized outside (stats combined in XLA, applied by the shared
    scale/shift/ReLU kernel)."""
    s = pl.program_id(0)

    @pl.when(s == 0)
    def _():
        # layer 1: (N,14) @ (14,1024); train-mode BN over the batch; ReLU.
        y1 = jnp.dot(x0_ref[...], w1_ref[...], preferred_element_type=jnp.float32)
        m = y1.shape[0]
        mean = jnp.sum(y1, axis=0, keepdims=True) * (1.0 / m)
        d = y1 - mean
        var = jnp.sum(d * d, axis=0, keepdims=True) * (1.0 / m)  # biased var (train BN)
        z = d * jax.lax.rsqrt(var + EPS) * g1_ref[...] + b1_ref[...]
        a1_sc[...] = jnp.maximum(z, 0.0).astype(a1_sc.dtype)     # bf16 for the MXU

    # layer 2 partial: all 7 kw positions / 128 channels of output row kh = s.
    y2 = jnp.dot(a1_sc[...], w2_ref[0], preferred_element_type=jnp.float32)  # (N, 896)
    y_ref[...] = y2.astype(y_ref.dtype)                          # one contiguous store
    sum_ref[...] = jnp.sum(y2, axis=0, keepdims=True)[None]      # (1, 1, 896) f32
    ssq_ref[...] = jnp.sum(y2 * y2, axis=0, keepdims=True)[None]


def _mm_psum_kernel(x_ref, w_ref, y_ref, sum_ref, ssq_ref):
    """Row-tiled matmul; emits per-tile per-column sum / sum-of-squares partials so the
    grid axis can be 'parallel'.  Zero-padded rows contribute exactly 0 to both."""
    y = jnp.dot(x_ref[...], w_ref[...], preferred_element_type=jnp.float32)
    y_ref[...] = y.astype(y_ref.dtype)                           # bf16 intermediate
    sum_ref[...] = jnp.sum(y, axis=0, keepdims=True)[None]       # (1, 1, C)
    ssq_ref[...] = jnp.sum(y * y, axis=0, keepdims=True)[None]


def _scale_shift_relu_kernel(y_ref, scale_ref, shift_ref, o_ref):
    """o = relu(y * scale + shift) with per-column scale/shift (folded BN); bf16 out."""
    z = y_ref[...].astype(jnp.float32) * scale_ref[...] + shift_ref[...]
    o_ref[...] = jnp.maximum(z, 0.0).astype(o_ref.dtype)


def _mm_sigmoid_kernel(x_ref, w_ref, o_ref):
    """Row-tiled matmul + sigmoid; only the real output columns are written."""
    y = jnp.dot(x_ref[...], w_ref[...], preferred_element_type=jnp.float32)
    o_ref[...] = jax.nn.sigmoid(y[:, : o_ref.shape[1]])


# ------------------------------ tiling helpers ------------------------------


def _pick_tile(m, max_tile=784):
    # Full-extent block is always legal (no (8,128) divisibility requirement, no padded
    # rows).  For large row counts use 784 = 16*49: bf16-sublane friendly and divides
    # N*49 / N*196 whenever N % 16 == 0.
    return m if m <= max_tile else max_tile


def _pad_rows(x, tile):
    m = x.shape[0]
    mp = ((m + tile - 1) // tile) * tile
    if mp != m:
        x = jnp.pad(x, ((0, mp - m), (0, 0)))   # zero rows: harmless for BN partials
    return x, mp


# ------------------------------ kernel wrappers -----------------------------


def l12_matmuls(x0, w1, g1, b1, w2p):
    """Layer-1 (+BN+ReLU) and the layer-2 matmul.  Returns:
       y12  : (N, 7*896) bf16 pre-BN layer-2 output, column order (kh, kw, co)
       s, q : (7, 1, 896) f32 per-row sum / sumsq partials (over the batch)."""
    n = x0.shape[0]
    return pl.pallas_call(
        _l12a_kernel,
        out_shape=(
            jax.ShapeDtypeStruct((n, 7 * 896), jnp.bfloat16),
            jax.ShapeDtypeStruct((7, 1, 896), jnp.float32),
            jax.ShapeDtypeStruct((7, 1, 896), jnp.float32),
        ),
        grid=(7,),
        in_specs=[
            pl.BlockSpec((n, 14), lambda s: (0, 0)),
            pl.BlockSpec((14, 1024), lambda s: (0, 0)),
            pl.BlockSpec((1, 1024), lambda s: (0, 0)),
            pl.BlockSpec((1, 1024), lambda s: (0, 0)),
            pl.BlockSpec((1, 1024, 896), lambda s: (s, 0, 0)),   # 1.75 MB bf16 / step
        ],
        out_specs=(
            pl.BlockSpec((n, 896), lambda s: (0, s)),            # contiguous row block
            pl.BlockSpec((1, 1, 896), lambda s: (s, 0, 0)),
            pl.BlockSpec((1, 1, 896), lambda s: (s, 0, 0)),
        ),
        scratch_shapes=[pltpu.VMEM((n, 1024), jnp.bfloat16)],     # layer-1 activation
        compiler_params=pltpu.CompilerParams(dimension_semantics=("arbitrary",)),
    )(x0, w1, g1, b1, w2p)


def apply_scale_shift_relu(y2d, scale, shift, *, max_tile=784):
    """relu(y2d * scale + shift), row-tiled, parallel grid; bf16 output (M, C)."""
    m, c = y2d.shape
    tile_m = _pick_tile(m, max_tile)
    yp, mp = _pad_rows(y2d, tile_m)
    grid = (mp // tile_m,)
    out = pl.pallas_call(
        _scale_shift_relu_kernel,
        out_shape=jax.ShapeDtypeStruct((mp, c), jnp.bfloat16),
        grid=grid,
        in_specs=[
            pl.BlockSpec((tile_m, c), lambda i: (i, 0)),
            pl.BlockSpec((1, c), lambda i: (0, 0)),
            pl.BlockSpec((1, c), lambda i: (0, 0)),
        ],
        out_specs=pl.BlockSpec((tile_m, c), lambda i: (i, 0)),
        compiler_params=pltpu.CompilerParams(dimension_semantics=("parallel",)),
    )(yp, scale, shift)
    return out[:m]


def _im2col_3x3(x_nhwc):
    """3x3-shift im2col (edge zero pad 1): (N,H,W,C) -> (N*H*W, 9*C), column block
    order (s, t) with shift s reading input row p+s-1 (t likewise for width)."""
    N, H, W, C = x_nhwc.shape
    xp = jnp.pad(x_nhwc, ((0, 0), (1, 1), (1, 1), (0, 0)))
    patches = [xp[:, s:s + H, t:t + W, :] for s in range(3) for t in range(3)]
    cols = jnp.concatenate(patches, axis=-1)                     # (N, H, W, 9C)
    return cols.reshape(N * H * W, 9 * C)


def conv_t_phase_bn_relu(a_nhwc, w_packed, gamma, beta, *, c_out, max_tile=784):
    """ConvTranspose2d(Cin, c_out, 4, 2, 1) + train-mode BN + ReLU via the 4-phase
    sub-pixel decomposition: one lane-dense matmul with a (9*Cin, 4*c_out) RHS, BN stats
    reduced across tiles and phases, scale/shift applied by a small Pallas pass, then an
    XLA pixel shuffle.  Returns (N, 2H, 2W, c_out) bf16 NHWC."""
    N, H, W, _ = a_nhwc.shape
    cols = _im2col_3x3(a_nhwc)                                   # (N*H*W, 9*Cin) bf16
    m, k = cols.shape
    c = w_packed.shape[1]                                        # 4 * c_out
    tile_m = _pick_tile(m, max_tile)
    colsp, mp = _pad_rows(cols, tile_m)
    grid = (mp // tile_m,)

    y, psum, pssq = pl.pallas_call(
        _mm_psum_kernel,
        out_shape=(
            jax.ShapeDtypeStruct((mp, c), jnp.bfloat16),
            jax.ShapeDtypeStruct((grid[0], 1, c), jnp.float32),
            jax.ShapeDtypeStruct((grid[0], 1, c), jnp.float32),
        ),
        grid=grid,
        in_specs=[
            pl.BlockSpec((tile_m, k), lambda i: (i, 0)),
            pl.BlockSpec((k, c), lambda i: (0, 0)),
        ],
        out_specs=(
            pl.BlockSpec((tile_m, c), lambda i: (i, 0)),
            pl.BlockSpec((1, 1, c), lambda i: (i, 0, 0)),        # per-tile partials
            pl.BlockSpec((1, 1, c), lambda i: (i, 0, 0)),
        ),
        compiler_params=pltpu.CompilerParams(dimension_semantics=("parallel",)),
    )(colsp, w_packed)

    # Combine tiny per-tile / per-phase stats in XLA; BN is over all 4*m positions per
    # channel.  Fold gamma/beta into a single scale/shift.
    cnt = 4.0 * m
    ssum = jnp.sum(psum[:, 0, :], axis=0).reshape(4, c_out).sum(axis=0)   # (c_out,)
    sssq = jnp.sum(pssq[:, 0, :], axis=0).reshape(4, c_out).sum(axis=0)
    mean = ssum / cnt
    var = jnp.maximum(sssq / cnt - mean * mean, 0.0)
    scale = gamma.reshape(c_out) * jax.lax.rsqrt(var + EPS)
    shift = beta.reshape(c_out) - mean * scale
    scale_c = jnp.tile(scale, 4).reshape(1, c).astype(jnp.float32)
    shift_c = jnp.tile(shift, 4).reshape(1, c).astype(jnp.float32)

    a = apply_scale_shift_relu(y[:m], scale_c, shift_c, max_tile=max_tile)
    # pixel shuffle: rows (n,p,q), cols (dh*2+dw)*c_out+co -> (N, 2H, 2W, c_out)
    a = a.reshape(N, H, W, 2, 2, c_out).transpose(0, 1, 3, 2, 4, 5)
    return a.reshape(N, 2 * H, 2 * W, c_out)


def conv_t_phase_sigmoid(a_nhwc, w_packed_padded, *, max_tile=784):
    """ConvTranspose2d(Cin, 1, 4, 2, 1) + Sigmoid via the 4-phase decomposition.
    Returns (N, 2H, 2W) f32."""
    N, H, W, _ = a_nhwc.shape
    cols = _im2col_3x3(a_nhwc)                                   # (N*H*W, 9*Cin) bf16
    m, k = cols.shape
    tile_m = _pick_tile(m, max_tile)
    colsp, mp = _pad_rows(cols, tile_m)
    grid = (mp // tile_m,)
    y = pl.pallas_call(
        _mm_sigmoid_kernel,
        out_shape=jax.ShapeDtypeStruct((mp, 4), jnp.float32),
        grid=grid,
        in_specs=[
            pl.BlockSpec((tile_m, k), lambda i: (i, 0)),
            pl.BlockSpec((k, 128), lambda i: (0, 0)),            # lane-padded RHS
        ],
        out_specs=pl.BlockSpec((tile_m, 4), lambda i: (i, 0)),
        compiler_params=pltpu.CompilerParams(dimension_semantics=("parallel",)),
    )(colsp, w_packed_padded)[:m]
    img = y.reshape(N, H, W, 2, 2).transpose(0, 1, 3, 2, 4)      # (N, H, dh, W, dw)
    return img.reshape(N, 2 * H, 2 * W)


# --------------------------- weight prepacking --------------------------------

# (parity d, shift s) -> kernel tap k, for ConvTranspose2d(K=4, stride=2, pad=1):
# output pixel oh = 2p + d reads input rows p+s-1 for the listed (s, tap) pairs.
_TAPS = {(0, 0): 3, (0, 1): 1, (1, 1): 2, (1, 2): 0}


def _ct_4s2p1_phase_weight(w):
    """PyTorch ConvTranspose2d weight (Cin, Cout, 4, 4) -> (9*Cin, 4*Cout) matrix.
    Rows match the 3x3-shift im2col (block (s*3+t)*Cin + ci); columns are
    (dh*2+dw)*Cout + co, phase (dh,dw) producing output pixel (2p+dh, 2q+dw)."""
    Cin, Cout = w.shape[0], w.shape[1]
    wm = jnp.zeros((9 * Cin, 4 * Cout), w.dtype)
    for (dh, s), kh in _TAPS.items():
        for (dw, t), kw in _TAPS.items():
            r0 = (s * 3 + t) * Cin
            c0 = (dh * 2 + dw) * Cout
            wm = wm.at[r0:r0 + Cin, c0:c0 + Cout].set(w[:, :, kh, kw])
    return wm


def prepare_params(params):
    """One-time weight prepacking (layout transforms + bf16 casts).  Run OUTSIDE jit so
    the jitted forward never touches the PyTorch-layout weights."""
    w2 = params["w2"]                                            # (1024, 128, 7, 7)
    w2p = w2.transpose(2, 0, 3, 1).reshape(7, 1024, 7 * 128)     # [kh][ci][kw*128+co]
    w3p = _ct_4s2p1_phase_weight(params["w3"])                   # (1152, 256)
    w4p = _ct_4s2p1_phase_weight(params["w4"])                   # (576, 4)
    w4p = jnp.pad(w4p, ((0, 0), (0, 128 - w4p.shape[1])))        # lane-dense RHS
    return {
        "w1": params["w1"].reshape(14, 1024).astype(jnp.bfloat16),  # k=1: plain matrix
        "w2": w2p.astype(jnp.bfloat16),
        "w3": w3p.astype(jnp.bfloat16),
        "w4": w4p.astype(jnp.bfloat16),
        "g1": params["g1"], "b1": params["b1"],
        "g2": params["g2"], "b2": params["b2"],
        "g3": params["g3"], "b3": params["b3"],
    }


# ------------------------------- forward pass ---------------------------------


def p_net_forward(x_nchw, pp):
    N = x_nchw.shape[0]

    # --- layers 1 + 2 (both on 1x1 spatial input): fused matmul kernel + BN-2 apply ---
    x0 = x_nchw.reshape(N, 14).astype(jnp.bfloat16)
    y12, s2, q2 = l12_matmuls(x0, pp["w1"], pp["g1"], pp["b1"], pp["w2"])
    inv2 = 1.0 / (N * 49)
    s128 = jnp.sum(s2.reshape(49, 128), axis=0)                  # per-channel sums
    q128 = jnp.sum(q2.reshape(49, 128), axis=0)
    mean2 = s128 * inv2
    var2 = jnp.maximum(q128 * inv2 - mean2 * mean2, 0.0)
    scale2 = pp["g2"].reshape(128) * jax.lax.rsqrt(var2 + EPS)
    shift2 = pp["b2"].reshape(128) - mean2 * scale2
    a2_2d = apply_scale_shift_relu(
        y12.reshape(N * 49, 128),
        scale2.reshape(1, 128).astype(jnp.float32),
        shift2.reshape(1, 128).astype(jnp.float32))
    a2 = a2_2d.reshape(N, 7, 7, 128)                             # NHWC bf16, pure reshape

    # --- layer 3: ConvTranspose2d(128, 64, 4, 2, 1): 7x7 -> 14x14, BN, ReLU ---
    a3 = conv_t_phase_bn_relu(a2, pp["w3"], pp["g3"], pp["b3"], c_out=64)

    # --- layer 4: ConvTranspose2d(64, 1, 4, 2, 1) + Sigmoid: 14x14 -> 28x28 ---
    img = conv_t_phase_sigmoid(a3, pp["w4"])                     # (N, 28, 28) f32
    return img[:, None, :, :]                                    # NCHW (N, 1, 28, 28)


# --------------------------------- main --------------------------------------

if __name__ == "__main__":
    key = jax.random.PRNGKey(0)
    ks = jax.random.split(key, 11)
    params = {
        # ConvTranspose2d weights: (Cin, Cout, kH, kW), deterministic synthetic init
        "w1": jax.random.normal(ks[0], (14, 1024, 1, 1), jnp.float32) * 0.05,
        "w2": jax.random.normal(ks[1], (1024, 128, 7, 7), jnp.float32) * 0.02,
        "w3": jax.random.normal(ks[2], (128, 64, 4, 4), jnp.float32) * 0.05,
        "w4": jax.random.normal(ks[3], (64, 1, 4, 4), jnp.float32) * 0.05,
        # BatchNorm affine params (gamma, beta), shape (1, C)
        "g1": 1.0 + 0.1 * jax.random.normal(ks[4], (1, 1024), jnp.float32),
        "b1": 0.1 * jax.random.normal(ks[5], (1, 1024), jnp.float32),
        "g2": 1.0 + 0.1 * jax.random.normal(ks[6], (1, 128), jnp.float32),
        "b2": 0.1 * jax.random.normal(ks[7], (1, 128), jnp.float32),
        "g3": 1.0 + 0.1 * jax.random.normal(ks[8], (1, 64), jnp.float32),
        "b3": 0.1 * jax.random.normal(ks[9], (1, 64), jnp.float32),
    }
    x = jax.random.normal(ks[10], (2, 14, 1, 1), jnp.float32)  # NCHW, latent 14x1x1

    packed = prepare_params(params)          # one-time prepack, outside jit
    fwd = jax.jit(p_net_forward)
    out = jax.block_until_ready(fwd(x, packed))

    assert out.shape == (2, 1, 28, 28), out.shape
    assert bool(jnp.all(jnp.isfinite(out)))
    assert bool(jnp.all((out >= 0.0) & (out <= 1.0)))  # sigmoid output range
    print("KERNEL_OK")
</pallas_src>

<mosaic_0001>
module attributes {stable_mosaic.version = 11 : i64} {
  func.func @_l12a_kernel(%arg0: i32, %arg1: memref<2x14xbf16, #tpu.memory_space<vmem>>, %arg2: memref<14x1024xbf16, #tpu.memory_space<vmem>>, %arg3: memref<1x1024xf32, #tpu.memory_space<vmem>>, %arg4: memref<1x1024xf32, #tpu.memory_space<vmem>>, %arg5: memref<1x1024x896xbf16, #tpu.memory_space<vmem>>, %arg6: memref<2x896xbf16, #tpu.memory_space<vmem>>, %arg7: memref<1x1x896xf32, #tpu.memory_space<vmem>>, %arg8: memref<1x1x896xf32, #tpu.memory_space<vmem>>, %arg9: memref<2x1024xbf16, #tpu.memory_space<vmem>>) attributes {dimension_semantics = [#tpu.dimension_semantics<arbitrary>], iteration_bounds = array<i64: 7>, scalar_prefetch = 0 : i64, scratch_operands = 1 : i64, tpu.core_type = #tpu.core_type<tc>, window_params = [{pipeline_mode = #tpu.pipeline_mode<synchronous>, transform_indices = @transform_0, window_bounds = array<i64: 2, 14>}, {pipeline_mode = #tpu.pipeline_mode<synchronous>, transform_indices = @transform_1, window_bounds = array<i64: 14, 1024>}, {pipeline_mode = #tpu.pipeline_mode<synchronous>, transform_indices = @transform_2, window_bounds = array<i64: 1, 1024>}, {pipeline_mode = #tpu.pipeline_mode<synchronous>, transform_indices = @transform_3, window_bounds = array<i64: 1, 1024>}, {transform_indices = @transform_4, window_bounds = array<i64: 1, 1024, 896>}, {transform_indices = @transform_5, window_bounds = array<i64: 2, 896>}, {transform_indices = @transform_6, window_bounds = array<i64: 1, 1, 896>}, {transform_indices = @transform_7, window_bounds = array<i64: 1, 1, 896>}]} {
    %c0_i32 = arith.constant 0 : i32
    %0 = arith.cmpi eq, %arg0, %c0_i32 : i32
    %1 = arith.extui %0 : i1 to i32
    %c0_i32_0 = arith.constant 0 : i32
    %2 = arith.cmpi ne, %1, %c0_i32_0 : i32
    scf.if %2 {
      %c0_15 = arith.constant 0 : index
      %c0_16 = arith.constant 0 : index
      %18 = vector.load %arg1[%c0_15, %c0_16] : memref<2x14xbf16, #tpu.memory_space<vmem>>, vector<2x14xbf16>
      %c0_17 = arith.constant 0 : index
      %c0_18 = arith.constant 0 : index
      %19 = vector.load %arg2[%c0_17, %c0_18] : memref<14x1024xbf16, #tpu.memory_space<vmem>>, vector<14x1024xbf16>
      %cst_19 = arith.constant dense<0.000000e+00> : vector<2x1024xf32>
      %20 = tpu.matmul %18, %19, %cst_19 {dimension_numbers = #tpu.dot_dimension_numbers<[1], [0], [0], [1], [0, 0, 1, 1], [], []>} : vector<2x14xbf16>, vector<14x1024xbf16>, vector<2x1024xf32> -> vector<2x1024xf32>
      %cst_20 = arith.constant dense<0.000000e+00> : vector<1024xf32>
      %21 = vector.multi_reduction <add>, %20, %cst_20 [0] : vector<2x1024xf32> to vector<1024xf32>
      %22 = vector.shape_cast %21 : vector<1024xf32> to vector<1x1024xf32>
      %cst_21 = arith.constant 5.000000e-01 : f32
      %23 = vector.broadcast %cst_21 : f32 to vector<1x1024xf32>
      %24 = arith.mulf %22, %23 : vector<1x1024xf32>
      %25 = vector.broadcast %24 : vector<1x1024xf32> to vector<2x1024xf32>
      %26 = arith.subf %20, %25 : vector<2x1024xf32>
      %27 = arith.mulf %26, %26 : vector<2x1024xf32>
      %cst_22 = arith.constant dense<0.000000e+00> : vector<1024xf32>
      %28 = vector.multi_reduction <add>, %27, %cst_22 [0] : vector<2x1024xf32> to vector<1024xf32>
      %29 = vector.shape_cast %28 : vector<1024xf32> to vector<1x1024xf32>
      %cst_23 = arith.constant 5.000000e-01 : f32
      %30 = vector.broadcast %cst_23 : f32 to vector<1x1024xf32>
      %31 = arith.mulf %29, %30 : vector<1x1024xf32>
      %cst_24 = arith.constant 9.99999974E-6 : f32
      %32 = vector.broadcast %cst_24 : f32 to vector<1x1024xf32>
      %33 = arith.addf %31, %32 : vector<1x1024xf32>
      %34 = math.rsqrt %33 : vector<1x1024xf32>
      %35 = vector.broadcast %34 : vector<1x1024xf32> to vector<2x1024xf32>
      %36 = arith.mulf %26, %35 : vector<2x1024xf32>
      %c0_25 = arith.constant 0 : index
      %c0_26 = arith.constant 0 : index
      %37 = vector.load %arg3[%c0_25, %c0_26] : memref<1x1024xf32, #tpu.memory_space<vmem>>, vector<1x1024xf32>
      %38 = vector.broadcast %37 : vector<1x1024xf32> to vector<2x1024xf32>
      %39 = arith.mulf %36, %38 : vector<2x1024xf32>
      %c0_27 = arith.constant 0 : index
      %c0_28 = arith.constant 0 : index
      %40 = vector.load %arg4[%c0_27, %c0_28] : memref<1x1024xf32, #tpu.memory_space<vmem>>, vector<1x1024xf32>
      %41 = vector.broadcast %40 : vector<1x1024xf32> to vector<2x1024xf32>
      %42 = arith.addf %39, %41 : vector<2x1024xf32>
      %cst_29 = arith.constant 0.000000e+00 : f32
      %43 = vector.broadcast %cst_29 : f32 to vector<2x1024xf32>
      %44 = arith.maximumf %42, %43 : vector<2x1024xf32>
      %45 = arith.truncf %44 : vector<2x1024xf32> to vector<2x1024xbf16>
      %c0_30 = arith.constant 0 : index
      %c0_31 = arith.constant 0 : index
      %46 = vector.load %arg9[%c0_30, %c0_31] : memref<2x1024xbf16, #tpu.memory_space<vmem>>, vector<2x1024xbf16>
      tpu.vector_store %arg9[%c0_30, %c0_31], %45 {strides = array<i32>} : memref<2x1024xbf16, #tpu.memory_space<vmem>>, vector<2x1024xbf16>,
    } else {
    }
    %c0 = arith.constant 0 : index
    %c0_1 = arith.constant 0 : index
    %3 = vector.load %arg9[%c0, %c0_1] : memref<2x1024xbf16, #tpu.memory_space<vmem>>, vector<2x1024xbf16>
    %c0_2 = arith.constant 0 : index
    %c0_3 = arith.constant 0 : index
    %c0_4 = arith.constant 0 : index
    %4 = vector.load %arg5[%c0_2, %c0_3, %c0_4] : memref<1x1024x896xbf16, #tpu.memory_space<vmem>>, vector<1x1024x896xbf16>
    %5 = vector.shape_cast %4 : vector<1x1024x896xbf16> to vector<1024x896xbf16>
    %cst = arith.constant dense<0.000000e+00> : vector<2x896xf32>
    %6 = tpu.matmul %3, %5, %cst {dimension_numbers = #tpu.dot_dimension_numbers<[1], [0], [0], [1], [0, 0, 1, 1], [], []>} : vector<2x1024xbf16>, vector<1024x896xbf16>, vector<2x896xf32> -> vector<2x896xf32>
    %7 = arith.truncf %6 : vector<2x896xf32> to vector<2x896xbf16>
    %c0_5 = arith.constant 0 : index
    %c0_6 = arith.constant 0 : index
    %8 = vector.load %arg6[%c0_5, %c0_6] : memref<2x896xbf16, #tpu.memory_space<vmem>>, vector<2x896xbf16>
    tpu.vector_store %arg6[%c0_5, %c0_6], %7 {strides = array<i32>} : memref<2x896xbf16, #tpu.memory_space<vmem>>, vector<2x896xbf16>,
    %cst_7 = arith.constant dense<0.000000e+00> : vector<896xf32>
    %9 = vector.multi_reduction <add>, %6, %cst_7 [0] : vector<2x896xf32> to vector<896xf32>
    %10 = vector.shape_cast %9 : vector<896xf32> to vector<1x896xf32>
    %11 = vector.shape_cast %10 : vector<1x896xf32> to vector<1x1x896xf32>
    %c0_8 = arith.constant 0 : index
    %c0_9 = arith.constant 0 : index
    %c0_10 = arith.constant 0 : index
    %12 = vector.load %arg7[%c0_8, %c0_9, %c0_10] : memref<1x1x896xf32, #tpu.memory_space<vmem>>, vector<1x1x896xf32>
    tpu.vector_store %arg7[%c0_8, %c0_9, %c0_10], %11 {strides = array<i32>} : memref<1x1x896xf32, #tpu.memory_space<vmem>>, vector<1x1x896xf32>,
    %13 = arith.mulf %6, %6 : vector<2x896xf32>
    %cst_11 = arith.constant dense<0.000000e+00> : vector<896xf32>
    %14 = vector.multi_reduction <add>, %13, %cst_11 [0] : vector<2x896xf32> to vector<896xf32>
    %15 = vector.shape_cast %14 : vector<896xf32> to vector<1x896xf32>
    %16 = vector.shape_cast %15 : vector<1x896xf32> to vector<1x1x896xf32>
    %c0_12 = arith.constant 0 : index
    %c0_13 = arith.constant 0 : index
    %c0_14 = arith.constant 0 : index
    %17 = vector.load %arg8[%c0_12, %c0_13, %c0_14] : memref<1x1x896xf32, #tpu.memory_space<vmem>>, vector<1x1x896xf32>
    tpu.vector_store %arg8[%c0_12, %c0_13, %c0_14], %16 {strides = array<i32>} : memref<1x1x896xf32, #tpu.memory_space<vmem>>, vector<1x1x896xf32>,
    return
  }
  func.func @transform_0(%arg0: i32) -> (i32, i32) {
    %c0_i32 = arith.constant 0 : i32
    %c0_i32_0 = arith.constant 0 : i32
    %c0_i32_1 = arith.constant 0 : i32
    return %c0_i32, %c0_i32_0 : i32, i32
  }
  func.func @transform_1(%arg0: i32) -> (i32, i32) {
    %c0_i32 = arith.constant 0 : i32
    %c0_i32_0 = arith.constant 0 : i32
    %c0_i32_1 = arith.constant 0 : i32
    return %c0_i32, %c0_i32_0 : i32, i32
  }
  func.func @transform_2(%arg0: i32) -> (i32, i32) {
    %c0_i32 = arith.constant 0 : i32
    %c0_i32_0 = arith.constant 0 : i32
    %c0_i32_1 = arith.constant 0 : i32
    return %c0_i32, %c0_i32_0 : i32, i32
  }
  func.func @transform_3(%arg0: i32) -> (i32, i32) {
    %c0_i32 = arith.constant 0 : i32
    %c0_i32_0 = arith.constant 0 : i32
    %c0_i32_1 = arith.constant 0 : i32
    return %c0_i32, %c0_i32_0 : i32, i32
  }
  func.func @transform_4(%arg0: i32) -> (i32, i32, i32) {
    %c0_i32 = arith.constant 0 : i32
    %c0_i32_0 = arith.constant 0 : i32
    %c0_i32_1 = arith.constant 0 : i32
    return %arg0, %c0_i32, %c0_i32_0 : i32, i32, i32
  }
  func.func @transform_5(%arg0: i32) -> (i32, i32) {
    %c0_i32 = arith.constant 0 : i32
    %c0_i32_0 = arith.constant 0 : i32
    return %c0_i32, %arg0 : i32, i32
  }
  func.func @transform_6(%arg0: i32) -> (i32, i32, i32) {
    %c0_i32 = arith.constant 0 : i32
    %c0_i32_0 = arith.constant 0 : i32
    %c0_i32_1 = arith.constant 0 : i32
    return %arg0, %c0_i32, %c0_i32_0 : i32, i32, i32
  }
  func.func @transform_7(%arg0: i32) -> (i32, i32, i32) {
    %c0_i32 = arith.constant 0 : i32
    %c0_i32_0 = arith.constant 0 : i32
    %c0_i32_1 = arith.constant 0 : i32
    return %arg0, %c0_i32, %c0_i32_0 : i32, i32, i32
  }
}

module attributes {stable_mosaic.version = 11 : i64} {
  func.func @_scale_shift_relu_kernel(%arg0: i32, %arg1: memref<98x128xbf16, #tpu.memory_space<vmem>>, %arg2: memref<1x128xf32, #tpu.memory_space<vmem>>, %arg3: memref<1x128xf32, #tpu.memory_space<vmem>>, %arg4: memref<98x128xbf16, #tpu.memory_space<vmem>>) attributes {dimension_semantics = [#tpu.dimension_semantics<parallel>], iteration_bounds = array<i64: 1>, scalar_prefetch = 0 : i64, scratch_operands = 0 : i64, tpu.core_type = #tpu.core_type<tc>, window_params = [{transform_indices = @transform_0, window_bounds = array<i64: 98, 128>}, {pipeline_mode = #tpu.pipeline_mode<synchronous>, transform_indices = @transform_1, window_bounds = array<i64: 1, 128>}, {pipeline_mode = #tpu.pipeline_mode<synchronous>, transform_indices = @transform_2, window_bounds = array<i64: 1, 128>}, {transform_indices = @transform_3, window_bounds = array<i64: 98, 128>}]} {
    %c0 = arith.constant 0 : index
    %c0_0 = arith.constant 0 : index
    %0 = vector.load %arg1[%c0, %c0_0] : memref<98x128xbf16, #tpu.memory_space<vmem>>, vector<98x128xbf16>
    %1 = arith.extf %0 : vector<98x128xbf16> to vector<98x128xf32>
    %c0_1 = arith.constant 0 : index
    %c0_2 = arith.constant 0 : index
    %2 = vector.load %arg2[%c0_1, %c0_2] : memref<1x128xf32, #tpu.memory_space<vmem>>, vector<1x128xf32>
    %3 = vector.broadcast %2 : vector<1x128xf32> to vector<98x128xf32>
    %4 = arith.mulf %1, %3 : vector<98x128xf32>
    %c0_3 = arith.constant 0 : index
    %c0_4 = arith.constant 0 : index
    %5 = vector.load %arg3[%c0_3, %c0_4] : memref<1x128xf32, #tpu.memory_space<vmem>>, vector<1x128xf32>
    %6 = vector.broadcast %5 : vector<1x128xf32> to vector<98x128xf32>
    %7 = arith.addf %4, %6 : vector<98x128xf32>
    %cst = arith.constant 0.000000e+00 : f32
    %8 = vector.broadcast %cst : f32 to vector<98x128xf32>
    %9 = arith.maximumf %7, %8 : vector<98x128xf32>
    %10 = arith.truncf %9 : vector<98x128xf32> to vector<98x128xbf16>
    %c0_5 = arith.constant 0 : index
    %c0_6 = arith.constant 0 : index
    %11 = vector.load %arg4[%c0_5, %c0_6] : memref<98x128xbf16, #tpu.memory_space<vmem>>, vector<98x128xbf16>
    tpu.vector_store %arg4[%c0_5, %c0_6], %10 {strides = array<i32>} : memref<98x128xbf16, #tpu.memory_space<vmem>>, vector<98x128xbf16>,
    return
  }
  func.func @transform_0(%arg0: i32) -> (i32, i32) {
    %c0_i32 = arith.constant 0 : i32
    %c0_i32_0 = arith.constant 0 : i32
    return %arg0, %c0_i32 : i32, i32
  }
  func.func @transform_1(%arg0: i32) -> (i32, i32) {
    %c0_i32 = arith.constant 0 : i32
    %c0_i32_0 = arith.constant 0 : i32
    %c0_i32_1 = arith.constant 0 : i32
    return %c0_i32, %c0_i32_0 : i32, i32
  }
  func.func @transform_2(%arg0: i32) -> (i32, i32) {
    %c0_i32 = arith.constant 0 : i32
    %c0_i32_0 = arith.constant 0 : i32
    %c0_i32_1 = arith.constant 0 : i32
    return %c0_i32, %c0_i32_0 : i32, i32
  }
  func.func @transform_3(%arg0: i32) -> (i32, i32) {
    %c0_i32 = arith.constant 0 : i32
    %c0_i32_0 = arith.constant 0 : i32
    return %arg0, %c0_i32 : i32, i32
  }
}

module attributes {stable_mosaic.version = 11 : i64} {
  func.func @_mm_psum_kernel(%arg0: i32, %arg1: memref<98x1152xbf16, #tpu.memory_space<vmem>>, %arg2: memref<1152x256xbf16, #tpu.memory_space<vmem>>, %arg3: memref<98x256xbf16, #tpu.memory_space<vmem>>, %arg4: memref<1x1x256xf32, #tpu.memory_space<vmem>>, %arg5: memref<1x1x256xf32, #tpu.memory_space<vmem>>) attributes {dimension_semantics = [#tpu.dimension_semantics<parallel>], iteration_bounds = array<i64: 1>, scalar_prefetch = 0 : i64, scratch_operands = 0 : i64, tpu.core_type = #tpu.core_type<tc>, window_params = [{transform_indices = @transform_0, window_bounds = array<i64: 98, 1152>}, {pipeline_mode = #tpu.pipeline_mode<synchronous>, transform_indices = @transform_1, window_bounds = array<i64: 1152, 256>}, {transform_indices = @transform_2, window_bounds = array<i64: 98, 256>}, {transform_indices = @transform_3, window_bounds = array<i64: 1, 1, 256>}, {transform_indices = @transform_4, window_bounds = array<i64: 1, 1, 256>}]} {
    %c0 = arith.constant 0 : index
    %c0_0 = arith.constant 0 : index
    %0 = vector.load %arg1[%c0, %c0_0] : memref<98x1152xbf16, #tpu.memory_space<vmem>>, vector<98x1152xbf16>
    %c0_1 = arith.constant 0 : index
    %c0_2 = arith.constant 0 : index
    %1 = vector.load %arg2[%c0_1, %c0_2] : memref<1152x256xbf16, #tpu.memory_space<vmem>>, vector<1152x256xbf16>
    %cst = arith.constant dense<0.000000e+00> : vector<98x256xf32>
    %2 = tpu.matmul %0, %1, %cst {dimension_numbers = #tpu.dot_dimension_numbers<[1], [0], [0], [1], [0, 0, 1, 1], [], []>} : vector<98x1152xbf16>, vector<1152x256xbf16>, vector<98x256xf32> -> vector<98x256xf32>
    %3 = arith.truncf %2 : vector<98x256xf32> to vector<98x256xbf16>
    %c0_3 = arith.constant 0 : index
    %c0_4 = arith.constant 0 : index
    %4 = vector.load %arg3[%c0_3, %c0_4] : memref<98x256xbf16, #tpu.memory_space<vmem>>, vector<98x256xbf16>
    tpu.vector_store %arg3[%c0_3, %c0_4], %3 {strides = array<i32>} : memref<98x256xbf16, #tpu.memory_space<vmem>>, vector<98x256xbf16>,
    %cst_5 = arith.constant dense<0.000000e+00> : vector<256xf32>
    %5 = vector.multi_reduction <add>, %2, %cst_5 [0] : vector<98x256xf32> to vector<256xf32>
    %6 = vector.shape_cast %5 : vector<256xf32> to vector<1x256xf32>
    %7 = vector.shape_cast %6 : vector<1x256xf32> to vector<1x1x256xf32>
    %c0_6 = arith.constant 0 : index
    %c0_7 = arith.constant 0 : index
    %c0_8 = arith.constant 0 : index
    %8 = vector.load %arg4[%c0_6, %c0_7, %c0_8] : memref<1x1x256xf32, #tpu.memory_space<vmem>>, vector<1x1x256xf32>
    tpu.vector_store %arg4[%c0_6, %c0_7, %c0_8], %7 {strides = array<i32>} : memref<1x1x256xf32, #tpu.memory_space<vmem>>, vector<1x1x256xf32>,
    %9 = arith.mulf %2, %2 : vector<98x256xf32>
    %cst_9 = arith.constant dense<0.000000e+00> : vector<256xf32>
    %10 = vector.multi_reduction <add>, %9, %cst_9 [0] : vector<98x256xf32> to vector<256xf32>
    %11 = vector.shape_cast %10 : vector<256xf32> to vector<1x256xf32>
    %12 = vector.shape_cast %11 : vector<1x256xf32> to vector<1x1x256xf32>
    %c0_10 = arith.constant 0 : index
    %c0_11 = arith.constant 0 : index
    %c0_12 = arith.constant 0 : index
    %13 = vector.load %arg5[%c0_10, %c0_11, %c0_12] : memref<1x1x256xf32, #tpu.memory_space<vmem>>, vector<1x1x256xf32>
    tpu.vector_store %arg5[%c0_10, %c0_11, %c0_12], %12 {strides = array<i32>} : memref<1x1x256xf32, #tpu.memory_space<vmem>>, vector<1x1x256xf32>,
    return
  }
  func.func @transform_0(%arg0: i32) -> (i32, i32) {
    %c0_i32 = arith.constant 0 : i32
    %c0_i32_0 = arith.constant 0 : i32
    return %arg0, %c0_i32 : i32, i32
  }
  func.func @transform_1(%arg0: i32) -> (i32, i32) {
    %c0_i32 = arith.constant 0 : i32
    %c0_i32_0 = arith.constant 0 : i32
    %c0_i32_1 = arith.constant 0 : i32
    return %c0_i32, %c0_i32_0 : i32, i32
  }
  func.func @transform_2(%arg0: i32) -> (i32, i32) {
    %c0_i32 = arith.constant 0 : i32
    %c0_i32_0 = arith.constant 0 : i32
    return %arg0, %c0_i32 : i32, i32
  }
  func.func @transform_3(%arg0: i32) -> (i32, i32, i32) {
    %c0_i32 = arith.constant 0 : i32
    %c0_i32_0 = arith.constant 0 : i32
    %c0_i32_1 = arith.constant 0 : i32
    return %arg0, %c0_i32, %c0_i32_0 : i32, i32, i32
  }
  func.func @transform_4(%arg0: i32) -> (i32, i32, i32) {
    %c0_i32 = arith.constant 0 : i32
    %c0_i32_0 = arith.constant 0 : i32
    %c0_i32_1 = arith.constant 0 : i32
    return %arg0, %c0_i32, %c0_i32_0 : i32, i32, i32
  }
}

module attributes {stable_mosaic.version = 11 : i64} {
  func.func @_scale_shift_relu_kernel(%arg0: i32, %arg1: memref<98x256xbf16, #tpu.memory_space<vmem>>, %arg2: memref<1x256xf32, #tpu.memory_space<vmem>>, %arg3: memref<1x256xf32, #tpu.memory_space<vmem>>, %arg4: memref<98x256xbf16, #tpu.memory_space<vmem>>) attributes {dimension_semantics = [#tpu.dimension_semantics<parallel>], iteration_bounds = array<i64: 1>, scalar_prefetch = 0 : i64, scratch_operands = 0 : i64, tpu.core_type = #tpu.core_type<tc>, window_params = [{transform_indices = @transform_0, window_bounds = array<i64: 98, 256>}, {pipeline_mode = #tpu.pipeline_mode<synchronous>, transform_indices = @transform_1, window_bounds = array<i64: 1, 256>}, {pipeline_mode = #tpu.pipeline_mode<synchronous>, transform_indices = @transform_2, window_bounds = array<i64: 1, 256>}, {transform_indices = @transform_3, window_bounds = array<i64: 98, 256>}]} {
    %c0 = arith.constant 0 : index
    %c0_0 = arith.constant 0 : index
    %0 = vector.load %arg1[%c0, %c0_0] : memref<98x256xbf16, #tpu.memory_space<vmem>>, vector<98x256xbf16>
    %1 = arith.extf %0 : vector<98x256xbf16> to vector<98x256xf32>
    %c0_1 = arith.constant 0 : index
    %c0_2 = arith.constant 0 : index
    %2 = vector.load %arg2[%c0_1, %c0_2] : memref<1x256xf32, #tpu.memory_space<vmem>>, vector<1x256xf32>
    %3 = vector.broadcast %2 : vector<1x256xf32> to vector<98x256xf32>
    %4 = arith.mulf %1, %3 : vector<98x256xf32>
    %c0_3 = arith.constant 0 : index
    %c0_4 = arith.constant 0 : index
    %5 = vector.load %arg3[%c0_3, %c0_4] : memref<1x256xf32, #tpu.memory_space<vmem>>, vector<1x256xf32>
    %6 = vector.broadcast %5 : vector<1x256xf32> to vector<98x256xf32>
    %7 = arith.addf %4, %6 : vector<98x256xf32>
    %cst = arith.constant 0.000000e+00 : f32
    %8 = vector.broadcast %cst : f32 to vector<98x256xf32>
    %9 = arith.maximumf %7, %8 : vector<98x256xf32>
    %10 = arith.truncf %9 : vector<98x256xf32> to vector<98x256xbf16>
    %c0_5 = arith.constant 0 : index
    %c0_6 = arith.constant 0 : index
    %11 = vector.load %arg4[%c0_5, %c0_6] : memref<98x256xbf16, #tpu.memory_space<vmem>>, vector<98x256xbf16>
    tpu.vector_store %arg4[%c0_5, %c0_6], %10 {strides = array<i32>} : memref<98x256xbf16, #tpu.memory_space<vmem>>, vector<98x256xbf16>,
    return
  }
  func.func @transform_0(%arg0: i32) -> (i32, i32) {
    %c0_i32 = arith.constant 0 : i32
    %c0_i32_0 = arith.constant 0 : i32
    return %arg0, %c0_i32 : i32, i32
  }
  func.func @transform_1(%arg0: i32) -> (i32, i32) {
    %c0_i32 = arith.constant 0 : i32
    %c0_i32_0 = arith.constant 0 : i32
    %c0_i32_1 = arith.constant 0 : i32
    return %c0_i32, %c0_i32_0 : i32, i32
  }
  func.func @transform_2(%arg0: i32) -> (i32, i32) {
    %c0_i32 = arith.constant 0 : i32
    %c0_i32_0 = arith.constant 0 : i32
    %c0_i32_1 = arith.constant 0 : i32
    return %c0_i32, %c0_i32_0 : i32, i32
  }
  func.func @transform_3(%arg0: i32) -> (i32, i32) {
    %c0_i32 = arith.constant 0 : i32
    %c0_i32_0 = arith.constant 0 : i32
    return %arg0, %c0_i32 : i32, i32
  }
}

module attributes {stable_mosaic.version = 11 : i64} {
  func.func @_mm_sigmoid_kernel(%arg0: i32, %arg1: memref<392x576xbf16, #tpu.memory_space<vmem>>, %arg2: memref<576x128xbf16, #tpu.memory_space<vmem>>, %arg3: memref<392x4xf32, #tpu.memory_space<vmem>>) attributes {dimension_semantics = [#tpu.dimension_semantics<parallel>], iteration_bounds = array<i64: 1>, scalar_prefetch = 0 : i64, scratch_operands = 0 : i64, tpu.core_type = #tpu.core_type<tc>, window_params = [{transform_indices = @transform_0, window_bounds = array<i64: 392, 576>}, {pipeline_mode = #tpu.pipeline_mode<synchronous>, transform_indices = @transform_1, window_bounds = array<i64: 576, 128>}, {transform_indices = @transform_2, window_bounds = array<i64: 392, 4>}]} {
    %c0 = arith.constant 0 : index
    %c0_0 = arith.constant 0 : index
    %0 = vector.load %arg1[%c0, %c0_0] : memref<392x576xbf16, #tpu.memory_space<vmem>>, vector<392x576xbf16>
    %c0_1 = arith.constant 0 : index
    %c0_2 = arith.constant 0 : index
    %1 = vector.load %arg2[%c0_1, %c0_2] : memref<576x128xbf16, #tpu.memory_space<vmem>>, vector<576x128xbf16>
    %cst = arith.constant dense<0.000000e+00> : vector<392x128xf32>
    %2 = tpu.matmul %0, %1, %cst {dimension_numbers = #tpu.dot_dimension_numbers<[1], [0], [0], [1], [0, 0, 1, 1], [], []>} : vector<392x576xbf16>, vector<576x128xbf16>, vector<392x128xf32> -> vector<392x128xf32>
    %3 = vector.extract_strided_slice %2 {offsets = [0, 0], sizes = [392, 4], strides = [1, 1]} : vector<392x128xf32> to vector<392x4xf32>
    %4 = arith.negf %3 : vector<392x4xf32>
    %5 = math.exp %4 : vector<392x4xf32>
    %cst_3 = arith.constant 1.000000e+00 : f32
    %6 = vector.broadcast %cst_3 : f32 to vector<392x4xf32>
    %7 = arith.addf %6, %5 : vector<392x4xf32>
    %8 = arith.divf %6, %7 : vector<392x4xf32>
    %c0_4 = arith.constant 0 : index
    %c0_5 = arith.constant 0 : index
    %9 = vector.load %arg3[%c0_4, %c0_5] : memref<392x4xf32, #tpu.memory_space<vmem>>, vector<392x4xf32>
    tpu.vector_store %arg3[%c0_4, %c0_5], %8 {strides = array<i32>} : memref<392x4xf32, #tpu.memory_space<vmem>>, vector<392x4xf32>,
    return
  }
  func.func @transform_0(%arg0: i32) -> (i32, i32) {
    %c0_i32 = arith.constant 0 : i32
    %c0_i32_0 = arith.constant 0 : i32
    return %arg0, %c0_i32 : i32, i32
  }
  func.func @transform_1(%arg0: i32) -> (i32, i32) {
    %c0_i32 = arith.constant 0 : i32
    %c0_i32_0 = arith.constant 0 : i32
    %c0_i32_1 = arith.constant 0 : i32
    return %c0_i32, %c0_i32_0 : i32, i32
  }
  func.func @transform_2(%arg0: i32) -> (i32, i32) {
    %c0_i32 = arith.constant 0 : i32
    %c0_i32_0 = arith.constant 0 : i32
    return %arg0, %c0_i32 : i32, i32
  }
}

</mosaic_0001>

<llo_original>
// kernel: p_net_forward.6
$region0: #{p_net_forward.6}
  #allocation0 [shape = 'u32[]', space=smem, size = 0x4, offset = 0x4, fixed_abs, tag = 'smem constant byte address 0x4 - core index']
  #allocation1 [shape = 'u32[72,128]{1,0:T(1,128)}', space=vmem, size = 0x9000, scoped, tag = 'internal scratch']
  %s0 = inlined_call_operand.vmem [shape: bf16[98,128], index: 0, kind: input, shape index: {}]
  %s1 = inlined_call_operand.vmem [shape: f32[1,128], index: 1, kind: input, shape index: {}]
  %s2 = inlined_call_operand.vmem [shape: f32[1,128], index: 2, kind: input, shape index: {}]
  %s3 = inlined_call_operand.vmem [shape: bf16[98,128], index: 3, kind: output, shape index: {}]
  %s4 = sld [smem:[#allocation0]]
  $region22: #{p_net_forward.6} parent=0
    _
  %s6 = ssub.s32 1, %s4
  %s7 = scalar_select 0, %s6, %s4
  // Predicated region
  $region2: #{p_net_forward.6} parent=0 // pred_check
    _
  $region3: #{p_net_forward.6} parent=0 // pred_check_branch
    %9 = sbr.rel (0) target = $region5
  $region4: #{p_net_forward.6} parent=0 // pred_region
    _
  $region5: #{p_net_forward.6} parent=0 // pred_fallthru
    _
  // Predicated region
  $region6: #{p_net_forward.6} parent=0 // pred_check
    _
  $region7: #{p_net_forward.6} parent=0 // pred_check_branch
    %11 = sbr.rel (0) target = $region9
  $region8: #{p_net_forward.6} parent=0 // pred_region
    _
  $region9: #{p_net_forward.6} parent=0 // pred_fallthru
    _
  // Predicated region
  $region10: #{p_net_forward.6} parent=0 // pred_check
    _
  $region11: #{p_net_forward.6} parent=0 // pred_check_branch
    %13 = sbr.rel (0) target = $region13
  $region12: #{p_net_forward.6} parent=0 // pred_region
    _
  $region13: #{p_net_forward.6} parent=0 // pred_fallthru
    _
  %v14 = vld [vmem:[%s0] sm:$0xf]
  %v15 = vld [vmem:[%s0 + $0x4] sm:$0xf]
  %v16 = vld [vmem:[%s0 + $0x8] sm:$0xf]
  %v17 = vld [vmem:[%s0 + $0xc] sm:$0xf]
  %v18 = vld [vmem:[%s0 + $0x10] sm:$0xf]
  %v19 = vld [vmem:[%s0 + $0x14] sm:$0xf]
  %v20 = vld [vmem:[%s0 + $0x18] sm:$0xf]
  %v21 = vld [vmem:[%s0 + $0x1c] sm:$0xf]
  %v22 = vld [vmem:[%s0 + $0x20] sm:$0xf]
  %v23 = vld [vmem:[%s0 + $0x24] sm:$0xf]
  %v24 = vld [vmem:[%s0 + $0x28] sm:$0xf]
  %v25 = vld [vmem:[%s0 + $0x2c] sm:$0xf]
  %v26 = vld [vmem:[%s0 + $0x30] sm:$0x1]
  %v27 = vunpack.c.l.bf16 %v14
  %v28 = vunpack.c.l.bf16 %v15
  %v29 = vunpack.c.l.bf16 %v16
  %v30 = vunpack.c.l.bf16 %v17
  %v31 = vunpack.c.l.bf16 %v18
  %v32 = vunpack.c.l.bf16 %v19
  %v33 = vunpack.c.l.bf16 %v20
  %v34 = vunpack.c.l.bf16 %v21
  %v35 = vunpack.c.l.bf16 %v22
  %v36 = vunpack.c.l.bf16 %v23
  %v37 = vunpack.c.l.bf16 %v24
  %v38 = vunpack.c.l.bf16 %v25
  %v39 = vunpack.c.l.bf16 %v26
  %v40 = vld [vmem:[%s1] sm:$0x1]
  %v42 = vperm.slane %v40, 0
  %v44 = vmul.f32 %v27, %v42
  %v45 = vmul.f32 %v28, %v42
  %v46 = vmul.f32 %v29, %v42
  %v47 = vmul.f32 %v30, %v42
  %v48 = vmul.f32 %v31, %v42
  %v49 = vmul.f32 %v32, %v42
  %v50 = vmul.f32 %v33, %v42
  %v51 = vmul.f32 %v34, %v42
  %v52 = vmul.f32 %v35, %v42
  %v53 = vmul.f32 %v36, %v42
  %v54 = vmul.f32 %v37, %v42
  %v55 = vmul.f32 %v38, %v42
  %v56 = vmul.f32 %v39, %v42
  %v57 = vld [vmem:[%s2] sm:$0x1]
  %v59 = vperm.slane %v57, 0
  %v61 = vadd.f32 %v44, %v59
  %v62 = vadd.f32 %v45, %v59
  %v63 = vadd.f32 %v46, %v59
  %v64 = vadd.f32 %v47, %v59
  %v65 = vadd.f32 %v48, %v59
  %v66 = vadd.f32 %v49, %v59
  %v67 = vadd.f32 %v50, %v59
  %v68 = vadd.f32 %v51, %v59
  %v69 = vadd.f32 %v52, %v59
  %v70 = vadd.f32 %v53, %v59
  %v71 = vadd.f32 %v54, %v59
  %v72 = vadd.f32 %v55, %v59
  %v73 = vadd.f32 %v56, %v59
  %v74 = vmax.f32 %v61, 0.0
  %v75 = vmax.f32 %v62, 0.0
  %v76 = vmax.f32 %v63, 0.0
  %v77 = vmax.f32 %v64, 0.0
  %v78 = vmax.f32 %v65, 0.0
  %v79 = vmax.f32 %v66, 0.0
  %v80 = vmax.f32 %v67, 0.0
  %v81 = vmax.f32 %v68, 0.0
  %v82 = vmax.f32 %v69, 0.0
  %v83 = vmax.f32 %v70, 0.0
  %v84 = vmax.f32 %v71, 0.0
  %v85 = vmax.f32 %v72, 0.0
  %v86 = vmax.f32 %v73, 0.0
  %v87 = vpack.c.bf16 %v74, %v74
  %v88 = vpack.c.bf16 %v75, %v75
  %v89 = vpack.c.bf16 %v76, %v76
  %v90 = vpack.c.bf16 %v77, %v77
  %v91 = vpack.c.bf16 %v78, %v78
  %v92 = vpack.c.bf16 %v79, %v79
  %v93 = vpack.c.bf16 %v80, %v80
  %v94 = vpack.c.bf16 %v81, %v81
  %v95 = vpack.c.bf16 %v82, %v82
  %v96 = vpack.c.bf16 %v83, %v83
  %v97 = vpack.c.bf16 %v84, %v84
  %v98 = vpack.c.bf16 %v85, %v85
  %v99 = vpack.c.bf16 %v86, %v86
  %100 = vst [vmem:[%s3] sm:$0xf] %v87
  %101 = vst [vmem:[%s3 + $0x4] sm:$0xf] %v88
  %102 = vst [vmem:[%s3 + $0x8] sm:$0xf] %v89
  %103 = vst [vmem:[%s3 + $0xc] sm:$0xf] %v90
  %104 = vst [vmem:[%s3 + $0x10] sm:$0xf] %v91
  %105 = vst [vmem:[%s3 + $0x14] sm:$0xf] %v92
  %106 = vst [vmem:[%s3 + $0x18] sm:$0xf] %v93
  %107 = vst [vmem:[%s3 + $0x1c] sm:$0xf] %v94
  %108 = vst [vmem:[%s3 + $0x20] sm:$0xf] %v95
  %109 = vst [vmem:[%s3 + $0x24] sm:$0xf] %v96
  %110 = vst [vmem:[%s3 + $0x28] sm:$0xf] %v97
  %111 = vst [vmem:[%s3 + $0x2c] sm:$0xf] %v98
  %112 = vst [vmem:[%s3 + $0x30] sm:$0x1] %v99
  // Predicated region
  $region14: #{p_net_forward.6} parent=0 // pred_check
    _
  $region15: #{p_net_forward.6} parent=0 // pred_check_branch
    %114 = sbr.rel (0) target = $region17
  $region16: #{p_net_forward.6} parent=0 // pred_region
    _
  $region17: #{p_net_forward.6} parent=0 // pred_fallthru
    _
  // Predicated region
  $region18: #{p_net_forward.6} parent=0 // pred_check
    _
  $region19: #{p_net_forward.6} parent=0 // pred_check_branch
    %116 = sbr.rel (0) target = $region21
  $region20: #{p_net_forward.6} parent=0 // pred_region
    _
  $region21: #{p_net_forward.6} parent=0 // pred_fallthru
    _

// kernel: tile.18
$region0: #{tile.18}
  #allocation0 [shape = 's32[1]{0}', space=sflag, size = 0x4, scoped, tag = 'scoped memory for tile.18']
  %s0 = inlined_call_operand.vmem [shape: f32[64], index: 0, kind: input, shape index: {}]
  %s1 = inlined_call_operand.vmem [shape: f32[4,64], index: 1, kind: output, shape index: {}]
  // Predicated region
  $region2: #{tile.18} parent=0 // pred_check
    _
  $region3: #{tile.18} parent=0 // pred_check_branch
    %3 = sbr.rel (0) target = $region5
  $region4: #{tile.18} parent=0 // pred_region
    _
  $region5: #{tile.18} parent=0 // pred_fallthru
    _
  %v4 = vld [vmem:[%s0] ss:$0 sm:$0xff]
  %5 = vst [vmem:[%s1] sm:$0xf] %v4

// kernel: tile.19
$region0: #{tile.19}
  %s0 = inlined_call_operand.vmem [shape: f32[4,64], index: 0, kind: input, shape index: {}]
  %s1 = inlined_call_operand.vmem [shape: f32[1,256], index: 1, kind: output, shape index: {}]
  $region1: #{tile.19} parent=0
    #allocation0 [shape = 'u8[8192]{0}', space=vmem, size = 0x2000, scoped, tag = 'scoped mem for output reshape']
    #allocation1 [shape = 'u8[4096]{0}', space=vmem, size = 0x1000, scoped, tag = 'scoped mem for input reshape']
    %s3 = ssub.s32 16, 1
    %v4 = vld [vmem:[%s0] sm:%s3]
    %5 = vst [vmem:[#allocation1] sm:%s3] %v4
    %s6 = smov 3
    %v7 = vld [vmem:[#allocation1] ss:$2 sm:%s6]
    %vm8 = vcmask 523264
    %9 = vst.msk [vmem:[#allocation0] ss:$8 sm:$0x3] %vm8, %v7
    %s10 = scalar_lea.vmem [#allocation1], 1
    %s11 = smov 3
    %v12 = vld [vmem:[%s10] ss:$2 sm:%s11]
    %13 = vrot.lane.b32.xlu0 %v12, 64
    %v14 = vpop.permute.xlu0 %13
    %vm15 = vcmask 1048064
    %16 = vst.msk [vmem:[#allocation0] ss:$8 sm:$0x3] %vm15, %v14
    %s18 = ssub.s32 2, 1
    %v19 = vld [vmem:[#allocation0] sm:%s18]
    %s21 = ssub.s32 2, 1
    %22 = vst [vmem:[%s1] sm:%s21] %v19
    %s23 = scalar_lea.vmem [#allocation0], 8
    %v24 = vld [vmem:[%s23] sm:%s18]
    %s26 = ssub.s32 2, 1
    %s27 = scalar_lea.vmem %s1, 1
    %28 = vst [vmem:[%s27] sm:%s26] %v24

// kernel: p_net_forward.8
$region0: #{p_net_forward.8}
  #allocation0 [shape = 'u32[]', space=smem, size = 0x4, offset = 0x4, fixed_abs, tag = 'smem constant byte address 0x4 - core index']
  #allocation1 [shape = 'u32[72,128]{1,0:T(1,128)}', space=vmem, size = 0x9000, scoped, tag = 'internal scratch']
  %s0 = inlined_call_operand.vmem [shape: bf16[98,256], index: 0, kind: input, shape index: {}]
  %s1 = inlined_call_operand.vmem [shape: f32[1,256], index: 1, kind: input, shape index: {}]
  %s2 = inlined_call_operand.vmem [shape: f32[1,256], index: 2, kind: input, shape index: {}]
  %s3 = inlined_call_operand.vmem [shape: bf16[98,256], index: 3, kind: output, shape index: {}]
  %s4 = sld [smem:[#allocation0]]
  $region22: #{p_net_forward.8} parent=0
    _
  %s6 = ssub.s32 1, %s4
  %s7 = scalar_select 0, %s6, %s4
  // Predicated region
  $region2: #{p_net_forward.8} parent=0 // pred_check
    _
  $region3: #{p_net_forward.8} parent=0 // pred_check_branch
    %9 = sbr.rel (0) target = $region5
  $region4: #{p_net_forward.8} parent=0 // pred_region
    _
  $region5: #{p_net_forward.8} parent=0 // pred_fallthru
    _
  // Predicated region
  $region6: #{p_net_forward.8} parent=0 // pred_check
    _
  $region7: #{p_net_forward.8} parent=0 // pred_check_branch
    %11 = sbr.rel (0) target = $region9
  $region8: #{p_net_forward.8} parent=0 // pred_region
    _
  $region9: #{p_net_forward.8} parent=0 // pred_fallthru
    _
  // Predicated region
  $region10: #{p_net_forward.8} parent=0 // pred_check
    _
  $region11: #{p_net_forward.8} parent=0 // pred_check_branch
    %13 = sbr.rel (0) target = $region13
  $region12: #{p_net_forward.8} parent=0 // pred_region
    _
  $region13: #{p_net_forward.8} parent=0 // pred_fallthru
    _
  %v14 = vld [vmem:[%s0] sm:$0xff]
  %v15 = vld [vmem:[%s0 + $0x8] sm:$0xff]
  %v16 = vld [vmem:[%s0 + $0x10] sm:$0xff]
  %v17 = vld [vmem:[%s0 + $0x18] sm:$0xff]
  %v18 = vld [vmem:[%s0 + $0x20] sm:$0xff]
  %v19 = vld [vmem:[%s0 + $0x28] sm:$0xff]
  %v20 = vld [vmem:[%s0 + $0x30] sm:$0xff]
  %v21 = vld [vmem:[%s0 + $0x38] sm:$0xff]
  %v22 = vld [vmem:[%s0 + $0x40] sm:$0xff]
  %v23 = vld [vmem:[%s0 + $0x48] sm:$0xff]
  %v24 = vld [vmem:[%s0 + $0x50] sm:$0xff]
  %v25 = vld [vmem:[%s0 + $0x58] sm:$0xff]
  %v26 = vld [vmem:[%s0 + $0x60] sm:$0x11]
  %v27 = vunpack.c.l.bf16 %v14
  %v28 = vunpack.c.h.bf16 %v14
  %v29 = vunpack.c.l.bf16 %v15
  %v30 = vunpack.c.h.bf16 %v15
  %v31 = vunpack.c.l.bf16 %v16
  %v32 = vunpack.c.h.bf16 %v16
  %v33 = vunpack.c.l.bf16 %v17
  %v34 = vunpack.c.h.bf16 %v17
  %v35 = vunpack.c.l.bf16 %v18
  %v36 = vunpack.c.h.bf16 %v18
  %v37 = vunpack.c.l.bf16 %v19
  %v38 = vunpack.c.h.bf16 %v19
  %v39 = vunpack.c.l.bf16 %v20
  %v40 = vunpack.c.h.bf16 %v20
  %v41 = vunpack.c.l.bf16 %v21
  %v42 = vunpack.c.h.bf16 %v21
  %v43 = vunpack.c.l.bf16 %v22
  %v44 = vunpack.c.h.bf16 %v22
  %v45 = vunpack.c.l.bf16 %v23
  %v46 = vunpack.c.h.bf16 %v23
  %v47 = vunpack.c.l.bf16 %v24
  %v48 = vunpack.c.h.bf16 %v24
  %v49 = vunpack.c.l.bf16 %v25
  %v50 = vunpack.c.h.bf16 %v25
  %v51 = vunpack.c.l.bf16 %v26
  %v52 = vunpack.c.h.bf16 %v26
  %v53 = vld [vmem:[%s1] sm:$0x3]
  %v55 = vperm.slane %v53, 0
  %v56 = vperm.slane %v53, 1
  %v59 = vmul.f32 %v27, %v55
  %v60 = vmul.f32 %v28, %v56
  %v61 = vmul.f32 %v29, %v55
  %v62 = vmul.f32 %v30, %v56
  %v63 = vmul.f32 %v31, %v55
  %v64 = vmul.f32 %v32, %v56
  %v65 = vmul.f32 %v33, %v55
  %v66 = vmul.f32 %v34, %v56
  %v67 = vmul.f32 %v35, %v55
  %v68 = vmul.f32 %v36, %v56
  %v69 = vmul.f32 %v37, %v55
  %v70 = vmul.f32 %v38, %v56
  %v71 = vmul.f32 %v39, %v55
  %v72 = vmul.f32 %v40, %v56
  %v73 = vmul.f32 %v41, %v55
  %v74 = vmul.f32 %v42, %v56
  %v75 = vmul.f32 %v43, %v55
  %v76 = vmul.f32 %v44, %v56
  %v77 = vmul.f32 %v45, %v55
  %v78 = vmul.f32 %v46, %v56
  %v79 = vmul.f32 %v47, %v55
  %v80 = vmul.f32 %v48, %v56
  %v81 = vmul.f32 %v49, %v55
  %v82 = vmul.f32 %v50, %v56
  %v83 = vmul.f32 %v51, %v55
  %v84 = vmul.f32 %v52, %v56
  %v85 = vld [vmem:[%s2] sm:$0x3]
  %v87 = vperm.slane %v85, 0
  %v88 = vperm.slane %v85, 1
  %v91 = vadd.f32 %v59, %v87
  %v92 = vadd.f32 %v60, %v88
  %v93 = vadd.f32 %v61, %v87
  %v94 = vadd.f32 %v62, %v88
  %v95 = vadd.f32 %v63, %v87
  %v96 = vadd.f32 %v64, %v88
  %v97 = vadd.f32 %v65, %v87
  %v98 = vadd.f32 %v66, %v88
  %v99 = vadd.f32 %v67, %v87
  %v100 = vadd.f32 %v68, %v88
  %v101 = vadd.f32 %v69, %v87
  %v102 = vadd.f32 %v70, %v88
  %v103 = vadd.f32 %v71, %v87
  %v104 = vadd.f32 %v72, %v88
  %v105 = vadd.f32 %v73, %v87
  %v106 = vadd.f32 %v74, %v88
  %v107 = vadd.f32 %v75, %v87
  %v108 = vadd.f32 %v76, %v88
  %v109 = vadd.f32 %v77, %v87
  %v110 = vadd.f32 %v78, %v88
  %v111 = vadd.f32 %v79, %v87
  %v112 = vadd.f32 %v80, %v88
  %v113 = vadd.f32 %v81, %v87
  %v114 = vadd.f32 %v82, %v88
  %v115 = vadd.f32 %v83, %v87
  %v116 = vadd.f32 %v84, %v88
  %v117 = vmax.f32 %v91, 0.0
  %v118 = vmax.f32 %v92, 0.0
  %v119 = vmax.f32 %v93, 0.0
  %v120 = vmax.f32 %v94, 0.0
  %v121 = vmax.f32 %v95, 0.0
  %v122 = vmax.f32 %v96, 0.0
  %v123 = vmax.f32 %v97, 0.0
  %v124 = vmax.f32 %v98, 0.0
  %v125 = vmax.f32 %v99, 0.0
  %v126 = vmax.f32 %v100, 0.0
  %v127 = vmax.f32 %v101, 0.0
  %v128 = vmax.f32 %v102, 0.0
  %v129 = vmax.f32 %v103, 0.0
  %v130 = vmax.f32 %v104, 0.0
  %v131 = vmax.f32 %v105, 0.0
  %v132 = vmax.f32 %v106, 0.0
  %v133 = vmax.f32 %v107, 0.0
  %v134 = vmax.f32 %v108, 0.0
  %v135 = vmax.f32 %v109, 0.0
  %v136 = vmax.f32 %v110, 0.0
  %v137 = vmax.f32 %v111, 0.0
  %v138 = vmax.f32 %v112, 0.0
  %v139 = vmax.f32 %v113, 0.0
  %v140 = vmax.f32 %v114, 0.0
  %v141 = vmax.f32 %v115, 0.0
  %v142 = vmax.f32 %v116, 0.0
  %v143 = vpack.c.bf16 %v118, %v117
  %v144 = vpack.c.bf16 %v120, %v119
  %v145 = vpack.c.bf16 %v122, %v121
  %v146 = vpack.c.bf16 %v124, %v123
  %v147 = vpack.c.bf16 %v126, %v125
  %v148 = vpack.c.bf16 %v128, %v127
  %v149 = vpack.c.bf16 %v130, %v129
  %v150 = vpack.c.bf16 %v132, %v131
  %v151 = vpack.c.bf16 %v134, %v133
  %v152 = vpack.c.bf16 %v136, %v135
  %v153 = vpack.c.bf16 %v138, %v137
  %v154 = vpack.c.bf16 %v140, %v139
  %v155 = vpack.c.bf16 %v142, %v141
  %156 = vst [vmem:[%s3] sm:$0xff] %v143
  %157 = vst [vmem:[%s3 + $0x8] sm:$0xff] %v144
  %158 = vst [vmem:[%s3 + $0x10] sm:$0xff] %v145
  %159 = vst [vmem:[%s3 + $0x18] sm:$0xff] %v146
  %160 = vst [vmem:[%s3 + $0x20] sm:$0xff] %v147
  %161 = vst [vmem:[%s3 + $0x28] sm:$0xff] %v148
  %162 = vst [vmem:[%s3 + $0x30] sm:$0xff] %v149
  %163 = vst [vmem:[%s3 + $0x38] sm:$0xff] %v150
  %164 = vst [vmem:[%s3 + $0x40] sm:$0xff] %v151
  %165 = vst [vmem:[%s3 + $0x48] sm:$0xff] %v152
  %166 = vst [vmem:[%s3 + $0x50] sm:$0xff] %v153
  %167 = vst [vmem:[%s3 + $0x58] sm:$0xff] %v154
  %168 = vst [vmem:[%s3 + $0x60] sm:$0x11] %v155
  // Predicated region
  $region14: #{p_net_forward.8} parent=0 // pred_check
    _
  $region15: #{p_net_forward.8} parent=0 // pred_check_branch
    %170 = sbr.rel (0) target = $region17
  $region16: #{p_net_forward.8} parent=0 // pred_region
    _
  $region17: #{p_net_forward.8} parent=0 // pred_fallthru
    _
  // Predicated region
  $region18: #{p_net_forward.8} parent=0 // pred_check
    _
  $region19: #{p_net_forward.8} parent=0 // pred_check_branch
    %172 = sbr.rel (0) target = $region21
  $region20: #{p_net_forward.8} parent=0 // pred_region
    _
  $region21: #{p_net_forward.8} parent=0 // pred_fallthru
    _

// kernel: p_net_forward.7
$region0: #{p_net_forward.7}
  #allocation0 [shape = 'u32[]', space=smem, size = 0x4, offset = 0x4, fixed_abs, tag = 'smem constant byte address 0x4 - core index']
  #allocation1 [shape = 'u32[72,128]{1,0:T(1,128)}', space=vmem, size = 0x9000, scoped, tag = 'internal scratch']
  %s0 = inlined_call_operand.vmem [shape: bf16[98,1152], index: 0, kind: input, shape index: {}]
  %s1 = inlined_call_operand.hbm [shape: bf16[1152,256], index: 1, kind: input, shape index: {}]
  %s2 = inlined_call_operand.vmem [shape: bf16[98,256], index: 2, kind: output, shape index: {0}]
  %s3 = inlined_call_operand.vmem [shape: f32[1,1,256], index: 3, kind: output, shape index: {1}]
  %s4 = inlined_call_operand.vmem [shape: f32[1,1,256], index: 4, kind: output, shape index: {2}]
  %5 = xla_tuple %s2, %s3, %s4
  %s6 = sld [smem:[#allocation0]]
  $region38: #{p_net_forward.7} parent=0
    _
  %s8 = ssub.s32 1, %s6
  %s9 = scalar_select 0, %s8, %s6
  $region1: #{p_net_forward.7} parent=0
    #allocation2 [shape = 'u8[589824]{0}', space=vmem, size = 0x90000, scoped, tag = 'input window, operand 1, single buffered']
    #allocation3 [shape = 's32[1]{0}', space=sflag, size = 0x4, scoped, tag = 'scoped memory for p_net_forward.7']
    %10 = vsyncpa [#allocation3], 0
    // Predicated region
    $region2: #{p_net_forward.7} parent=1 // pred_check
      _
    $region3: #{p_net_forward.7} parent=1 // pred_check_branch
      %12 = sbr.rel (0) target = $region5
    $region4: #{p_net_forward.7} parent=1 // pred_region
      _
    $region5: #{p_net_forward.7} parent=1 // pred_fallthru
      _
    // Predicated region
    $region6: #{p_net_forward.7} parent=1 // pred_check
      _
    $region7: #{p_net_forward.7} parent=1 // pred_check_branch
      %14 = sbr.rel (0) target = $region9
    $region8: #{p_net_forward.7} parent=1 // pred_region
      %16 = vsyncadd [#allocation3], 0
      %s17 = sshll.u32 %s1, 4
      %s18 = int_to_ptr.hbm [resolvable:$true] %s17
      %s19 = sshll.u32 [#allocation2], 4
      %s20 = int_to_ptr.vmem [resolvable:$true] %s19
      %25 = dma.hbm_to_vmem [thread:$0]  %s18, 18432, %s20, [#allocation3], 128, 128, 8
    $region9: #{p_net_forward.7} parent=1 // pred_fallthru
      _
    // Predicated region
    $region10: #{p_net_forward.7} parent=1 // pred_check
      _
    $region11: #{p_net_forward.7} parent=1 // pred_check_branch
      %27 = sbr.rel (0) target = $region13
    $region12: #{p_net_forward.7} parent=1 // pred_region
      %29 = dma.done [#allocation3], 18432
    $region13: #{p_net_forward.7} parent=1 // pred_fallthru
      _
    %v30 = vld [vmem:[%s0] sm:$0xff]
    %v31 = vld [vmem:[%s0 + $0x8] sm:$0xff]
    %v32 = vld [vmem:[%s0 + $0x10] sm:$0xff]
    %v33 = vld [vmem:[%s0 + $0x18] sm:$0xff]
    %v34 = vld [vmem:[%s0 + $0x20] sm:$0xf]
    %v35 = vld [vmem:[%s0 + $0x24] sm:$0xff]
    %v36 = vld [vmem:[%s0 + $0x2c] sm:$0xff]
    %v37 = vld [vmem:[%s0 + $0x34] sm:$0xff]
    %v38 = vld [vmem:[%s0 + $0x3c] sm:$0xff]
    %v39 = vld [vmem:[%s0 + $0x44] sm:$0xf]
    %v40 = vld [vmem:[%s0 + $0x48] sm:$0xff]
    %v41 = vld [vmem:[%s0 + $0x50] sm:$0xff]
    %v42 = vld [vmem:[%s0 + $0x58] sm:$0xff]
    %v43 = vld [vmem:[%s0 + $0x60] sm:$0xff]
    %v44 = vld [vmem:[%s0 + $0x68] sm:$0xf]
    %v45 = vld [vmem:[%s0 + $0x6c] sm:$0xff]
    %v46 = vld [vmem:[%s0 + $0x74] sm:$0xff]
    %v47 = vld [vmem:[%s0 + $0x7c] sm:$0xff]
    %v48 = vld [vmem:[%s0 + $0x84] sm:$0xff]
    %v49 = vld [vmem:[%s0 + $0x8c] sm:$0xf]
    %v50 = vld [vmem:[%s0 + $0x90] sm:$0xff]
    %v51 = vld [vmem:[%s0 + $0x98] sm:$0xff]
    %v52 = vld [vmem:[%s0 + $0xa0] sm:$0xff]
    %v53 = vld [vmem:[%s0 + $0xa8] sm:$0xff]
    %v54 = vld [vmem:[%s0 + $0xb0] sm:$0xf]
    %v55 = vld [vmem:[%s0 + $0xb4] sm:$0xff]
    %v56 = vld [vmem:[%s0 + $0xbc] sm:$0xff]
    %v57 = vld [vmem:[%s0 + $0xc4] sm:$0xff]
    %v58 = vld [vmem:[%s0 + $0xcc] sm:$0xff]
    %v59 = vld [vmem:[%s0 + $0xd4] sm:$0xf]
    %v60 = vld [vmem:[%s0 + $0xd8] sm:$0xff]
    %v61 = vld [vmem:[%s0 + $0xe0] sm:$0xff]
    %v62 = vld [vmem:[%s0 + $0xe8] sm:$0xff]
    %v63 = vld [vmem:[%s0 + $0xf0] sm:$0xff]
    %v64 = vld [vmem:[%s0 + $0xf8] sm:$0xf]
    %v65 = vld [vmem:[%s0 + $0xfc] sm:$0xff]
    %v66 = vld [vmem:[%s0 + $0x104] sm:$0xff]
    %v67 = vld [vmem:[%s0 + $0x10c] sm:$0xff]
    %v68 = vld [vmem:[%s0 + $0x114] sm:$0xff]
    %v69 = vld [vmem:[%s0 + $0x11c] sm:$0xf]
    %v70 = vld [vmem:[%s0 + $0x120] sm:$0xff]
    %v71 = vld [vmem:[%s0 + $0x128] sm:$0xff]
    %v72 = vld [vmem:[%s0 + $0x130] sm:$0xff]
    %v73 = vld [vmem:[%s0 + $0x138] sm:$0xff]
    %v74 = vld [vmem:[%s0 + $0x140] sm:$0xf]
    %v75 = vld [vmem:[%s0 + $0x144] sm:$0xff]
    %v76 = vld [vmem:[%s0 + $0x14c] sm:$0xff]
    %v77 = vld [vmem:[%s0 + $0x154] sm:$0xff]
    %v78 = vld [vmem:[%s0 + $0x15c] sm:$0xff]
    %v79 = vld [vmem:[%s0 + $0x164] sm:$0xf]
    %v80 = vld [vmem:[%s0 + $0x168] sm:$0xff]
    %v81 = vld [vmem:[%s0 + $0x170] sm:$0xff]
    %v82 = vld [vmem:[%s0 + $0x178] sm:$0xff]
    %v83 = vld [vmem:[%s0 + $0x180] sm:$0xff]
    %v84 = vld [vmem:[%s0 + $0x188] sm:$0xf]
    %v85 = vld [vmem:[%s0 + $0x18c] sm:$0xff]
    %v86 = vld [vmem:[%s0 + $0x194] sm:$0xff]
    %v87 = vld [vmem:[%s0 + $0x19c] sm:$0xff]
    %v88 = vld [vmem:[%s0 + $0x1a4] sm:$0xff]
    %v89 = vld [vmem:[%s0 + $0x1ac] sm:$0xf]
    %v90 = vld [vmem:[%s0 + $0x1b0] sm:$0x11]
    %v91 = vld [vmem:[%s0 + $0x1b8] sm:$0x11]
    %v92 = vld [vmem:[%s0 + $0x1c0] sm:$0x11]
    %v93 = vld [vmem:[%s0 + $0x1c8] sm:$0x11]
    %v94 = vld [vmem:[%s0 + $0x1d0] sm:$0x1]
    %v95 = vld [vmem:[#allocation2] sm:$0xff]
    %v96 = vld [vmem:[#allocation2 + $0x8] sm:$0xff]
    %v97 = vld [vmem:[#allocation2 + $0x10] sm:$0xff]
    %v98 = vld [vmem:[#allocation2 + $0x18] sm:$0xff]
    %v99 = vld [vmem:[#allocation2 + $0x20] sm:$0xff]
    %v100 = vld [vmem:[#allocation2 + $0x28] sm:$0xff]
    %v101 = vld [vmem:[#allocation2 + $0x30] sm:$0xff]
    %v102 = vld [vmem:[#allocation2 + $0x38] sm:$0xff]
    %v103 = vld [vmem:[#allocation2 + $0x40] sm:$0xff]
    %v104 = vld [vmem:[#allocation2 + $0x48] sm:$0xff]
    %v105 = vld [vmem:[#allocation2 + $0x50] sm:$0xff]
    %v106 = vld [vmem:[#allocation2 + $0x58] sm:$0xff]
    %v107 = vld [vmem:[#allocation2 + $0x60] sm:$0xff]
    %v108 = vld [vmem:[#allocation2 + $0x68] sm:$0xff]
    %v109 = vld [vmem:[#allocation2 + $0x70] sm:$0xff]
    %v110 = vld [vmem:[#allocation2 + $0x78] sm:$0xff]
    %v111 = vld [vmem:[#allocation2 + $0x80] sm:$0xff]
    %v112 = vld [vmem:[#allocation2 + $0x88] sm:$0xff]
    %v113 = vld [vmem:[#allocation2 + $0x90] sm:$0xff]
    %v114 = vld [vmem:[#allocation2 + $0x98] sm:$0xff]
    %v115 = vld [vmem:[#allocation2 + $0xa0] sm:$0xff]
    %v116 = vld [vmem:[#allocation2 + $0xa8] sm:$0xff]
    %v117 = vld [vmem:[#allocation2 + $0xb0] sm:$0xff]
    %v118 = vld [vmem:[#allocation2 + $0xb8] sm:$0xff]
    %v119 = vld [vmem:[#allocation2 + $0xc0] sm:$0xff]
    %v120 = vld [vmem:[#allocation2 + $0xc8] sm:$0xff]
    %v121 = vld [vmem:[#allocation2 + $0xd0] sm:$0xff]
    %v122 = vld [vmem:[#allocation2 + $0xd8] sm:$0xff]
    %v123 = vld [vmem:[#allocation2 + $0xe0] sm:$0xff]
    %v124 = vld [vmem:[#allocation2 + $0xe8] sm:$0xff]
    %v125 = vld [vmem:[#allocation2 + $0xf0] sm:$0xff]
    %v126 = vld [vmem:[#allocation2 + $0xf8] sm:$0xff]
    %v127 = vld [vmem:[#allocation2 + $0x100] sm:$0xff]
    %v128 = vld [vmem:[#allocation2 + $0x108] sm:$0xff]
    %v129 = vld [vmem:[#allocation2 + $0x110] sm:$0xff]
    %v130 = vld [vmem:[#allocation2 + $0x118] sm:$0xff]
    %v131 = vld [vmem:[#allocation2 + $0x120] sm:$0xff]
    %v132 = vld [vmem:[#allocation2 + $0x128] sm:$0xff]
    %v133 = vld [vmem:[#allocation2 + $0x130] sm:$0xff]
    %v134 = vld [vmem:[#allocation2 + $0x138] sm:$0xff]
    %v135 = vld [vmem:[#allocation2 + $0x140] sm:$0xff]
    %v136 = vld [vmem:[#allocation2 + $0x148] sm:$0xff]
    %v137 = vld [vmem:[#allocation2 + $0x150] sm:$0xff]
    %v138 = vld [vmem:[#allocation2 + $0x158] sm:$0xff]
    %v139 = vld [vmem:[#allocation2 + $0x160] sm:$0xff]
    %v140 = vld [vmem:[#allocation2 + $0x168] sm:$0xff]
    %v141 = vld [vmem:[#allocation2 + $0x170] sm:$0xff]
    %v142 = vld [vmem:[#allocation2 + $0x178] sm:$0xff]
    %v143 = vld [vmem:[#allocation2 + $0x180] sm:$0xff]
    %v144 = vld [vmem:[#allocation2 + $0x188] sm:$0xff]
    %v145 = vld [vmem:[#allocation2 + $0x190] sm:$0xff]
    %v146 = vld [vmem:[#allocation2 + $0x198] sm:$0xff]
    %v147 = vld [vmem:[#allocation2 + $0x1a0] sm:$0xff]
    %v148 = vld [vmem:[#allocation2 + $0x1a8] sm:$0xff]
    %v149 = vld [vmem:[#allocation2 + $0x1b0] sm:$0xff]
    %v150 = vld [vmem:[#allocation2 + $0x1b8] sm:$0xff]
    %v151 = vld [vmem:[#allocation2 + $0x1c0] sm:$0xff]
    %v152 = vld [vmem:[#allocation2 + $0x1c8] sm:$0xff]
    %v153 = vld [vmem:[#allocation2 + $0x1d0] sm:$0xff]
    %v154 = vld [vmem:[#allocation2 + $0x1d8] sm:$0xff]
    %v155 = vld [vmem:[#allocation2 + $0x1e0] sm:$0xff]
    %v156 = vld [vmem:[#allocation2 + $0x1e8] sm:$0xff]
    %v157 = vld [vmem:[#allocation2 + $0x1f0] sm:$0xff]
    %v158 = vld [vmem:[#allocation2 + $0x1f8] sm:$0xff]
    %v159 = vld [vmem:[#allocation2 + $0x200] sm:$0xff]
    %v160 = vld [vmem:[#allocation2 + $0x208] sm:$0xff]
    %v161 = vld [vmem:[#allocation2 + $0x210] sm:$0xff]
    %v162 = vld [vmem:[#allocation2 + $0x218] sm:$0xff]
    %v163 = vld [vmem:[#allocation2 + $0x220] sm:$0xff]
    %v164 = vld [vmem:[#allocation2 + $0x228] sm:$0xff]
    %v165 = vld [vmem:[#allocation2 + $0x230] sm:$0xff]
    %v166 = vld [vmem:[#allocation2 + $0x238] sm:$0xff]
    %v167 = vld [vmem:[#allocation2 + $0x240] sm:$0xff]
    %v168 = vld [vmem:[#allocation2 + $0x248] sm:$0xff]
    %v169 = vld [vmem:[#allocation2 + $0x250] sm:$0xff]
    %v170 = vld [vmem:[#allocation2 + $0x258] sm:$0xff]
    %v171 = vld [vmem:[#allocation2 + $0x260] sm:$0xff]
    %v172 = vld [vmem:[#allocation2 + $0x268] sm:$0xff]
    %v173 = vld [vmem:[#allocation2 + $0x270] sm:$0xff]
    %v174 = vld [vmem:[#allocation2 + $0x278] sm:$0xff]
    %v175 = vld [vmem:[#allocation2 + $0x280] sm:$0xff]
    %v176 = vld [vmem:[#allocation2 + $0x288] sm:$0xff]
    %v177 = vld [vmem:[#allocation2 + $0x290] sm:$0xff]
    %v178 = vld [vmem:[#allocation2 + $0x298] sm:$0xff]
    %v179 = vld [vmem:[#allocation2 + $0x2a0] sm:$0xff]
    %v180 = vld [vmem:[#allocation2 + $0x2a8] sm:$0xff]
    %v181 = vld [vmem:[#allocation2 + $0x2b0] sm:$0xff]
    %v182 = vld [vmem:[#allocation2 + $0x2b8] sm:$0xff]
    %v183 = vld [vmem:[#allocation2 + $0x2c0] sm:$0xff]
    %v184 = vld [vmem:[#allocation2 + $0x2c8] sm:$0xff]
    %v185 = vld [vmem:[#allocation2 + $0x2d0] sm:$0xff]
    %v186 = vld [vmem:[#allocation2 + $0x2d8] sm:$0xff]
    %v187 = vld [vmem:[#allocation2 + $0x2e0] sm:$0xff]
    %v188 = vld [vmem:[#allocation2 + $0x2e8] sm:$0xff]
    %v189 = vld [vmem:[#allocation2 + $0x2f0] sm:$0xff]
    %v190 = vld [vmem:[#allocation2 + $0x2f8] sm:$0xff]
    %v191 = vld [vmem:[#allocation2 + $0x300] sm:$0xff]
    %v192 = vld [vmem:[#allocation2 + $0x308] sm:$0xff]
    %v193 = vld [vmem:[#allocation2 + $0x310] sm:$0xff]
    %v194 = vld [vmem:[#allocation2 + $0x318] sm:$0xff]
    %v195 = vld [vmem:[#allocation2 + $0x320] sm:$0xff]
    %v196 = vld [vmem:[#allocation2 + $0x328] sm:$0xff]
    %v197 = vld [vmem:[#allocation2 + $0x330] sm:$0xff]
    %v198 = vld [vmem:[#allocation2 + $0x338] sm:$0xff]
    %v199 = vld [vmem:[#allocation2 + $0x340] sm:$0xff]
    %v200 = vld [vmem:[#allocation2 + $0x348] sm:$0xff]
    %v201 = vld [vmem:[#allocation2 + $0x350] sm:$0xff]
    %v202 = vld [vmem:[#allocation2 + $0x358] sm:$0xff]
    %v203 = vld [vmem:[#allocation2 + $0x360] sm:$0xff]
    %v204 = vld [vmem:[#allocation2 + $0x368] sm:$0xff]
    %v205 = vld [vmem:[#allocation2 + $0x370] sm:$0xff]
    %v206 = vld [vmem:[#allocation2 + $0x378] sm:$0xff]
    %v207 = vld [vmem:[#allocation2 + $0x380] sm:$0xff]
    %v208 = vld [vmem:[#allocation2 + $0x388] sm:$0xff]
    %v209 = vld [vmem:[#allocation2 + $0x390] sm:$0xff]
    %v210 = vld [vmem:[#allocation2 + $0x398] sm:$0xff]
    %v211 = vld [vmem:[#allocation2 + $0x3a0] sm:$0xff]
    %v212 = vld [vmem:[#allocation2 + $0x3a8] sm:$0xff]
    %v213 = vld [vmem:[#allocation2 + $0x3b0] sm:$0xff]
    %v214 = vld [vmem:[#allocation2 + $0x3b8] sm:$0xff]
    %v215 = vld [vmem:[#allocation2 + $0x3c0] sm:$0xff]
    %v216 = vld [vmem:[#allocation2 + $0x3c8] sm:$0xff]
    %v217 = vld [vmem:[#allocation2 + $0x3d0] sm:$0xff]
    %v218 = vld [vmem:[#allocation2 + $0x3d8] sm:$0xff]
    %v219 = vld [vmem:[#allocation2 + $0x3e0] sm:$0xff]
    %v220 = vld [vmem:[#allocation2 + $0x3e8] sm:$0xff]
    %v221 = vld [vmem:[#allocation2 + $0x3f0] sm:$0xff]
    %v222 = vld [vmem:[#allocation2 + $0x3f8] sm:$0xff]
    %v223 = vld [vmem:[#allocation2 + $0x400] sm:$0xff]
    %v224 = vld [vmem:[#allocation2 + $0x408] sm:$0xff]
    %v225 = vld [vmem:[#allocation2 + $0x410] sm:$0xff]
    %v226 = vld [vmem:[#allocation2 + $0x418] sm:$0xff]
    %v227 = vld [vmem:[#allocation2 + $0x420] sm:$0xff]
    %v228 = vld [vmem:[#allocation2 + $0x428] sm:$0xff]
    %v229 = vld [vmem:[#allocation2 + $0x430] sm:$0xff]
    %v230 = vld [vmem:[#allocation2 + $0x438] sm:$0xff]
    %v231 = vld [vmem:[#allocation2 + $0x440] sm:$0xff]
    %v232 = vld [vmem:[#allocation2 + $0x448] sm:$0xff]
    %v233 = vld [vmem:[#allocation2 + $0x450] sm:$0xff]
    %v234 = vld [vmem:[#allocation2 + $0x458] sm:$0xff]
    %v235 = vld [vmem:[#allocation2 + $0x460] sm:$0xff]
    %v236 = vld [vmem:[#allocation2 + $0x468] sm:$0xff]
    %v237 = vld [vmem:[#allocation2 + $0x470] sm:$0xff]
    %v238 = vld [vmem:[#allocation2 + $0x478] sm:$0xff]
    %v304 = vunpack.c.l.b16 %v30
    %v305 = vunpack.c.h.b16 %v30
    %v306 = vunpack.c.l.b16 %v31
    %v307 = vunpack.c.h.b16 %v31
    %v308 = vunpack.c.l.b16 %v32
    %v309 = vunpack.c.h.b16 %v32
    %v310 = vunpack.c.l.b16 %v33
    %v311 = vunpack.c.h.b16 %v33
    %v312 = vunpack.c.l.b16 %v34
    %v313 = vunpack.c.l.b16 %v35
    %v314 = vunpack.c.h.b16 %v35
    %v315 = vunpack.c.l.b16 %v36
    %v316 = vunpack.c.h.b16 %v36
    %v317 = vunpack.c.l.b16 %v37
    %v318 = vunpack.c.h.b16 %v37
    %v319 = vunpack.c.l.b16 %v38
    %v320 = vunpack.c.h.b16 %v38
    %v321 = vunpack.c.l.b16 %v39
    %v322 = vunpack.c.l.b16 %v40
    %v323 = vunpack.c.h.b16 %v40
    %v324 = vunpack.c.l.b16 %v41
    %v325 = vunpack.c.h.b16 %v41
    %v326 = vunpack.c.l.b16 %v42
    %v327 = vunpack.c.h.b16 %v42
    %v328 = vunpack.c.l.b16 %v43
    %v329 = vunpack.c.h.b16 %v43
    %v330 = vunpack.c.l.b16 %v44
    %v331 = vunpack.c.l.b16 %v45
    %v332 = vunpack.c.h.b16 %v45
    %v333 = vunpack.c.l.b16 %v46
    %v334 = vunpack.c.h.b16 %v46
    %v335 = vunpack.c.l.b16 %v47
    %v336 = vunpack.c.h.b16 %v47
    %v337 = vunpack.c.l.b16 %v48
    %v338 = vunpack.c.h.b16 %v48
    %v339 = vunpack.c.l.b16 %v49
    %v340 = vunpack.c.l.b16 %v50
    %v341 = vunpack.c.h.b16 %v50
    %v342 = vunpack.c.l.b16 %v51
    %v343 = vunpack.c.h.b16 %v51
    %v344 = vunpack.c.l.b16 %v52
    %v345 = vunpack.c.h.b16 %v52
    %v346 = vunpack.c.l.b16 %v53
    %v347 = vunpack.c.h.b16 %v53
    %v348 = vunpack.c.l.b16 %v54
    %v349 = vunpack.c.l.b16 %v55
    %v350 = vunpack.c.h.b16 %v55
    %v351 = vunpack.c.l.b16 %v56
    %v352 = vunpack.c.h.b16 %v56
    %v353 = vunpack.c.l.b16 %v57
    %v354 = vunpack.c.h.b16 %v57
    %v355 = vunpack.c.l.b16 %v58
    %v356 = vunpack.c.h.b16 %v58
    %v357 = vunpack.c.l.b16 %v59
    %v358 = vunpack.c.l.b16 %v60
    %v359 = vunpack.c.h.b16 %v60
    %v360 = vunpack.c.l.b16 %v61
    %v361 = vunpack.c.h.b16 %v61
    %v362 = vunpack.c.l.b16 %v62
    %v363 = vunpack.c.h.b16 %v62
    %v364 = vunpack.c.l.b16 %v63
    %v365 = vunpack.c.h.b16 %v63
    %v366 = vunpack.c.l.b16 %v64
    %v367 = vunpack.c.l.b16 %v65
    %v368 = vunpack.c.h.b16 %v65
    %v369 = vunpack.c.l.b16 %v66
    %v370 = vunpack.c.h.b16 %v66
    %v371 = vunpack.c.l.b16 %v67
    %v372 = vunpack.c.h.b16 %v67
    %v373 = vunpack.c.l.b16 %v68
    %v374 = vunpack.c.h.b16 %v68
    %v375 = vunpack.c.l.b16 %v69
    %v376 = vunpack.c.l.b16 %v70
    %v377 = vunpack.c.h.b16 %v70
    %v378 = vunpack.c.l.b16 %v71
    %v379 = vunpack.c.h.b16 %v71
    %v380 = vunpack.c.l.b16 %v72
    %v381 = vunpack.c.h.b16 %v72
    %v382 = vunpack.c.l.b16 %v73
    %v383 = vunpack.c.h.b16 %v73
    %v384 = vunpack.c.l.b16 %v74
    %v385 = vunpack.c.l.b16 %v75
    %v386 = vunpack.c.h.b16 %v75
    %v387 = vunpack.c.l.b16 %v76
    %v388 = vunpack.c.h.b16 %v76
    %v389 = vunpack.c.l.b16 %v77
    %v390 = vunpack.c.h.b16 %v77
    %v391 = vunpack.c.l.b16 %v78
    %v392 = vunpack.c.h.b16 %v78
    %v393 = vunpack.c.l.b16 %v79
    %v394 = vunpack.c.l.b16 %v80
    %v395 = vunpack.c.h.b16 %v80
    %v396 = vunpack.c.l.b16 %v81
    %v397 = vunpack.c.h.b16 %v81
    %v398 = vunpack.c.l.b16 %v82
    %v399 = vunpack.c.h.b16 %v82
    %v400 = vunpack.c.l.b16 %v83
    %v401 = vunpack.c.h.b16 %v83
    %v402 = vunpack.c.l.b16 %v84
    %v403 = vunpack.c.l.b16 %v85
    %v404 = vunpack.c.h.b16 %v85
    %v405 = vunpack.c.l.b16 %v86
    %v406 = vunpack.c.h.b16 %v86
    %v407 = vunpack.c.l.b16 %v87
    %v408 = vunpack.c.h.b16 %v87
    %v409 = vunpack.c.l.b16 %v88
    %v410 = vunpack.c.h.b16 %v88
    %v411 = vunpack.c.l.b16 %v89
    %v412 = vunpack.c.l.b16 %v90
    %v413 = vunpack.c.h.b16 %v90
    %v414 = vunpack.c.l.b16 %v91
    %v415 = vunpack.c.h.b16 %v91
    %v416 = vunpack.c.l.b16 %v92
    %v417 = vunpack.c.h.b16 %v92
    %v418 = vunpack.c.l.b16 %v93
    %v419 = vunpack.c.h.b16 %v93
    %v420 = vunpack.c.l.b16 %v94
    %v421 = vpack.c.b16 %v313, %v304
    %v422 = vpack.c.b16 %v314, %v305
    %v423 = vpack.c.b16 %v315, %v306
    %v424 = vpack.c.b16 %v316, %v307
    %v425 = vpack.c.b16 %v317, %v308
    %v426 = vpack.c.b16 %v318, %v309
    %v427 = vpack.c.b16 %v319, %v310
    %v428 = vpack.c.b16 %v320, %v311
    %v429 = vpack.c.b16 %v321, %v312
    %v430 = vpack.c.b16 %v331, %v322
    %v431 = vpack.c.b16 %v332, %v323
    %v432 = vpack.c.b16 %v333, %v324
    %v433 = vpack.c.b16 %v334, %v325
    %v434 = vpack.c.b16 %v335, %v326
    %v435 = vpack.c.b16 %v336, %v327
    %v436 = vpack.c.b16 %v337, %v328
    %v437 = vpack.c.b16 %v338, %v329
    %v438 = vpack.c.b16 %v339, %v330
    %v439 = vpack.c.b16 %v349, %v340
    %v440 = vpack.c.b16 %v350, %v341
    %v441 = vpack.c.b16 %v351, %v342
    %v442 = vpack.c.b16 %v352, %v343
    %v443 = vpack.c.b16 %v353, %v344
    %v444 = vpack.c.b16 %v354, %v345
    %v445 = vpack.c.b16 %v355, %v346
    %v446 = vpack.c.b16 %v356, %v347
    %v447 = vpack.c.b16 %v357, %v348
    %v448 = vpack.c.b16 %v367, %v358
    %v449 = vpack.c.b16 %v368, %v359
    %v450 = vpack.c.b16 %v369, %v360
    %v451 = vpack.c.b16 %v370, %v361
    %v452 = vpack.c.b16 %v371, %v362
    %v453 = vpack.c.b16 %v372, %v363
    %v454 = vpack.c.b16 %v373, %v364
    %v455 = vpack.c.b16 %v374, %v365
    %v456 = vpack.c.b16 %v375, %v366
    %v457 = vpack.c.b16 %v385, %v376
    %v458 = vpack.c.b16 %v386, %v377
    %v459 = vpack.c.b16 %v387, %v378
    %v460 = vpack.c.b16 %v388, %v379
    %v461 = vpack.c.b16 %v389, %v380
    %v462 = vpack.c.b16 %v390, %v381
    %v463 = vpack.c.b16 %v391, %v382
    %v464 = vpack.c.b16 %v392, %v383
    %v465 = vpack.c.b16 %v393, %v384
    %v466 = vpack.c.b16 %v403, %v394
    %v467 = vpack.c.b16 %v404, %v395
    %v468 = vpack.c.b16 %v405, %v396
    %v469 = vpack.c.b16 %v406, %v397
    %v470 = vpack.c.b16 %v407, %v398
    %v471 = vpack.c.b16 %v408, %v399
    %v472 = vpack.c.b16 %v409, %v400
    %v473 = vpack.c.b16 %v410, %v401
    %v474 = vpack.c.b16 %v411, %v402
    %v475 = vpack.c.b16 %v412, %v412
    %v476 = vpack.c.b16 %v413, %v413
    %v477 = vpack.c.b16 %v414, %v414
    %v478 = vpack.c.b16 %v415, %v415
    %v479 = vpack.c.b16 %v416, %v416
    %v480 = vpack.c.b16 %v417, %v417
    %v481 = vpack.c.b16 %v418, %v418
    %v482 = vpack.c.b16 %v419, %v419
    %v483 = vpack.c.b16 %v420, %v420
    %v691 = vunpack.c.l.b16 %v95
    %v692 = vunpack.c.h.b16 %v95
    %v693 = vunpack.c.l.b16 %v96
    %v694 = vunpack.c.h.b16 %v96
    %v695 = vunpack.c.l.b16 %v97
    %v696 = vunpack.c.h.b16 %v97
    %v697 = vunpack.c.l.b16 %v98
    %v698 = vunpack.c.h.b16 %v98
    %v699 = vunpack.c.l.b16 %v99
    %v700 = vunpack.c.h.b16 %v99
    %v701 = vunpack.c.l.b16 %v100
    %v702 = vunpack.c.h.b16 %v100
    %v703 = vunpack.c.l.b16 %v101
    %v704 = vunpack.c.h.b16 %v101
    %v705 = vunpack.c.l.b16 %v102
    %v706 = vunpack.c.h.b16 %v102
    %v707 = vunpack.c.l.b16 %v103
    %v708 = vunpack.c.h.b16 %v103
    %v709 = vunpack.c.l.b16 %v104
    %v710 = vunpack.c.h.b16 %v104
    %v711 = vunpack.c.l.b16 %v105
    %v712 = vunpack.c.h.b16 %v105
    %v713 = vunpack.c.l.b16 %v106
    %v714 = vunpack.c.h.b16 %v106
    %v715 = vunpack.c.l.b16 %v107
    %v716 = vunpack.c.h.b16 %v107
    %v717 = vunpack.c.l.b16 %v108
    %v718 = vunpack.c.h.b16 %v108
    %v719 = vunpack.c.l.b16 %v109
    %v720 = vunpack.c.h.b16 %v109
    %v721 = vunpack.c.l.b16 %v110
    %v722 = vunpack.c.h.b16 %v110
    %v723 = vunpack.c.l.b16 %v111
    %v724 = vunpack.c.h.b16 %v111
    %v725 = vunpack.c.l.b16 %v112
    %v726 = vunpack.c.h.b16 %v112
    %v727 = vunpack.c.l.b16 %v113
    %v728 = vunpack.c.h.b16 %v113
    %v729 = vunpack.c.l.b16 %v114
    %v730 = vunpack.c.h.b16 %v114
    %v731 = vunpack.c.l.b16 %v115
    %v732 = vunpack.c.h.b16 %v115
    %v733 = vunpack.c.l.b16 %v116
    %v734 = vunpack.c.h.b16 %v116
    %v735 = vunpack.c.l.b16 %v117
    %v736 = vunpack.c.h.b16 %v117
    %v737 = vunpack.c.l.b16 %v118
    %v738 = vunpack.c.h.b16 %v118
    %v739 = vunpack.c.l.b16 %v119
    %v740 = vunpack.c.h.b16 %v119
    %v741 = vunpack.c.l.b16 %v120
    %v742 = vunpack.c.h.b16 %v120
    %v743 = vunpack.c.l.b16 %v121
    %v744 = vunpack.c.h.b16 %v121
    %v745 = vunpack.c.l.b16 %v122
    %v746 = vunpack.c.h.b16 %v122
    %v747 = vunpack.c.l.b16 %v123
    %v748 = vunpack.c.h.b16 %v123
    %v749 = vunpack.c.l.b16 %v124
    %v750 = vunpack.c.h.b16 %v124
    %v751 = vunpack.c.l.b16 %v125
    %v752 = vunpack.c.h.b16 %v125
    %v753 = vunpack.c.l.b16 %v126
    %v754 = vunpack.c.h.b16 %v126
    %v755 = vunpack.c.l.b16 %v127
    %v756 = vunpack.c.h.b16 %v127
    %v757 = vunpack.c.l.b16 %v128
    %v758 = vunpack.c.h.b16 %v128
    %v759 = vunpack.c.l.b16 %v129
    %v760 = vunpack.c.h.b16 %v129
    %v761 = vunpack.c.l.b16 %v130
    %v762 = vunpack.c.h.b16 %v130
    %v763 = vunpack.c.l.b16 %v131
    %v764 = vunpack.c.h.b16 %v131
    %v765 = vunpack.c.l.b16 %v132
    %v766 = vunpack.c.h.b16 %v132
    %v767 = vunpack.c.l.b16 %v133
    %v768 = vunpack.c.h.b16 %v133
    %v769 = vunpack.c.l.b16 %v134
    %v770 = vunpack.c.h.b16 %v134
    %v771 = vunpack.c.l.b16 %v135
    %v772 = vunpack.c.h.b16 %v135
    %v773 = vunpack.c.l.b16 %v136
    %v774 = vunpack.c.h.b16 %v136
    %v775 = vunpack.c.l.b16 %v137
    %v776 = vunpack.c.h.b16 %v137
    %v777 = vunpack.c.l.b16 %v138
    %v778 = vunpack.c.h.b16 %v138
    %v779 = vunpack.c.l.b16 %v139
    %v780 = vunpack.c.h.b16 %v139
    %v781 = vunpack.c.l.b16 %v140
    %v782 = vunpack.c.h.b16 %v140
    %v783 = vunpack.c.l.b16 %v141
    %v784 = vunpack.c.h.b16 %v141
    %v785 = vunpack.c.l.b16 %v142
    %v786 = vunpack.c.h.b16 %v142
    %v787 = vunpack.c.l.b16 %v143
    %v788 = vunpack.c.h.b16 %v143
    %v789 = vunpack.c.l.b16 %v144
    %v790 = vunpack.c.h.b16 %v144
    %v791 = vunpack.c.l.b16 %v145
    %v792 = vunpack.c.h.b16 %v145
    %v793 = vunpack.c.l.b16 %v146
    %v794 = vunpack.c.h.b16 %v146
    %v795 = vunpack.c.l.b16 %v147
    %v796 = vunpack.c.h.b16 %v147
    %v797 = vunpack.c.l.b16 %v148
    %v798 = vunpack.c.h.b16 %v148
    %v799 = vunpack.c.l.b16 %v149
    %v800 = vunpack.c.h.b16 %v149
    %v801 = vunpack.c.l.b16 %v150
    %v802 = vunpack.c.h.b16 %v150
    %v803 = vunpack.c.l.b16 %v151
    %v804 = vunpack.c.h.b16 %v151
    %v805 = vunpack.c.l.b16 %v152
    %v806 = vunpack.c.h.b16 %v152
    %v807 = vunpack.c.l.b16 %v153
    %v808 = vunpack.c.h.b16 %v153
    %v809 = vunpack.c.l.b16 %v154
    %v810 = vunpack.c.h.b16 %v154
    %v811 = vunpack.c.l.b16 %v155
    %v812 = vunpack.c.h.b16 %v155
    %v813 = vunpack.c.l.b16 %v156
    %v814 = vunpack.c.h.b16 %v156
    %v815 = vunpack.c.l.b16 %v157
    %v816 = vunpack.c.h.b16 %v157
    %v817 = vunpack.c.l.b16 %v158
    %v818 = vunpack.c.h.b16 %v158
    %v819 = vunpack.c.l.b16 %v159
    %v820 = vunpack.c.h.b16 %v159
    %v821 = vunpack.c.l.b16 %v160
    %v822 = vunpack.c.h.b16 %v160
    %v823 = vunpack.c.l.b16 %v161
    %v824 = vunpack.c.h.b16 %v161
    %v825 = vunpack.c.l.b16 %v162
    %v826 = vunpack.c.h.b16 %v162
    %v827 = vunpack.c.l.b16 %v163
    %v828 = vunpack.c.h.b16 %v163
    %v829 = vunpack.c.l.b16 %v164
    %v830 = vunpack.c.h.b16 %v164
    %v831 = vunpack.c.l.b16 %v165
    %v832 = vunpack.c.h.b16 %v165
    %v833 = vunpack.c.l.b16 %v166
    %v834 = vunpack.c.h.b16 %v166
    %v835 = vunpack.c.l.b16 %v167
    %v836 = vunpack.c.h.b16 %v167
    %v837 = vunpack.c.l.b16 %v168
    %v838 = vunpack.c.h.b16 %v168
    %v839 = vunpack.c.l.b16 %v169
    %v840 = vunpack.c.h.b16 %v169
    %v841 = vunpack.c.l.b16 %v170
    %v842 = vunpack.c.h.b16 %v170
    %v843 = vunpack.c.l.b16 %v171
    %v844 = vunpack.c.h.b16 %v171
    %v845 = vunpack.c.l.b16 %v172
    %v846 = vunpack.c.h.b16 %v172
    %v847 = vunpack.c.l.b16 %v173
    %v848 = vunpack.c.h.b16 %v173
    %v849 = vunpack.c.l.b16 %v174
    %v850 = vunpack.c.h.b16 %v174
    %v851 = vunpack.c.l.b16 %v175
    %v852 = vunpack.c.h.b16 %v175
    %v853 = vunpack.c.l.b16 %v176
    %v854 = vunpack.c.h.b16 %v176
    %v855 = vunpack.c.l.b16 %v177
    %v856 = vunpack.c.h.b16 %v177
    %v857 = vunpack.c.l.b16 %v178
    %v858 = vunpack.c.h.b16 %v178
    %v859 = vunpack.c.l.b16 %v179
    %v860 = vunpack.c.h.b16 %v179
    %v861 = vunpack.c.l.b16 %v180
    %v862 = vunpack.c.h.b16 %v180
    %v863 = vunpack.c.l.b16 %v181
    %v864 = vunpack.c.h.b16 %v181
    %v865 = vunpack.c.l.b16 %v182
    %v866 = vunpack.c.h.b16 %v182
    %v867 = vunpack.c.l.b16 %v183
    %v868 = vunpack.c.h.b16 %v183
    %v869 = vunpack.c.l.b16 %v184
    %v870 = vunpack.c.h.b16 %v184
    %v871 = vunpack.c.l.b16 %v185
    %v872 = vunpack.c.h.b16 %v185
    %v873 = vunpack.c.l.b16 %v186
    %v874 = vunpack.c.h.b16 %v186
    %v875 = vunpack.c.l.b16 %v187
    %v876 = vunpack.c.h.b16 %v187
    %v877 = vunpack.c.l.b16 %v188
    %v878 = vunpack.c.h.b16 %v188
    %v879 = vunpack.c.l.b16 %v189
    %v880 = vunpack.c.h.b16 %v189
    %v881 = vunpack.c.l.b16 %v190
    %v882 = vunpack.c.h.b16 %v190
    %v883 = vunpack.c.l.b16 %v191
    %v884 = vunpack.c.h.b16 %v191
    %v885 = vunpack.c.l.b16 %v192
    %v886 = vunpack.c.h.b16 %v192
    %v887 = vunpack.c.l.b16 %v193
    %v888 = vunpack.c.h.b16 %v193
    %v889 = vunpack.c.l.b16 %v194
    %v890 = vunpack.c.h.b16 %v194
    %v891 = vunpack.c.l.b16 %v195
    %v892 = vunpack.c.h.b16 %v195
    %v893 = vunpack.c.l.b16 %v196
    %v894 = vunpack.c.h.b16 %v196
    %v895 = vunpack.c.l.b16 %v197
    %v896 = vunpack.c.h.b16 %v197
    %v897 = vunpack.c.l.b16 %v198
    %v898 = vunpack.c.h.b16 %v198
    %v899 = vunpack.c.l.b16 %v199
    %v900 = vunpack.c.h.b16 %v199
    %v901 = vunpack.c.l.b16 %v200
    %v902 = vunpack.c.h.b16 %v200
    %v903 = vunpack.c.l.b16 %v201
    %v904 = vunpack.c.h.b16 %v201
    %v905 = vunpack.c.l.b16 %v202
    %v906 = vunpack.c.h.b16 %v202
    %v907 = vunpack.c.l.b16 %v203
    %v908 = vunpack.c.h.b16 %v203
    %v909 = vunpack.c.l.b16 %v204
    %v910 = vunpack.c.h.b16 %v204
    %v911 = vunpack.c.l.b16 %v205
    %v912 = vunpack.c.h.b16 %v205
    %v913 = vunpack.c.l.b16 %v206
    %v914 = vunpack.c.h.b16 %v206
    %v915 = vunpack.c.l.b16 %v207
    %v916 = vunpack.c.h.b16 %v207
    %v917 = vunpack.c.l.b16 %v208
    %v918 = vunpack.c.h.b16 %v208
    %v919 = vunpack.c.l.b16 %v209
    %v920 = vunpack.c.h.b16 %v209
    %v921 = vunpack.c.l.b16 %v210
    %v922 = vunpack.c.h.b16 %v210
    %v923 = vunpack.c.l.b16 %v211
    %v924 = vunpack.c.h.b16 %v211
    %v925 = vunpack.c.l.b16 %v212
    %v926 = vunpack.c.h.b16 %v212
    %v927 = vunpack.c.l.b16 %v213
    %v928 = vunpack.c.h.b16 %v213
    %v929 = vunpack.c.l.b16 %v214
    %v930 = vunpack.c.h.b16 %v214
    %v931 = vunpack.c.l.b16 %v215
    %v932 = vunpack.c.h.b16 %v215
    %v933 = vunpack.c.l.b16 %v216
    %v934 = vunpack.c.h.b16 %v216
    %v935 = vunpack.c.l.b16 %v217
    %v936 = vunpack.c.h.b16 %v217
    %v937 = vunpack.c.l.b16 %v218
    %v938 = vunpack.c.h.b16 %v218
    %v939 = vunpack.c.l.b16 %v219
    %v940 = vunpack.c.h.b16 %v219
    %v941 = vunpack.c.l.b16 %v220
    %v942 = vunpack.c.h.b16 %v220
    %v943 = vunpack.c.l.b16 %v221
    %v944 = vunpack.c.h.b16 %v221
    %v945 = vunpack.c.l.b16 %v222
    %v946 = vunpack.c.h.b16 %v222
    %v947 = vunpack.c.l.b16 %v223
    %v948 = vunpack.c.h.b16 %v223
    %v949 = vunpack.c.l.b16 %v224
    %v950 = vunpack.c.h.b16 %v224
    %v951 = vunpack.c.l.b16 %v225
    %v952 = vunpack.c.h.b16 %v225
    %v953 = vunpack.c.l.b16 %v226
    %v954 = vunpack.c.h.b16 %v226
    %v955 = vunpack.c.l.b16 %v227
    %v956 = vunpack.c.h.b16 %v227
    %v957 = vunpack.c.l.b16 %v228
    %v958 = vunpack.c.h.b16 %v228
    %v959 = vunpack.c.l.b16 %v229
    %v960 = vunpack.c.h.b16 %v229
    %v961 = vunpack.c.l.b16 %v230
    %v962 = vunpack.c.h.b16 %v230
    %v963 = vunpack.c.l.b16 %v231
    %v964 = vunpack.c.h.b16 %v231
    %v965 = vunpack.c.l.b16 %v232
    %v966 = vunpack.c.h.b16 %v232
    %v967 = vunpack.c.l.b16 %v233
    %v968 = vunpack.c.h.b16 %v233
    %v969 = vunpack.c.l.b16 %v234
    %v970 = vunpack.c.h.b16 %v234
    %v971 = vunpack.c.l.b16 %v235
    %v972 = vunpack.c.h.b16 %v235
    %v973 = vunpack.c.l.b16 %v236
    %v974 = vunpack.c.h.b16 %v236
    %v975 = vunpack.c.l.b16 %v237
    %v976 = vunpack.c.h.b16 %v237
    %v977 = vunpack.c.l.b16 %v238
    %v978 = vunpack.c.h.b16 %v238
    %v979 = vpack.c.b16 %v693, %v691
    %v980 = vpack.c.b16 %v694, %v692
    %v981 = vpack.c.b16 %v697, %v695
    %v982 = vpack.c.b16 %v698, %v696
    %v983 = vpack.c.b16 %v701, %v699
    %v984 = vpack.c.b16 %v702, %v700
    %v985 = vpack.c.b16 %v705, %v703
    %v986 = vpack.c.b16 %v706, %v704
    %v987 = vpack.c.b16 %v709, %v707
    %v988 = vpack.c.b16 %v710, %v708
    %v989 = vpack.c.b16 %v713, %v711
    %v990 = vpack.c.b16 %v714, %v712
    %v991 = vpack.c.b16 %v717, %v715
    %v992 = vpack.c.b16 %v718, %v716
    %v993 = vpack.c.b16 %v721, %v719
    %v994 = vpack.c.b16 %v722, %v720
    %v995 = vpack.c.b16 %v725, %v723
    %v996 = vpack.c.b16 %v726, %v724
    %v997 = vpack.c.b16 %v729, %v727
    %v998 = vpack.c.b16 %v730, %v728
    %v999 = vpack.c.b16 %v733, %v731
    %v1000 = vpack.c.b16 %v734, %v732
    %v1001 = vpack.c.b16 %v737, %v735
    %v1002 = vpack.c.b16 %v738, %v736
    %v1003 = vpack.c.b16 %v741, %v739
    %v1004 = vpack.c.b16 %v742, %v740
    %v1005 = vpack.c.b16 %v745, %v743
    %v1006 = vpack.c.b16 %v746, %v744
    %v1007 = vpack.c.b16 %v749, %v747
    %v1008 = vpack.c.b16 %v750, %v748
    %v1009 = vpack.c.b16 %v753, %v751
    %v1010 = vpack.c.b16 %v754, %v752
    %v1011 = vpack.c.b16 %v757, %v755
    %v1012 = vpack.c.b16 %v758, %v756
    %v1013 = vpack.c.b16 %v761, %v759
    %v1014 = vpack.c.b16 %v762, %v760
    %v1015 = vpack.c.b16 %v765, %v763
    %v1016 = vpack.c.b16 %v766, %v764
    %v1017 = vpack.c.b16 %v769, %v767
    %v1018 = vpack.c.b16 %v770, %v768
    %v1019 = vpack.c.b16 %v773, %v771
    %v1020 = vpack.c.b16 %v774, %v772
    %v1021 = vpack.c.b16 %v777, %v775
    %v1022 = vpack.c.b16 %v778, %v776
    %v1023 = vpack.c.b16 %v781, %v779
    %v1024 = vpack.c.b16 %v782, %v780
    %v1025 = vpack.c.b16 %v785, %v783
    %v1026 = vpack.c.b16 %v786, %v784
    %v1027 = vpack.c.b16 %v789, %v787
    %v1028 = vpack.c.b16 %v790, %v788
    %v1029 = vpack.c.b16 %v793, %v791
    %v1030 = vpack.c.b16 %v794, %v792
    %v1031 = vpack.c.b16 %v797, %v795
    %v1032 = vpack.c.b16 %v798, %v796
    %v1033 = vpack.c.b16 %v801, %v799
    %v1034 = vpack.c.b16 %v802, %v800
    %v1035 = vpack.c.b16 %v805, %v803
    %v1036 = vpack.c.b16 %v806, %v804
    %v1037 = vpack.c.b16 %v809, %v807
    %v1038 = vpack.c.b16 %v810, %v808
    %v1039 = vpack.c.b16 %v813, %v811
    %v1040 = vpack.c.b16 %v814, %v812
    %v1041 = vpack.c.b16 %v817, %v815
    %v1042 = vpack.c.b16 %v818, %v816
    %v1043 = vpack.c.b16 %v821, %v819
    %v1044 = vpack.c.b16 %v822, %v820
    %v1045 = vpack.c.b16 %v825, %v823
    %v1046 = vpack.c.b16 %v826, %v824
    %v1047 = vpack.c.b16 %v829, %v827
    %v1048 = vpack.c.b16 %v830, %v828
    %v1049 = vpack.c.b16 %v833, %v831
    %v1050 = vpack.c.b16 %v834, %v832
    %v1051 = vpack.c.b16 %v837, %v835
    %v1052 = vpack.c.b16 %v838, %v836
    %v1053 = vpack.c.b16 %v841, %v839
    %v1054 = vpack.c.b16 %v842, %v840
    %v1055 = vpack.c.b16 %v845, %v843
    %v1056 = vpack.c.b16 %v846, %v844
    %v1057 = vpack.c.b16 %v849, %v847
    %v1058 = vpack.c.b16 %v850, %v848
    %v1059 = vpack.c.b16 %v853, %v851
    %v1060 = vpack.c.b16 %v854, %v852
    %v1061 = vpack.c.b16 %v857, %v855
    %v1062 = vpack.c.b16 %v858, %v856
    %v1063 = vpack.c.b16 %v861, %v859
    %v1064 = vpack.c.b16 %v862, %v860
    %v1065 = vpack.c.b16 %v865, %v863
    %v1066 = vpack.c.b16 %v866, %v864
    %v1067 = vpack.c.b16 %v869, %v867
    %v1068 = vpack.c.b16 %v870, %v868
    %v1069 = vpack.c.b16 %v873, %v871
    %v1070 = vpack.c.b16 %v874, %v872
    %v1071 = vpack.c.b16 %v877, %v875
    %v1072 = vpack.c.b16 %v878, %v876
    %v1073 = vpack.c.b16 %v881, %v879
    %v1074 = vpack.c.b16 %v882, %v880
    %v1075 = vpack.c.b16 %v885, %v883
    %v1076 = vpack.c.b16 %v886, %v884
    %v1077 = vpack.c.b16 %v889, %v887
    %v1078 = vpack.c.b16 %v890, %v888
    %v1079 = vpack.c.b16 %v893, %v891
    %v1080 = vpack.c.b16 %v894, %v892
    %v1081 = vpack.c.b16 %v897, %v895
    %v1082 = vpack.c.b16 %v898, %v896
    %v1083 = vpack.c.b16 %v901, %v899
    %v1084 = vpack.c.b16 %v902, %v900
    %v1085 = vpack.c.b16 %v905, %v903
    %v1086 = vpack.c.b16 %v906, %v904
    %v1087 = vpack.c.b16 %v909, %v907
    %v1088 = vpack.c.b16 %v910, %v908
    %v1089 = vpack.c.b16 %v913, %v911
    %v1090 = vpack.c.b16 %v914, %v912
    %v1091 = vpack.c.b16 %v917, %v915
    %v1092 = vpack.c.b16 %v918, %v916
    %v1093 = vpack.c.b16 %v921, %v919
    %v1094 = vpack.c.b16 %v922, %v920
    %v1095 = vpack.c.b16 %v925, %v923
    %v1096 = vpack.c.b16 %v926, %v924
    %v1097 = vpack.c.b16 %v929, %v927
    %v1098 = vpack.c.b16 %v930, %v928
    %v1099 = vpack.c.b16 %v933, %v931
    %v1100 = vpack.c.b16 %v934, %v932
    %v1101 = vpack.c.b16 %v937, %v935
    %v1102 = vpack.c.b16 %v938, %v936
    %v1103 = vpack.c.b16 %v941, %v939
    %v1104 = vpack.c.b16 %v942, %v940
    %v1105 = vpack.c.b16 %v945, %v943
    %v1106 = vpack.c.b16 %v946, %v944
    %v1107 = vpack.c.b16 %v949, %v947
    %v1108 = vpack.c.b16 %v950, %v948
    %v1109 = vpack.c.b16 %v953, %v951
    %v1110 = vpack.c.b16 %v954, %v952
    %v1111 = vpack.c.b16 %v957, %v955
    %v1112 = vpack.c.b16 %v958, %v956
    %v1113 = vpack.c.b16 %v961, %v959
    %v1114 = vpack.c.b16 %v962, %v960
    %v1115 = vpack.c.b16 %v965, %v963
    %v1116 = vpack.c.b16 %v966, %v964
    %v1117 = vpack.c.b16 %v969, %v967
    %v1118 = vpack.c.b16 %v970, %v968
    %v1119 = vpack.c.b16 %v973, %v971
    %v1120 = vpack.c.b16 %v974, %v972
    %v1121 = vpack.c.b16 %v977, %v975
    %v1122 = vpack.c.b16 %v978, %v976
    %1267 = vmatpush.bf16.msra.mxu0 %v993
    %1268 = vmatpush.bf16.msra.mxu0 %v991
    %1269 = vmatpush.bf16.msra.mxu0 %v989
    %1270 = vmatpush.bf16.msra.mxu0 %v987
    %1271 = vmatpush.bf16.msra.mxu0 %v985
    %1272 = vmatpush.bf16.msra.mxu0 %v983
    %1273 = vmatpush.bf16.msra.mxu0 %v981
    %1274 = vmatpush.bf16.msra.mxu0 %v979
    %1275 = vmatmul.bf16.gmra.mxu0 %v421
    %v1276 = vpop.f32.mrf.mxu0
    %v1277 = vadd.f32 0.0, %v1276
    %v1278 = vpop.f32.mrf.mxu0
    %v1279 = vadd.f32 0.0, %v1278
    %1280 = vmatmul.bf16.gmra.mxu0 %v430
    %v1281 = vpop.f32.mrf.mxu0
    %v1282 = vadd.f32 0.0, %v1281
    %v1283 = vpop.f32.mrf.mxu0
    %v1284 = vadd.f32 0.0, %v1283
    %1285 = vmatmul.bf16.gmra.mxu0 %v439
    %v1286 = vpop.f32.mrf.mxu0
    %v1287 = vadd.f32 0.0, %v1286
    %v1288 = vpop.f32.mrf.mxu0
    %v1289 = vadd.f32 0.0, %v1288
    %1290 = vmatmul.bf16.gmra.mxu0 %v448
    %v1291 = vpop.f32.mrf.mxu0
    %v1292 = vadd.f32 0.0, %v1291
    %v1293 = vpop.f32.mrf.mxu0
    %v1294 = vadd.f32 0.0, %v1293
    %1295 = vmatmul.bf16.gmra.mxu0 %v457
    %v1296 = vpop.f32.mrf.mxu0
    %v1297 = vadd.f32 0.0, %v1296
    %v1298 = vpop.f32.mrf.mxu0
    %v1299 = vadd.f32 0.0, %v1298
    %1300 = vmatmul.bf16.gmra.mxu0 %v466
    %v1301 = vpop.f32.mrf.mxu0
    %v1302 = vadd.f32 0.0, %v1301
    %v1303 = vpop.f32.mrf.mxu0
    %v1304 = vadd.f32 0.0, %v1303
    %1305 = vmatmul.bf16.gmra.mxu0 %v475
    %v1306 = vpop.f32.mrf.mxu0
    %v1307 = vadd.f32 0.0, %v1306
    %v1308 = vpop.f32.mrf.mxu0
    %1309 = vdwg.mxu0
    %1310 = vmatpush.bf16.msra.mxu0 %v1009
    %1311 = vmatpush.bf16.msra.mxu0 %v1007
    %1312 = vmatpush.bf16.msra.mxu0 %v1005
    %1313 = vmatpush.bf16.msra.mxu0 %v1003
    %1314 = vmatpush.bf16.msra.mxu0 %v1001
    %1315 = vmatpush.bf16.msra.mxu0 %v999
    %1316 = vmatpush.bf16.msra.mxu0 %v997
    %1317 = vmatpush.bf16.msra.mxu0 %v995
    %1318 = vmatmul.bf16.gmra.mxu0 %v422
    %v1319 = vpop.f32.mrf.mxu0
    %v1320 = vadd.f32 %v1277, %v1319
    %v1321 = vpop.f32.mrf.mxu0
    %v1322 = vadd.f32 %v1279, %v1321
    %1323 = vmatmul.bf16.gmra.mxu0 %v431
    %v1324 = vpop.f32.mrf.mxu0
    %v1325 = vadd.f32 %v1282, %v1324
    %v1326 = vpop.f32.mrf.mxu0
    %v1327 = vadd.f32 %v1284, %v1326
    %1328 = vmatmul.bf16.gmra.mxu0 %v440
    %v1329 = vpop.f32.mrf.mxu0
    %v1330 = vadd.f32 %v1287, %v1329
    %v1331 = vpop.f32.mrf.mxu0
    %v1332 = vadd.f32 %v1289, %v1331
    %1333 = vmatmul.bf16.gmra.mxu0 %v449
    %v1334 = vpop.f32.mrf.mxu0
    %v1335 = vadd.f32 %v1292, %v1334
    %v1336 = vpop.f32.mrf.mxu0
    %v1337 = vadd.f32 %v1294, %v1336
    %1338 = vmatmul.bf16.gmra.mxu0 %v458
    %v1339 = vpop.f32.mrf.mxu0
    %v1340 = vadd.f32 %v1297, %v1339
    %v1341 = vpop.f32.mrf.mxu0
    %v1342 = vadd.f32 %v1299, %v1341
    %1343 = vmatmul.bf16.gmra.mxu0 %v467
    %v1344 = vpop.f32.mrf.mxu0
    %v1345 = vadd.f32 %v1302, %v1344
    %v1346 = vpop.f32.mrf.mxu0
    %v1347 = vadd.f32 %v1304, %v1346
    %1348 = vmatmul.bf16.gmra.mxu0 %v476
    %v1349 = vpop.f32.mrf.mxu0
    %v1350 = vadd.f32 %v1307, %v1349
    %v1351 = vpop.f32.mrf.mxu0
    %1352 = vdwg.mxu0
    %1353 = vmatpush.bf16.msra.mxu0 %v1025
    %1354 = vmatpush.bf16.msra.mxu0 %v1023
    %1355 = vmatpush.bf16.msra.mxu0 %v1021
    %1356 = vmatpush.bf16.msra.mxu0 %v1019
    %1357 = vmatpush.bf16.msra.mxu0 %v1017
    %1358 = vmatpush.bf16.msra.mxu0 %v1015
    %1359 = vmatpush.bf16.msra.mxu0 %v1013
    %1360 = vmatpush.bf16.msra.mxu0 %v1011
    %1361 = vmatmul.bf16.gmra.mxu0 %v423
    %v1362 = vpop.f32.mrf.mxu0
    %v1363 = vadd.f32 %v1320, %v1362
    %v1364 = vpop.f32.mrf.mxu0
    %v1365 = vadd.f32 %v1322, %v1364
    %1366 = vmatmul.bf16.gmra.mxu0 %v432
    %v1367 = vpop.f32.mrf.mxu0
    %v1368 = vadd.f32 %v1325, %v1367
    %v1369 = vpop.f32.mrf.mxu0
    %v1370 = vadd.f32 %v1327, %v1369
    %1371 = vmatmul.bf16.gmra.mxu0 %v441
    %v1372 = vpop.f32.mrf.mxu0
    %v1373 = vadd.f32 %v1330, %v1372
    %v1374 = vpop.f32.mrf.mxu0
    %v1375 = vadd.f32 %v1332, %v1374
    %1376 = vmatmul.bf16.gmra.mxu0 %v450
    %v1377 = vpop.f32.mrf.mxu0
    %v1378 = vadd.f32 %v1335, %v1377
    %v1379 = vpop.f32.mrf.mxu0
    %v1380 = vadd.f32 %v1337, %v1379
    %1381 = vmatmul.bf16.gmra.mxu0 %v459
    %v1382 = vpop.f32.mrf.mxu0
    %v1383 = vadd.f32 %v1340, %v1382
    %v1384 = vpop.f32.mrf.mxu0
    %v1385 = vadd.f32 %v1342, %v1384
    %1386 = vmatmul.bf16.gmra.mxu0 %v468
    %v1387 = vpop.f32.mrf.mxu0
    %v1388 = vadd.f32 %v1345, %v1387
    %v1389 = vpop.f32.mrf.mxu0
    %v1390 = vadd.f32 %v1347, %v1389
    %1391 = vmatmul.bf16.gmra.mxu0 %v477
    %v1392 = vpop.f32.mrf.mxu0
    %v1393 = vadd.f32 %v1350, %v1392
    %v1394 = vpop.f32.mrf.mxu0
    %1395 = vdwg.mxu0
    %1396 = vmatpush.bf16.msra.mxu0 %v1041
    %1397 = vmatpush.bf16.msra.mxu0 %v1039
    %1398 = vmatpush.bf16.msra.mxu0 %v1037
    %1399 = vmatpush.bf16.msra.mxu0 %v1035
    %1400 = vmatpush.bf16.msra.mxu0 %v1033
    %1401 = vmatpush.bf16.msra.mxu0 %v1031
    %1402 = vmatpush.bf16.msra.mxu0 %v1029
    %1403 = vmatpush.bf16.msra.mxu0 %v1027
    %1404 = vmatmul.bf16.gmra.mxu0 %v424
    %v1405 = vpop.f32.mrf.mxu0
    %v1406 = vadd.f32 %v1363, %v1405
    %v1407 = vpop.f32.mrf.mxu0
    %v1408 = vadd.f32 %v1365, %v1407
    %1409 = vmatmul.bf16.gmra.mxu0 %v433
    %v1410 = vpop.f32.mrf.mxu0
    %v1411 = vadd.f32 %v1368, %v1410
    %v1412 = vpop.f32.mrf.mxu0
    %v1413 = vadd.f32 %v1370, %v1412
    %1414 = vmatmul.bf16.gmra.mxu0 %v442
    %v1415 = vpop.f32.mrf.mxu0
    %v1416 = vadd.f32 %v1373, %v1415
    %v1417 = vpop.f32.mrf.mxu0
    %v1418 = vadd.f32 %v1375, %v1417
    %1419 = vmatmul.bf16.gmra.mxu0 %v451
    %v1420 = vpop.f32.mrf.mxu0
    %v1421 = vadd.f32 %v1378, %v1420
    %v1422 = vpop.f32.mrf.mxu0
    %v1423 = vadd.f32 %v1380, %v1422
    %1424 = vmatmul.bf16.gmra.mxu0 %v460
    %v1425 = vpop.f32.mrf.mxu0
    %v1426 = vadd.f32 %v1383, %v1425
    %v1427 = vpop.f32.mrf.mxu0
    %v1428 = vadd.f32 %v1385, %v1427
    %1429 = vmatmul.bf16.gmra.mxu0 %v469
    %v1430 = vpop.f32.mrf.mxu0
    %v1431 = vadd.f32 %v1388, %v1430
    %v1432 = vpop.f32.mrf.mxu0
    %v1433 = vadd.f32 %v1390, %v1432
    %1434 = vmatmul.bf16.gmra.mxu0 %v478
    %v1435 = vpop.f32.mrf.mxu0
    %v1436 = vadd.f32 %v1393, %v1435
    %v1437 = vpop.f32.mrf.mxu0
    %1438 = vdwg.mxu0
    %1439 = vmatpush.bf16.msra.mxu0 %v1057
    %1440 = vmatpush.bf16.msra.mxu0 %v1055
    %1441 = vmatpush.bf16.msra.mxu0 %v1053
    %1442 = vmatpush.bf16.msra.mxu0 %v1051
    %1443 = vmatpush.bf16.msra.mxu0 %v1049
    %1444 = vmatpush.bf16.msra.mxu0 %v1047
    %1445 = vmatpush.bf16.msra.mxu0 %v1045
    %1446 = vmatpush.bf16.msra.mxu0 %v1043
    %1447 = vmatmul.bf16.gmra.mxu0 %v425
    %v1448 = vpop.f32.mrf.mxu0
    %v1449 = vadd.f32 %v1406, %v1448
    %v1450 = vpop.f32.mrf.mxu0
    %v1451 = vadd.f32 %v1408, %v1450
    %1452 = vmatmul.bf16.gmra.mxu0 %v434
    %v1453 = vpop.f32.mrf.mxu0
    %v1454 = vadd.f32 %v1411, %v1453
    %v1455 = vpop.f32.mrf.mxu0
    %v1456 = vadd.f32 %v1413, %v1455
    %1457 = vmatmul.bf16.gmra.mxu0 %v443
    %v1458 = vpop.f32.mrf.mxu0
    %v1459 = vadd.f32 %v1416, %v1458
    %v1460 = vpop.f32.mrf.mxu0
    %v1461 = vadd.f32 %v1418, %v1460
    %1462 = vmatmul.bf16.gmra.mxu0 %v452
    %v1463 = vpop.f32.mrf.mxu0
    %v1464 = vadd.f32 %v1421, %v1463
    %v1465 = vpop.f32.mrf.mxu0
    %v1466 = vadd.f32 %v1423, %v1465
    %1467 = vmatmul.bf16.gmra.mxu0 %v461
    %v1468 = vpop.f32.mrf.mxu0
    %v1469 = vadd.f32 %v1426, %v1468
    %v1470 = vpop.f32.mrf.mxu0
    %v1471 = vadd.f32 %v1428, %v1470
    %1472 = vmatmul.bf16.gmra.mxu0 %v470
    %v1473 = vpop.f32.mrf.mxu0
    %v1474 = vadd.f32 %v1431, %v1473
    %v1475 = vpop.f32.mrf.mxu0
    %v1476 = vadd.f32 %v1433, %v1475
    %1477 = vmatmul.bf16.gmra.mxu0 %v479
    %v1478 = vpop.f32.mrf.mxu0
    %v1479 = vadd.f32 %v1436, %v1478
    %v1480 = vpop.f32.mrf.mxu0
    %1481 = vdwg.mxu0
    %1482 = vmatpush.bf16.msra.mxu0 %v1073
    %1483 = vmatpush.bf16.msra.mxu0 %v1071
    %1484 = vmatpush.bf16.msra.mxu0 %v1069
    %1485 = vmatpush.bf16.msra.mxu0 %v1067
    %1486 = vmatpush.bf16.msra.mxu0 %v1065
    %1487 = vmatpush.bf16.msra.mxu0 %v1063
    %1488 = vmatpush.bf16.msra.mxu0 %v1061
    %1489 = vmatpush.bf16.msra.mxu0 %v1059
    %1490 = vmatmul.bf16.gmra.mxu0 %v426
    %v1491 = vpop.f32.mrf.mxu0
    %v1492 = vadd.f32 %v1449, %v1491
    %v1493 = vpop.f32.mrf.mxu0
    %v1494 = vadd.f32 %v1451, %v1493
    %1495 = vmatmul.bf16.gmra.mxu0 %v435
    %v1496 = vpop.f32.mrf.mxu0
    %v1497 = vadd.f32 %v1454, %v1496
    %v1498 = vpop.f32.mrf.mxu0
    %v1499 = vadd.f32 %v1456, %v1498
    %1500 = vmatmul.bf16.gmra.mxu0 %v444
    %v1501 = vpop.f32.mrf.mxu0
    %v1502 = vadd.f32 %v1459, %v1501
    %v1503 = vpop.f32.mrf.mxu0
    %v1504 = vadd.f32 %v1461, %v1503
    %1505 = vmatmul.bf16.gmra.mxu0 %v453
    %v1506 = vpop.f32.mrf.mxu0
    %v1507 = vadd.f32 %v1464, %v1506
    %v1508 = vpop.f32.mrf.mxu0
    %v1509 = vadd.f32 %v1466, %v1508
    %1510 = vmatmul.bf16.gmra.mxu0 %v462
    %v1511 = vpop.f32.mrf.mxu0
    %v1512 = vadd.f32 %v1469, %v1511
    %v1513 = vpop.f32.mrf.mxu0
    %v1514 = vadd.f32 %v1471, %v1513
    %1515 = vmatmul.bf16.gmra.mxu0 %v471
    %v1516 = vpop.f32.mrf.mxu0
    %v1517 = vadd.f32 %v1474, %v1516
    %v1518 = vpop.f32.mrf.mxu0
    %v1519 = vadd.f32 %v1476, %v1518
    %1520 = vmatmul.bf16.gmra.mxu0 %v480
    %v1521 = vpop.f32.mrf.mxu0
    %v1522 = vadd.f32 %v1479, %v1521
    %v1523 = vpop.f32.mrf.mxu0
    %1524 = vdwg.mxu0
    %1525 = vmatpush.bf16.msra.mxu0 %v1089
    %1526 = vmatpush.bf16.msra.mxu0 %v1087
    %1527 = vmatpush.bf16.msra.mxu0 %v1085
    %1528 = vmatpush.bf16.msra.mxu0 %v1083
    %1529 = vmatpush.bf16.msra.mxu0 %v1081
    %1530 = vmatpush.bf16.msra.mxu0 %v1079
    %1531 = vmatpush.bf16.msra.mxu0 %v1077
    %1532 = vmatpush.bf16.msra.mxu0 %v1075
    %1533 = vmatmul.bf16.gmra.mxu0 %v427
    %v1534 = vpop.f32.mrf.mxu0
    %v1535 = vadd.f32 %v1492, %v1534
    %v1536 = vpop.f32.mrf.mxu0
    %v1537 = vadd.f32 %v1494, %v1536
    %1538 = vmatmul.bf16.gmra.mxu0 %v436
    %v1539 = vpop.f32.mrf.mxu0
    %v1540 = vadd.f32 %v1497, %v1539
    %v1541 = vpop.f32.mrf.mxu0
    %v1542 = vadd.f32 %v1499, %v1541
    %1543 = vmatmul.bf16.gmra.mxu0 %v445
    %v1544 = vpop.f32.mrf.mxu0
    %v1545 = vadd.f32 %v1502, %v1544
    %v1546 = vpop.f32.mrf.mxu0
    %v1547 = vadd.f32 %v1504, %v1546
    %1548 = vmatmul.bf16.gmra.mxu0 %v454
    %v1549 = vpop.f32.mrf.mxu0
    %v1550 = vadd.f32 %v1507, %v1549
    %v1551 = vpop.f32.mrf.mxu0
    %v1552 = vadd.f32 %v1509, %v1551
    %1553 = vmatmul.bf16.gmra.mxu0 %v463
    %v1554 = vpop.f32.mrf.mxu0
    %v1555 = vadd.f32 %v1512, %v1554
    %v1556 = vpop.f32.mrf.mxu0
    %v1557 = vadd.f32 %v1514, %v1556
    %1558 = vmatmul.bf16.gmra.mxu0 %v472
    %v1559 = vpop.f32.mrf.mxu0
    %v1560 = vadd.f32 %v1517, %v1559
    %v1561 = vpop.f32.mrf.mxu0
    %v1562 = vadd.f32 %v1519, %v1561
    %1563 = vmatmul.bf16.gmra.mxu0 %v481
    %v1564 = vpop.f32.mrf.mxu0
    %v1565 = vadd.f32 %v1522, %v1564
    %v1566 = vpop.f32.mrf.mxu0
    %1567 = vdwg.mxu0
    %1568 = vmatpush.bf16.msra.mxu0 %v1105
    %1569 = vmatpush.bf16.msra.mxu0 %v1103
    %1570 = vmatpush.bf16.msra.mxu0 %v1101
    %1571 = vmatpush.bf16.msra.mxu0 %v1099
    %1572 = vmatpush.bf16.msra.mxu0 %v1097
    %1573 = vmatpush.bf16.msra.mxu0 %v1095
    %1574 = vmatpush.bf16.msra.mxu0 %v1093
    %1575 = vmatpush.bf16.msra.mxu0 %v1091
    %1576 = vmatmul.bf16.gmra.mxu0 %v428
    %v1577 = vpop.f32.mrf.mxu0
    %v1578 = vadd.f32 %v1535, %v1577
    %v1579 = vpop.f32.mrf.mxu0
    %v1580 = vadd.f32 %v1537, %v1579
    %1581 = vmatmul.bf16.gmra.mxu0 %v437
    %v1582 = vpop.f32.mrf.mxu0
    %v1583 = vadd.f32 %v1540, %v1582
    %v1584 = vpop.f32.mrf.mxu0
    %v1585 = vadd.f32 %v1542, %v1584
    %1586 = vmatmul.bf16.gmra.mxu0 %v446
    %v1587 = vpop.f32.mrf.mxu0
    %v1588 = vadd.f32 %v1545, %v1587
    %v1589 = vpop.f32.mrf.mxu0
    %v1590 = vadd.f32 %v1547, %v1589
    %1591 = vmatmul.bf16.gmra.mxu0 %v455
    %v1592 = vpop.f32.mrf.mxu0
    %v1593 = vadd.f32 %v1550, %v1592
    %v1594 = vpop.f32.mrf.mxu0
    %v1595 = vadd.f32 %v1552, %v1594
    %1596 = vmatmul.bf16.gmra.mxu0 %v464
    %v1597 = vpop.f32.mrf.mxu0
    %v1598 = vadd.f32 %v1555, %v1597
    %v1599 = vpop.f32.mrf.mxu0
    %v1600 = vadd.f32 %v1557, %v1599
    %1601 = vmatmul.bf16.gmra.mxu0 %v473
    %v1602 = vpop.f32.mrf.mxu0
    %v1603 = vadd.f32 %v1560, %v1602
    %v1604 = vpop.f32.mrf.mxu0
    %v1605 = vadd.f32 %v1562, %v1604
    %1606 = vmatmul.bf16.gmra.mxu0 %v482
    %v1607 = vpop.f32.mrf.mxu0
    %v1608 = vadd.f32 %v1565, %v1607
    %v1609 = vpop.f32.mrf.mxu0
    %1610 = vdwg.mxu0
    %1611 = vmatpush.bf16.msra.mxu0 %v1121
    %1612 = vmatpush.bf16.msra.mxu0 %v1119
    %1613 = vmatpush.bf16.msra.mxu0 %v1117
    %1614 = vmatpush.bf16.msra.mxu0 %v1115
    %1615 = vmatpush.bf16.msra.mxu0 %v1113
    %1616 = vmatpush.bf16.msra.mxu0 %v1111
    %1617 = vmatpush.bf16.msra.mxu0 %v1109
    %1618 = vmatpush.bf16.msra.mxu0 %v1107
    %1619 = vmatmul.bf16.gmra.mxu0 %v429
    %v1620 = vpop.f32.mrf.mxu0
    %v1621 = vadd.f32 %v1578, %v1620
    %v1622 = vpop.f32.mrf.mxu0
    %v1623 = vadd.f32 %v1580, %v1622
    %1624 = vmatmul.bf16.gmra.mxu0 %v438
    %v1625 = vpop.f32.mrf.mxu0
    %v1626 = vadd.f32 %v1583, %v1625
    %v1627 = vpop.f32.mrf.mxu0
    %v1628 = vadd.f32 %v1585, %v1627
    %1629 = vmatmul.bf16.gmra.mxu0 %v447
    %v1630 = vpop.f32.mrf.mxu0
    %v1631 = vadd.f32 %v1588, %v1630
    %v1632 = vpop.f32.mrf.mxu0
    %v1633 = vadd.f32 %v1590, %v1632
    %1634 = vmatmul.bf16.gmra.mxu0 %v456
    %v1635 = vpop.f32.mrf.mxu0
    %v1636 = vadd.f32 %v1593, %v1635
    %v1637 = vpop.f32.mrf.mxu0
    %v1638 = vadd.f32 %v1595, %v1637
    %1639 = vmatmul.bf16.gmra.mxu0 %v465
    %v1640 = vpop.f32.mrf.mxu0
    %v1641 = vadd.f32 %v1598, %v1640
    %v1642 = vpop.f32.mrf.mxu0
    %v1643 = vadd.f32 %v1600, %v1642
    %1644 = vmatmul.bf16.gmra.mxu0 %v474
    %v1645 = vpop.f32.mrf.mxu0
    %v1646 = vadd.f32 %v1603, %v1645
    %v1647 = vpop.f32.mrf.mxu0
    %v1648 = vadd.f32 %v1605, %v1647
    %1649 = vmatmul.bf16.gmra.mxu0 %v483
    %v1650 = vpop.f32.mrf.mxu0
    %v1651 = vadd.f32 %v1608, %v1650
    %v1652 = vpop.f32.mrf.mxu0
    %1653 = vdwg.mxu0
    %1654 = vmatpush.bf16.msra.mxu0 %v994
    %1655 = vmatpush.bf16.msra.mxu0 %v992
    %1656 = vmatpush.bf16.msra.mxu0 %v990
    %1657 = vmatpush.bf16.msra.mxu0 %v988
    %1658 = vmatpush.bf16.msra.mxu0 %v986
    %1659 = vmatpush.bf16.msra.mxu0 %v984
    %1660 = vmatpush.bf16.msra.mxu0 %v982
    %1661 = vmatpush.bf16.msra.mxu0 %v980
    %1662 = vmatmul.bf16.gmra.mxu0 %v421
    %v1663 = vpop.f32.mrf.mxu0
    %v1664 = vadd.f32 0.0, %v1663
    %v1665 = vpop.f32.mrf.mxu0
    %v1666 = vadd.f32 0.0, %v1665
    %1667 = vmatmul.bf16.gmra.mxu0 %v430
    %v1668 = vpop.f32.mrf.mxu0
    %v1669 = vadd.f32 0.0, %v1668
    %v1670 = vpop.f32.mrf.mxu0
    %v1671 = vadd.f32 0.0, %v1670
    %1672 = vmatmul.bf16.gmra.mxu0 %v439
    %v1673 = vpop.f32.mrf.mxu0
    %v1674 = vadd.f32 0.0, %v1673
    %v1675 = vpop.f32.mrf.mxu0
    %v1676 = vadd.f32 0.0, %v1675
    %1677 = vmatmul.bf16.gmra.mxu0 %v448
    %v1678 = vpop.f32.mrf.mxu0
    %v1679 = vadd.f32 0.0, %v1678
    %v1680 = vpop.f32.mrf.mxu0
    %v1681 = vadd.f32 0.0, %v1680
    %1682 = vmatmul.bf16.gmra.mxu0 %v457
    %v1683 = vpop.f32.mrf.mxu0
    %v1684 = vadd.f32 0.0, %v1683
    %v1685 = vpop.f32.mrf.mxu0
    %v1686 = vadd.f32 0.0, %v1685
    %1687 = vmatmul.bf16.gmra.mxu0 %v466
    %v1688 = vpop.f32.mrf.mxu0
    %v1689 = vadd.f32 0.0, %v1688
    %v1690 = vpop.f32.mrf.mxu0
    %v1691 = vadd.f32 0.0, %v1690
    %1692 = vmatmul.bf16.gmra.mxu0 %v475
    %v1693 = vpop.f32.mrf.mxu0
    %v1694 = vadd.f32 0.0, %v1693
    %v1695 = vpop.f32.mrf.mxu0
    %1696 = vdwg.mxu0
    %1697 = vmatpush.bf16.msra.mxu0 %v1010
    %1698 = vmatpush.bf16.msra.mxu0 %v1008
    %1699 = vmatpush.bf16.msra.mxu0 %v1006
    %1700 = vmatpush.bf16.msra.mxu0 %v1004
    %1701 = vmatpush.bf16.msra.mxu0 %v1002
    %1702 = vmatpush.bf16.msra.mxu0 %v1000
    %1703 = vmatpush.bf16.msra.mxu0 %v998
    %1704 = vmatpush.bf16.msra.mxu0 %v996
    %1705 = vmatmul.bf16.gmra.mxu0 %v422
    %v1706 = vpop.f32.mrf.mxu0
    %v1707 = vadd.f32 %v1664, %v1706
    %v1708 = vpop.f32.mrf.mxu0
    %v1709 = vadd.f32 %v1666, %v1708
    %1710 = vmatmul.bf16.gmra.mxu0 %v431
    %v1711 = vpop.f32.mrf.mxu0
    %v1712 = vadd.f32 %v1669, %v1711
    %v1713 = vpop.f32.mrf.mxu0
    %v1714 = vadd.f32 %v1671, %v1713
    %1715 = vmatmul.bf16.gmra.mxu0 %v440
    %v1716 = vpop.f32.mrf.mxu0
    %v1717 = vadd.f32 %v1674, %v1716
    %v1718 = vpop.f32.mrf.mxu0
    %v1719 = vadd.f32 %v1676, %v1718
    %1720 = vmatmul.bf16.gmra.mxu0 %v449
    %v1721 = vpop.f32.mrf.mxu0
    %v1722 = vadd.f32 %v1679, %v1721
    %v1723 = vpop.f32.mrf.mxu0
    %v1724 = vadd.f32 %v1681, %v1723
    %1725 = vmatmul.bf16.gmra.mxu0 %v458
    %v1726 = vpop.f32.mrf.mxu0
    %v1727 = vadd.f32 %v1684, %v1726
    %v1728 = vpop.f32.mrf.mxu0
    %v1729 = vadd.f32 %v1686, %v1728
    %1730 = vmatmul.bf16.gmra.mxu0 %v467
    %v1731 = vpop.f32.mrf.mxu0
    %v1732 = vadd.f32 %v1689, %v1731
    %v1733 = vpop.f32.mrf.mxu0
    %v1734 = vadd.f32 %v1691, %v1733
    %1735 = vmatmul.bf16.gmra.mxu0 %v476
    %v1736 = vpop.f32.mrf.mxu0
    %v1737 = vadd.f32 %v1694, %v1736
    %v1738 = vpop.f32.mrf.mxu0
    %1739 = vdwg.mxu0
    %1740 = vmatpush.bf16.msra.mxu0 %v1026
    %1741 = vmatpush.bf16.msra.mxu0 %v1024
    %1742 = vmatpush.bf16.msra.mxu0 %v1022
    %1743 = vmatpush.bf16.msra.mxu0 %v1020
    %1744 = vmatpush.bf16.msra.mxu0 %v1018
    %1745 = vmatpush.bf16.msra.mxu0 %v1016
    %1746 = vmatpush.bf16.msra.mxu0 %v1014
    %1747 = vmatpush.bf16.msra.mxu0 %v1012
    %1748 = vmatmul.bf16.gmra.mxu0 %v423
    %v1749 = vpop.f32.mrf.mxu0
    %v1750 = vadd.f32 %v1707, %v1749
    %v1751 = vpop.f32.mrf.mxu0
    %v1752 = vadd.f32 %v1709, %v1751
    %1753 = vmatmul.bf16.gmra.mxu0 %v432
    %v1754 = vpop.f32.mrf.mxu0
    %v1755 = vadd.f32 %v1712, %v1754
    %v1756 = vpop.f32.mrf.mxu0
    %v1757 = vadd.f32 %v1714, %v1756
    %1758 = vmatmul.bf16.gmra.mxu0 %v441
    %v1759 = vpop.f32.mrf.mxu0
    %v1760 = vadd.f32 %v1717, %v1759
    %v1761 = vpop.f32.mrf.mxu0
    %v1762 = vadd.f32 %v1719, %v1761
    %1763 = vmatmul.bf16.gmra.mxu0 %v450
    %v1764 = vpop.f32.mrf.mxu0
    %v1765 = vadd.f32 %v1722, %v1764
    %v1766 = vpop.f32.mrf.mxu0
    %v1767 = vadd.f32 %v1724, %v1766
    %1768 = vmatmul.bf16.gmra.mxu0 %v459
    %v1769 = vpop.f32.mrf.mxu0
    %v1770 = vadd.f32 %v1727, %v1769
    %v1771 = vpop.f32.mrf.mxu0
    %v1772 = vadd.f32 %v1729, %v1771
    %1773 = vmatmul.bf16.gmra.mxu0 %v468
    %v1774 = vpop.f32.mrf.mxu0
    %v1775 = vadd.f32 %v1732, %v1774
    %v1776 = vpop.f32.mrf.mxu0
    %v1777 = vadd.f32 %v1734, %v1776
    %1778 = vmatmul.bf16.gmra.mxu0 %v477
    %v1779 = vpop.f32.mrf.mxu0
    %v1780 = vadd.f32 %v1737, %v1779
    %v1781 = vpop.f32.mrf.mxu0
    %1782 = vdwg.mxu0
    %1783 = vmatpush.bf16.msra.mxu0 %v1042
    %1784 = vmatpush.bf16.msra.mxu0 %v1040
    %1785 = vmatpush.bf16.msra.mxu0 %v1038
    %1786 = vmatpush.bf16.msra.mxu0 %v1036
    %1787 = vmatpush.bf16.msra.mxu0 %v1034
    %1788 = vmatpush.bf16.msra.mxu0 %v1032
    %1789 = vmatpush.bf16.msra.mxu0 %v1030
    %1790 = vmatpush.bf16.msra.mxu0 %v1028
    %1791 = vmatmul.bf16.gmra.mxu0 %v424
    %v1792 = vpop.f32.mrf.mxu0
    %v1793 = vadd.f32 %v1750, %v1792
    %v1794 = vpop.f32.mrf.mxu0
    %v1795 = vadd.f32 %v1752, %v1794
    %1796 = vmatmul.bf16.gmra.mxu0 %v433
    %v1797 = vpop.f32.mrf.mxu0
    %v1798 = vadd.f32 %v1755, %v1797
    %v1799 = vpop.f32.mrf.mxu0
    %v1800 = vadd.f32 %v1757, %v1799
    %1801 = vmatmul.bf16.gmra.mxu0 %v442
    %v1802 = vpop.f32.mrf.mxu0
    %v1803 = vadd.f32 %v1760, %v1802
    %v1804 = vpop.f32.mrf.mxu0
    %v1805 = vadd.f32 %v1762, %v1804
    %1806 = vmatmul.bf16.gmra.mxu0 %v451
    %v1807 = vpop.f32.mrf.mxu0
    %v1808 = vadd.f32 %v1765, %v1807
    %v1809 = vpop.f32.mrf.mxu0
    %v1810 = vadd.f32 %v1767, %v1809
    %1811 = vmatmul.bf16.gmra.mxu0 %v460
    %v1812 = vpop.f32.mrf.mxu0
    %v1813 = vadd.f32 %v1770, %v1812
    %v1814 = vpop.f32.mrf.mxu0
    %v1815 = vadd.f32 %v1772, %v1814
    %1816 = vmatmul.bf16.gmra.mxu0 %v469
    %v1817 = vpop.f32.mrf.mxu0
    %v1818 = vadd.f32 %v1775, %v1817
    %v1819 = vpop.f32.mrf.mxu0
    %v1820 = vadd.f32 %v1777, %v1819
    %1821 = vmatmul.bf16.gmra.mxu0 %v478
    %v1822 = vpop.f32.mrf.mxu0
    %v1823 = vadd.f32 %v1780, %v1822
    %v1824 = vpop.f32.mrf.mxu0
    %1825 = vdwg.mxu0
    %1826 = vmatpush.bf16.msra.mxu0 %v1058
    %1827 = vmatpush.bf16.msra.mxu0 %v1056
    %1828 = vmatpush.bf16.msra.mxu0 %v1054
    %1829 = vmatpush.bf16.msra.mxu0 %v1052
    %1830 = vmatpush.bf16.msra.mxu0 %v1050
    %1831 = vmatpush.bf16.msra.mxu0 %v1048
    %1832 = vmatpush.bf16.msra.mxu0 %v1046
    %1833 = vmatpush.bf16.msra.mxu0 %v1044
    %1834 = vmatmul.bf16.gmra.mxu0 %v425
    %v1835 = vpop.f32.mrf.mxu0
    %v1836 = vadd.f32 %v1793, %v1835
    %v1837 = vpop.f32.mrf.mxu0
    %v1838 = vadd.f32 %v1795, %v1837
    %1839 = vmatmul.bf16.gmra.mxu0 %v434
    %v1840 = vpop.f32.mrf.mxu0
    %v1841 = vadd.f32 %v1798, %v1840
    %v1842 = vpop.f32.mrf.mxu0
    %v1843 = vadd.f32 %v1800, %v1842
    %1844 = vmatmul.bf16.gmra.mxu0 %v443
    %v1845 = vpop.f32.mrf.mxu0
    %v1846 = vadd.f32 %v1803, %v1845
    %v1847 = vpop.f32.mrf.mxu0
    %v1848 = vadd.f32 %v1805, %v1847
    %1849 = vmatmul.bf16.gmra.mxu0 %v452
    %v1850 = vpop.f32.mrf.mxu0
    %v1851 = vadd.f32 %v1808, %v1850
    %v1852 = vpop.f32.mrf.mxu0
    %v1853 = vadd.f32 %v1810, %v1852
    %1854 = vmatmul.bf16.gmra.mxu0 %v461
    %v1855 = vpop.f32.mrf.mxu0
    %v1856 = vadd.f32 %v1813, %v1855
    %v1857 = vpop.f32.mrf.mxu0
    %v1858 = vadd.f32 %v1815, %v1857
    %1859 = vmatmul.bf16.gmra.mxu0 %v470
    %v1860 = vpop.f32.mrf.mxu0
    %v1861 = vadd.f32 %v1818, %v1860
    %v1862 = vpop.f32.mrf.mxu0
    %v1863 = vadd.f32 %v1820, %v1862
    %1864 = vmatmul.bf16.gmra.mxu0 %v479
    %v1865 = vpop.f32.mrf.mxu0
    %v1866 = vadd.f32 %v1823, %v1865
    %v1867 = vpop.f32.mrf.mxu0
    %1868 = vdwg.mxu0
    %1869 = vmatpush.bf16.msra.mxu0 %v1074
    %1870 = vmatpush.bf16.msra.mxu0 %v1072
    %1871 = vmatpush.bf16.msra.mxu0 %v1070
    %1872 = vmatpush.bf16.msra.mxu0 %v1068
    %1873 = vmatpush.bf16.msra.mxu0 %v1066
    %1874 = vmatpush.bf16.msra.mxu0 %v1064
    %1875 = vmatpush.bf16.msra.mxu0 %v1062
    %1876 = vmatpush.bf16.msra.mxu0 %v1060
    %1877 = vmatmul.bf16.gmra.mxu0 %v426
    %v1878 = vpop.f32.mrf.mxu0
    %v1879 = vadd.f32 %v1836, %v1878
    %v1880 = vpop.f32.mrf.mxu0
    %v1881 = vadd.f32 %v1838, %v1880
    %1882 = vmatmul.bf16.gmra.mxu0 %v435
    %v1883 = vpop.f32.mrf.mxu0
    %v1884 = vadd.f32 %v1841, %v1883
    %v1885 = vpop.f32.mrf.mxu0
    %v1886 = vadd.f32 %v1843, %v1885
    %1887 = vmatmul.bf16.gmra.mxu0 %v444
    %v1888 = vpop.f32.mrf.mxu0
    %v1889 = vadd.f32 %v1846, %v1888
    %v1890 = vpop.f32.mrf.mxu0
    %v1891 = vadd.f32 %v1848, %v1890
    %1892 = vmatmul.bf16.gmra.mxu0 %v453
    %v1893 = vpop.f32.mrf.mxu0
    %v1894 = vadd.f32 %v1851, %v1893
    %v1895 = vpop.f32.mrf.mxu0
    %v1896 = vadd.f32 %v1853, %v1895
    %1897 = vmatmul.bf16.gmra.mxu0 %v462
    %v1898 = vpop.f32.mrf.mxu0
    %v1899 = vadd.f32 %v1856, %v1898
    %v1900 = vpop.f32.mrf.mxu0
    %v1901 = vadd.f32 %v1858, %v1900
    %1902 = vmatmul.bf16.gmra.mxu0 %v471
    %v1903 = vpop.f32.mrf.mxu0
    %v1904 = vadd.f32 %v1861, %v1903
    %v1905 = vpop.f32.mrf.mxu0
    %v1906 = vadd.f32 %v1863, %v1905
    %1907 = vmatmul.bf16.gmra.mxu0 %v480
    %v1908 = vpop.f32.mrf.mxu0
    %v1909 = vadd.f32 %v1866, %v1908
    %v1910 = vpop.f32.mrf.mxu0
    %1911 = vdwg.mxu0
    %1912 = vmatpush.bf16.msra.mxu0 %v1090
    %1913 = vmatpush.bf16.msra.mxu0 %v1088
    %1914 = vmatpush.bf16.msra.mxu0 %v1086
    %1915 = vmatpush.bf16.msra.mxu0 %v1084
    %1916 = vmatpush.bf16.msra.mxu0 %v1082
    %1917 = vmatpush.bf16.msra.mxu0 %v1080
    %1918 = vmatpush.bf16.msra.mxu0 %v1078
    %1919 = vmatpush.bf16.msra.mxu0 %v1076
    %1920 = vmatmul.bf16.gmra.mxu0 %v427
    %v1921 = vpop.f32.mrf.mxu0
    %v1922 = vadd.f32 %v1879, %v1921
    %v1923 = vpop.f32.mrf.mxu0
    %v1924 = vadd.f32 %v1881, %v1923
    %1925 = vmatmul.bf16.gmra.mxu0 %v436
    %v1926 = vpop.f32.mrf.mxu0
    %v1927 = vadd.f32 %v1884, %v1926
    %v1928 = vpop.f32.mrf.mxu0
    %v1929 = vadd.f32 %v1886, %v1928
    %1930 = vmatmul.bf16.gmra.mxu0 %v445
    %v1931 = vpop.f32.mrf.mxu0
    %v1932 = vadd.f32 %v1889, %v1931
    %v1933 = vpop.f32.mrf.mxu0
    %v1934 = vadd.f32 %v1891, %v1933
    %1935 = vmatmul.bf16.gmra.mxu0 %v454
    %v1936 = vpop.f32.mrf.mxu0
    %v1937 = vadd.f32 %v1894, %v1936
    %v1938 = vpop.f32.mrf.mxu0
    %v1939 = vadd.f32 %v1896, %v1938
    %1940 = vmatmul.bf16.gmra.mxu0 %v463
    %v1941 = vpop.f32.mrf.mxu0
    %v1942 = vadd.f32 %v1899, %v1941
    %v1943 = vpop.f32.mrf.mxu0
    %v1944 = vadd.f32 %v1901, %v1943
    %1945 = vmatmul.bf16.gmra.mxu0 %v472
    %v1946 = vpop.f32.mrf.mxu0
    %v1947 = vadd.f32 %v1904, %v1946
    %v1948 = vpop.f32.mrf.mxu0
    %v1949 = vadd.f32 %v1906, %v1948
    %1950 = vmatmul.bf16.gmra.mxu0 %v481
    %v1951 = vpop.f32.mrf.mxu0
    %v1952 = vadd.f32 %v1909, %v1951
    %v1953 = vpop.f32.mrf.mxu0
    %1954 = vdwg.mxu0
    %1955 = vmatpush.bf16.msra.mxu0 %v1106
    %1956 = vmatpush.bf16.msra.mxu0 %v1104
    %1957 = vmatpush.bf16.msra.mxu0 %v1102
    %1958 = vmatpush.bf16.msra.mxu0 %v1100
    %1959 = vmatpush.bf16.msra.mxu0 %v1098
    %1960 = vmatpush.bf16.msra.mxu0 %v1096
    %1961 = vmatpush.bf16.msra.mxu0 %v1094
    %1962 = vmatpush.bf16.msra.mxu0 %v1092
    %1963 = vmatmul.bf16.gmra.mxu0 %v428
    %v1964 = vpop.f32.mrf.mxu0
    %v1965 = vadd.f32 %v1922, %v1964
    %v1966 = vpop.f32.mrf.mxu0
    %v1967 = vadd.f32 %v1924, %v1966
    %1968 = vmatmul.bf16.gmra.mxu0 %v437
    %v1969 = vpop.f32.mrf.mxu0
    %v1970 = vadd.f32 %v1927, %v1969
    %v1971 = vpop.f32.mrf.mxu0
    %v1972 = vadd.f32 %v1929, %v1971
    %1973 = vmatmul.bf16.gmra.mxu0 %v446
    %v1974 = vpop.f32.mrf.mxu0
    %v1975 = vadd.f32 %v1932, %v1974
    %v1976 = vpop.f32.mrf.mxu0
    %v1977 = vadd.f32 %v1934, %v1976
    %1978 = vmatmul.bf16.gmra.mxu0 %v455
    %v1979 = vpop.f32.mrf.mxu0
    %v1980 = vadd.f32 %v1937, %v1979
    %v1981 = vpop.f32.mrf.mxu0
    %v1982 = vadd.f32 %v1939, %v1981
    %1983 = vmatmul.bf16.gmra.mxu0 %v464
    %v1984 = vpop.f32.mrf.mxu0
    %v1985 = vadd.f32 %v1942, %v1984
    %v1986 = vpop.f32.mrf.mxu0
    %v1987 = vadd.f32 %v1944, %v1986
    %1988 = vmatmul.bf16.gmra.mxu0 %v473
    %v1989 = vpop.f32.mrf.mxu0
    %v1990 = vadd.f32 %v1947, %v1989
    %v1991 = vpop.f32.mrf.mxu0
    %v1992 = vadd.f32 %v1949, %v1991
    %1993 = vmatmul.bf16.gmra.mxu0 %v482
    %v1994 = vpop.f32.mrf.mxu0
    %v1995 = vadd.f32 %v1952, %v1994
    %v1996 = vpop.f32.mrf.mxu0
    %1997 = vdwg.mxu0
    %1998 = vmatpush.bf16.msra.mxu0 %v1122
    %1999 = vmatpush.bf16.msra.mxu0 %v1120
    %2000 = vmatpush.bf16.msra.mxu0 %v1118
    %2001 = vmatpush.bf16.msra.mxu0 %v1116
    %2002 = vmatpush.bf16.msra.mxu0 %v1114
    %2003 = vmatpush.bf16.msra.mxu0 %v1112
    %2004 = vmatpush.bf16.msra.mxu0 %v1110
    %2005 = vmatpush.bf16.msra.mxu0 %v1108
    %2006 = vmatmul.bf16.gmra.mxu0 %v429
    %v2007 = vpop.f32.mrf.mxu0
    %v2008 = vadd.f32 %v1965, %v2007
    %v2009 = vpop.f32.mrf.mxu0
    %v2010 = vadd.f32 %v1967, %v2009
    %2011 = vmatmul.bf16.gmra.mxu0 %v438
    %v2012 = vpop.f32.mrf.mxu0
    %v2013 = vadd.f32 %v1970, %v2012
    %v2014 = vpop.f32.mrf.mxu0
    %v2015 = vadd.f32 %v1972, %v2014
    %2016 = vmatmul.bf16.gmra.mxu0 %v447
    %v2017 = vpop.f32.mrf.mxu0
    %v2018 = vadd.f32 %v1975, %v2017
    %v2019 = vpop.f32.mrf.mxu0
    %v2020 = vadd.f32 %v1977, %v2019
    %2021 = vmatmul.bf16.gmra.mxu0 %v456
    %v2022 = vpop.f32.mrf.mxu0
    %v2023 = vadd.f32 %v1980, %v2022
    %v2024 = vpop.f32.mrf.mxu0
    %v2025 = vadd.f32 %v1982, %v2024
    %2026 = vmatmul.bf16.gmra.mxu0 %v465
    %v2027 = vpop.f32.mrf.mxu0
    %v2028 = vadd.f32 %v1985, %v2027
    %v2029 = vpop.f32.mrf.mxu0
    %v2030 = vadd.f32 %v1987, %v2029
    %2031 = vmatmul.bf16.gmra.mxu0 %v474
    %v2032 = vpop.f32.mrf.mxu0
    %v2033 = vadd.f32 %v1990, %v2032
    %v2034 = vpop.f32.mrf.mxu0
    %v2035 = vadd.f32 %v1992, %v2034
    %2036 = vmatmul.bf16.gmra.mxu0 %v483
    %v2037 = vpop.f32.mrf.mxu0
    %v2038 = vadd.f32 %v1995, %v2037
    %v2039 = vpop.f32.mrf.mxu0
    %2040 = vdwg.mxu0
    %v2041 = vpack.c.bf16 %v2008, %v1621
    %v2042 = vpack.c.bf16 %v2010, %v1623
    %v2043 = vpack.c.bf16 %v2013, %v1626
    %v2044 = vpack.c.bf16 %v2015, %v1628
    %v2045 = vpack.c.bf16 %v2018, %v1631
    %v2046 = vpack.c.bf16 %v2020, %v1633
    %v2047 = vpack.c.bf16 %v2023, %v1636
    %v2048 = vpack.c.bf16 %v2025, %v1638
    %v2049 = vpack.c.bf16 %v2028, %v1641
    %v2050 = vpack.c.bf16 %v2030, %v1643
    %v2051 = vpack.c.bf16 %v2033, %v1646
    %v2052 = vpack.c.bf16 %v2035, %v1648
    %v2053 = vpack.c.bf16 %v2038, %v1651
    %2054 = vst [vmem:[%s2] sm:$0xff] %v2041
    %2055 = vst [vmem:[%s2 + $0x8] sm:$0xff] %v2042
    %2056 = vst [vmem:[%s2 + $0x10] sm:$0xff] %v2043
    %2057 = vst [vmem:[%s2 + $0x18] sm:$0xff] %v2044
    %2058 = vst [vmem:[%s2 + $0x20] sm:$0xff] %v2045
    %2059 = vst [vmem:[%s2 + $0x28] sm:$0xff] %v2046
    %2060 = vst [vmem:[%s2 + $0x30] sm:$0xff] %v2047
    %2061 = vst [vmem:[%s2 + $0x38] sm:$0xff] %v2048
    %2062 = vst [vmem:[%s2 + $0x40] sm:$0xff] %v2049
    %2063 = vst [vmem:[%s2 + $0x48] sm:$0xff] %v2050
    %2064 = vst [vmem:[%s2 + $0x50] sm:$0xff] %v2051
    %2065 = vst [vmem:[%s2 + $0x58] sm:$0xff] %v2052
    %2066 = vst [vmem:[%s2 + $0x60] sm:$0x11] %v2053
    %v2067 = vadd.f32 %v1621, %v1623
    %v2068 = vadd.f32 %v2067, %v1626
    %v2069 = vadd.f32 %v2068, %v1628
    %v2070 = vadd.f32 %v2069, %v1631
    %v2071 = vadd.f32 %v2070, %v1633
    %v2072 = vadd.f32 %v2071, %v1636
    %v2073 = vadd.f32 %v2072, %v1638
    %v2074 = vadd.f32 %v2073, %v1641
    %v2075 = vadd.f32 %v2074, %v1643
    %v2076 = vadd.f32 %v2075, %v1646
    %v2077 = vadd.f32 %v2076, %v1648
    %vm2078 = vcmask 1041408
    %v2079 = vsel %vm2078, %v1651, 0.0
    %v2080 = vadd.f32 %v2077, %v2079
    %v2081 = vrot.slane %v2080, 4
    %v2082 = vadd.f32 %v2080, %v2081
    %v2083 = vrot.slane %v2082, 2
    %v2084 = vadd.f32 %v2082, %v2083
    %v2085 = vrot.slane %v2084, 1
    %v2086 = vadd.f32 %v2084, %v2085
    %v2087 = vadd.f32 %v2008, %v2010
    %v2088 = vadd.f32 %v2087, %v2013
    %v2089 = vadd.f32 %v2088, %v2015
    %v2090 = vadd.f32 %v2089, %v2018
    %v2091 = vadd.f32 %v2090, %v2020
    %v2092 = vadd.f32 %v2091, %v2023
    %v2093 = vadd.f32 %v2092, %v2025
    %v2094 = vadd.f32 %v2093, %v2028
    %v2095 = vadd.f32 %v2094, %v2030
    %v2096 = vadd.f32 %v2095, %v2033
    %v2097 = vadd.f32 %v2096, %v2035
    %v2098 = vsel %vm2078, %v2038, 0.0
    %v2099 = vadd.f32 %v2097, %v2098
    %v2100 = vrot.slane %v2099, 4
    %v2101 = vadd.f32 %v2099, %v2100
    %v2102 = vrot.slane %v2101, 2
    %v2103 = vadd.f32 %v2101, %v2102
    %v2104 = vrot.slane %v2103, 1
    %v2105 = vadd.f32 %v2103, %v2104
    %v2108 = vrot.slane %v2105, 7
    %vm2109 = vcmask 1040384
    %v2110 = vsel %vm2109, %v2086, %v2108
    %v2112 = vlaneseq
    %vm2113 = vcmp.ge.s32.totalorder %v2112, 0
    %vm2114 = vcmp.lt.s32.totalorder %v2112, 256
    %vm2115 = vmand %vm2113, %vm2114
    %2116 = vst.msk [vmem:[%s3] sm:$0x3] %vm2115, %v2110
    %v2117 = vmul.f32 %v1621, %v1621
    %v2118 = vmul.f32 %v2008, %v2008
    %v2119 = vmul.f32 %v1623, %v1623
    %v2120 = vmul.f32 %v2010, %v2010
    %v2121 = vmul.f32 %v1626, %v1626
    %v2122 = vmul.f32 %v2013, %v2013
    %v2123 = vmul.f32 %v1628, %v1628
    %v2124 = vmul.f32 %v2015, %v2015
    %v2125 = vmul.f32 %v1631, %v1631
    %v2126 = vmul.f32 %v2018, %v2018
    %v2127 = vmul.f32 %v1633, %v1633
    %v2128 = vmul.f32 %v2020, %v2020
    %v2129 = vmul.f32 %v1636, %v1636
    %v2130 = vmul.f32 %v2023, %v2023
    %v2131 = vmul.f32 %v1638, %v1638
    %v2132 = vmul.f32 %v2025, %v2025
    %v2133 = vmul.f32 %v1641, %v1641
    %v2134 = vmul.f32 %v2028, %v2028
    %v2135 = vmul.f32 %v1643, %v1643
    %v2136 = vmul.f32 %v2030, %v2030
    %v2137 = vmul.f32 %v1646, %v1646
    %v2138 = vmul.f32 %v2033, %v2033
    %v2139 = vmul.f32 %v1648, %v1648
    %v2140 = vmul.f32 %v2035, %v2035
    %v2141 = vmul.f32 %v1651, %v1651
    %v2142 = vmul.f32 %v2038, %v2038
    %v2143 = vadd.f32 %v2117, %v2119
    %v2144 = vadd.f32 %v2143, %v2121
    %v2145 = vadd.f32 %v2144, %v2123
    %v2146 = vadd.f32 %v2145, %v2125
    %v2147 = vadd.f32 %v2146, %v2127
    %v2148 = vadd.f32 %v2147, %v2129
    %v2149 = vadd.f32 %v2148, %v2131
    %v2150 = vadd.f32 %v2149, %v2133
    %v2151 = vadd.f32 %v2150, %v2135
    %v2152 = vadd.f32 %v2151, %v2137
    %v2153 = vadd.f32 %v2152, %v2139
    %v2154 = vsel %vm2078, %v2141, 0.0
    %v2155 = vadd.f32 %v2153, %v2154
    %v2156 = vrot.slane %v2155, 4
    %v2157 = vadd.f32 %v2155, %v2156
    %v2158 = vrot.slane %v2157, 2
    %v2159 = vadd.f32 %v2157, %v2158
    %v2160 = vrot.slane %v2159, 1
    %v2161 = vadd.f32 %v2159, %v2160
    %v2162 = vadd.f32 %v2118, %v2120
    %v2163 = vadd.f32 %v2162, %v2122
    %v2164 = vadd.f32 %v2163, %v2124
    %v2165 = vadd.f32 %v2164, %v2126
    %v2166 = vadd.f32 %v2165, %v2128
    %v2167 = vadd.f32 %v2166, %v2130
    %v2168 = vadd.f32 %v2167, %v2132
    %v2169 = vadd.f32 %v2168, %v2134
    %v2170 = vadd.f32 %v2169, %v2136
    %v2171 = vadd.f32 %v2170, %v2138
    %v2172 = vadd.f32 %v2171, %v2140
    %v2173 = vsel %vm2078, %v2142, 0.0
    %v2174 = vadd.f32 %v2172, %v2173
    %v2175 = vrot.slane %v2174, 4
    %v2176 = vadd.f32 %v2174, %v2175
    %v2177 = vrot.slane %v2176, 2
    %v2178 = vadd.f32 %v2176, %v2177
    %v2179 = vrot.slane %v2178, 1
    %v2180 = vadd.f32 %v2178, %v2179
    %v2183 = vrot.slane %v2180, 7
    %v2184 = vsel %vm2109, %v2161, %v2183
    %2186 = vst.msk [vmem:[%s4] sm:$0x3] %vm2115, %v2184
    // Predicated region
    $region14: #{p_net_forward.7} parent=1 // pred_check
      _
    $region15: #{p_net_forward.7} parent=1 // pred_check_branch
      %2188 = sbr.rel (0) target = $region17
    $region16: #{p_net_forward.7} parent=1 // pred_region
      _
    $region17: #{p_net_forward.7} parent=1 // pred_fallthru
      _
    // Predicated region
    $region18: #{p_net_forward.7} parent=1 // pred_check
      _
    $region19: #{p_net_forward.7} parent=1 // pred_check_branch
      %2190 = sbr.rel (0) target = $region21
    $region20: #{p_net_forward.7} parent=1 // pred_region
      _
    $region21: #{p_net_forward.7} parent=1 // pred_fallthru
      _
    // Predicated region
    $region22: #{p_net_forward.7} parent=1 // pred_check
      _
    $region23: #{p_net_forward.7} parent=1 // pred_check_branch
      %2192 = sbr.rel (0) target = $region25
    $region24: #{p_net_forward.7} parent=1 // pred_region
      _
    $region25: #{p_net_forward.7} parent=1 // pred_fallthru
      _
    // Predicated region
    $region26: #{p_net_forward.7} parent=1 // pred_check
      _
    $region27: #{p_net_forward.7} parent=1 // pred_check_branch
      %2194 = sbr.rel (0) target = $region29
    $region28: #{p_net_forward.7} parent=1 // pred_region
      _
    $region29: #{p_net_forward.7} parent=1 // pred_fallthru
      _
    // Predicated region
    $region30: #{p_net_forward.7} parent=1 // pred_check
      _
    $region31: #{p_net_forward.7} parent=1 // pred_check_branch
      %2196 = sbr.rel (0) target = $region33
    $region32: #{p_net_forward.7} parent=1 // pred_region
      _
    $region33: #{p_net_forward.7} parent=1 // pred_fallthru
      _
    // Predicated region
    $region34: #{p_net_forward.7} parent=1 // pred_check
      _
    $region35: #{p_net_forward.7} parent=1 // pred_check_branch
      %2198 = sbr.rel (0) target = $region37
    $region36: #{p_net_forward.7} parent=1 // pred_region
      _
    $region37: #{p_net_forward.7} parent=1 // pred_fallthru
      _
    %2199 = vsyncpa [#allocation3], 1

// kernel: p_net_forward.5
$region0: #{p_net_forward.5}
  #allocation0 [shape = 'u32[]', space=smem, size = 0x4, offset = 0x4, fixed_abs, tag = 'smem constant byte address 0x4 - core index']
  #allocation1 [shape = 'u32[72,128]{1,0:T(1,128)}', space=vmem, size = 0x9000, scoped, tag = 'internal scratch']
  #allocation2 [shape = 'bf16[2,1024]{1,0:T(2,128)(2,1)}', space=vmem, size = 0x1000, scoped, tag = 'scratch operand']
  %s0 = inlined_call_operand.vmem [shape: bf16[2,14], index: 0, kind: input, shape index: {}]
  %s1 = inlined_call_operand.hbm [shape: bf16[14,1024], index: 1, kind: input, shape index: {}]
  %s2 = inlined_call_operand.hbm [shape: f32[1,1024], index: 2, kind: input, shape index: {}]
  %s3 = inlined_call_operand.hbm [shape: f32[1,1024], index: 3, kind: input, shape index: {}]
  %s4 = inlined_call_operand.hbm [shape: bf16[7,1024,896], index: 4, kind: input, shape index: {}]
  %s5 = inlined_call_operand.vmem [shape: bf16[2,6272], index: 5, kind: output, shape index: {0}]
  %s6 = inlined_call_operand.vmem [shape: f32[7,1,896], index: 6, kind: output, shape index: {1}]
  %s7 = inlined_call_operand.vmem [shape: f32[7,1,896], index: 7, kind: output, shape index: {2}]
  %8 = xla_tuple %s5, %s6, %s7
  %s9 = sld [smem:[#allocation0]]
  $region89: #{p_net_forward.5} parent=0
    _
  %s11 = ssub.s32 1, %s9
  %s12 = scalar_select 0, %s11, %s9
  $region1: #{p_net_forward.5} parent=0
    #allocation3 [shape = 'u8[32768]{0}', space=vmem, size = 0x8000, scoped, tag = 'input window, operand 1, single buffered']
    #allocation4 [shape = 's32[2]{0}', space=sflag, size = 0x8, scoped, tag = 'scoped memory for p_net_forward.5']
    #allocation5 [shape = 'u8[4096]{0}', space=vmem, size = 0x1000, scoped, tag = 'input window, operand 2, single buffered']
    #allocation6 [shape = 's32[1]{0}', space=sflag, size = 0x4, scoped, tag = 'scoped memory for p_net_forward.5']
    #allocation7 [shape = 'u8[4096]{0}', space=vmem, size = 0x1000, scoped, tag = 'input window, operand 3, single buffered']
    #allocation8 [shape = 'u8[3670016]{0}', space=vmem, size = 0x380000, scoped, tag = 'input window, operand 4']
    #allocation9 [shape = 's32[2]{0}', space=sflag, size = 0x8, scoped, tag = 'scoped memory for p_net_forward.5']
    %13 = vsyncpa [#allocation4], 0
    %14 = vsyncpa [#allocation6], 0
    %15 = vsyncpa [#allocation9], 0
    %s16 = scalar_lea.sflag [#allocation9], 1
    %17 = vsyncpa %s16, 0
    loop: start=0, step=1, limit=9
    $region2: #{p_net_forward.5} parent=1 // loop_pre_header
      _
    $region3: #{p_net_forward.5} parent=1 // loop_header
      %s19 = sphi 0, %s23
      %p20 = scmp.ge.s32.totalorder %s19, 9
      %s27 = sphi 0, %s27
      %s29 = sphi 0, %s27
      %s30 = sphi 0, %s29
      %s44 = sphi 0, %s30
      %s48 = sphi 0, %s48
      %s50 = sphi 0, %s48
      %s51 = sphi 0, %s50
      %s65 = sphi 0, %s51
      %s69 = sphi 0, %s69
      %s71 = sphi 0, %s69
      %s72 = sphi 0, %s71
      %s86 = sphi 0, %s72
      %s90 = sphi 0, %s90
      %s92 = sphi 0, %s90
      %s93 = sphi 0, %s92
      %s107 = sphi 0, %s93
      %s113 = sphi 0, %s115
      %s116 = sphi 0, %s113
      %s117 = sphi 0, %s116
      %s133 = sphi 0, %s117
      %s139 = sphi 0, %s141
      %s142 = sphi 0, %s139
      %s143 = sphi 0, %s142
      %s159 = sphi 0, %s143
      %s165 = sphi 0, %s167
      %s168 = sphi 0, %s165
      %s169 = sphi 0, %s168
      %s185 = sphi 0, %s169
      %s191 = sphi 0, %s193
      %s194 = sphi 0, %s191
      %s195 = sphi 0, %s194
      %s211 = sphi 0, %s195
    $region4: #{p_net_forward.5} parent=1 // loop_header_branch
      %22 = sbr.rel (%p20) target = $region8
    $region5: #{p_net_forward.5} parent=1 // loop_body
      %s24 = ssub.s32 %s19, 1
      %s25 = ssub.s32 %s19, 2
      %s26 = sadd.s32 %s19, 1
      %s28 = sadd.s32 %s27, 1
      %p31 = scmp.eq.s32.totalorder %s19, 6
      %p32 = scmp.ne.s32.totalorder %s27, %s29
      %p33 = scmp.eq.s32.totalorder %s19, 0
      %p34 = por %p32, %p33
      %p35 = scmp.ne.s32.totalorder %s27, %s29
      %p36 = scmp.eq.s32.totalorder %s24, 6
      %p37 = por %p35, %p36
      %p38 = scmp.ne.s32.totalorder %s29, %s30
      %p39 = scmp.eq.s32.totalorder %s24, 0
      %p40 = por %p38, %p39
      %p41 = scmp.ne.s32.totalorder %s29, %s30
      %p42 = scmp.eq.s32.totalorder %s25, 6
      %p43 = por %p41, %p42
      %p45 = scmp.ne.s32.totalorder %s30, %s44
      %p46 = scmp.eq.s32.totalorder %s25, 0
      %p47 = por %p45, %p46
      %s49 = sadd.s32 %s48, 1
      %p52 = scmp.eq.s32.totalorder %s19, 6
      %p53 = scmp.ne.s32.totalorder %s48, %s50
      %p54 = scmp.eq.s32.totalorder %s19, 0
      %p55 = por %p53, %p54
      %p56 = scmp.ne.s32.totalorder %s48, %s50
      %p57 = scmp.eq.s32.totalorder %s24, 6
      %p58 = por %p56, %p57
      %p59 = scmp.ne.s32.totalorder %s50, %s51
      %p60 = scmp.eq.s32.totalorder %s24, 0
      %p61 = por %p59, %p60
      %p62 = scmp.ne.s32.totalorder %s50, %s51
      %p63 = scmp.eq.s32.totalorder %s25, 6
      %p64 = por %p62, %p63
      %p66 = scmp.ne.s32.totalorder %s51, %s65
      %p67 = scmp.eq.s32.totalorder %s25, 0
      %p68 = por %p66, %p67
      %s70 = sadd.s32 %s69, 1
      %p73 = scmp.eq.s32.totalorder %s19, 6
      %p74 = scmp.ne.s32.totalorder %s69, %s71
      %p75 = scmp.eq.s32.totalorder %s19, 0
      %p76 = por %p74, %p75
      %p77 = scmp.ne.s32.totalorder %s69, %s71
      %p78 = scmp.eq.s32.totalorder %s24, 6
      %p79 = por %p77, %p78
      %p80 = scmp.ne.s32.totalorder %s71, %s72
      %p81 = scmp.eq.s32.totalorder %s24, 0
      %p82 = por %p80, %p81
      %p83 = scmp.ne.s32.totalorder %s71, %s72
      %p84 = scmp.eq.s32.totalorder %s25, 6
      %p85 = por %p83, %p84
      %p87 = scmp.ne.s32.totalorder %s72, %s86
      %p88 = scmp.eq.s32.totalorder %s25, 0
      %p89 = por %p87, %p88
      %s91 = sadd.s32 %s90, 1
      %p94 = scmp.eq.s32.totalorder %s19, 6
      %p95 = scmp.ne.s32.totalorder %s90, %s92
      %p96 = scmp.eq.s32.totalorder %s19, 0
      %p97 = por %p95, %p96
      %p98 = scmp.ne.s32.totalorder %s90, %s92
      %p99 = scmp.eq.s32.totalorder %s24, 6
      %p100 = por %p98, %p99
      %p101 = scmp.ne.s32.totalorder %s92, %s93
      %p102 = scmp.eq.s32.totalorder %s24, 0
      %p103 = por %p101, %p102
      %p104 = scmp.ne.s32.totalorder %s92, %s93
      %p105 = scmp.eq.s32.totalorder %s25, 6
      %p106 = por %p104, %p105
      %p108 = scmp.ne.s32.totalorder %s93, %s107
      %p109 = scmp.eq.s32.totalorder %s25, 0
      %p110 = por %p108, %p109
      %s111 = ssub.s32 %s19, %s26
      %p112 = scmp.eq.s32.totalorder %s111, 0
      %s114 = sadd.s32 %s113, 1
      %s115 = scalar_select %p112, %s113, %s114
      %p118 = pneg %p112
      %p119 = scmp.eq.s32.totalorder %s19, 6
      %p120 = por %p118, %p119
      %p121 = scmp.ne.s32.totalorder %s113, %s116
      %p122 = scmp.eq.s32.totalorder %s19, 0
      %p123 = por %p121, %p122
      %p124 = scmp.ne.s32.totalorder %s113, %s116
      %p125 = scmp.eq.s32.totalorder %s24, 6
      %p126 = por %p124, %p125
      %p127 = scmp.ne.s32.totalorder %s116, %s117
      %p128 = scmp.eq.s32.totalorder %s24, 0
      %p129 = por %p127, %p128
      %p130 = scmp.ne.s32.totalorder %s116, %s117
      %p131 = scmp.eq.s32.totalorder %s25, 6
      %p132 = por %p130, %p131
      %p134 = scmp.ne.s32.totalorder %s117, %s133
      %p135 = scmp.eq.s32.totalorder %s25, 0
      %p136 = por %p134, %p135
      %s137 = ssub.s32 %s19, %s26
      %p138 = scmp.eq.s32.totalorder %s137, 0
      %s140 = sadd.s32 %s139, 1
      %s141 = scalar_select %p138, %s139, %s140
      %p144 = pneg %p138
      %p145 = scmp.eq.s32.totalorder %s19, 6
      %p146 = por %p144, %p145
      %p147 = scmp.ne.s32.totalorder %s139, %s142
      %p148 = scmp.eq.s32.totalorder %s19, 0
      %p149 = por %p147, %p148
      %p150 = scmp.ne.s32.totalorder %s139, %s142
      %p151 = scmp.eq.s32.totalorder %s24, 6
      %p152 = por %p150, %p151
      %p153 = scmp.ne.s32.totalorder %s142, %s143
      %p154 = scmp.eq.s32.totalorder %s24, 0
      %p155 = por %p153, %p154
      %p156 = scmp.ne.s32.totalorder %s142, %s143
      %p157 = scmp.eq.s32.totalorder %s25, 6
      %p158 = por %p156, %p157
      %p160 = scmp.ne.s32.totalorder %s143, %s159
      %p161 = scmp.eq.s32.totalorder %s25, 0
      %p162 = por %p160, %p161
      %s163 = ssub.s32 %s19, %s26
      %p164 = scmp.eq.s32.totalorder %s163, 0
      %s166 = sadd.s32 %s165, 1
      %s167 = scalar_select %p164, %s165, %s166
      %p170 = pneg %p164
      %p171 = scmp.eq.s32.totalorder %s19, 6
      %p172 = por %p170, %p171
      %p173 = scmp.ne.s32.totalorder %s165, %s168
      %p174 = scmp.eq.s32.totalorder %s19, 0
      %p175 = por %p173, %p174
      %p176 = scmp.ne.s32.totalorder %s165, %s168
      %p177 = scmp.eq.s32.totalorder %s24, 6
      %p178 = por %p176, %p177
      %p179 = scmp.ne.s32.totalorder %s168, %s169
      %p180 = scmp.eq.s32.totalorder %s24, 0
      %p181 = por %p179, %p180
      %p182 = scmp.ne.s32.totalorder %s168, %s169
      %p183 = scmp.eq.s32.totalorder %s25, 6
      %p184 = por %p182, %p183
      %p186 = scmp.ne.s32.totalorder %s169, %s185
      %p187 = scmp.eq.s32.totalorder %s25, 0
      %p188 = por %p186, %p187
      %s189 = ssub.s32 %s19, %s26
      %p190 = scmp.eq.s32.totalorder %s189, 0
      %s192 = sadd.s32 %s191, 1
      %s193 = scalar_select %p190, %s191, %s192
      %p196 = pneg %p190
      %p197 = scmp.eq.s32.totalorder %s19, 6
      %p198 = por %p196, %p197
      %p199 = scmp.ne.s32.totalorder %s191, %s194
      %p200 = scmp.eq.s32.totalorder %s19, 0
      %p201 = por %p199, %p200
      %p202 = scmp.ne.s32.totalorder %s191, %s194
      %p203 = scmp.eq.s32.totalorder %s24, 6
      %p204 = por %p202, %p203
      %p205 = scmp.ne.s32.totalorder %s194, %s195
      %p206 = scmp.eq.s32.totalorder %s24, 0
      %p207 = por %p205, %p206
      %p208 = scmp.ne.s32.totalorder %s194, %s195
      %p209 = scmp.eq.s32.totalorder %s25, 6
      %p210 = por %p208, %p209
      %p212 = scmp.ne.s32.totalorder %s195, %s211
      %p213 = scmp.eq.s32.totalorder %s25, 0
      %p214 = por %p212, %p213
      %p215 = scmp.le.s32.totalorder 1, %s19
      %p216 = scmp.lt.s32.totalorder %s19, 8
      %p217 = pnand %p215, %p216
      %p218 = pneg %p217
      // Predicated region
      $region9: #{p_net_forward.5} parent=5 // pred_check
        _
      $region10: #{p_net_forward.5} parent=5 // pred_check_branch
        %220 = sbr.rel (%p217) target = $region12
      $region11: #{p_net_forward.5} parent=5 // pred_region
        %s221 = ssub.s32 %s19, 1
        // Predicated region
        $region13: #{p_net_forward.5} parent=11 // pred_check
          %p222 = pneg %p40
        $region14: #{p_net_forward.5} parent=11 // pred_check_branch
          %224 = sbr.rel (%p222) target = $region16
        $region15: #{p_net_forward.5} parent=11 // pred_region
          _
        $region16: #{p_net_forward.5} parent=11 // pred_fallthru
          _
        // Predicated region
        $region17: #{p_net_forward.5} parent=11 // pred_check
          %p225 = pneg %p61
        $region18: #{p_net_forward.5} parent=11 // pred_check_branch
          %227 = sbr.rel (%p225) target = $region20
        $region19: #{p_net_forward.5} parent=11 // pred_region
          %229 = vsyncadd [#allocation4], 0
          %s230 = sshll.u32 %s1, 4
          %s231 = int_to_ptr.hbm [resolvable:$true] %s230
          %s232 = sshll.u32 [#allocation3], 4
          %s233 = int_to_ptr.vmem [resolvable:$true] %s232
          %238 = dma.hbm_to_vmem [thread:$0]  %s231, 1024, %s233, [#allocation4], 512, 512, 32
        $region20: #{p_net_forward.5} parent=11 // pred_fallthru
          _
        // Predicated region
        $region21: #{p_net_forward.5} parent=11 // pred_check
          %p239 = pneg %p82
        $region22: #{p_net_forward.5} parent=11 // pred_check_branch
          %241 = sbr.rel (%p239) target = $region24
        $region23: #{p_net_forward.5} parent=11 // pred_region
          %243 = vsyncadd [#allocation6], 0
          %s245 = sshll.u32 %s2, 4
          %s246 = int_to_ptr.hbm [resolvable:$true] %s245
          %s247 = sshll.u32 [#allocation5], 4
          %s248 = int_to_ptr.vmem [resolvable:$true] %s247
          %250 = dma.hbm_to_vmem [thread:$0]  %s246, 128, %s248, [#allocation6]
        $region24: #{p_net_forward.5} parent=11 // pred_fallthru
          _
        // Predicated region
        $region25: #{p_net_forward.5} parent=11 // pred_check
          %p251 = pneg %p103
        $region26: #{p_net_forward.5} parent=11 // pred_check_branch
          %253 = sbr.rel (%p251) target = $region28
        $region27: #{p_net_forward.5} parent=11 // pred_region
          %255 = vsyncadd [#allocation6], 0
          %s257 = sshll.u32 %s3, 4
          %s258 = int_to_ptr.hbm [resolvable:$true] %s257
          %s259 = sshll.u32 [#allocation7], 4
          %s260 = int_to_ptr.vmem [resolvable:$true] %s259
          %262 = dma.hbm_to_vmem [thread:$0]  %s258, 128, %s260, [#allocation6]
        $region28: #{p_net_forward.5} parent=11 // pred_fallthru
          _
      $region12: #{p_net_forward.5} parent=5 // pred_fallthru
        _
      %p263 = scmp.lt.s32.totalorder %s19, 7
      // Predicated region
      $region29: #{p_net_forward.5} parent=5 // pred_check
        %p264 = pneg %p263
      $region30: #{p_net_forward.5} parent=5 // pred_check_branch
        %266 = sbr.rel (%p264) target = $region32
      $region31: #{p_net_forward.5} parent=5 // pred_region
        // Predicated region
        $region33: #{p_net_forward.5} parent=31 // pred_check
          %p267 = pneg %p123
        $region34: #{p_net_forward.5} parent=31 // pred_check_branch
          %269 = sbr.rel (%p267) target = $region36
        $region35: #{p_net_forward.5} parent=31 // pred_region
          %s270 = sand.u32 %s113, 1
          %s271 = scalar_lea.sflag [#allocation9], %s270
          %s272 = sand.u32 %s113, 1
          %s273 = smul.addr %s272, 3584
          %s274 = scalar_lea.vmem [#allocation8], %s273
          %276 = vsyncadd %s271, 0
          %s277 = smul.addr %s19, 896
          %s278 = smul.addr %s277, 4
          %s279 = scalar_lea.hbm %s4, %s278
          %s280 = sshll.u32 %s279, 4
          %s281 = int_to_ptr.hbm [resolvable:$true] %s280
          %s282 = sshll.u32 %s274, 4
          %s283 = int_to_ptr.vmem [resolvable:$true] %s282
          %288 = dma.hbm_to_vmem [thread:$0]  %s281, 57344, %s283, %s271, 448, 448, 28
        $region36: #{p_net_forward.5} parent=31 // pred_fallthru
          _
      $region32: #{p_net_forward.5} parent=5 // pred_fallthru
        _
      %p289 = scmp.le.s32.totalorder 1, %s19
      %p290 = scmp.lt.s32.totalorder %s19, 8
      %p291 = pnand %p289, %p290
      %p292 = pneg %p291
      // Predicated region
      $region37: #{p_net_forward.5} parent=5 // pred_check
        _
      $region38: #{p_net_forward.5} parent=5 // pred_check_branch
        %294 = sbr.rel (%p291) target = $region40
      $region39: #{p_net_forward.5} parent=5 // pred_region
        %s295 = ssub.s32 %s19, 1
        // Predicated region
        $region41: #{p_net_forward.5} parent=39 // pred_check
          %p296 = pneg %p61
        $region42: #{p_net_forward.5} parent=39 // pred_check_branch
          %298 = sbr.rel (%p296) target = $region44
        $region43: #{p_net_forward.5} parent=39 // pred_region
          %300 = dma.done [#allocation4], 1024
        $region44: #{p_net_forward.5} parent=39 // pred_fallthru
          _
        // Predicated region
        $region45: #{p_net_forward.5} parent=39 // pred_check
          %p301 = pneg %p82
        $region46: #{p_net_forward.5} parent=39 // pred_check_branch
          %303 = sbr.rel (%p301) target = $region48
        $region47: #{p_net_forward.5} parent=39 // pred_region
          %305 = dma.done [#allocation6], 128
        $region48: #{p_net_forward.5} parent=39 // pred_fallthru
          _
        // Predicated region
        $region49: #{p_net_forward.5} parent=39 // pred_check
          %p306 = pneg %p103
        $region50: #{p_net_forward.5} parent=39 // pred_check_branch
          %308 = sbr.rel (%p306) target = $region52
        $region51: #{p_net_forward.5} parent=39 // pred_region
          %310 = dma.done [#allocation6], 128
        $region52: #{p_net_forward.5} parent=39 // pred_fallthru
          _
        %s311 = sand.u32 %s116, 1
        %s312 = scalar_lea.sflag [#allocation9], %s311
        %s313 = sand.u32 %s116, 1
        %s314 = smul.addr %s313, 3584
        %s315 = scalar_lea.vmem [#allocation8], %s314
        // Predicated region
        $region53: #{p_net_forward.5} parent=39 // pred_check
          %p316 = pneg %p129
        $region54: #{p_net_forward.5} parent=39 // pred_check_branch
          %318 = sbr.rel (%p316) target = $region56
        $region55: #{p_net_forward.5} parent=39 // pred_region
          %320 = dma.done %s312, 57344
        $region56: #{p_net_forward.5} parent=39 // pred_fallthru
          _
        %p321 = pneg %p40
        %p322 = pneg %p37
        %p323 = pneg %p61
        %p324 = pneg %p58
        %p325 = pneg %p82
        %p326 = pneg %p79
        %p327 = pneg %p103
        %p328 = pneg %p100
        %s329 = sand.u32 %s116, 1
        %s330 = scalar_lea.sflag [#allocation9], %s329
        %s331 = sand.u32 %s116, 1
        %s332 = smul.addr %s331, 3584
        %s333 = scalar_lea.vmem [#allocation8], %s332
        %p334 = pneg %p129
        %p335 = pneg %p126
        %p336 = pneg %p155
        %p337 = pneg %p152
        %s338 = smul.u32 7, %s24
        %p339 = scmp.lt.s32.totalorder %s338, 48
        %s340 = scalar_select %p339, %s338, 48
        %s341 = scalar_lea.vmem %s5, %s340
        %p342 = pneg %p181
        %p343 = pneg %p178
        %p344 = scmp.lt.s32.totalorder %s24, 6
        %s345 = scalar_select %p344, %s24, 6
        %s346 = smul.addr %s345, 7
        %s347 = scalar_lea.vmem %s6, %s346
        %p348 = pneg %p207
        %p349 = pneg %p204
        %p350 = scmp.lt.s32.totalorder %s24, 6
        %s351 = scalar_select %p350, %s24, 6
        %s352 = smul.addr %s351, 7
        %s353 = scalar_lea.vmem %s7, %s352
        %s354 = smul.u32 7, %s24
        %p355 = scmp.lt.s32.totalorder %s354, 48
        %s356 = scalar_select %p355, %s354, 48
        %s357 = scalar_lea.vmem %s5, %s356
        %s358 = smul.u32 7, %s24
        %p359 = scmp.lt.s32.totalorder %s24, 6
        %s360 = scalar_select %p359, %s24, 6
        %s361 = smul.addr %s360, 7
        %s362 = scalar_lea.vmem %s6, %s361
        %p363 = scmp.lt.s32.totalorder %s24, 6
        %s364 = scalar_select %p363, %s24, 6
        %s365 = smul.addr %s364, 7
        %s366 = scalar_lea.vmem %s7, %s365
        %p368 = scmp.eq.s32.totalorder %s24, 0
        // Predicated region
        $region57: #{p_net_forward.5} parent=39 // pred_check
          %p369 = pneg %p368
        $region58: #{p_net_forward.5} parent=39 // pred_check_branch
          %371 = sbr.rel (%p369) target = $region60
        $region59: #{p_net_forward.5} parent=39 // pred_region
          %v372 = vld [vmem:[%s0] sm:$0x1]
          %v373 = vld [vmem:[#allocation3] sm:$0xff]
          %v374 = vld [vmem:[#allocation3 + $0x8] sm:$0xff]
          %v375 = vld [vmem:[#allocation3 + $0x10] sm:$0xff]
          %v376 = vld [vmem:[#allocation3 + $0x18] sm:$0xff]
          %v377 = vld [vmem:[#allocation3 + $0x20] sm:$0x77]
          %v378 = vld [vmem:[#allocation3 + $0x28] sm:$0x77]
          %v379 = vld [vmem:[#allocation3 + $0x30] sm:$0x77]
          %v380 = vld [vmem:[#allocation3 + $0x38] sm:$0x77]
          %v389 = vunpack.c.l.b16 %v373
          %v390 = vunpack.c.h.b16 %v373
          %v391 = vunpack.c.l.b16 %v374
          %v392 = vunpack.c.h.b16 %v374
          %v393 = vunpack.c.l.b16 %v375
          %v394 = vunpack.c.h.b16 %v375
          %v395 = vunpack.c.l.b16 %v376
          %v396 = vunpack.c.h.b16 %v376
          %v397 = vunpack.c.l.b16 %v377
          %v398 = vunpack.c.h.b16 %v377
          %v399 = vunpack.c.l.b16 %v378
          %v400 = vunpack.c.h.b16 %v378
          %v401 = vunpack.c.l.b16 %v379
          %v402 = vunpack.c.h.b16 %v379
          %v403 = vunpack.c.l.b16 %v380
          %v404 = vunpack.c.h.b16 %v380
          %v405 = vpack.c.b16 %v397, %v389
          %v406 = vpack.c.b16 %v398, %v390
          %v407 = vpack.c.b16 %v399, %v391
          %v408 = vpack.c.b16 %v400, %v392
          %v409 = vpack.c.b16 %v401, %v393
          %v410 = vpack.c.b16 %v402, %v394
          %v411 = vpack.c.b16 %v403, %v395
          %v412 = vpack.c.b16 %v404, %v396
          %vm413 = vcmask 113664
          %v415 = vsel %vm413, %v372, 0
          %vm417 = vcmask 1046528
          %v419 = vsel %vm417, %v405, 0
          %v422 = vsel %vm417, %v406, 0
          %v425 = vsel %vm417, %v407, 0
          %v428 = vsel %vm417, %v408, 0
          %v431 = vsel %vm417, %v409, 0
          %v434 = vsel %vm417, %v410, 0
          %v437 = vsel %vm417, %v411, 0
          %v440 = vsel %vm417, %v412, 0
          %442 = vmatpush.bf16.msra.mxu0 0
          %443 = vmatpush.bf16.msra.mxu0 0
          %444 = vmatpush.bf16.msra.mxu0 0
          %445 = vmatpush.bf16.msra.mxu0 0
          %446 = vmatpush.bf16.msra.mxu0 0
          %447 = vmatpush.bf16.msra.mxu0 0
          %448 = vmatpush.bf16.msra.mxu0 0
          %449 = vmatpush.bf16.msra.mxu0 %v419
          %450 = vmatmul.bf16.gmra.mxu0 %v415
          %v451 = vpop.f32.mrf.mxu0
          %v452 = vadd.f32 0.0, %v451
          %v453 = vpop.f32.mrf.mxu0
          %454 = vdwg.mxu0
          %455 = vmatpush.bf16.msra.mxu0 0
          %456 = vmatpush.bf16.msra.mxu0 0
          %457 = vmatpush.bf16.msra.mxu0 0
          %458 = vmatpush.bf16.msra.mxu0 0
          %459 = vmatpush.bf16.msra.mxu0 0
          %460 = vmatpush.bf16.msra.mxu0 0
          %461 = vmatpush.bf16.msra.mxu0 0
          %462 = vmatpush.bf16.msra.mxu0 %v422
          %463 = vmatmul.bf16.gmra.mxu0 %v415
          %v464 = vpop.f32.mrf.mxu0
          %v465 = vadd.f32 0.0, %v464
          %v466 = vpop.f32.mrf.mxu0
          %467 = vdwg.mxu0
          %468 = vmatpush.bf16.msra.mxu0 0
          %469 = vmatpush.bf16.msra.mxu0 0
          %470 = vmatpush.bf16.msra.mxu0 0
          %471 = vmatpush.bf16.msra.mxu0 0
          %472 = vmatpush.bf16.msra.mxu0 0
          %473 = vmatpush.bf16.msra.mxu0 0
          %474 = vmatpush.bf16.msra.mxu0 0
          %475 = vmatpush.bf16.msra.mxu0 %v425
          %476 = vmatmul.bf16.gmra.mxu0 %v415
          %v477 = vpop.f32.mrf.mxu0
          %v478 = vadd.f32 0.0, %v477
          %v479 = vpop.f32.mrf.mxu0
          %480 = vdwg.mxu0
          %481 = vmatpush.bf16.msra.mxu0 0
          %482 = vmatpush.bf16.msra.mxu0 0
          %483 = vmatpush.bf16.msra.mxu0 0
          %484 = vmatpush.bf16.msra.mxu0 0
          %485 = vmatpush.bf16.msra.mxu0 0
          %486 = vmatpush.bf16.msra.mxu0 0
          %487 = vmatpush.bf16.msra.mxu0 0
          %488 = vmatpush.bf16.msra.mxu0 %v428
          %489 = vmatmul.bf16.gmra.mxu0 %v415
          %v490 = vpop.f32.mrf.mxu0
          %v491 = vadd.f32 0.0, %v490
          %v492 = vpop.f32.mrf.mxu0
          %493 = vdwg.mxu0
          %494 = vmatpush.bf16.msra.mxu0 0
          %495 = vmatpush.bf16.msra.mxu0 0
          %496 = vmatpush.bf16.msra.mxu0 0
          %497 = vmatpush.bf16.msra.mxu0 0
          %498 = vmatpush.bf16.msra.mxu0 0
          %499 = vmatpush.bf16.msra.mxu0 0
          %500 = vmatpush.bf16.msra.mxu0 0
          %501 = vmatpush.bf16.msra.mxu0 %v431
          %502 = vmatmul.bf16.gmra.mxu0 %v415
          %v503 = vpop.f32.mrf.mxu0
          %v504 = vadd.f32 0.0, %v503
          %v505 = vpop.f32.mrf.mxu0
          %506 = vdwg.mxu0
          %507 = vmatpush.bf16.msra.mxu0 0
          %508 = vmatpush.bf16.msra.mxu0 0
          %509 = vmatpush.bf16.msra.mxu0 0
          %510 = vmatpush.bf16.msra.mxu0 0
          %511 = vmatpush.bf16.msra.mxu0 0
          %512 = vmatpush.bf16.msra.mxu0 0
          %513 = vmatpush.bf16.msra.mxu0 0
          %514 = vmatpush.bf16.msra.mxu0 %v434
          %515 = vmatmul.bf16.gmra.mxu0 %v415
          %v516 = vpop.f32.mrf.mxu0
          %v517 = vadd.f32 0.0, %v516
          %v518 = vpop.f32.mrf.mxu0
          %519 = vdwg.mxu0
          %520 = vmatpush.bf16.msra.mxu0 0
          %521 = vmatpush.bf16.msra.mxu0 0
          %522 = vmatpush.bf16.msra.mxu0 0
          %523 = vmatpush.bf16.msra.mxu0 0
          %524 = vmatpush.bf16.msra.mxu0 0
          %525 = vmatpush.bf16.msra.mxu0 0
          %526 = vmatpush.bf16.msra.mxu0 0
          %527 = vmatpush.bf16.msra.mxu0 %v437
          %528 = vmatmul.bf16.gmra.mxu0 %v415
          %v529 = vpop.f32.mrf.mxu0
          %v530 = vadd.f32 0.0, %v529
          %v531 = vpop.f32.mrf.mxu0
          %532 = vdwg.mxu0
          %533 = vmatpush.bf16.msra.mxu0 0
          %534 = vmatpush.bf16.msra.mxu0 0
          %535 = vmatpush.bf16.msra.mxu0 0
          %536 = vmatpush.bf16.msra.mxu0 0
          %537 = vmatpush.bf16.msra.mxu0 0
          %538 = vmatpush.bf16.msra.mxu0 0
          %539 = vmatpush.bf16.msra.mxu0 0
          %540 = vmatpush.bf16.msra.mxu0 %v440
          %541 = vmatmul.bf16.gmra.mxu0 %v415
          %v542 = vpop.f32.mrf.mxu0
          %v543 = vadd.f32 0.0, %v542
          %v544 = vpop.f32.mrf.mxu0
          %545 = vdwg.mxu0
          %vm546 = vcmask 1041408
          %v547 = vsel %vm546, %v452, 0.0
          %v548 = vrot.slane %v547, 4
          %v549 = vadd.f32 %v547, %v548
          %v550 = vrot.slane %v549, 2
          %v551 = vadd.f32 %v549, %v550
          %v552 = vrot.slane %v551, 1
          %v553 = vadd.f32 %v551, %v552
          %v554 = vsel %vm546, %v465, 0.0
          %v555 = vrot.slane %v554, 4
          %v556 = vadd.f32 %v554, %v555
          %v557 = vrot.slane %v556, 2
          %v558 = vadd.f32 %v556, %v557
          %v559 = vrot.slane %v558, 1
          %v560 = vadd.f32 %v558, %v559
          %v561 = vsel %vm546, %v478, 0.0
          %v562 = vrot.slane %v561, 4
          %v563 = vadd.f32 %v561, %v562
          %v564 = vrot.slane %v563, 2
          %v565 = vadd.f32 %v563, %v564
          %v566 = vrot.slane %v565, 1
          %v567 = vadd.f32 %v565, %v566
          %v568 = vsel %vm546, %v491, 0.0
          %v569 = vrot.slane %v568, 4
          %v570 = vadd.f32 %v568, %v569
          %v571 = vrot.slane %v570, 2
          %v572 = vadd.f32 %v570, %v571
          %v573 = vrot.slane %v572, 1
          %v574 = vadd.f32 %v572, %v573
          %v575 = vsel %vm546, %v504, 0.0
          %v576 = vrot.slane %v575, 4
          %v577 = vadd.f32 %v575, %v576
          %v578 = vrot.slane %v577, 2
          %v579 = vadd.f32 %v577, %v578
          %v580 = vrot.slane %v579, 1
          %v581 = vadd.f32 %v579, %v580
          %v582 = vsel %vm546, %v517, 0.0
          %v583 = vrot.slane %v582, 4
          %v584 = vadd.f32 %v582, %v583
          %v585 = vrot.slane %v584, 2
          %v586 = vadd.f32 %v584, %v585
          %v587 = vrot.slane %v586, 1
          %v588 = vadd.f32 %v586, %v587
          %v589 = vsel %vm546, %v530, 0.0
          %v590 = vrot.slane %v589, 4
          %v591 = vadd.f32 %v589, %v590
          %v592 = vrot.slane %v591, 2
          %v593 = vadd.f32 %v591, %v592
          %v594 = vrot.slane %v593, 1
          %v595 = vadd.f32 %v593, %v594
          %v596 = vsel %vm546, %v543, 0.0
          %v597 = vrot.slane %v596, 4
          %v598 = vadd.f32 %v596, %v597
          %v599 = vrot.slane %v598, 2
          %v600 = vadd.f32 %v598, %v599
          %v601 = vrot.slane %v600, 1
          %v602 = vadd.f32 %v600, %v601
          %v603 = vmul.f32 %v553, 0.5
          %v604 = vmul.f32 %v560, 0.5
          %v605 = vmul.f32 %v567, 0.5
          %v606 = vmul.f32 %v574, 0.5
          %v607 = vmul.f32 %v581, 0.5
          %v608 = vmul.f32 %v588, 0.5
          %v609 = vmul.f32 %v595, 0.5
          %v610 = vmul.f32 %v602, 0.5
          %v611 = vsub.f32 %v452, %v603
          %v612 = vsub.f32 %v465, %v604
          %v613 = vsub.f32 %v478, %v605
          %v614 = vsub.f32 %v491, %v606
          %v615 = vsub.f32 %v504, %v607
          %v616 = vsub.f32 %v517, %v608
          %v617 = vsub.f32 %v530, %v609
          %v618 = vsub.f32 %v543, %v610
          %v619 = vmul.f32 %v611, %v611
          %v620 = vmul.f32 %v612, %v612
          %v621 = vmul.f32 %v613, %v613
          %v622 = vmul.f32 %v614, %v614
          %v623 = vmul.f32 %v615, %v615
          %v624 = vmul.f32 %v616, %v616
          %v625 = vmul.f32 %v617, %v617
          %v626 = vmul.f32 %v618, %v618
          %v627 = vsel %vm546, %v619, 0.0
          %v628 = vrot.slane %v627, 4
          %v629 = vadd.f32 %v627, %v628
          %v630 = vrot.slane %v629, 2
          %v631 = vadd.f32 %v629, %v630
          %v632 = vrot.slane %v631, 1
          %v633 = vadd.f32 %v631, %v632
          %v634 = vsel %vm546, %v620, 0.0
          %v635 = vrot.slane %v634, 4
          %v636 = vadd.f32 %v634, %v635
          %v637 = vrot.slane %v636, 2
          %v638 = vadd.f32 %v636, %v637
          %v639 = vrot.slane %v638, 1
          %v640 = vadd.f32 %v638, %v639
          %v641 = vsel %vm546, %v621, 0.0
          %v642 = vrot.slane %v641, 4
          %v643 = vadd.f32 %v641, %v642
          %v644 = vrot.slane %v643, 2
          %v645 = vadd.f32 %v643, %v644
          %v646 = vrot.slane %v645, 1
          %v647 = vadd.f32 %v645, %v646
          %v648 = vsel %vm546, %v622, 0.0
          %v649 = vrot.slane %v648, 4
          %v650 = vadd.f32 %v648, %v649
          %v651 = vrot.slane %v650, 2
          %v652 = vadd.f32 %v650, %v651
          %v653 = vrot.slane %v652, 1
          %v654 = vadd.f32 %v652, %v653
          %v655 = vsel %vm546, %v623, 0.0
          %v656 = vrot.slane %v655, 4
          %v657 = vadd.f32 %v655, %v656
          %v658 = vrot.slane %v657, 2
          %v659 = vadd.f32 %v657, %v658
          %v660 = vrot.slane %v659, 1
          %v661 = vadd.f32 %v659, %v660
          %v662 = vsel %vm546, %v624, 0.0
          %v663 = vrot.slane %v662, 4
          %v664 = vadd.f32 %v662, %v663
          %v665 = vrot.slane %v664, 2
          %v666 = vadd.f32 %v664, %v665
          %v667 = vrot.slane %v666, 1
          %v668 = vadd.f32 %v666, %v667
          %v669 = vsel %vm546, %v625, 0.0
          %v670 = vrot.slane %v669, 4
          %v671 = vadd.f32 %v669, %v670
          %v672 = vrot.slane %v671, 2
          %v673 = vadd.f32 %v671, %v672
          %v674 = vrot.slane %v673, 1
          %v675 = vadd.f32 %v673, %v674
          %v676 = vsel %vm546, %v626, 0.0
          %v677 = vrot.slane %v676, 4
          %v678 = vadd.f32 %v676, %v677
          %v679 = vrot.slane %v678, 2
          %v680 = vadd.f32 %v678, %v679
          %v681 = vrot.slane %v680, 1
          %v682 = vadd.f32 %v680, %v681
          %v683 = vmul.f32 %v633, 0.5
          %v684 = vmul.f32 %v640, 0.5
          %v685 = vmul.f32 %v647, 0.5
          %v686 = vmul.f32 %v654, 0.5
          %v687 = vmul.f32 %v661, 0.5
          %v688 = vmul.f32 %v668, 0.5
          %v689 = vmul.f32 %v675, 0.5
          %v690 = vmul.f32 %v682, 0.5
          %v691 = vadd.f32 %v683, 1e-05
          %v692 = vadd.f32 %v684, 1e-05
          %v693 = vadd.f32 %v685, 1e-05
          %v694 = vadd.f32 %v686, 1e-05
          %v695 = vadd.f32 %v687, 1e-05
          %v696 = vadd.f32 %v688, 1e-05
          %v697 = vadd.f32 %v689, 1e-05
          %v698 = vadd.f32 %v690, 1e-05
          %v699 = vrsqrt.pop %v691
          %v700 = vmul.f32 %v699, %v691
          %v701 = vmul.f32 %v700, %v699
          %v702 = vmul.f32 0.5, %v701
          %v703 = vsub.f32 1.5, %v702
          %v704 = vmul.f32 %v699, %v703
          %vm705 = vweird.f32 %v691
          %vm706 = vweird.f32 %v699
          %vm707 = vmor %vm705, %vm706
          %v708 = vsel %vm707, %v699, %v704
          %v709 = vrsqrt.pop %v692
          %v710 = vmul.f32 %v709, %v692
          %v711 = vmul.f32 %v710, %v709
          %v712 = vmul.f32 0.5, %v711
          %v713 = vsub.f32 1.5, %v712
          %v714 = vmul.f32 %v709, %v713
          %vm715 = vweird.f32 %v692
          %vm716 = vweird.f32 %v709
          %vm717 = vmor %vm715, %vm716
          %v718 = vsel %vm717, %v709, %v714
          %v719 = vrsqrt.pop %v693
          %v720 = vmul.f32 %v719, %v693
          %v721 = vmul.f32 %v720, %v719
          %v722 = vmul.f32 0.5, %v721
          %v723 = vsub.f32 1.5, %v722
          %v724 = vmul.f32 %v719, %v723
          %vm725 = vweird.f32 %v693
          %vm726 = vweird.f32 %v719
          %vm727 = vmor %vm725, %vm726
          %v728 = vsel %vm727, %v719, %v724
          %v729 = vrsqrt.pop %v694
          %v730 = vmul.f32 %v729, %v694
          %v731 = vmul.f32 %v730, %v729
          %v732 = vmul.f32 0.5, %v731
          %v733 = vsub.f32 1.5, %v732
          %v734 = vmul.f32 %v729, %v733
          %vm735 = vweird.f32 %v694
          %vm736 = vweird.f32 %v729
          %vm737 = vmor %vm735, %vm736
          %v738 = vsel %vm737, %v729, %v734
          %v739 = vrsqrt.pop %v695
          %v740 = vmul.f32 %v739, %v695
          %v741 = vmul.f32 %v740, %v739
          %v742 = vmul.f32 0.5, %v741
          %v743 = vsub.f32 1.5, %v742
          %v744 = vmul.f32 %v739, %v743
          %vm745 = vweird.f32 %v695
          %vm746 = vweird.f32 %v739
          %vm747 = vmor %vm745, %vm746
          %v748 = vsel %vm747, %v739, %v744
          %v749 = vrsqrt.pop %v696
          %v750 = vmul.f32 %v749, %v696
          %v751 = vmul.f32 %v750, %v749
          %v752 = vmul.f32 0.5, %v751
          %v753 = vsub.f32 1.5, %v752
          %v754 = vmul.f32 %v749, %v753
          %vm755 = vweird.f32 %v696
          %vm756 = vweird.f32 %v749
          %vm757 = vmor %vm755, %vm756
          %v758 = vsel %vm757, %v749, %v754
          %v759 = vrsqrt.pop %v697
          %v760 = vmul.f32 %v759, %v697
          %v761 = vmul.f32 %v760, %v759
          %v762 = vmul.f32 0.5, %v761
          %v763 = vsub.f32 1.5, %v762
          %v764 = vmul.f32 %v759, %v763
          %vm765 = vweird.f32 %v697
          %vm766 = vweird.f32 %v759
          %vm767 = vmor %vm765, %vm766
          %v768 = vsel %vm767, %v759, %v764
          %v769 = vrsqrt.pop %v698
          %v770 = vmul.f32 %v769, %v698
          %v771 = vmul.f32 %v770, %v769
          %v772 = vmul.f32 0.5, %v771
          %v773 = vsub.f32 1.5, %v772
          %v774 = vmul.f32 %v769, %v773
          %vm775 = vweird.f32 %v698
          %vm776 = vweird.f32 %v769
          %vm777 = vmor %vm775, %vm776
          %v778 = vsel %vm777, %v769, %v774
          %v779 = vmul.f32 %v611, %v708
          %v780 = vmul.f32 %v612, %v718
          %v781 = vmul.f32 %v613, %v728
          %v782 = vmul.f32 %v614, %v738
          %v783 = vmul.f32 %v615, %v748
          %v784 = vmul.f32 %v616, %v758
          %v785 = vmul.f32 %v617, %v768
          %v786 = vmul.f32 %v618, %v778
          %v787 = vld [vmem:[#allocation5] sm:$0xff]
          %v789 = vperm.slane %v787, 0
          %v790 = vperm.slane %v787, 1
          %v791 = vperm.slane %v787, 2
          %v792 = vperm.slane %v787, 3
          %v793 = vperm.slane %v787, 4
          %v794 = vperm.slane %v787, 5
          %v795 = vperm.slane %v787, 6
          %v796 = vperm.slane %v787, 7
          %v805 = vmul.f32 %v779, %v789
          %v806 = vmul.f32 %v780, %v790
          %v807 = vmul.f32 %v781, %v791
          %v808 = vmul.f32 %v782, %v792
          %v809 = vmul.f32 %v783, %v793
          %v810 = vmul.f32 %v784, %v794
          %v811 = vmul.f32 %v785, %v795
          %v812 = vmul.f32 %v786, %v796
          %v813 = vld [vmem:[#allocation7] sm:$0xff]
          %v815 = vperm.slane %v813, 0
          %v816 = vperm.slane %v813, 1
          %v817 = vperm.slane %v813, 2
          %v818 = vperm.slane %v813, 3
          %v819 = vperm.slane %v813, 4
          %v820 = vperm.slane %v813, 5
          %v821 = vperm.slane %v813, 6
          %v822 = vperm.slane %v813, 7
          %v831 = vadd.f32 %v805, %v815
          %v832 = vadd.f32 %v806, %v816
          %v833 = vadd.f32 %v807, %v817
          %v834 = vadd.f32 %v808, %v818
          %v835 = vadd.f32 %v809, %v819
          %v836 = vadd.f32 %v810, %v820
          %v837 = vadd.f32 %v811, %v821
          %v838 = vadd.f32 %v812, %v822
          %v839 = vmax.f32 %v831, 0.0
          %v840 = vmax.f32 %v832, 0.0
          %v841 = vmax.f32 %v833, 0.0
          %v842 = vmax.f32 %v834, 0.0
          %v843 = vmax.f32 %v835, 0.0
          %v844 = vmax.f32 %v836, 0.0
          %v845 = vmax.f32 %v837, 0.0
          %v846 = vmax.f32 %v838, 0.0
          %v847 = vpack.c.bf16 %v840, %v839
          %v848 = vpack.c.bf16 %v842, %v841
          %v849 = vpack.c.bf16 %v844, %v843
          %v850 = vpack.c.bf16 %v846, %v845
          %v855 = vrot.slane %v847, 3
          %v856 = vrot.slane %v848, 6
          %v857 = vrot.slane %v848, 1
          %v858 = vrot.slane %v849, 4
          %v859 = vrot.slane %v849, 7
          %v860 = vrot.slane %v850, 2
          %v861 = vrot.slane %v850, 5
          %vm862 = vcmask 1040384
          %v865 = vsel %vm862, %v847, %v855
          %vm866 = vcmask 1042434
          %v869 = vsel %vm866, %v856, %v857
          %v870 = vsel %vm546, %v865, %v869
          %vm871 = vcmask 1044484
          %v874 = vsel %vm871, %v858, %v859
          %vm875 = vcmask 1046534
          %v878 = vsel %vm875, %v860, %v861
          %vm879 = vcmask 1045508
          %v880 = vsel %vm879, %v874, %v878
          %vm881 = vcmask 1043456
          %v882 = vsel %vm881, %v870, %v880
          %884 = vst [vmem:[#allocation2] sm:$0xff] %v882
        $region60: #{p_net_forward.5} parent=39 // pred_fallthru
          _
        %v885 = vld [vmem:[#allocation2] sm:$0xff]
        %v886 = vld [vmem:[%s315] sm:$0xff]
        %v887 = vld [vmem:[%s315 + $0x8] sm:$0xff]
        %v888 = vld [vmem:[%s315 + $0x10] sm:$0xff]
        %v889 = vld [vmem:[%s315 + $0x18] sm:$0xf]
        %v890 = vld [vmem:[%s315 + $0x1c] sm:$0xff]
        %v891 = vld [vmem:[%s315 + $0x24] sm:$0xff]
        %v892 = vld [vmem:[%s315 + $0x2c] sm:$0xff]
        %v893 = vld [vmem:[%s315 + $0x34] sm:$0xf]
        %v894 = vld [vmem:[%s315 + $0x38] sm:$0xff]
        %v895 = vld [vmem:[%s315 + $0x40] sm:$0xff]
        %v896 = vld [vmem:[%s315 + $0x48] sm:$0xff]
        %v897 = vld [vmem:[%s315 + $0x50] sm:$0xf]
        %v898 = vld [vmem:[%s315 + $0x54] sm:$0xff]
        %v899 = vld [vmem:[%s315 + $0x5c] sm:$0xff]
        %v900 = vld [vmem:[%s315 + $0x64] sm:$0xff]
        %v901 = vld [vmem:[%s315 + $0x6c] sm:$0xf]
        %v902 = vld [vmem:[%s315 + $0x70] sm:$0xff]
        %v903 = vld [vmem:[%s315 + $0x78] sm:$0xff]
        %v904 = vld [vmem:[%s315 + $0x80] sm:$0xff]
        %v905 = vld [vmem:[%s315 + $0x88] sm:$0xf]
        %v906 = vld [vmem:[%s315 + $0x8c] sm:$0xff]
        %v907 = vld [vmem:[%s315 + $0x94] sm:$0xff]
        %v908 = vld [vmem:[%s315 + $0x9c] sm:$0xff]
        %v909 = vld [vmem:[%s315 + $0xa4] sm:$0xf]
        %v910 = vld [vmem:[%s315 + $0xa8] sm:$0xff]
        %v911 = vld [vmem:[%s315 + $0xb0] sm:$0xff]
        %v912 = vld [vmem:[%s315 + $0xb8] sm:$0xff]
        %v913 = vld [vmem:[%s315 + $0xc0] sm:$0xf]
        %v914 = vld [vmem:[%s315 + $0xc4] sm:$0xff]
        %v915 = vld [vmem:[%s315 + $0xcc] sm:$0xff]
        %v916 = vld [vmem:[%s315 + $0xd4] sm:$0xff]
        %v917 = vld [vmem:[%s315 + $0xdc] sm:$0xf]
        %v918 = vld [vmem:[%s315 + $0xe0] sm:$0xff]
        %v919 = vld [vmem:[%s315 + $0xe8] sm:$0xff]
        %v920 = vld [vmem:[%s315 + $0xf0] sm:$0xff]
        %v921 = vld [vmem:[%s315 + $0xf8] sm:$0xf]
        %v922 = vld [vmem:[%s315 + $0xfc] sm:$0xff]
        %v923 = vld [vmem:[%s315 + $0x104] sm:$0xff]
        %v924 = vld [vmem:[%s315 + $0x10c] sm:$0xff]
        %v925 = vld [vmem:[%s315 + $0x114] sm:$0xf]
        %v926 = vld [vmem:[%s315 + $0x118] sm:$0xff]
        %v927 = vld [vmem:[%s315 + $0x120] sm:$0xff]
        %v928 = vld [vmem:[%s315 + $0x128] sm:$0xff]
        %v929 = vld [vmem:[%s315 + $0x130] sm:$0xf]
        %v930 = vld [vmem:[%s315 + $0x134] sm:$0xff]
        %v931 = vld [vmem:[%s315 + $0x13c] sm:$0xff]
        %v932 = vld [vmem:[%s315 + $0x144] sm:$0xff]
        %v933 = vld [vmem:[%s315 + $0x14c] sm:$0xf]
        %v934 = vld [vmem:[%s315 + $0x150] sm:$0xff]
        %v935 = vld [vmem:[%s315 + $0x158] sm:$0xff]
        %v936 = vld [vmem:[%s315 + $0x160] sm:$0xff]
        %v937 = vld [vmem:[%s315 + $0x168] sm:$0xf]
        %v938 = vld [vmem:[%s315 + $0x16c] sm:$0xff]
        %v939 = vld [vmem:[%s315 + $0x174] sm:$0xff]
        %v940 = vld [vmem:[%s315 + $0x17c] sm:$0xff]
        %v941 = vld [vmem:[%s315 + $0x184] sm:$0xf]
        %v942 = vld [vmem:[%s315 + $0x188] sm:$0xff]
        %v943 = vld [vmem:[%s315 + $0x190] sm:$0xff]
        %v944 = vld [vmem:[%s315 + $0x198] sm:$0xff]
        %v945 = vld [vmem:[%s315 + $0x1a0] sm:$0xf]
        %v946 = vld [vmem:[%s315 + $0x1a4] sm:$0xff]
        %v947 = vld [vmem:[%s315 + $0x1ac] sm:$0xff]
        %v948 = vld [vmem:[%s315 + $0x1b4] sm:$0xff]
        %v949 = vld [vmem:[%s315 + $0x1bc] sm:$0xf]
        %v950 = vld [vmem:[%s315 + $0x1c0] sm:$0xff]
        %v951 = vld [vmem:[%s315 + $0x1c8] sm:$0xff]
        %v952 = vld [vmem:[%s315 + $0x1d0] sm:$0xff]
        %v953 = vld [vmem:[%s315 + $0x1d8] sm:$0xf]
        %v954 = vld [vmem:[%s315 + $0x1dc] sm:$0xff]
        %v955 = vld [vmem:[%s315 + $0x1e4] sm:$0xff]
        %v956 = vld [vmem:[%s315 + $0x1ec] sm:$0xff]
        %v957 = vld [vmem:[%s315 + $0x1f4] sm:$0xf]
        %v958 = vld [vmem:[%s315 + $0x1f8] sm:$0xff]
        %v959 = vld [vmem:[%s315 + $0x200] sm:$0xff]
        %v960 = vld [vmem:[%s315 + $0x208] sm:$0xff]
        %v961 = vld [vmem:[%s315 + $0x210] sm:$0xf]
        %v962 = vld [vmem:[%s315 + $0x214] sm:$0xff]
        %v963 = vld [vmem:[%s315 + $0x21c] sm:$0xff]
        %v964 = vld [vmem:[%s315 + $0x224] sm:$0xff]
        %v965 = vld [vmem:[%s315 + $0x22c] sm:$0xf]
        %v966 = vld [vmem:[%s315 + $0x230] sm:$0xff]
        %v967 = vld [vmem:[%s315 + $0x238] sm:$0xff]
        %v968 = vld [vmem:[%s315 + $0x240] sm:$0xff]
        %v969 = vld [vmem:[%s315 + $0x248] sm:$0xf]
        %v970 = vld [vmem:[%s315 + $0x24c] sm:$0xff]
        %v971 = vld [vmem:[%s315 + $0x254] sm:$0xff]
        %v972 = vld [vmem:[%s315 + $0x25c] sm:$0xff]
        %v973 = vld [vmem:[%s315 + $0x264] sm:$0xf]
        %v974 = vld [vmem:[%s315 + $0x268] sm:$0xff]
        %v975 = vld [vmem:[%s315 + $0x270] sm:$0xff]
        %v976 = vld [vmem:[%s315 + $0x278] sm:$0xff]
        %v977 = vld [vmem:[%s315 + $0x280] sm:$0xf]
        %v978 = vld [vmem:[%s315 + $0x284] sm:$0xff]
        %v979 = vld [vmem:[%s315 + $0x28c] sm:$0xff]
        %v980 = vld [vmem:[%s315 + $0x294] sm:$0xff]
        %v981 = vld [vmem:[%s315 + $0x29c] sm:$0xf]
        %v982 = vld [vmem:[%s315 + $0x2a0] sm:$0xff]
        %v983 = vld [vmem:[%s315 + $0x2a8] sm:$0xff]
        %v984 = vld [vmem:[%s315 + $0x2b0] sm:$0xff]
        %v985 = vld [vmem:[%s315 + $0x2b8] sm:$0xf]
        %v986 = vld [vmem:[%s315 + $0x2bc] sm:$0xff]
        %v987 = vld [vmem:[%s315 + $0x2c4] sm:$0xff]
        %v988 = vld [vmem:[%s315 + $0x2cc] sm:$0xff]
        %v989 = vld [vmem:[%s315 + $0x2d4] sm:$0xf]
        %v990 = vld [vmem:[%s315 + $0x2d8] sm:$0xff]
        %v991 = vld [vmem:[%s315 + $0x2e0] sm:$0xff]
        %v992 = vld [vmem:[%s315 + $0x2e8] sm:$0xff]
        %v993 = vld [vmem:[%s315 + $0x2f0] sm:$0xf]
        %v994 = vld [vmem:[%s315 + $0x2f4] sm:$0xff]
        %v995 = vld [vmem:[%s315 + $0x2fc] sm:$0xff]
        %v996 = vld [vmem:[%s315 + $0x304] sm:$0xff]
        %v997 = vld [vmem:[%s315 + $0x30c] sm:$0xf]
        %v998 = vld [vmem:[%s315 + $0x310] sm:$0xff]
        %v999 = vld [vmem:[%s315 + $0x318] sm:$0xff]
        %v1000 = vld [vmem:[%s315 + $0x320] sm:$0xff]
        %v1001 = vld [vmem:[%s315 + $0x328] sm:$0xf]
        %v1002 = vld [vmem:[%s315 + $0x32c] sm:$0xff]
        %v1003 = vld [vmem:[%s315 + $0x334] sm:$0xff]
        %v1004 = vld [vmem:[%s315 + $0x33c] sm:$0xff]
        %v1005 = vld [vmem:[%s315 + $0x344] sm:$0xf]
        %v1006 = vld [vmem:[%s315 + $0x348] sm:$0xff]
        %v1007 = vld [vmem:[%s315 + $0x350] sm:$0xff]
        %v1008 = vld [vmem:[%s315 + $0x358] sm:$0xff]
        %v1009 = vld [vmem:[%s315 + $0x360] sm:$0xf]
        %v1010 = vld [vmem:[%s315 + $0x364] sm:$0xff]
        %v1011 = vld [vmem:[%s315 + $0x36c] sm:$0xff]
        %v1012 = vld [vmem:[%s315 + $0x374] sm:$0xff]
        %v1013 = vld [vmem:[%s315 + $0x37c] sm:$0xf]
        %v1014 = vld [vmem:[%s315 + $0x380] sm:$0xff]
        %v1015 = vld [vmem:[%s315 + $0x388] sm:$0xff]
        %v1016 = vld [vmem:[%s315 + $0x390] sm:$0xff]
        %v1017 = vld [vmem:[%s315 + $0x398] sm:$0xf]
        %v1018 = vld [vmem:[%s315 + $0x39c] sm:$0xff]
        %v1019 = vld [vmem:[%s315 + $0x3a4] sm:$0xff]
        %v1020 = vld [vmem:[%s315 + $0x3ac] sm:$0xff]
        %v1021 = vld [vmem:[%s315 + $0x3b4] sm:$0xf]
        %v1022 = vld [vmem:[%s315 + $0x3b8] sm:$0xff]
        %v1023 = vld [vmem:[%s315 + $0x3c0] sm:$0xff]
        %v1024 = vld [vmem:[%s315 + $0x3c8] sm:$0xff]
        %v1025 = vld [vmem:[%s315 + $0x3d0] sm:$0xf]
        %v1026 = vld [vmem:[%s315 + $0x3d4] sm:$0xff]
        %v1027 = vld [vmem:[%s315 + $0x3dc] sm:$0xff]
        %v1028 = vld [vmem:[%s315 + $0x3e4] sm:$0xff]
        %v1029 = vld [vmem:[%s315 + $0x3ec] sm:$0xf]
        %v1030 = vld [vmem:[%s315 + $0x3f0] sm:$0xff]
        %v1031 = vld [vmem:[%s315 + $0x3f8] sm:$0xff]
        %v1032 = vld [vmem:[%s315 + $0x400] sm:$0xff]
        %v1033 = vld [vmem:[%s315 + $0x408] sm:$0xf]
        %v1034 = vld [vmem:[%s315 + $0x40c] sm:$0xff]
        %v1035 = vld [vmem:[%s315 + $0x414] sm:$0xff]
        %v1036 = vld [vmem:[%s315 + $0x41c] sm:$0xff]
        %v1037 = vld [vmem:[%s315 + $0x424] sm:$0xf]
        %v1038 = vld [vmem:[%s315 + $0x428] sm:$0xff]
        %v1039 = vld [vmem:[%s315 + $0x430] sm:$0xff]
        %v1040 = vld [vmem:[%s315 + $0x438] sm:$0xff]
        %v1041 = vld [vmem:[%s315 + $0x440] sm:$0xf]
        %v1042 = vld [vmem:[%s315 + $0x444] sm:$0xff]
        %v1043 = vld [vmem:[%s315 + $0x44c] sm:$0xff]
        %v1044 = vld [vmem:[%s315 + $0x454] sm:$0xff]
        %v1045 = vld [vmem:[%s315 + $0x45c] sm:$0xf]
        %v1046 = vld [vmem:[%s315 + $0x460] sm:$0xff]
        %v1047 = vld [vmem:[%s315 + $0x468] sm:$0xff]
        %v1048 = vld [vmem:[%s315 + $0x470] sm:$0xff]
        %v1049 = vld [vmem:[%s315 + $0x478] sm:$0xf]
        %v1050 = vld [vmem:[%s315 + $0x47c] sm:$0xff]
        %v1051 = vld [vmem:[%s315 + $0x484] sm:$0xff]
        %v1052 = vld [vmem:[%s315 + $0x48c] sm:$0xff]
        %v1053 = vld [vmem:[%s315 + $0x494] sm:$0xf]
        %v1054 = vld [vmem:[%s315 + $0x498] sm:$0xff]
        %v1055 = vld [vmem:[%s315 + $0x4a0] sm:$0xff]
        %v1056 = vld [vmem:[%s315 + $0x4a8] sm:$0xff]
        %v1057 = vld [vmem:[%s315 + $0x4b0] sm:$0xf]
        %v1058 = vld [vmem:[%s315 + $0x4b4] sm:$0xff]
        %v1059 = vld [vmem:[%s315 + $0x4bc] sm:$0xff]
        %v1060 = vld [vmem:[%s315 + $0x4c4] sm:$0xff]
        %v1061 = vld [vmem:[%s315 + $0x4cc] sm:$0xf]
        %v1062 = vld [vmem:[%s315 + $0x4d0] sm:$0xff]
        %v1063 = vld [vmem:[%s315 + $0x4d8] sm:$0xff]
        %v1064 = vld [vmem:[%s315 + $0x4e0] sm:$0xff]
        %v1065 = vld [vmem:[%s315 + $0x4e8] sm:$0xf]
        %v1066 = vld [vmem:[%s315 + $0x4ec] sm:$0xff]
        %v1067 = vld [vmem:[%s315 + $0x4f4] sm:$0xff]
        %v1068 = vld [vmem:[%s315 + $0x4fc] sm:$0xff]
        %v1069 = vld [vmem:[%s315 + $0x504] sm:$0xf]
        %v1070 = vld [vmem:[%s315 + $0x508] sm:$0xff]
        %v1071 = vld [vmem:[%s315 + $0x510] sm:$0xff]
        %v1072 = vld [vmem:[%s315 + $0x518] sm:$0xff]
        %v1073 = vld [vmem:[%s315 + $0x520] sm:$0xf]
        %v1074 = vld [vmem:[%s315 + $0x524] sm:$0xff]
        %v1075 = vld [vmem:[%s315 + $0x52c] sm:$0xff]
        %v1076 = vld [vmem:[%s315 + $0x534] sm:$0xff]
        %v1077 = vld [vmem:[%s315 + $0x53c] sm:$0xf]
        %v1078 = vld [vmem:[%s315 + $0x540] sm:$0xff]
        %v1079 = vld [vmem:[%s315 + $0x548] sm:$0xff]
        %v1080 = vld [vmem:[%s315 + $0x550] sm:$0xff]
        %v1081 = vld [vmem:[%s315 + $0x558] sm:$0xf]
        %v1082 = vld [vmem:[%s315 + $0x55c] sm:$0xff]
        %v1083 = vld [vmem:[%s315 + $0x564] sm:$0xff]
        %v1084 = vld [vmem:[%s315 + $0x56c] sm:$0xff]
        %v1085 = vld [vmem:[%s315 + $0x574] sm:$0xf]
        %v1086 = vld [vmem:[%s315 + $0x578] sm:$0xff]
        %v1087 = vld [vmem:[%s315 + $0x580] sm:$0xff]
        %v1088 = vld [vmem:[%s315 + $0x588] sm:$0xff]
        %v1089 = vld [vmem:[%s315 + $0x590] sm:$0xf]
        %v1090 = vld [vmem:[%s315 + $0x594] sm:$0xff]
        %v1091 = vld [vmem:[%s315 + $0x59c] sm:$0xff]
        %v1092 = vld [vmem:[%s315 + $0x5a4] sm:$0xff]
        %v1093 = vld [vmem:[%s315 + $0x5ac] sm:$0xf]
        %v1094 = vld [vmem:[%s315 + $0x5b0] sm:$0xff]
        %v1095 = vld [vmem:[%s315 + $0x5b8] sm:$0xff]
        %v1096 = vld [vmem:[%s315 + $0x5c0] sm:$0xff]
        %v1097 = vld [vmem:[%s315 + $0x5c8] sm:$0xf]
        %v1098 = vld [vmem:[%s315 + $0x5cc] sm:$0xff]
        %v1099 = vld [vmem:[%s315 + $0x5d4] sm:$0xff]
        %v1100 = vld [vmem:[%s315 + $0x5dc] sm:$0xff]
        %v1101 = vld [vmem:[%s315 + $0x5e4] sm:$0xf]
        %v1102 = vld [vmem:[%s315 + $0x5e8] sm:$0xff]
        %v1103 = vld [vmem:[%s315 + $0x5f0] sm:$0xff]
        %v1104 = vld [vmem:[%s315 + $0x5f8] sm:$0xff]
        %v1105 = vld [vmem:[%s315 + $0x600] sm:$0xf]
        %v1106 = vld [vmem:[%s315 + $0x604] sm:$0xff]
        %v1107 = vld [vmem:[%s315 + $0x60c] sm:$0xff]
        %v1108 = vld [vmem:[%s315 + $0x614] sm:$0xff]
        %v1109 = vld [vmem:[%s315 + $0x61c] sm:$0xf]
        %v1110 = vld [vmem:[%s315 + $0x620] sm:$0xff]
        %v1111 = vld [vmem:[%s315 + $0x628] sm:$0xff]
        %v1112 = vld [vmem:[%s315 + $0x630] sm:$0xff]
        %v1113 = vld [vmem:[%s315 + $0x638] sm:$0xf]
        %v1114 = vld [vmem:[%s315 + $0x63c] sm:$0xff]
        %v1115 = vld [vmem:[%s315 + $0x644] sm:$0xff]
        %v1116 = vld [vmem:[%s315 + $0x64c] sm:$0xff]
        %v1117 = vld [vmem:[%s315 + $0x654] sm:$0xf]
        %v1118 = vld [vmem:[%s315 + $0x658] sm:$0xff]
        %v1119 = vld [vmem:[%s315 + $0x660] sm:$0xff]
        %v1120 = vld [vmem:[%s315 + $0x668] sm:$0xff]
        %v1121 = vld [vmem:[%s315 + $0x670] sm:$0xf]
        %v1122 = vld [vmem:[%s315 + $0x674] sm:$0xff]
        %v1123 = vld [vmem:[%s315 + $0x67c] sm:$0xff]
        %v1124 = vld [vmem:[%s315 + $0x684] sm:$0xff]
        %v1125 = vld [vmem:[%s315 + $0x68c] sm:$0xf]
        %v1126 = vld [vmem:[%s315 + $0x690] sm:$0xff]
        %v1127 = vld [vmem:[%s315 + $0x698] sm:$0xff]
        %v1128 = vld [vmem:[%s315 + $0x6a0] sm:$0xff]
        %v1129 = vld [vmem:[%s315 + $0x6a8] sm:$0xf]
        %v1130 = vld [vmem:[%s315 + $0x6ac] sm:$0xff]
        %v1131 = vld [vmem:[%s315 + $0x6b4] sm:$0xff]
        %v1132 = vld [vmem:[%s315 + $0x6bc] sm:$0xff]
        %v1133 = vld [vmem:[%s315 + $0x6c4] sm:$0xf]
        %v1134 = vld [vmem:[%s315 + $0x6c8] sm:$0xff]
        %v1135 = vld [vmem:[%s315 + $0x6d0] sm:$0xff]
        %v1136 = vld [vmem:[%s315 + $0x6d8] sm:$0xff]
        %v1137 = vld [vmem:[%s315 + $0x6e0] sm:$0xf]
        %v1138 = vld [vmem:[%s315 + $0x6e4] sm:$0xff]
        %v1139 = vld [vmem:[%s315 + $0x6ec] sm:$0xff]
        %v1140 = vld [vmem:[%s315 + $0x6f4] sm:$0xff]
        %v1141 = vld [vmem:[%s315 + $0x6fc] sm:$0xf]
        %v1142 = vld [vmem:[%s315 + $0x700] sm:$0xff]
        %v1143 = vld [vmem:[%s315 + $0x708] sm:$0xff]
        %v1144 = vld [vmem:[%s315 + $0x710] sm:$0xff]
        %v1145 = vld [vmem:[%s315 + $0x718] sm:$0xf]
        %v1146 = vld [vmem:[%s315 + $0x71c] sm:$0xff]
        %v1147 = vld [vmem:[%s315 + $0x724] sm:$0xff]
        %v1148 = vld [vmem:[%s315 + $0x72c] sm:$0xff]
        %v1149 = vld [vmem:[%s315 + $0x734] sm:$0xf]
        %v1150 = vld [vmem:[%s315 + $0x738] sm:$0xff]
        %v1151 = vld [vmem:[%s315 + $0x740] sm:$0xff]
        %v1152 = vld [vmem:[%s315 + $0x748] sm:$0xff]
        %v1153 = vld [vmem:[%s315 + $0x750] sm:$0xf]
        %v1154 = vld [vmem:[%s315 + $0x754] sm:$0xff]
        %v1155 = vld [vmem:[%s315 + $0x75c] sm:$0xff]
        %v1156 = vld [vmem:[%s315 + $0x764] sm:$0xff]
        %v1157 = vld [vmem:[%s315 + $0x76c] sm:$0xf]
        %v1158 = vld [vmem:[%s315 + $0x770] sm:$0xff]
        %v1159 = vld [vmem:[%s315 + $0x778] sm:$0xff]
        %v1160 = vld [vmem:[%s315 + $0x780] sm:$0xff]
        %v1161 = vld [vmem:[%s315 + $0x788] sm:$0xf]
        %v1162 = vld [vmem:[%s315 + $0x78c] sm:$0xff]
        %v1163 = vld [vmem:[%s315 + $0x794] sm:$0xff]
        %v1164 = vld [vmem:[%s315 + $0x79c] sm:$0xff]
        %v1165 = vld [vmem:[%s315 + $0x7a4] sm:$0xf]
        %v1166 = vld [vmem:[%s315 + $0x7a8] sm:$0xff]
        %v1167 = vld [vmem:[%s315 + $0x7b0] sm:$0xff]
        %v1168 = vld [vmem:[%s315 + $0x7b8] sm:$0xff]
        %v1169 = vld [vmem:[%s315 + $0x7c0] sm:$0xf]
        %v1170 = vld [vmem:[%s315 + $0x7c4] sm:$0xff]
        %v1171 = vld [vmem:[%s315 + $0x7cc] sm:$0xff]
        %v1172 = vld [vmem:[%s315 + $0x7d4] sm:$0xff]
        %v1173 = vld [vmem:[%s315 + $0x7dc] sm:$0xf]
        %v1174 = vld [vmem:[%s315 + $0x7e0] sm:$0xff]
        %v1175 = vld [vmem:[%s315 + $0x7e8] sm:$0xff]
        %v1176 = vld [vmem:[%s315 + $0x7f0] sm:$0xff]
        %v1177 = vld [vmem:[%s315 + $0x7f8] sm:$0xf]
        %v1178 = vld [vmem:[%s315 + $0x7fc] sm:$0xff]
        %v1179 = vld [vmem:[%s315 + $0x804] sm:$0xff]
        %v1180 = vld [vmem:[%s315 + $0x80c] sm:$0xff]
        %v1181 = vld [vmem:[%s315 + $0x814] sm:$0xf]
        %v1182 = vld [vmem:[%s315 + $0x818] sm:$0xff]
        %v1183 = vld [vmem:[%s315 + $0x820] sm:$0xff]
        %v1184 = vld [vmem:[%s315 + $0x828] sm:$0xff]
        %v1185 = vld [vmem:[%s315 + $0x830] sm:$0xf]
        %v1186 = vld [vmem:[%s315 + $0x834] sm:$0xff]
        %v1187 = vld [vmem:[%s315 + $0x83c] sm:$0xff]
        %v1188 = vld [vmem:[%s315 + $0x844] sm:$0xff]
        %v1189 = vld [vmem:[%s315 + $0x84c] sm:$0xf]
        %v1190 = vld [vmem:[%s315 + $0x850] sm:$0xff]
        %v1191 = vld [vmem:[%s315 + $0x858] sm:$0xff]
        %v1192 = vld [vmem:[%s315 + $0x860] sm:$0xff]
        %v1193 = vld [vmem:[%s315 + $0x868] sm:$0xf]
        %v1194 = vld [vmem:[%s315 + $0x86c] sm:$0xff]
        %v1195 = vld [vmem:[%s315 + $0x874] sm:$0xff]
        %v1196 = vld [vmem:[%s315 + $0x87c] sm:$0xff]
        %v1197 = vld [vmem:[%s315 + $0x884] sm:$0xf]
        %v1198 = vld [vmem:[%s315 + $0x888] sm:$0xff]
        %v1199 = vld [vmem:[%s315 + $0x890] sm:$0xff]
        %v1200 = vld [vmem:[%s315 + $0x898] sm:$0xff]
        %v1201 = vld [vmem:[%s315 + $0x8a0] sm:$0xf]
        %v1202 = vld [vmem:[%s315 + $0x8a4] sm:$0xff]
        %v1203 = vld [vmem:[%s315 + $0x8ac] sm:$0xff]
        %v1204 = vld [vmem:[%s315 + $0x8b4] sm:$0xff]
        %v1205 = vld [vmem:[%s315 + $0x8bc] sm:$0xf]
        %v1206 = vld [vmem:[%s315 + $0x8c0] sm:$0xff]
        %v1207 = vld [vmem:[%s315 + $0x8c8] sm:$0xff]
        %v1208 = vld [vmem:[%s315 + $0x8d0] sm:$0xff]
        %v1209 = vld [vmem:[%s315 + $0x8d8] sm:$0xf]
        %v1210 = vld [vmem:[%s315 + $0x8dc] sm:$0xff]
        %v1211 = vld [vmem:[%s315 + $0x8e4] sm:$0xff]
        %v1212 = vld [vmem:[%s315 + $0x8ec] sm:$0xff]
        %v1213 = vld [vmem:[%s315 + $0x8f4] sm:$0xf]
        %v1214 = vld [vmem:[%s315 + $0x8f8] sm:$0xff]
        %v1215 = vld [vmem:[%s315 + $0x900] sm:$0xff]
        %v1216 = vld [vmem:[%s315 + $0x908] sm:$0xff]
        %v1217 = vld [vmem:[%s315 + $0x910] sm:$0xf]
        %v1218 = vld [vmem:[%s315 + $0x914] sm:$0xff]
        %v1219 = vld [vmem:[%s315 + $0x91c] sm:$0xff]
        %v1220 = vld [vmem:[%s315 + $0x924] sm:$0xff]
        %v1221 = vld [vmem:[%s315 + $0x92c] sm:$0xf]
        %v1222 = vld [vmem:[%s315 + $0x930] sm:$0xff]
        %v1223 = vld [vmem:[%s315 + $0x938] sm:$0xff]
        %v1224 = vld [vmem:[%s315 + $0x940] sm:$0xff]
        %v1225 = vld [vmem:[%s315 + $0x948] sm:$0xf]
        %v1226 = vld [vmem:[%s315 + $0x94c] sm:$0xff]
        %v1227 = vld [vmem:[%s315 + $0x954] sm:$0xff]
        %v1228 = vld [vmem:[%s315 + $0x95c] sm:$0xff]
        %v1229 = vld [vmem:[%s315 + $0x964] sm:$0xf]
        %v1230 = vld [vmem:[%s315 + $0x968] sm:$0xff]
        %v1231 = vld [vmem:[%s315 + $0x970] sm:$0xff]
        %v1232 = vld [vmem:[%s315 + $0x978] sm:$0xff]
        %v1233 = vld [vmem:[%s315 + $0x980] sm:$0xf]
        %v1234 = vld [vmem:[%s315 + $0x984] sm:$0xff]
        %v1235 = vld [vmem:[%s315 + $0x98c] sm:$0xff]
        %v1236 = vld [vmem:[%s315 + $0x994] sm:$0xff]
        %v1237 = vld [vmem:[%s315 + $0x99c] sm:$0xf]
        %v1238 = vld [vmem:[%s315 + $0x9a0] sm:$0xff]
        %v1239 = vld [vmem:[%s315 + $0x9a8] sm:$0xff]
        %v1240 = vld [vmem:[%s315 + $0x9b0] sm:$0xff]
        %v1241 = vld [vmem:[%s315 + $0x9b8] sm:$0xf]
        %v1242 = vld [vmem:[%s315 + $0x9bc] sm:$0xff]
        %v1243 = vld [vmem:[%s315 + $0x9c4] sm:$0xff]
        %v1244 = vld [vmem:[%s315 + $0x9cc] sm:$0xff]
        %v1245 = vld [vmem:[%s315 + $0x9d4] sm:$0xf]
        %v1246 = vld [vmem:[%s315 + $0x9d8] sm:$0xff]
        %v1247 = vld [vmem:[%s315 + $0x9e0] sm:$0xff]
        %v1248 = vld [vmem:[%s315 + $0x9e8] sm:$0xff]
        %v1249 = vld [vmem:[%s315 + $0x9f0] sm:$0xf]
        %v1250 = vld [vmem:[%s315 + $0x9f4] sm:$0xff]
        %v1251 = vld [vmem:[%s315 + $0x9fc] sm:$0xff]
        %v1252 = vld [vmem:[%s315 + $0xa04] sm:$0xff]
        %v1253 = vld [vmem:[%s315 + $0xa0c] sm:$0xf]
        %v1254 = vld [vmem:[%s315 + $0xa10] sm:$0xff]
        %v1255 = vld [vmem:[%s315 + $0xa18] sm:$0xff]
        %v1256 = vld [vmem:[%s315 + $0xa20] sm:$0xff]
        %v1257 = vld [vmem:[%s315 + $0xa28] sm:$0xf]
        %v1258 = vld [vmem:[%s315 + $0xa2c] sm:$0xff]
        %v1259 = vld [vmem:[%s315 + $0xa34] sm:$0xff]
        %v1260 = vld [vmem:[%s315 + $0xa3c] sm:$0xff]
        %v1261 = vld [vmem:[%s315 + $0xa44] sm:$0xf]
        %v1262 = vld [vmem:[%s315 + $0xa48] sm:$0xff]
        %v1263 = vld [vmem:[%s315 + $0xa50] sm:$0xff]
        %v1264 = vld [vmem:[%s315 + $0xa58] sm:$0xff]
        %v1265 = vld [vmem:[%s315 + $0xa60] sm:$0xf]
        %v1266 = vld [vmem:[%s315 + $0xa64] sm:$0xff]
        %v1267 = vld [vmem:[%s315 + $0xa6c] sm:$0xff]
        %v1268 = vld [vmem:[%s315 + $0xa74] sm:$0xff]
        %v1269 = vld [vmem:[%s315 + $0xa7c] sm:$0xf]
        %v1270 = vld [vmem:[%s315 + $0xa80] sm:$0xff]
        %v1271 = vld [vmem:[%s315 + $0xa88] sm:$0xff]
        %v1272 = vld [vmem:[%s315 + $0xa90] sm:$0xff]
        %v1273 = vld [vmem:[%s315 + $0xa98] sm:$0xf]
        %v1274 = vld [vmem:[%s315 + $0xa9c] sm:$0xff]
        %v1275 = vld [vmem:[%s315 + $0xaa4] sm:$0xff]
        %v1276 = vld [vmem:[%s315 + $0xaac] sm:$0xff]
        %v1277 = vld [vmem:[%s315 + $0xab4] sm:$0xf]
        %v1278 = vld [vmem:[%s315 + $0xab8] sm:$0xff]
        %v1279 = vld [vmem:[%s315 + $0xac0] sm:$0xff]
        %v1280 = vld [vmem:[%s315 + $0xac8] sm:$0xff]
        %v1281 = vld [vmem:[%s315 + $0xad0] sm:$0xf]
        %v1282 = vld [vmem:[%s315 + $0xad4] sm:$0xff]
        %v1283 = vld [vmem:[%s315 + $0xadc] sm:$0xff]
        %v1284 = vld [vmem:[%s315 + $0xae4] sm:$0xff]
        %v1285 = vld [vmem:[%s315 + $0xaec] sm:$0xf]
        %v1286 = vld [vmem:[%s315 + $0xaf0] sm:$0xff]
        %v1287 = vld [vmem:[%s315 + $0xaf8] sm:$0xff]
        %v1288 = vld [vmem:[%s315 + $0xb00] sm:$0xff]
        %v1289 = vld [vmem:[%s315 + $0xb08] sm:$0xf]
        %v1290 = vld [vmem:[%s315 + $0xb0c] sm:$0xff]
        %v1291 = vld [vmem:[%s315 + $0xb14] sm:$0xff]
        %v1292 = vld [vmem:[%s315 + $0xb1c] sm:$0xff]
        %v1293 = vld [vmem:[%s315 + $0xb24] sm:$0xf]
        %v1294 = vld [vmem:[%s315 + $0xb28] sm:$0xff]
        %v1295 = vld [vmem:[%s315 + $0xb30] sm:$0xff]
        %v1296 = vld [vmem:[%s315 + $0xb38] sm:$0xff]
        %v1297 = vld [vmem:[%s315 + $0xb40] sm:$0xf]
        %v1298 = vld [vmem:[%s315 + $0xb44] sm:$0xff]
        %v1299 = vld [vmem:[%s315 + $0xb4c] sm:$0xff]
        %v1300 = vld [vmem:[%s315 + $0xb54] sm:$0xff]
        %v1301 = vld [vmem:[%s315 + $0xb5c] sm:$0xf]
        %v1302 = vld [vmem:[%s315 + $0xb60] sm:$0xff]
        %v1303 = vld [vmem:[%s315 + $0xb68] sm:$0xff]
        %v1304 = vld [vmem:[%s315 + $0xb70] sm:$0xff]
        %v1305 = vld [vmem:[%s315 + $0xb78] sm:$0xf]
        %v1306 = vld [vmem:[%s315 + $0xb7c] sm:$0xff]
        %v1307 = vld [vmem:[%s315 + $0xb84] sm:$0xff]
        %v1308 = vld [vmem:[%s315 + $0xb8c] sm:$0xff]
        %v1309 = vld [vmem:[%s315 + $0xb94] sm:$0xf]
        %v1310 = vld [vmem:[%s315 + $0xb98] sm:$0xff]
        %v1311 = vld [vmem:[%s315 + $0xba0] sm:$0xff]
        %v1312 = vld [vmem:[%s315 + $0xba8] sm:$0xff]
        %v1313 = vld [vmem:[%s315 + $0xbb0] sm:$0xf]
        %v1314 = vld [vmem:[%s315 + $0xbb4] sm:$0xff]
        %v1315 = vld [vmem:[%s315 + $0xbbc] sm:$0xff]
        %v1316 = vld [vmem:[%s315 + $0xbc4] sm:$0xff]
        %v1317 = vld [vmem:[%s315 + $0xbcc] sm:$0xf]
        %v1318 = vld [vmem:[%s315 + $0xbd0] sm:$0xff]
        %v1319 = vld [vmem:[%s315 + $0xbd8] sm:$0xff]
        %v1320 = vld [vmem:[%s315 + $0xbe0] sm:$0xff]
        %v1321 = vld [vmem:[%s315 + $0xbe8] sm:$0xf]
        %v1322 = vld [vmem:[%s315 + $0xbec] sm:$0xff]
        %v1323 = vld [vmem:[%s315 + $0xbf4] sm:$0xff]
        %v1324 = vld [vmem:[%s315 + $0xbfc] sm:$0xff]
        %v1325 = vld [vmem:[%s315 + $0xc04] sm:$0xf]
        %v1326 = vld [vmem:[%s315 + $0xc08] sm:$0xff]
        %v1327 = vld [vmem:[%s315 + $0xc10] sm:$0xff]
        %v1328 = vld [vmem:[%s315 + $0xc18] sm:$0xff]
        %v1329 = vld [vmem:[%s315 + $0xc20] sm:$0xf]
        %v1330 = vld [vmem:[%s315 + $0xc24] sm:$0xff]
        %v1331 = vld [vmem:[%s315 + $0xc2c] sm:$0xff]
        %v1332 = vld [vmem:[%s315 + $0xc34] sm:$0xff]
        %v1333 = vld [vmem:[%s315 + $0xc3c] sm:$0xf]
        %v1334 = vld [vmem:[%s315 + $0xc40] sm:$0xff]
        %v1335 = vld [vmem:[%s315 + $0xc48] sm:$0xff]
        %v1336 = vld [vmem:[%s315 + $0xc50] sm:$0xff]
        %v1337 = vld [vmem:[%s315 + $0xc58] sm:$0xf]
        %v1338 = vld [vmem:[%s315 + $0xc5c] sm:$0xff]
        %v1339 = vld [vmem:[%s315 + $0xc64] sm:$0xff]
        %v1340 = vld [vmem:[%s315 + $0xc6c] sm:$0xff]
        %v1341 = vld [vmem:[%s315 + $0xc74] sm:$0xf]
        %v1342 = vld [vmem:[%s315 + $0xc78] sm:$0xff]
        %v1343 = vld [vmem:[%s315 + $0xc80] sm:$0xff]
        %v1344 = vld [vmem:[%s315 + $0xc88] sm:$0xff]
        %v1345 = vld [vmem:[%s315 + $0xc90] sm:$0xf]
        %v1346 = vld [vmem:[%s315 + $0xc94] sm:$0xff]
        %v1347 = vld [vmem:[%s315 + $0xc9c] sm:$0xff]
        %v1348 = vld [vmem:[%s315 + $0xca4] sm:$0xff]
        %v1349 = vld [vmem:[%s315 + $0xcac] sm:$0xf]
        %v1350 = vld [vmem:[%s315 + $0xcb0] sm:$0xff]
        %v1351 = vld [vmem:[%s315 + $0xcb8] sm:$0xff]
        %v1352 = vld [vmem:[%s315 + $0xcc0] sm:$0xff]
        %v1353 = vld [vmem:[%s315 + $0xcc8] sm:$0xf]
        %v1354 = vld [vmem:[%s315 + $0xccc] sm:$0xff]
        %v1355 = vld [vmem:[%s315 + $0xcd4] sm:$0xff]
        %v1356 = vld [vmem:[%s315 + $0xcdc] sm:$0xff]
        %v1357 = vld [vmem:[%s315 + $0xce4] sm:$0xf]
        %v1358 = vld [vmem:[%s315 + $0xce8] sm:$0xff]
        %v1359 = vld [vmem:[%s315 + $0xcf0] sm:$0xff]
        %v1360 = vld [vmem:[%s315 + $0xcf8] sm:$0xff]
        %v1361 = vld [vmem:[%s315 + $0xd00] sm:$0xf]
        %v1362 = vld [vmem:[%s315 + $0xd04] sm:$0xff]
        %v1363 = vld [vmem:[%s315 + $0xd0c] sm:$0xff]
        %v1364 = vld [vmem:[%s315 + $0xd14] sm:$0xff]
        %v1365 = vld [vmem:[%s315 + $0xd1c] sm:$0xf]
        %v1366 = vld [vmem:[%s315 + $0xd20] sm:$0xff]
        %v1367 = vld [vmem:[%s315 + $0xd28] sm:$0xff]
        %v1368 = vld [vmem:[%s315 + $0xd30] sm:$0xff]
        %v1369 = vld [vmem:[%s315 + $0xd38] sm:$0xf]
        %v1370 = vld [vmem:[%s315 + $0xd3c] sm:$0xff]
        %v1371 = vld [vmem:[%s315 + $0xd44] sm:$0xff]
        %v1372 = vld [vmem:[%s315 + $0xd4c] sm:$0xff]
        %v1373 = vld [vmem:[%s315 + $0xd54] sm:$0xf]
        %v1374 = vld [vmem:[%s315 + $0xd58] sm:$0xff]
        %v1375 = vld [vmem:[%s315 + $0xd60] sm:$0xff]
        %v1376 = vld [vmem:[%s315 + $0xd68] sm:$0xff]
        %v1377 = vld [vmem:[%s315 + $0xd70] sm:$0xf]
        %v1378 = vld [vmem:[%s315 + $0xd74] sm:$0xff]
        %v1379 = vld [vmem:[%s315 + $0xd7c] sm:$0xff]
        %v1380 = vld [vmem:[%s315 + $0xd84] sm:$0xff]
        %v1381 = vld [vmem:[%s315 + $0xd8c] sm:$0xf]
        %v1382 = vld [vmem:[%s315 + $0xd90] sm:$0xff]
        %v1383 = vld [vmem:[%s315 + $0xd98] sm:$0xff]
        %v1384 = vld [vmem:[%s315 + $0xda0] sm:$0xff]
        %v1385 = vld [vmem:[%s315 + $0xda8] sm:$0xf]
        %v1386 = vld [vmem:[%s315 + $0xdac] sm:$0xff]
        %v1387 = vld [vmem:[%s315 + $0xdb4] sm:$0xff]
        %v1388 = vld [vmem:[%s315 + $0xdbc] sm:$0xff]
        %v1389 = vld [vmem:[%s315 + $0xdc4] sm:$0xf]
        %v1390 = vld [vmem:[%s315 + $0xdc8] sm:$0xff]
        %v1391 = vld [vmem:[%s315 + $0xdd0] sm:$0xff]
        %v1392 = vld [vmem:[%s315 + $0xdd8] sm:$0xff]
        %v1393 = vld [vmem:[%s315 + $0xde0] sm:$0xf]
        %v1394 = vld [vmem:[%s315 + $0xde4] sm:$0xff]
        %v1395 = vld [vmem:[%s315 + $0xdec] sm:$0xff]
        %v1396 = vld [vmem:[%s315 + $0xdf4] sm:$0xff]
        %v1397 = vld [vmem:[%s315 + $0xdfc] sm:$0xf]
        %1399 = vst [vmem:[#allocation1] ss:$9 sm:$0xff] %v885
        %v1400 = vld [vmem:[#allocation1] sm:$0xff]
        %v1401 = vld [vmem:[#allocation1 + $0x9] sm:$0xff]
        %v1402 = vld [vmem:[#allocation1 + $0x12] sm:$0xff]
        %v1403 = vld [vmem:[#allocation1 + $0x1b] sm:$0xff]
        %v1404 = vld [vmem:[#allocation1 + $0x24] sm:$0xff]
        %v1405 = vld [vmem:[#allocation1 + $0x2d] sm:$0xff]
        %v1406 = vld [vmem:[#allocation1 + $0x36] sm:$0xff]
        %v1407 = vld [vmem:[#allocation1 + $0x3f] sm:$0xff]
        %v1928 = vunpack.c.l.b16 %v886
        %v1929 = vunpack.c.h.b16 %v886
        %v1930 = vunpack.c.l.b16 %v887
        %v1931 = vunpack.c.h.b16 %v887
        %v1932 = vunpack.c.l.b16 %v888
        %v1933 = vunpack.c.h.b16 %v888
        %v1934 = vunpack.c.l.b16 %v889
        %v1935 = vunpack.c.l.b16 %v890
        %v1936 = vunpack.c.h.b16 %v890
        %v1937 = vunpack.c.l.b16 %v891
        %v1938 = vunpack.c.h.b16 %v891
        %v1939 = vunpack.c.l.b16 %v892
        %v1940 = vunpack.c.h.b16 %v892
        %v1941 = vunpack.c.l.b16 %v893
        %v1942 = vunpack.c.l.b16 %v894
        %v1943 = vunpack.c.h.b16 %v894
        %v1944 = vunpack.c.l.b16 %v895
        %v1945 = vunpack.c.h.b16 %v895
        %v1946 = vunpack.c.l.b16 %v896
        %v1947 = vunpack.c.h.b16 %v896
        %v1948 = vunpack.c.l.b16 %v897
        %v1949 = vunpack.c.l.b16 %v898
        %v1950 = vunpack.c.h.b16 %v898
        %v1951 = vunpack.c.l.b16 %v899
        %v1952 = vunpack.c.h.b16 %v899
        %v1953 = vunpack.c.l.b16 %v900
        %v1954 = vunpack.c.h.b16 %v900
        %v1955 = vunpack.c.l.b16 %v901
        %v1956 = vunpack.c.l.b16 %v902
        %v1957 = vunpack.c.h.b16 %v902
        %v1958 = vunpack.c.l.b16 %v903
        %v1959 = vunpack.c.h.b16 %v903
        %v1960 = vunpack.c.l.b16 %v904
        %v1961 = vunpack.c.h.b16 %v904
        %v1962 = vunpack.c.l.b16 %v905
        %v1963 = vunpack.c.l.b16 %v906
        %v1964 = vunpack.c.h.b16 %v906
        %v1965 = vunpack.c.l.b16 %v907
        %v1966 = vunpack.c.h.b16 %v907
        %v1967 = vunpack.c.l.b16 %v908
        %v1968 = vunpack.c.h.b16 %v908
        %v1969 = vunpack.c.l.b16 %v909
        %v1970 = vunpack.c.l.b16 %v910
        %v1971 = vunpack.c.h.b16 %v910
        %v1972 = vunpack.c.l.b16 %v911
        %v1973 = vunpack.c.h.b16 %v911
        %v1974 = vunpack.c.l.b16 %v912
        %v1975 = vunpack.c.h.b16 %v912
        %v1976 = vunpack.c.l.b16 %v913
        %v1977 = vunpack.c.l.b16 %v914
        %v1978 = vunpack.c.h.b16 %v914
        %v1979 = vunpack.c.l.b16 %v915
        %v1980 = vunpack.c.h.b16 %v915
        %v1981 = vunpack.c.l.b16 %v916
        %v1982 = vunpack.c.h.b16 %v916
        %v1983 = vunpack.c.l.b16 %v917
        %v1984 = vunpack.c.l.b16 %v918
        %v1985 = vunpack.c.h.b16 %v918
        %v1986 = vunpack.c.l.b16 %v919
        %v1987 = vunpack.c.h.b16 %v919
        %v1988 = vunpack.c.l.b16 %v920
        %v1989 = vunpack.c.h.b16 %v920
        %v1990 = vunpack.c.l.b16 %v921
        %v1991 = vunpack.c.l.b16 %v922
        %v1992 = vunpack.c.h.b16 %v922
        %v1993 = vunpack.c.l.b16 %v923
        %v1994 = vunpack.c.h.b16 %v923
        %v1995 = vunpack.c.l.b16 %v924
        %v1996 = vunpack.c.h.b16 %v924
        %v1997 = vunpack.c.l.b16 %v925
        %v1998 = vunpack.c.l.b16 %v926
        %v1999 = vunpack.c.h.b16 %v926
        %v2000 = vunpack.c.l.b16 %v927
        %v2001 = vunpack.c.h.b16 %v927
        %v2002 = vunpack.c.l.b16 %v928
        %v2003 = vunpack.c.h.b16 %v928
        %v2004 = vunpack.c.l.b16 %v929
        %v2005 = vunpack.c.l.b16 %v930
        %v2006 = vunpack.c.h.b16 %v930
        %v2007 = vunpack.c.l.b16 %v931
        %v2008 = vunpack.c.h.b16 %v931
        %v2009 = vunpack.c.l.b16 %v932
        %v2010 = vunpack.c.h.b16 %v932
        %v2011 = vunpack.c.l.b16 %v933
        %v2012 = vunpack.c.l.b16 %v934
        %v2013 = vunpack.c.h.b16 %v934
        %v2014 = vunpack.c.l.b16 %v935
        %v2015 = vunpack.c.h.b16 %v935
        %v2016 = vunpack.c.l.b16 %v936
        %v2017 = vunpack.c.h.b16 %v936
        %v2018 = vunpack.c.l.b16 %v937
        %v2019 = vunpack.c.l.b16 %v938
        %v2020 = vunpack.c.h.b16 %v938
        %v2021 = vunpack.c.l.b16 %v939
        %v2022 = vunpack.c.h.b16 %v939
        %v2023 = vunpack.c.l.b16 %v940
        %v2024 = vunpack.c.h.b16 %v940
        %v2025 = vunpack.c.l.b16 %v941
        %v2026 = vunpack.c.l.b16 %v942
        %v2027 = vunpack.c.h.b16 %v942
        %v2028 = vunpack.c.l.b16 %v943
        %v2029 = vunpack.c.h.b16 %v943
        %v2030 = vunpack.c.l.b16 %v944
        %v2031 = vunpack.c.h.b16 %v944
        %v2032 = vunpack.c.l.b16 %v945
        %v2033 = vunpack.c.l.b16 %v946
        %v2034 = vunpack.c.h.b16 %v946
        %v2035 = vunpack.c.l.b16 %v947
        %v2036 = vunpack.c.h.b16 %v947
        %v2037 = vunpack.c.l.b16 %v948
        %v2038 = vunpack.c.h.b16 %v948
        %v2039 = vunpack.c.l.b16 %v949
        %v2040 = vunpack.c.l.b16 %v950
        %v2041 = vunpack.c.h.b16 %v950
        %v2042 = vunpack.c.l.b16 %v951
        %v2043 = vunpack.c.h.b16 %v951
        %v2044 = vunpack.c.l.b16 %v952
        %v2045 = vunpack.c.h.b16 %v952
        %v2046 = vunpack.c.l.b16 %v953
        %v2047 = vunpack.c.l.b16 %v954
        %v2048 = vunpack.c.h.b16 %v954
        %v2049 = vunpack.c.l.b16 %v955
        %v2050 = vunpack.c.h.b16 %v955
        %v2051 = vunpack.c.l.b16 %v956
        %v2052 = vunpack.c.h.b16 %v956
        %v2053 = vunpack.c.l.b16 %v957
        %v2054 = vunpack.c.l.b16 %v958
        %v2055 = vunpack.c.h.b16 %v958
        %v2056 = vunpack.c.l.b16 %v959
        %v2057 = vunpack.c.h.b16 %v959
        %v2058 = vunpack.c.l.b16 %v960
        %v2059 = vunpack.c.h.b16 %v960
        %v2060 = vunpack.c.l.b16 %v961
        %v2061 = vunpack.c.l.b16 %v962
        %v2062 = vunpack.c.h.b16 %v962
        %v2063 = vunpack.c.l.b16 %v963
        %v2064 = vunpack.c.h.b16 %v963
        %v2065 = vunpack.c.l.b16 %v964
        %v2066 = vunpack.c.h.b16 %v964
        %v2067 = vunpack.c.l.b16 %v965
        %v2068 = vunpack.c.l.b16 %v966
        %v2069 = vunpack.c.h.b16 %v966
        %v2070 = vunpack.c.l.b16 %v967
        %v2071 = vunpack.c.h.b16 %v967
        %v2072 = vunpack.c.l.b16 %v968
        %v2073 = vunpack.c.h.b16 %v968
        %v2074 = vunpack.c.l.b16 %v969
        %v2075 = vunpack.c.l.b16 %v970
        %v2076 = vunpack.c.h.b16 %v970
        %v2077 = vunpack.c.l.b16 %v971
        %v2078 = vunpack.c.h.b16 %v971
        %v2079 = vunpack.c.l.b16 %v972
        %v2080 = vunpack.c.h.b16 %v972
        %v2081 = vunpack.c.l.b16 %v973
        %v2082 = vunpack.c.l.b16 %v974
        %v2083 = vunpack.c.h.b16 %v974
        %v2084 = vunpack.c.l.b16 %v975
        %v2085 = vunpack.c.h.b16 %v975
        %v2086 = vunpack.c.l.b16 %v976
        %v2087 = vunpack.c.h.b16 %v976
        %v2088 = vunpack.c.l.b16 %v977
        %v2089 = vunpack.c.l.b16 %v978
        %v2090 = vunpack.c.h.b16 %v978
        %v2091 = vunpack.c.l.b16 %v979
        %v2092 = vunpack.c.h.b16 %v979
        %v2093 = vunpack.c.l.b16 %v980
        %v2094 = vunpack.c.h.b16 %v980
        %v2095 = vunpack.c.l.b16 %v981
        %v2096 = vunpack.c.l.b16 %v982
        %v2097 = vunpack.c.h.b16 %v982
        %v2098 = vunpack.c.l.b16 %v983
        %v2099 = vunpack.c.h.b16 %v983
        %v2100 = vunpack.c.l.b16 %v984
        %v2101 = vunpack.c.h.b16 %v984
        %v2102 = vunpack.c.l.b16 %v985
        %v2103 = vunpack.c.l.b16 %v986
        %v2104 = vunpack.c.h.b16 %v986
        %v2105 = vunpack.c.l.b16 %v987
        %v2106 = vunpack.c.h.b16 %v987
        %v2107 = vunpack.c.l.b16 %v988
        %v2108 = vunpack.c.h.b16 %v988
        %v2109 = vunpack.c.l.b16 %v989
        %v2110 = vunpack.c.l.b16 %v990
        %v2111 = vunpack.c.h.b16 %v990
        %v2112 = vunpack.c.l.b16 %v991
        %v2113 = vunpack.c.h.b16 %v991
        %v2114 = vunpack.c.l.b16 %v992
        %v2115 = vunpack.c.h.b16 %v992
        %v2116 = vunpack.c.l.b16 %v993
        %v2117 = vunpack.c.l.b16 %v994
        %v2118 = vunpack.c.h.b16 %v994
        %v2119 = vunpack.c.l.b16 %v995
        %v2120 = vunpack.c.h.b16 %v995
        %v2121 = vunpack.c.l.b16 %v996
        %v2122 = vunpack.c.h.b16 %v996
        %v2123 = vunpack.c.l.b16 %v997
        %v2124 = vunpack.c.l.b16 %v998
        %v2125 = vunpack.c.h.b16 %v998
        %v2126 = vunpack.c.l.b16 %v999
        %v2127 = vunpack.c.h.b16 %v999
        %v2128 = vunpack.c.l.b16 %v1000
        %v2129 = vunpack.c.h.b16 %v1000
        %v2130 = vunpack.c.l.b16 %v1001
        %v2131 = vunpack.c.l.b16 %v1002
        %v2132 = vunpack.c.h.b16 %v1002
        %v2133 = vunpack.c.l.b16 %v1003
        %v2134 = vunpack.c.h.b16 %v1003
        %v2135 = vunpack.c.l.b16 %v1004
        %v2136 = vunpack.c.h.b16 %v1004
        %v2137 = vunpack.c.l.b16 %v1005
        %v2138 = vunpack.c.l.b16 %v1006
        %v2139 = vunpack.c.h.b16 %v1006
        %v2140 = vunpack.c.l.b16 %v1007
        %v2141 = vunpack.c.h.b16 %v1007
        %v2142 = vunpack.c.l.b16 %v1008
        %v2143 = vunpack.c.h.b16 %v1008
        %v2144 = vunpack.c.l.b16 %v1009
        %v2145 = vunpack.c.l.b16 %v1010
        %v2146 = vunpack.c.h.b16 %v1010
        %v2147 = vunpack.c.l.b16 %v1011
        %v2148 = vunpack.c.h.b16 %v1011
        %v2149 = vunpack.c.l.b16 %v1012
        %v2150 = vunpack.c.h.b16 %v1012
        %v2151 = vunpack.c.l.b16 %v1013
        %v2152 = vunpack.c.l.b16 %v1014
        %v2153 = vunpack.c.h.b16 %v1014
        %v2154 = vunpack.c.l.b16 %v1015
        %v2155 = vunpack.c.h.b16 %v1015
        %v2156 = vunpack.c.l.b16 %v1016
        %v2157 = vunpack.c.h.b16 %v1016
        %v2158 = vunpack.c.l.b16 %v1017
        %v2159 = vunpack.c.l.b16 %v1018
        %v2160 = vunpack.c.h.b16 %v1018
        %v2161 = vunpack.c.l.b16 %v1019
        %v2162 = vunpack.c.h.b16 %v1019
        %v2163 = vunpack.c.l.b16 %v1020
        %v2164 = vunpack.c.h.b16 %v1020
        %v2165 = vunpack.c.l.b16 %v1021
        %v2166 = vunpack.c.l.b16 %v1022
        %v2167 = vunpack.c.h.b16 %v1022
        %v2168 = vunpack.c.l.b16 %v1023
        %v2169 = vunpack.c.h.b16 %v1023
        %v2170 = vunpack.c.l.b16 %v1024
        %v2171 = vunpack.c.h.b16 %v1024
        %v2172 = vunpack.c.l.b16 %v1025
        %v2173 = vunpack.c.l.b16 %v1026
        %v2174 = vunpack.c.h.b16 %v1026
        %v2175 = vunpack.c.l.b16 %v1027
        %v2176 = vunpack.c.h.b16 %v1027
        %v2177 = vunpack.c.l.b16 %v1028
        %v2178 = vunpack.c.h.b16 %v1028
        %v2179 = vunpack.c.l.b16 %v1029
        %v2180 = vunpack.c.l.b16 %v1030
        %v2181 = vunpack.c.h.b16 %v1030
        %v2182 = vunpack.c.l.b16 %v1031
        %v2183 = vunpack.c.h.b16 %v1031
        %v2184 = vunpack.c.l.b16 %v1032
        %v2185 = vunpack.c.h.b16 %v1032
        %v2186 = vunpack.c.l.b16 %v1033
        %v2187 = vunpack.c.l.b16 %v1034
        %v2188 = vunpack.c.h.b16 %v1034
        %v2189 = vunpack.c.l.b16 %v1035
        %v2190 = vunpack.c.h.b16 %v1035
        %v2191 = vunpack.c.l.b16 %v1036
        %v2192 = vunpack.c.h.b16 %v1036
        %v2193 = vunpack.c.l.b16 %v1037
        %v2194 = vunpack.c.l.b16 %v1038
        %v2195 = vunpack.c.h.b16 %v1038
        %v2196 = vunpack.c.l.b16 %v1039
        %v2197 = vunpack.c.h.b16 %v1039
        %v2198 = vunpack.c.l.b16 %v1040
        %v2199 = vunpack.c.h.b16 %v1040
        %v2200 = vunpack.c.l.b16 %v1041
        %v2201 = vunpack.c.l.b16 %v1042
        %v2202 = vunpack.c.h.b16 %v1042
        %v2203 = vunpack.c.l.b16 %v1043
        %v2204 = vunpack.c.h.b16 %v1043
        %v2205 = vunpack.c.l.b16 %v1044
        %v2206 = vunpack.c.h.b16 %v1044
        %v2207 = vunpack.c.l.b16 %v1045
        %v2208 = vunpack.c.l.b16 %v1046
        %v2209 = vunpack.c.h.b16 %v1046
        %v2210 = vunpack.c.l.b16 %v1047
        %v2211 = vunpack.c.h.b16 %v1047
        %v2212 = vunpack.c.l.b16 %v1048
        %v2213 = vunpack.c.h.b16 %v1048
        %v2214 = vunpack.c.l.b16 %v1049
        %v2215 = vunpack.c.l.b16 %v1050
        %v2216 = vunpack.c.h.b16 %v1050
        %v2217 = vunpack.c.l.b16 %v1051
        %v2218 = vunpack.c.h.b16 %v1051
        %v2219 = vunpack.c.l.b16 %v1052
        %v2220 = vunpack.c.h.b16 %v1052
        %v2221 = vunpack.c.l.b16 %v1053
        %v2222 = vunpack.c.l.b16 %v1054
        %v2223 = vunpack.c.h.b16 %v1054
        %v2224 = vunpack.c.l.b16 %v1055
        %v2225 = vunpack.c.h.b16 %v1055
        %v2226 = vunpack.c.l.b16 %v1056
        %v2227 = vunpack.c.h.b16 %v1056
        %v2228 = vunpack.c.l.b16 %v1057
        %v2229 = vunpack.c.l.b16 %v1058
        %v2230 = vunpack.c.h.b16 %v1058
        %v2231 = vunpack.c.l.b16 %v1059
        %v2232 = vunpack.c.h.b16 %v1059
        %v2233 = vunpack.c.l.b16 %v1060
        %v2234 = vunpack.c.h.b16 %v1060
        %v2235 = vunpack.c.l.b16 %v1061
        %v2236 = vunpack.c.l.b16 %v1062
        %v2237 = vunpack.c.h.b16 %v1062
        %v2238 = vunpack.c.l.b16 %v1063
        %v2239 = vunpack.c.h.b16 %v1063
        %v2240 = vunpack.c.l.b16 %v1064
        %v2241 = vunpack.c.h.b16 %v1064
        %v2242 = vunpack.c.l.b16 %v1065
        %v2243 = vunpack.c.l.b16 %v1066
        %v2244 = vunpack.c.h.b16 %v1066
        %v2245 = vunpack.c.l.b16 %v1067
        %v2246 = vunpack.c.h.b16 %v1067
        %v2247 = vunpack.c.l.b16 %v1068
        %v2248 = vunpack.c.h.b16 %v1068
        %v2249 = vunpack.c.l.b16 %v1069
        %v2250 = vunpack.c.l.b16 %v1070
        %v2251 = vunpack.c.h.b16 %v1070
        %v2252 = vunpack.c.l.b16 %v1071
        %v2253 = vunpack.c.h.b16 %v1071
        %v2254 = vunpack.c.l.b16 %v1072
        %v2255 = vunpack.c.h.b16 %v1072
        %v2256 = vunpack.c.l.b16 %v1073
        %v2257 = vunpack.c.l.b16 %v1074
        %v2258 = vunpack.c.h.b16 %v1074
        %v2259 = vunpack.c.l.b16 %v1075
        %v2260 = vunpack.c.h.b16 %v1075
        %v2261 = vunpack.c.l.b16 %v1076
        %v2262 = vunpack.c.h.b16 %v1076
        %v2263 = vunpack.c.l.b16 %v1077
        %v2264 = vunpack.c.l.b16 %v1078
        %v2265 = vunpack.c.h.b16 %v1078
        %v2266 = vunpack.c.l.b16 %v1079
        %v2267 = vunpack.c.h.b16 %v1079
        %v2268 = vunpack.c.l.b16 %v1080
        %v2269 = vunpack.c.h.b16 %v1080
        %v2270 = vunpack.c.l.b16 %v1081
        %v2271 = vunpack.c.l.b16 %v1082
        %v2272 = vunpack.c.h.b16 %v1082
        %v2273 = vunpack.c.l.b16 %v1083
        %v2274 = vunpack.c.h.b16 %v1083
        %v2275 = vunpack.c.l.b16 %v1084
        %v2276 = vunpack.c.h.b16 %v1084
        %v2277 = vunpack.c.l.b16 %v1085
        %v2278 = vunpack.c.l.b16 %v1086
        %v2279 = vunpack.c.h.b16 %v1086
        %v2280 = vunpack.c.l.b16 %v1087
        %v2281 = vunpack.c.h.b16 %v1087
        %v2282 = vunpack.c.l.b16 %v1088
        %v2283 = vunpack.c.h.b16 %v1088
        %v2284 = vunpack.c.l.b16 %v1089
        %v2285 = vunpack.c.l.b16 %v1090
        %v2286 = vunpack.c.h.b16 %v1090
        %v2287 = vunpack.c.l.b16 %v1091
        %v2288 = vunpack.c.h.b16 %v1091
        %v2289 = vunpack.c.l.b16 %v1092
        %v2290 = vunpack.c.h.b16 %v1092
        %v2291 = vunpack.c.l.b16 %v1093
        %v2292 = vunpack.c.l.b16 %v1094
        %v2293 = vunpack.c.h.b16 %v1094
        %v2294 = vunpack.c.l.b16 %v1095
        %v2295 = vunpack.c.h.b16 %v1095
        %v2296 = vunpack.c.l.b16 %v1096
        %v2297 = vunpack.c.h.b16 %v1096
        %v2298 = vunpack.c.l.b16 %v1097
        %v2299 = vunpack.c.l.b16 %v1098
        %v2300 = vunpack.c.h.b16 %v1098
        %v2301 = vunpack.c.l.b16 %v1099
        %v2302 = vunpack.c.h.b16 %v1099
        %v2303 = vunpack.c.l.b16 %v1100
        %v2304 = vunpack.c.h.b16 %v1100
        %v2305 = vunpack.c.l.b16 %v1101
        %v2306 = vunpack.c.l.b16 %v1102
        %v2307 = vunpack.c.h.b16 %v1102
        %v2308 = vunpack.c.l.b16 %v1103
        %v2309 = vunpack.c.h.b16 %v1103
        %v2310 = vunpack.c.l.b16 %v1104
        %v2311 = vunpack.c.h.b16 %v1104
        %v2312 = vunpack.c.l.b16 %v1105
        %v2313 = vunpack.c.l.b16 %v1106
        %v2314 = vunpack.c.h.b16 %v1106
        %v2315 = vunpack.c.l.b16 %v1107
        %v2316 = vunpack.c.h.b16 %v1107
        %v2317 = vunpack.c.l.b16 %v1108
        %v2318 = vunpack.c.h.b16 %v1108
        %v2319 = vunpack.c.l.b16 %v1109
        %v2320 = vunpack.c.l.b16 %v1110
        %v2321 = vunpack.c.h.b16 %v1110
        %v2322 = vunpack.c.l.b16 %v1111
        %v2323 = vunpack.c.h.b16 %v1111
        %v2324 = vunpack.c.l.b16 %v1112
        %v2325 = vunpack.c.h.b16 %v1112
        %v2326 = vunpack.c.l.b16 %v1113
        %v2327 = vunpack.c.l.b16 %v1114
        %v2328 = vunpack.c.h.b16 %v1114
        %v2329 = vunpack.c.l.b16 %v1115
        %v2330 = vunpack.c.h.b16 %v1115
        %v2331 = vunpack.c.l.b16 %v1116
        %v2332 = vunpack.c.h.b16 %v1116
        %v2333 = vunpack.c.l.b16 %v1117
        %v2334 = vunpack.c.l.b16 %v1118
        %v2335 = vunpack.c.h.b16 %v1118
        %v2336 = vunpack.c.l.b16 %v1119
        %v2337 = vunpack.c.h.b16 %v1119
        %v2338 = vunpack.c.l.b16 %v1120
        %v2339 = vunpack.c.h.b16 %v1120
        %v2340 = vunpack.c.l.b16 %v1121
        %v2341 = vunpack.c.l.b16 %v1122
        %v2342 = vunpack.c.h.b16 %v1122
        %v2343 = vunpack.c.l.b16 %v1123
        %v2344 = vunpack.c.h.b16 %v1123
        %v2345 = vunpack.c.l.b16 %v1124
        %v2346 = vunpack.c.h.b16 %v1124
        %v2347 = vunpack.c.l.b16 %v1125
        %v2348 = vunpack.c.l.b16 %v1126
        %v2349 = vunpack.c.h.b16 %v1126
        %v2350 = vunpack.c.l.b16 %v1127
        %v2351 = vunpack.c.h.b16 %v1127
        %v2352 = vunpack.c.l.b16 %v1128
        %v2353 = vunpack.c.h.b16 %v1128
        %v2354 = vunpack.c.l.b16 %v1129
        %v2355 = vunpack.c.l.b16 %v1130
        %v2356 = vunpack.c.h.b16 %v1130
        %v2357 = vunpack.c.l.b16 %v1131
        %v2358 = vunpack.c.h.b16 %v1131
        %v2359 = vunpack.c.l.b16 %v1132
        %v2360 = vunpack.c.h.b16 %v1132
        %v2361 = vunpack.c.l.b16 %v1133
        %v2362 = vunpack.c.l.b16 %v1134
        %v2363 = vunpack.c.h.b16 %v1134
        %v2364 = vunpack.c.l.b16 %v1135
        %v2365 = vunpack.c.h.b16 %v1135
        %v2366 = vunpack.c.l.b16 %v1136
        %v2367 = vunpack.c.h.b16 %v1136
        %v2368 = vunpack.c.l.b16 %v1137
        %v2369 = vunpack.c.l.b16 %v1138
        %v2370 = vunpack.c.h.b16 %v1138
        %v2371 = vunpack.c.l.b16 %v1139
        %v2372 = vunpack.c.h.b16 %v1139
        %v2373 = vunpack.c.l.b16 %v1140
        %v2374 = vunpack.c.h.b16 %v1140
        %v2375 = vunpack.c.l.b16 %v1141
        %v2376 = vunpack.c.l.b16 %v1142
        %v2377 = vunpack.c.h.b16 %v1142
        %v2378 = vunpack.c.l.b16 %v1143
        %v2379 = vunpack.c.h.b16 %v1143
        %v2380 = vunpack.c.l.b16 %v1144
        %v2381 = vunpack.c.h.b16 %v1144
        %v2382 = vunpack.c.l.b16 %v1145
        %v2383 = vunpack.c.l.b16 %v1146
        %v2384 = vunpack.c.h.b16 %v1146
        %v2385 = vunpack.c.l.b16 %v1147
        %v2386 = vunpack.c.h.b16 %v1147
        %v2387 = vunpack.c.l.b16 %v1148
        %v2388 = vunpack.c.h.b16 %v1148
        %v2389 = vunpack.c.l.b16 %v1149
        %v2390 = vunpack.c.l.b16 %v1150
        %v2391 = vunpack.c.h.b16 %v1150
        %v2392 = vunpack.c.l.b16 %v1151
        %v2393 = vunpack.c.h.b16 %v1151
        %v2394 = vunpack.c.l.b16 %v1152
        %v2395 = vunpack.c.h.b16 %v1152
        %v2396 = vunpack.c.l.b16 %v1153
        %v2397 = vunpack.c.l.b16 %v1154
        %v2398 = vunpack.c.h.b16 %v1154
        %v2399 = vunpack.c.l.b16 %v1155
        %v2400 = vunpack.c.h.b16 %v1155
        %v2401 = vunpack.c.l.b16 %v1156
        %v2402 = vunpack.c.h.b16 %v1156
        %v2403 = vunpack.c.l.b16 %v1157
        %v2404 = vunpack.c.l.b16 %v1158
        %v2405 = vunpack.c.h.b16 %v1158
        %v2406 = vunpack.c.l.b16 %v1159
        %v2407 = vunpack.c.h.b16 %v1159
        %v2408 = vunpack.c.l.b16 %v1160
        %v2409 = vunpack.c.h.b16 %v1160
        %v2410 = vunpack.c.l.b16 %v1161
        %v2411 = vunpack.c.l.b16 %v1162
        %v2412 = vunpack.c.h.b16 %v1162
        %v2413 = vunpack.c.l.b16 %v1163
        %v2414 = vunpack.c.h.b16 %v1163
        %v2415 = vunpack.c.l.b16 %v1164
        %v2416 = vunpack.c.h.b16 %v1164
        %v2417 = vunpack.c.l.b16 %v1165
        %v2418 = vunpack.c.l.b16 %v1166
        %v2419 = vunpack.c.h.b16 %v1166
        %v2420 = vunpack.c.l.b16 %v1167
        %v2421 = vunpack.c.h.b16 %v1167
        %v2422 = vunpack.c.l.b16 %v1168
        %v2423 = vunpack.c.h.b16 %v1168
        %v2424 = vunpack.c.l.b16 %v1169
        %v2425 = vunpack.c.l.b16 %v1170
        %v2426 = vunpack.c.h.b16 %v1170
        %v2427 = vunpack.c.l.b16 %v1171
        %v2428 = vunpack.c.h.b16 %v1171
        %v2429 = vunpack.c.l.b16 %v1172
        %v2430 = vunpack.c.h.b16 %v1172
        %v2431 = vunpack.c.l.b16 %v1173
        %v2432 = vunpack.c.l.b16 %v1174
        %v2433 = vunpack.c.h.b16 %v1174
        %v2434 = vunpack.c.l.b16 %v1175
        %v2435 = vunpack.c.h.b16 %v1175
        %v2436 = vunpack.c.l.b16 %v1176
        %v2437 = vunpack.c.h.b16 %v1176
        %v2438 = vunpack.c.l.b16 %v1177
        %v2439 = vunpack.c.l.b16 %v1178
        %v2440 = vunpack.c.h.b16 %v1178
        %v2441 = vunpack.c.l.b16 %v1179
        %v2442 = vunpack.c.h.b16 %v1179
        %v2443 = vunpack.c.l.b16 %v1180
        %v2444 = vunpack.c.h.b16 %v1180
        %v2445 = vunpack.c.l.b16 %v1181
        %v2446 = vunpack.c.l.b16 %v1182
        %v2447 = vunpack.c.h.b16 %v1182
        %v2448 = vunpack.c.l.b16 %v1183
        %v2449 = vunpack.c.h.b16 %v1183
        %v2450 = vunpack.c.l.b16 %v1184
        %v2451 = vunpack.c.h.b16 %v1184
        %v2452 = vunpack.c.l.b16 %v1185
        %v2453 = vunpack.c.l.b16 %v1186
        %v2454 = vunpack.c.h.b16 %v1186
        %v2455 = vunpack.c.l.b16 %v1187
        %v2456 = vunpack.c.h.b16 %v1187
        %v2457 = vunpack.c.l.b16 %v1188
        %v2458 = vunpack.c.h.b16 %v1188
        %v2459 = vunpack.c.l.b16 %v1189
        %v2460 = vunpack.c.l.b16 %v1190
        %v2461 = vunpack.c.h.b16 %v1190
        %v2462 = vunpack.c.l.b16 %v1191
        %v2463 = vunpack.c.h.b16 %v1191
        %v2464 = vunpack.c.l.b16 %v1192
        %v2465 = vunpack.c.h.b16 %v1192
        %v2466 = vunpack.c.l.b16 %v1193
        %v2467 = vunpack.c.l.b16 %v1194
        %v2468 = vunpack.c.h.b16 %v1194
        %v2469 = vunpack.c.l.b16 %v1195
        %v2470 = vunpack.c.h.b16 %v1195
        %v2471 = vunpack.c.l.b16 %v1196
        %v2472 = vunpack.c.h.b16 %v1196
        %v2473 = vunpack.c.l.b16 %v1197
        %v2474 = vunpack.c.l.b16 %v1198
        %v2475 = vunpack.c.h.b16 %v1198
        %v2476 = vunpack.c.l.b16 %v1199
        %v2477 = vunpack.c.h.b16 %v1199
        %v2478 = vunpack.c.l.b16 %v1200
        %v2479 = vunpack.c.h.b16 %v1200
        %v2480 = vunpack.c.l.b16 %v1201
        %v2481 = vunpack.c.l.b16 %v1202
        %v2482 = vunpack.c.h.b16 %v1202
        %v2483 = vunpack.c.l.b16 %v1203
        %v2484 = vunpack.c.h.b16 %v1203
        %v2485 = vunpack.c.l.b16 %v1204
        %v2486 = vunpack.c.h.b16 %v1204
        %v2487 = vunpack.c.l.b16 %v1205
        %v2488 = vunpack.c.l.b16 %v1206
        %v2489 = vunpack.c.h.b16 %v1206
        %v2490 = vunpack.c.l.b16 %v1207
        %v2491 = vunpack.c.h.b16 %v1207
        %v2492 = vunpack.c.l.b16 %v1208
        %v2493 = vunpack.c.h.b16 %v1208
        %v2494 = vunpack.c.l.b16 %v1209
        %v2495 = vunpack.c.l.b16 %v1210
        %v2496 = vunpack.c.h.b16 %v1210
        %v2497 = vunpack.c.l.b16 %v1211
        %v2498 = vunpack.c.h.b16 %v1211
        %v2499 = vunpack.c.l.b16 %v1212
        %v2500 = vunpack.c.h.b16 %v1212
        %v2501 = vunpack.c.l.b16 %v1213
        %v2502 = vunpack.c.l.b16 %v1214
        %v2503 = vunpack.c.h.b16 %v1214
        %v2504 = vunpack.c.l.b16 %v1215
        %v2505 = vunpack.c.h.b16 %v1215
        %v2506 = vunpack.c.l.b16 %v1216
        %v2507 = vunpack.c.h.b16 %v1216
        %v2508 = vunpack.c.l.b16 %v1217
        %v2509 = vunpack.c.l.b16 %v1218
        %v2510 = vunpack.c.h.b16 %v1218
        %v2511 = vunpack.c.l.b16 %v1219
        %v2512 = vunpack.c.h.b16 %v1219
        %v2513 = vunpack.c.l.b16 %v1220
        %v2514 = vunpack.c.h.b16 %v1220
        %v2515 = vunpack.c.l.b16 %v1221
        %v2516 = vunpack.c.l.b16 %v1222
        %v2517 = vunpack.c.h.b16 %v1222
        %v2518 = vunpack.c.l.b16 %v1223
        %v2519 = vunpack.c.h.b16 %v1223
        %v2520 = vunpack.c.l.b16 %v1224
        %v2521 = vunpack.c.h.b16 %v1224
        %v2522 = vunpack.c.l.b16 %v1225
        %v2523 = vunpack.c.l.b16 %v1226
        %v2524 = vunpack.c.h.b16 %v1226
        %v2525 = vunpack.c.l.b16 %v1227
        %v2526 = vunpack.c.h.b16 %v1227
        %v2527 = vunpack.c.l.b16 %v1228
        %v2528 = vunpack.c.h.b16 %v1228
        %v2529 = vunpack.c.l.b16 %v1229
        %v2530 = vunpack.c.l.b16 %v1230
        %v2531 = vunpack.c.h.b16 %v1230
        %v2532 = vunpack.c.l.b16 %v1231
        %v2533 = vunpack.c.h.b16 %v1231
        %v2534 = vunpack.c.l.b16 %v1232
        %v2535 = vunpack.c.h.b16 %v1232
        %v2536 = vunpack.c.l.b16 %v1233
        %v2537 = vunpack.c.l.b16 %v1234
        %v2538 = vunpack.c.h.b16 %v1234
        %v2539 = vunpack.c.l.b16 %v1235
        %v2540 = vunpack.c.h.b16 %v1235
        %v2541 = vunpack.c.l.b16 %v1236
        %v2542 = vunpack.c.h.b16 %v1236
        %v2543 = vunpack.c.l.b16 %v1237
        %v2544 = vunpack.c.l.b16 %v1238
        %v2545 = vunpack.c.h.b16 %v1238
        %v2546 = vunpack.c.l.b16 %v1239
        %v2547 = vunpack.c.h.b16 %v1239
        %v2548 = vunpack.c.l.b16 %v1240
        %v2549 = vunpack.c.h.b16 %v1240
        %v2550 = vunpack.c.l.b16 %v1241
        %v2551 = vunpack.c.l.b16 %v1242
        %v2552 = vunpack.c.h.b16 %v1242
        %v2553 = vunpack.c.l.b16 %v1243
        %v2554 = vunpack.c.h.b16 %v1243
        %v2555 = vunpack.c.l.b16 %v1244
        %v2556 = vunpack.c.h.b16 %v1244
        %v2557 = vunpack.c.l.b16 %v1245
        %v2558 = vunpack.c.l.b16 %v1246
        %v2559 = vunpack.c.h.b16 %v1246
        %v2560 = vunpack.c.l.b16 %v1247
        %v2561 = vunpack.c.h.b16 %v1247
        %v2562 = vunpack.c.l.b16 %v1248
        %v2563 = vunpack.c.h.b16 %v1248
        %v2564 = vunpack.c.l.b16 %v1249
        %v2565 = vunpack.c.l.b16 %v1250
        %v2566 = vunpack.c.h.b16 %v1250
        %v2567 = vunpack.c.l.b16 %v1251
        %v2568 = vunpack.c.h.b16 %v1251
        %v2569 = vunpack.c.l.b16 %v1252
        %v2570 = vunpack.c.h.b16 %v1252
        %v2571 = vunpack.c.l.b16 %v1253
        %v2572 = vunpack.c.l.b16 %v1254
        %v2573 = vunpack.c.h.b16 %v1254
        %v2574 = vunpack.c.l.b16 %v1255
        %v2575 = vunpack.c.h.b16 %v1255
        %v2576 = vunpack.c.l.b16 %v1256
        %v2577 = vunpack.c.h.b16 %v1256
        %v2578 = vunpack.c.l.b16 %v1257
        %v2579 = vunpack.c.l.b16 %v1258
        %v2580 = vunpack.c.h.b16 %v1258
        %v2581 = vunpack.c.l.b16 %v1259
        %v2582 = vunpack.c.h.b16 %v1259
        %v2583 = vunpack.c.l.b16 %v1260
        %v2584 = vunpack.c.h.b16 %v1260
        %v2585 = vunpack.c.l.b16 %v1261
        %v2586 = vunpack.c.l.b16 %v1262
        %v2587 = vunpack.c.h.b16 %v1262
        %v2588 = vunpack.c.l.b16 %v1263
        %v2589 = vunpack.c.h.b16 %v1263
        %v2590 = vunpack.c.l.b16 %v1264
        %v2591 = vunpack.c.h.b16 %v1264
        %v2592 = vunpack.c.l.b16 %v1265
        %v2593 = vunpack.c.l.b16 %v1266
        %v2594 = vunpack.c.h.b16 %v1266
        %v2595 = vunpack.c.l.b16 %v1267
        %v2596 = vunpack.c.h.b16 %v1267
        %v2597 = vunpack.c.l.b16 %v1268
        %v2598 = vunpack.c.h.b16 %v1268
        %v2599 = vunpack.c.l.b16 %v1269
        %v2600 = vunpack.c.l.b16 %v1270
        %v2601 = vunpack.c.h.b16 %v1270
        %v2602 = vunpack.c.l.b16 %v1271
        %v2603 = vunpack.c.h.b16 %v1271
        %v2604 = vunpack.c.l.b16 %v1272
        %v2605 = vunpack.c.h.b16 %v1272
        %v2606 = vunpack.c.l.b16 %v1273
        %v2607 = vunpack.c.l.b16 %v1274
        %v2608 = vunpack.c.h.b16 %v1274
        %v2609 = vunpack.c.l.b16 %v1275
        %v2610 = vunpack.c.h.b16 %v1275
        %v2611 = vunpack.c.l.b16 %v1276
        %v2612 = vunpack.c.h.b16 %v1276
        %v2613 = vunpack.c.l.b16 %v1277
        %v2614 = vunpack.c.l.b16 %v1278
        %v2615 = vunpack.c.h.b16 %v1278
        %v2616 = vunpack.c.l.b16 %v1279
        %v2617 = vunpack.c.h.b16 %v1279
        %v2618 = vunpack.c.l.b16 %v1280
        %v2619 = vunpack.c.h.b16 %v1280
        %v2620 = vunpack.c.l.b16 %v1281
        %v2621 = vunpack.c.l.b16 %v1282
        %v2622 = vunpack.c.h.b16 %v1282
        %v2623 = vunpack.c.l.b16 %v1283
        %v2624 = vunpack.c.h.b16 %v1283
        %v2625 = vunpack.c.l.b16 %v1284
        %v2626 = vunpack.c.h.b16 %v1284
        %v2627 = vunpack.c.l.b16 %v1285
        %v2628 = vunpack.c.l.b16 %v1286
        %v2629 = vunpack.c.h.b16 %v1286
        %v2630 = vunpack.c.l.b16 %v1287
        %v2631 = vunpack.c.h.b16 %v1287
        %v2632 = vunpack.c.l.b16 %v1288
        %v2633 = vunpack.c.h.b16 %v1288
        %v2634 = vunpack.c.l.b16 %v1289
        %v2635 = vunpack.c.l.b16 %v1290
        %v2636 = vunpack.c.h.b16 %v1290
        %v2637 = vunpack.c.l.b16 %v1291
        %v2638 = vunpack.c.h.b16 %v1291
        %v2639 = vunpack.c.l.b16 %v1292
        %v2640 = vunpack.c.h.b16 %v1292
        %v2641 = vunpack.c.l.b16 %v1293
        %v2642 = vunpack.c.l.b16 %v1294
        %v2643 = vunpack.c.h.b16 %v1294
        %v2644 = vunpack.c.l.b16 %v1295
        %v2645 = vunpack.c.h.b16 %v1295
        %v2646 = vunpack.c.l.b16 %v1296
        %v2647 = vunpack.c.h.b16 %v1296
        %v2648 = vunpack.c.l.b16 %v1297
        %v2649 = vunpack.c.l.b16 %v1298
        %v2650 = vunpack.c.h.b16 %v1298
        %v2651 = vunpack.c.l.b16 %v1299
        %v2652 = vunpack.c.h.b16 %v1299
        %v2653 = vunpack.c.l.b16 %v1300
        %v2654 = vunpack.c.h.b16 %v1300
        %v2655 = vunpack.c.l.b16 %v1301
        %v2656 = vunpack.c.l.b16 %v1302
        %v2657 = vunpack.c.h.b16 %v1302
        %v2658 = vunpack.c.l.b16 %v1303
        %v2659 = vunpack.c.h.b16 %v1303
        %v2660 = vunpack.c.l.b16 %v1304
        %v2661 = vunpack.c.h.b16 %v1304
        %v2662 = vunpack.c.l.b16 %v1305
        %v2663 = vunpack.c.l.b16 %v1306
        %v2664 = vunpack.c.h.b16 %v1306
        %v2665 = vunpack.c.l.b16 %v1307
        %v2666 = vunpack.c.h.b16 %v1307
        %v2667 = vunpack.c.l.b16 %v1308
        %v2668 = vunpack.c.h.b16 %v1308
        %v2669 = vunpack.c.l.b16 %v1309
        %v2670 = vunpack.c.l.b16 %v1310
        %v2671 = vunpack.c.h.b16 %v1310
        %v2672 = vunpack.c.l.b16 %v1311
        %v2673 = vunpack.c.h.b16 %v1311
        %v2674 = vunpack.c.l.b16 %v1312
        %v2675 = vunpack.c.h.b16 %v1312
        %v2676 = vunpack.c.l.b16 %v1313
        %v2677 = vunpack.c.l.b16 %v1314
        %v2678 = vunpack.c.h.b16 %v1314
        %v2679 = vunpack.c.l.b16 %v1315
        %v2680 = vunpack.c.h.b16 %v1315
        %v2681 = vunpack.c.l.b16 %v1316
        %v2682 = vunpack.c.h.b16 %v1316
        %v2683 = vunpack.c.l.b16 %v1317
        %v2684 = vunpack.c.l.b16 %v1318
        %v2685 = vunpack.c.h.b16 %v1318
        %v2686 = vunpack.c.l.b16 %v1319
        %v2687 = vunpack.c.h.b16 %v1319
        %v2688 = vunpack.c.l.b16 %v1320
        %v2689 = vunpack.c.h.b16 %v1320
        %v2690 = vunpack.c.l.b16 %v1321
        %v2691 = vunpack.c.l.b16 %v1322
        %v2692 = vunpack.c.h.b16 %v1322
        %v2693 = vunpack.c.l.b16 %v1323
        %v2694 = vunpack.c.h.b16 %v1323
        %v2695 = vunpack.c.l.b16 %v1324
        %v2696 = vunpack.c.h.b16 %v1324
        %v2697 = vunpack.c.l.b16 %v1325
        %v2698 = vunpack.c.l.b16 %v1326
        %v2699 = vunpack.c.h.b16 %v1326
        %v2700 = vunpack.c.l.b16 %v1327
        %v2701 = vunpack.c.h.b16 %v1327
        %v2702 = vunpack.c.l.b16 %v1328
        %v2703 = vunpack.c.h.b16 %v1328
        %v2704 = vunpack.c.l.b16 %v1329
        %v2705 = vunpack.c.l.b16 %v1330
        %v2706 = vunpack.c.h.b16 %v1330
        %v2707 = vunpack.c.l.b16 %v1331
        %v2708 = vunpack.c.h.b16 %v1331
        %v2709 = vunpack.c.l.b16 %v1332
        %v2710 = vunpack.c.h.b16 %v1332
        %v2711 = vunpack.c.l.b16 %v1333
        %v2712 = vunpack.c.l.b16 %v1334
        %v2713 = vunpack.c.h.b16 %v1334
        %v2714 = vunpack.c.l.b16 %v1335
        %v2715 = vunpack.c.h.b16 %v1335
        %v2716 = vunpack.c.l.b16 %v1336
        %v2717 = vunpack.c.h.b16 %v1336
        %v2718 = vunpack.c.l.b16 %v1337
        %v2719 = vunpack.c.l.b16 %v1338
        %v2720 = vunpack.c.h.b16 %v1338
        %v2721 = vunpack.c.l.b16 %v1339
        %v2722 = vunpack.c.h.b16 %v1339
        %v2723 = vunpack.c.l.b16 %v1340
        %v2724 = vunpack.c.h.b16 %v1340
        %v2725 = vunpack.c.l.b16 %v1341
        %v2726 = vunpack.c.l.b16 %v1342
        %v2727 = vunpack.c.h.b16 %v1342
        %v2728 = vunpack.c.l.b16 %v1343
        %v2729 = vunpack.c.h.b16 %v1343
        %v2730 = vunpack.c.l.b16 %v1344
        %v2731 = vunpack.c.h.b16 %v1344
        %v2732 = vunpack.c.l.b16 %v1345
        %v2733 = vunpack.c.l.b16 %v1346
        %v2734 = vunpack.c.h.b16 %v1346
        %v2735 = vunpack.c.l.b16 %v1347
        %v2736 = vunpack.c.h.b16 %v1347
        %v2737 = vunpack.c.l.b16 %v1348
        %v2738 = vunpack.c.h.b16 %v1348
        %v2739 = vunpack.c.l.b16 %v1349
        %v2740 = vunpack.c.l.b16 %v1350
        %v2741 = vunpack.c.h.b16 %v1350
        %v2742 = vunpack.c.l.b16 %v1351
        %v2743 = vunpack.c.h.b16 %v1351
        %v2744 = vunpack.c.l.b16 %v1352
        %v2745 = vunpack.c.h.b16 %v1352
        %v2746 = vunpack.c.l.b16 %v1353
        %v2747 = vunpack.c.l.b16 %v1354
        %v2748 = vunpack.c.h.b16 %v1354
        %v2749 = vunpack.c.l.b16 %v1355
        %v2750 = vunpack.c.h.b16 %v1355
        %v2751 = vunpack.c.l.b16 %v1356
        %v2752 = vunpack.c.h.b16 %v1356
        %v2753 = vunpack.c.l.b16 %v1357
        %v2754 = vunpack.c.l.b16 %v1358
        %v2755 = vunpack.c.h.b16 %v1358
        %v2756 = vunpack.c.l.b16 %v1359
        %v2757 = vunpack.c.h.b16 %v1359
        %v2758 = vunpack.c.l.b16 %v1360
        %v2759 = vunpack.c.h.b16 %v1360
        %v2760 = vunpack.c.l.b16 %v1361
        %v2761 = vunpack.c.l.b16 %v1362
        %v2762 = vunpack.c.h.b16 %v1362
        %v2763 = vunpack.c.l.b16 %v1363
        %v2764 = vunpack.c.h.b16 %v1363
        %v2765 = vunpack.c.l.b16 %v1364
        %v2766 = vunpack.c.h.b16 %v1364
        %v2767 = vunpack.c.l.b16 %v1365
        %v2768 = vunpack.c.l.b16 %v1366
        %v2769 = vunpack.c.h.b16 %v1366
        %v2770 = vunpack.c.l.b16 %v1367
        %v2771 = vunpack.c.h.b16 %v1367
        %v2772 = vunpack.c.l.b16 %v1368
        %v2773 = vunpack.c.h.b16 %v1368
        %v2774 = vunpack.c.l.b16 %v1369
        %v2775 = vunpack.c.l.b16 %v1370
        %v2776 = vunpack.c.h.b16 %v1370
        %v2777 = vunpack.c.l.b16 %v1371
        %v2778 = vunpack.c.h.b16 %v1371
        %v2779 = vunpack.c.l.b16 %v1372
        %v2780 = vunpack.c.h.b16 %v1372
        %v2781 = vunpack.c.l.b16 %v1373
        %v2782 = vunpack.c.l.b16 %v1374
        %v2783 = vunpack.c.h.b16 %v1374
        %v2784 = vunpack.c.l.b16 %v1375
        %v2785 = vunpack.c.h.b16 %v1375
        %v2786 = vunpack.c.l.b16 %v1376
        %v2787 = vunpack.c.h.b16 %v1376
        %v2788 = vunpack.c.l.b16 %v1377
        %v2789 = vunpack.c.l.b16 %v1378
        %v2790 = vunpack.c.h.b16 %v1378
        %v2791 = vunpack.c.l.b16 %v1379
        %v2792 = vunpack.c.h.b16 %v1379
        %v2793 = vunpack.c.l.b16 %v1380
        %v2794 = vunpack.c.h.b16 %v1380
        %v2795 = vunpack.c.l.b16 %v1381
        %v2796 = vunpack.c.l.b16 %v1382
        %v2797 = vunpack.c.h.b16 %v1382
        %v2798 = vunpack.c.l.b16 %v1383
        %v2799 = vunpack.c.h.b16 %v1383
        %v2800 = vunpack.c.l.b16 %v1384
        %v2801 = vunpack.c.h.b16 %v1384
        %v2802 = vunpack.c.l.b16 %v1385
        %v2803 = vunpack.c.l.b16 %v1386
        %v2804 = vunpack.c.h.b16 %v1386
        %v2805 = vunpack.c.l.b16 %v1387
        %v2806 = vunpack.c.h.b16 %v1387
        %v2807 = vunpack.c.l.b16 %v1388
        %v2808 = vunpack.c.h.b16 %v1388
        %v2809 = vunpack.c.l.b16 %v1389
        %v2810 = vunpack.c.l.b16 %v1390
        %v2811 = vunpack.c.h.b16 %v1390
        %v2812 = vunpack.c.l.b16 %v1391
        %v2813 = vunpack.c.h.b16 %v1391
        %v2814 = vunpack.c.l.b16 %v1392
        %v2815 = vunpack.c.h.b16 %v1392
        %v2816 = vunpack.c.l.b16 %v1393
        %v2817 = vunpack.c.l.b16 %v1394
        %v2818 = vunpack.c.h.b16 %v1394
        %v2819 = vunpack.c.l.b16 %v1395
        %v2820 = vunpack.c.h.b16 %v1395
        %v2821 = vunpack.c.l.b16 %v1396
        %v2822 = vunpack.c.h.b16 %v1396
        %v2823 = vunpack.c.l.b16 %v1397
        %v2824 = vpack.c.b16 %v1935, %v1928
        %v2825 = vpack.c.b16 %v1936, %v1929
        %v2826 = vpack.c.b16 %v1937, %v1930
        %v2827 = vpack.c.b16 %v1938, %v1931
        %v2828 = vpack.c.b16 %v1939, %v1932
        %v2829 = vpack.c.b16 %v1940, %v1933
        %v2830 = vpack.c.b16 %v1941, %v1934
        %v2831 = vpack.c.b16 %v1949, %v1942
        %v2832 = vpack.c.b16 %v1950, %v1943
        %v2833 = vpack.c.b16 %v1951, %v1944
        %v2834 = vpack.c.b16 %v1952, %v1945
        %v2835 = vpack.c.b16 %v1953, %v1946
        %v2836 = vpack.c.b16 %v1954, %v1947
        %v2837 = vpack.c.b16 %v1955, %v1948
        %v2838 = vpack.c.b16 %v1963, %v1956
        %v2839 = vpack.c.b16 %v1964, %v1957
        %v2840 = vpack.c.b16 %v1965, %v1958
        %v2841 = vpack.c.b16 %v1966, %v1959
        %v2842 = vpack.c.b16 %v1967, %v1960
        %v2843 = vpack.c.b16 %v1968, %v1961
        %v2844 = vpack.c.b16 %v1969, %v1962
        %v2845 = vpack.c.b16 %v1977, %v1970
        %v2846 = vpack.c.b16 %v1978, %v1971
        %v2847 = vpack.c.b16 %v1979, %v1972
        %v2848 = vpack.c.b16 %v1980, %v1973
        %v2849 = vpack.c.b16 %v1981, %v1974
        %v2850 = vpack.c.b16 %v1982, %v1975
        %v2851 = vpack.c.b16 %v1983, %v1976
        %v2852 = vpack.c.b16 %v1991, %v1984
        %v2853 = vpack.c.b16 %v1992, %v1985
        %v2854 = vpack.c.b16 %v1993, %v1986
        %v2855 = vpack.c.b16 %v1994, %v1987
        %v2856 = vpack.c.b16 %v1995, %v1988
        %v2857 = vpack.c.b16 %v1996, %v1989
        %v2858 = vpack.c.b16 %v1997, %v1990
        %v2859 = vpack.c.b16 %v2005, %v1998
        %v2860 = vpack.c.b16 %v2006, %v1999
        %v2861 = vpack.c.b16 %v2007, %v2000
        %v2862 = vpack.c.b16 %v2008, %v2001
        %v2863 = vpack.c.b16 %v2009, %v2002
        %v2864 = vpack.c.b16 %v2010, %v2003
        %v2865 = vpack.c.b16 %v2011, %v2004
        %v2866 = vpack.c.b16 %v2019, %v2012
        %v2867 = vpack.c.b16 %v2020, %v2013
        %v2868 = vpack.c.b16 %v2021, %v2014
        %v2869 = vpack.c.b16 %v2022, %v2015
        %v2870 = vpack.c.b16 %v2023, %v2016
        %v2871 = vpack.c.b16 %v2024, %v2017
        %v2872 = vpack.c.b16 %v2025, %v2018
        %v2873 = vpack.c.b16 %v2033, %v2026
        %v2874 = vpack.c.b16 %v2034, %v2027
        %v2875 = vpack.c.b16 %v2035, %v2028
        %v2876 = vpack.c.b16 %v2036, %v2029
        %v2877 = vpack.c.b16 %v2037, %v2030
        %v2878 = vpack.c.b16 %v2038, %v2031
        %v2879 = vpack.c.b16 %v2039, %v2032
        %v2880 = vpack.c.b16 %v2047, %v2040
        %v2881 = vpack.c.b16 %v2048, %v2041
        %v2882 = vpack.c.b16 %v2049, %v2042
        %v2883 = vpack.c.b16 %v2050, %v2043
        %v2884 = vpack.c.b16 %v2051, %v2044
        %v2885 = vpack.c.b16 %v2052, %v2045
        %v2886 = vpack.c.b16 %v2053, %v2046
        %v2887 = vpack.c.b16 %v2061, %v2054
        %v2888 = vpack.c.b16 %v2062, %v2055
        %v2889 = vpack.c.b16 %v2063, %v2056
        %v2890 = vpack.c.b16 %v2064, %v2057
        %v2891 = vpack.c.b16 %v2065, %v2058
        %v2892 = vpack.c.b16 %v2066, %v2059
        %v2893 = vpack.c.b16 %v2067, %v2060
        %v2894 = vpack.c.b16 %v2075, %v2068
        %v2895 = vpack.c.b16 %v2076, %v2069
        %v2896 = vpack.c.b16 %v2077, %v2070
        %v2897 = vpack.c.b16 %v2078, %v2071
        %v2898 = vpack.c.b16 %v2079, %v2072
        %v2899 = vpack.c.b16 %v2080, %v2073
        %v2900 = vpack.c.b16 %v2081, %v2074
        %v2901 = vpack.c.b16 %v2089, %v2082
        %v2902 = vpack.c.b16 %v2090, %v2083
        %v2903 = vpack.c.b16 %v2091, %v2084
        %v2904 = vpack.c.b16 %v2092, %v2085
        %v2905 = vpack.c.b16 %v2093, %v2086
        %v2906 = vpack.c.b16 %v2094, %v2087
        %v2907 = vpack.c.b16 %v2095, %v2088
        %v2908 = vpack.c.b16 %v2103, %v2096
        %v2909 = vpack.c.b16 %v2104, %v2097
        %v2910 = vpack.c.b16 %v2105, %v2098
        %v2911 = vpack.c.b16 %v2106, %v2099
        %v2912 = vpack.c.b16 %v2107, %v2100
        %v2913 = vpack.c.b16 %v2108, %v2101
        %v2914 = vpack.c.b16 %v2109, %v2102
        %v2915 = vpack.c.b16 %v2117, %v2110
        %v2916 = vpack.c.b16 %v2118, %v2111
        %v2917 = vpack.c.b16 %v2119, %v2112
        %v2918 = vpack.c.b16 %v2120, %v2113
        %v2919 = vpack.c.b16 %v2121, %v2114
        %v2920 = vpack.c.b16 %v2122, %v2115
        %v2921 = vpack.c.b16 %v2123, %v2116
        %v2922 = vpack.c.b16 %v2131, %v2124
        %v2923 = vpack.c.b16 %v2132, %v2125
        %v2924 = vpack.c.b16 %v2133, %v2126
        %v2925 = vpack.c.b16 %v2134, %v2127
        %v2926 = vpack.c.b16 %v2135, %v2128
        %v2927 = vpack.c.b16 %v2136, %v2129
        %v2928 = vpack.c.b16 %v2137, %v2130
        %v2929 = vpack.c.b16 %v2145, %v2138
        %v2930 = vpack.c.b16 %v2146, %v2139
        %v2931 = vpack.c.b16 %v2147, %v2140
        %v2932 = vpack.c.b16 %v2148, %v2141
        %v2933 = vpack.c.b16 %v2149, %v2142
        %v2934 = vpack.c.b16 %v2150, %v2143
        %v2935 = vpack.c.b16 %v2151, %v2144
        %v2936 = vpack.c.b16 %v2159, %v2152
        %v2937 = vpack.c.b16 %v2160, %v2153
        %v2938 = vpack.c.b16 %v2161, %v2154
        %v2939 = vpack.c.b16 %v2162, %v2155
        %v2940 = vpack.c.b16 %v2163, %v2156
        %v2941 = vpack.c.b16 %v2164, %v2157
        %v2942 = vpack.c.b16 %v2165, %v2158
        %v2943 = vpack.c.b16 %v2173, %v2166
        %v2944 = vpack.c.b16 %v2174, %v2167
        %v2945 = vpack.c.b16 %v2175, %v2168
        %v2946 = vpack.c.b16 %v2176, %v2169
        %v2947 = vpack.c.b16 %v2177, %v2170
        %v2948 = vpack.c.b16 %v2178, %v2171
        %v2949 = vpack.c.b16 %v2179, %v2172
        %v2950 = vpack.c.b16 %v2187, %v2180
        %v2951 = vpack.c.b16 %v2188, %v2181
        %v2952 = vpack.c.b16 %v2189, %v2182
        %v2953 = vpack.c.b16 %v2190, %v2183
        %v2954 = vpack.c.b16 %v2191, %v2184
        %v2955 = vpack.c.b16 %v2192, %v2185
        %v2956 = vpack.c.b16 %v2193, %v2186
        %v2957 = vpack.c.b16 %v2201, %v2194
        %v2958 = vpack.c.b16 %v2202, %v2195
        %v2959 = vpack.c.b16 %v2203, %v2196
        %v2960 = vpack.c.b16 %v2204, %v2197
        %v2961 = vpack.c.b16 %v2205, %v2198
        %v2962 = vpack.c.b16 %v2206, %v2199
        %v2963 = vpack.c.b16 %v2207, %v2200
        %v2964 = vpack.c.b16 %v2215, %v2208
        %v2965 = vpack.c.b16 %v2216, %v2209
        %v2966 = vpack.c.b16 %v2217, %v2210
        %v2967 = vpack.c.b16 %v2218, %v2211
        %v2968 = vpack.c.b16 %v2219, %v2212
        %v2969 = vpack.c.b16 %v2220, %v2213
        %v2970 = vpack.c.b16 %v2221, %v2214
        %v2971 = vpack.c.b16 %v2229, %v2222
        %v2972 = vpack.c.b16 %v2230, %v2223
        %v2973 = vpack.c.b16 %v2231, %v2224
        %v2974 = vpack.c.b16 %v2232, %v2225
        %v2975 = vpack.c.b16 %v2233, %v2226
        %v2976 = vpack.c.b16 %v2234, %v2227
        %v2977 = vpack.c.b16 %v2235, %v2228
        %v2978 = vpack.c.b16 %v2243, %v2236
        %v2979 = vpack.c.b16 %v2244, %v2237
        %v2980 = vpack.c.b16 %v2245, %v2238
        %v2981 = vpack.c.b16 %v2246, %v2239
        %v2982 = vpack.c.b16 %v2247, %v2240
        %v2983 = vpack.c.b16 %v2248, %v2241
        %v2984 = vpack.c.b16 %v2249, %v2242
        %v2985 = vpack.c.b16 %v2257, %v2250
        %v2986 = vpack.c.b16 %v2258, %v2251
        %v2987 = vpack.c.b16 %v2259, %v2252
        %v2988 = vpack.c.b16 %v2260, %v2253
        %v2989 = vpack.c.b16 %v2261, %v2254
        %v2990 = vpack.c.b16 %v2262, %v2255
        %v2991 = vpack.c.b16 %v2263, %v2256
        %v2992 = vpack.c.b16 %v2271, %v2264
        %v2993 = vpack.c.b16 %v2272, %v2265
        %v2994 = vpack.c.b16 %v2273, %v2266
        %v2995 = vpack.c.b16 %v2274, %v2267
        %v2996 = vpack.c.b16 %v2275, %v2268
        %v2997 = vpack.c.b16 %v2276, %v2269
        %v2998 = vpack.c.b16 %v2277, %v2270
        %v2999 = vpack.c.b16 %v2285, %v2278
        %v3000 = vpack.c.b16 %v2286, %v2279
        %v3001 = vpack.c.b16 %v2287, %v2280
        %v3002 = vpack.c.b16 %v2288, %v2281
        %v3003 = vpack.c.b16 %v2289, %v2282
        %v3004 = vpack.c.b16 %v2290, %v2283
        %v3005 = vpack.c.b16 %v2291, %v2284
        %v3006 = vpack.c.b16 %v2299, %v2292
        %v3007 = vpack.c.b16 %v2300, %v2293
        %v3008 = vpack.c.b16 %v2301, %v2294
        %v3009 = vpack.c.b16 %v2302, %v2295
        %v3010 = vpack.c.b16 %v2303, %v2296
        %v3011 = vpack.c.b16 %v2304, %v2297
        %v3012 = vpack.c.b16 %v2305, %v2298
        %v3013 = vpack.c.b16 %v2313, %v2306
        %v3014 = vpack.c.b16 %v2314, %v2307
        %v3015 = vpack.c.b16 %v2315, %v2308
        %v3016 = vpack.c.b16 %v2316, %v2309
        %v3017 = vpack.c.b16 %v2317, %v2310
        %v3018 = vpack.c.b16 %v2318, %v2311
        %v3019 = vpack.c.b16 %v2319, %v2312
        %v3020 = vpack.c.b16 %v2327, %v2320
        %v3021 = vpack.c.b16 %v2328, %v2321
        %v3022 = vpack.c.b16 %v2329, %v2322
        %v3023 = vpack.c.b16 %v2330, %v2323
        %v3024 = vpack.c.b16 %v2331, %v2324
        %v3025 = vpack.c.b16 %v2332, %v2325
        %v3026 = vpack.c.b16 %v2333, %v2326
        %v3027 = vpack.c.b16 %v2341, %v2334
        %v3028 = vpack.c.b16 %v2342, %v2335
        %v3029 = vpack.c.b16 %v2343, %v2336
        %v3030 = vpack.c.b16 %v2344, %v2337
        %v3031 = vpack.c.b16 %v2345, %v2338
        %v3032 = vpack.c.b16 %v2346, %v2339
        %v3033 = vpack.c.b16 %v2347, %v2340
        %v3034 = vpack.c.b16 %v2355, %v2348
        %v3035 = vpack.c.b16 %v2356, %v2349
        %v3036 = vpack.c.b16 %v2357, %v2350
        %v3037 = vpack.c.b16 %v2358, %v2351
        %v3038 = vpack.c.b16 %v2359, %v2352
        %v3039 = vpack.c.b16 %v2360, %v2353
        %v3040 = vpack.c.b16 %v2361, %v2354
        %v3041 = vpack.c.b16 %v2369, %v2362
        %v3042 = vpack.c.b16 %v2370, %v2363
        %v3043 = vpack.c.b16 %v2371, %v2364
        %v3044 = vpack.c.b16 %v2372, %v2365
        %v3045 = vpack.c.b16 %v2373, %v2366
        %v3046 = vpack.c.b16 %v2374, %v2367
        %v3047 = vpack.c.b16 %v2375, %v2368
        %v3048 = vpack.c.b16 %v2383, %v2376
        %v3049 = vpack.c.b16 %v2384, %v2377
        %v3050 = vpack.c.b16 %v2385, %v2378
        %v3051 = vpack.c.b16 %v2386, %v2379
        %v3052 = vpack.c.b16 %v2387, %v2380
        %v3053 = vpack.c.b16 %v2388, %v2381
        %v3054 = vpack.c.b16 %v2389, %v2382
        %v3055 = vpack.c.b16 %v2397, %v2390
        %v3056 = vpack.c.b16 %v2398, %v2391
        %v3057 = vpack.c.b16 %v2399, %v2392
        %v3058 = vpack.c.b16 %v2400, %v2393
        %v3059 = vpack.c.b16 %v2401, %v2394
        %v3060 = vpack.c.b16 %v2402, %v2395
        %v3061 = vpack.c.b16 %v2403, %v2396
        %v3062 = vpack.c.b16 %v2411, %v2404
        %v3063 = vpack.c.b16 %v2412, %v2405
        %v3064 = vpack.c.b16 %v2413, %v2406
        %v3065 = vpack.c.b16 %v2414, %v2407
        %v3066 = vpack.c.b16 %v2415, %v2408
        %v3067 = vpack.c.b16 %v2416, %v2409
        %v3068 = vpack.c.b16 %v2417, %v2410
        %v3069 = vpack.c.b16 %v2425, %v2418
        %v3070 = vpack.c.b16 %v2426, %v2419
        %v3071 = vpack.c.b16 %v2427, %v2420
        %v3072 = vpack.c.b16 %v2428, %v2421
        %v3073 = vpack.c.b16 %v2429, %v2422
        %v3074 = vpack.c.b16 %v2430, %v2423
        %v3075 = vpack.c.b16 %v2431, %v2424
        %v3076 = vpack.c.b16 %v2439, %v2432
        %v3077 = vpack.c.b16 %v2440, %v2433
        %v3078 = vpack.c.b16 %v2441, %v2434
        %v3079 = vpack.c.b16 %v2442, %v2435
        %v3080 = vpack.c.b16 %v2443, %v2436
        %v3081 = vpack.c.b16 %v2444, %v2437
        %v3082 = vpack.c.b16 %v2445, %v2438
        %v3083 = vpack.c.b16 %v2453, %v2446
        %v3084 = vpack.c.b16 %v2454, %v2447
        %v3085 = vpack.c.b16 %v2455, %v2448
        %v3086 = vpack.c.b16 %v2456, %v2449
        %v3087 = vpack.c.b16 %v2457, %v2450
        %v3088 = vpack.c.b16 %v2458, %v2451
        %v3089 = vpack.c.b16 %v2459, %v2452
        %v3090 = vpack.c.b16 %v2467, %v2460
        %v3091 = vpack.c.b16 %v2468, %v2461
        %v3092 = vpack.c.b16 %v2469, %v2462
        %v3093 = vpack.c.b16 %v2470, %v2463
        %v3094 = vpack.c.b16 %v2471, %v2464
        %v3095 = vpack.c.b16 %v2472, %v2465
        %v3096 = vpack.c.b16 %v2473, %v2466
        %v3097 = vpack.c.b16 %v2481, %v2474
        %v3098 = vpack.c.b16 %v2482, %v2475
        %v3099 = vpack.c.b16 %v2483, %v2476
        %v3100 = vpack.c.b16 %v2484, %v2477
        %v3101 = vpack.c.b16 %v2485, %v2478
        %v3102 = vpack.c.b16 %v2486, %v2479
        %v3103 = vpack.c.b16 %v2487, %v2480
        %v3104 = vpack.c.b16 %v2495, %v2488
        %v3105 = vpack.c.b16 %v2496, %v2489
        %v3106 = vpack.c.b16 %v2497, %v2490
        %v3107 = vpack.c.b16 %v2498, %v2491
        %v3108 = vpack.c.b16 %v2499, %v2492
        %v3109 = vpack.c.b16 %v2500, %v2493
        %v3110 = vpack.c.b16 %v2501, %v2494
        %v3111 = vpack.c.b16 %v2509, %v2502
        %v3112 = vpack.c.b16 %v2510, %v2503
        %v3113 = vpack.c.b16 %v2511, %v2504
        %v3114 = vpack.c.b16 %v2512, %v2505
        %v3115 = vpack.c.b16 %v2513, %v2506
        %v3116 = vpack.c.b16 %v2514, %v2507
        %v3117 = vpack.c.b16 %v2515, %v2508
        %v3118 = vpack.c.b16 %v2523, %v2516
        %v3119 = vpack.c.b16 %v2524, %v2517
        %v3120 = vpack.c.b16 %v2525, %v2518
        %v3121 = vpack.c.b16 %v2526, %v2519
        %v3122 = vpack.c.b16 %v2527, %v2520
        %v3123 = vpack.c.b16 %v2528, %v2521
        %v3124 = vpack.c.b16 %v2529, %v2522
        %v3125 = vpack.c.b16 %v2537, %v2530
        %v3126 = vpack.c.b16 %v2538, %v2531
        %v3127 = vpack.c.b16 %v2539, %v2532
        %v3128 = vpack.c.b16 %v2540, %v2533
        %v3129 = vpack.c.b16 %v2541, %v2534
        %v3130 = vpack.c.b16 %v2542, %v2535
        %v3131 = vpack.c.b16 %v2543, %v2536
        %v3132 = vpack.c.b16 %v2551, %v2544
        %v3133 = vpack.c.b16 %v2552, %v2545
        %v3134 = vpack.c.b16 %v2553, %v2546
        %v3135 = vpack.c.b16 %v2554, %v2547
        %v3136 = vpack.c.b16 %v2555, %v2548
        %v3137 = vpack.c.b16 %v2556, %v2549
        %v3138 = vpack.c.b16 %v2557, %v2550
        %v3139 = vpack.c.b16 %v2565, %v2558
        %v3140 = vpack.c.b16 %v2566, %v2559
        %v3141 = vpack.c.b16 %v2567, %v2560
        %v3142 = vpack.c.b16 %v2568, %v2561
        %v3143 = vpack.c.b16 %v2569, %v2562
        %v3144 = vpack.c.b16 %v2570, %v2563
        %v3145 = vpack.c.b16 %v2571, %v2564
        %v3146 = vpack.c.b16 %v2579, %v2572
        %v3147 = vpack.c.b16 %v2580, %v2573
        %v3148 = vpack.c.b16 %v2581, %v2574
        %v3149 = vpack.c.b16 %v2582, %v2575
        %v3150 = vpack.c.b16 %v2583, %v2576
        %v3151 = vpack.c.b16 %v2584, %v2577
        %v3152 = vpack.c.b16 %v2585, %v2578
        %v3153 = vpack.c.b16 %v2593, %v2586
        %v3154 = vpack.c.b16 %v2594, %v2587
        %v3155 = vpack.c.b16 %v2595, %v2588
        %v3156 = vpack.c.b16 %v2596, %v2589
        %v3157 = vpack.c.b16 %v2597, %v2590
        %v3158 = vpack.c.b16 %v2598, %v2591
        %v3159 = vpack.c.b16 %v2599, %v2592
        %v3160 = vpack.c.b16 %v2607, %v2600
        %v3161 = vpack.c.b16 %v2608, %v2601
        %v3162 = vpack.c.b16 %v2609, %v2602
        %v3163 = vpack.c.b16 %v2610, %v2603
        %v3164 = vpack.c.b16 %v2611, %v2604
        %v3165 = vpack.c.b16 %v2612, %v2605
        %v3166 = vpack.c.b16 %v2613, %v2606
        %v3167 = vpack.c.b16 %v2621, %v2614
        %v3168 = vpack.c.b16 %v2622, %v2615
        %v3169 = vpack.c.b16 %v2623, %v2616
        %v3170 = vpack.c.b16 %v2624, %v2617
        %v3171 = vpack.c.b16 %v2625, %v2618
        %v3172 = vpack.c.b16 %v2626, %v2619
        %v3173 = vpack.c.b16 %v2627, %v2620
        %v3174 = vpack.c.b16 %v2635, %v2628
        %v3175 = vpack.c.b16 %v2636, %v2629
        %v3176 = vpack.c.b16 %v2637, %v2630
        %v3177 = vpack.c.b16 %v2638, %v2631
        %v3178 = vpack.c.b16 %v2639, %v2632
        %v3179 = vpack.c.b16 %v2640, %v2633
        %v3180 = vpack.c.b16 %v2641, %v2634
        %v3181 = vpack.c.b16 %v2649, %v2642
        %v3182 = vpack.c.b16 %v2650, %v2643
        %v3183 = vpack.c.b16 %v2651, %v2644
        %v3184 = vpack.c.b16 %v2652, %v2645
        %v3185 = vpack.c.b16 %v2653, %v2646
        %v3186 = vpack.c.b16 %v2654, %v2647
        %v3187 = vpack.c.b16 %v2655, %v2648
        %v3188 = vpack.c.b16 %v2663, %v2656
        %v3189 = vpack.c.b16 %v2664, %v2657
        %v3190 = vpack.c.b16 %v2665, %v2658
        %v3191 = vpack.c.b16 %v2666, %v2659
        %v3192 = vpack.c.b16 %v2667, %v2660
        %v3193 = vpack.c.b16 %v2668, %v2661
        %v3194 = vpack.c.b16 %v2669, %v2662
        %v3195 = vpack.c.b16 %v2677, %v2670
        %v3196 = vpack.c.b16 %v2678, %v2671
        %v3197 = vpack.c.b16 %v2679, %v2672
        %v3198 = vpack.c.b16 %v2680, %v2673
        %v3199 = vpack.c.b16 %v2681, %v2674
        %v3200 = vpack.c.b16 %v2682, %v2675
        %v3201 = vpack.c.b16 %v2683, %v2676
        %v3202 = vpack.c.b16 %v2691, %v2684
        %v3203 = vpack.c.b16 %v2692, %v2685
        %v3204 = vpack.c.b16 %v2693, %v2686
        %v3205 = vpack.c.b16 %v2694, %v2687
        %v3206 = vpack.c.b16 %v2695, %v2688
        %v3207 = vpack.c.b16 %v2696, %v2689
        %v3208 = vpack.c.b16 %v2697, %v2690
        %v3209 = vpack.c.b16 %v2705, %v2698
        %v3210 = vpack.c.b16 %v2706, %v2699
        %v3211 = vpack.c.b16 %v2707, %v2700
        %v3212 = vpack.c.b16 %v2708, %v2701
        %v3213 = vpack.c.b16 %v2709, %v2702
        %v3214 = vpack.c.b16 %v2710, %v2703
        %v3215 = vpack.c.b16 %v2711, %v2704
        %v3216 = vpack.c.b16 %v2719, %v2712
        %v3217 = vpack.c.b16 %v2720, %v2713
        %v3218 = vpack.c.b16 %v2721, %v2714
        %v3219 = vpack.c.b16 %v2722, %v2715
        %v3220 = vpack.c.b16 %v2723, %v2716
        %v3221 = vpack.c.b16 %v2724, %v2717
        %v3222 = vpack.c.b16 %v2725, %v2718
        %v3223 = vpack.c.b16 %v2733, %v2726
        %v3224 = vpack.c.b16 %v2734, %v2727
        %v3225 = vpack.c.b16 %v2735, %v2728
        %v3226 = vpack.c.b16 %v2736, %v2729
        %v3227 = vpack.c.b16 %v2737, %v2730
        %v3228 = vpack.c.b16 %v2738, %v2731
        %v3229 = vpack.c.b16 %v2739, %v2732
        %v3230 = vpack.c.b16 %v2747, %v2740
        %v3231 = vpack.c.b16 %v2748, %v2741
        %v3232 = vpack.c.b16 %v2749, %v2742
        %v3233 = vpack.c.b16 %v2750, %v2743
        %v3234 = vpack.c.b16 %v2751, %v2744
        %v3235 = vpack.c.b16 %v2752, %v2745
        %v3236 = vpack.c.b16 %v2753, %v2746
        %v3237 = vpack.c.b16 %v2761, %v2754
        %v3238 = vpack.c.b16 %v2762, %v2755
        %v3239 = vpack.c.b16 %v2763, %v2756
        %v3240 = vpack.c.b16 %v2764, %v2757
        %v3241 = vpack.c.b16 %v2765, %v2758
        %v3242 = vpack.c.b16 %v2766, %v2759
        %v3243 = vpack.c.b16 %v2767, %v2760
        %v3244 = vpack.c.b16 %v2775, %v2768
        %v3245 = vpack.c.b16 %v2776, %v2769
        %v3246 = vpack.c.b16 %v2777, %v2770
        %v3247 = vpack.c.b16 %v2778, %v2771
        %v3248 = vpack.c.b16 %v2779, %v2772
        %v3249 = vpack.c.b16 %v2780, %v2773
        %v3250 = vpack.c.b16 %v2781, %v2774
        %v3251 = vpack.c.b16 %v2789, %v2782
        %v3252 = vpack.c.b16 %v2790, %v2783
        %v3253 = vpack.c.b16 %v2791, %v2784
        %v3254 = vpack.c.b16 %v2792, %v2785
        %v3255 = vpack.c.b16 %v2793, %v2786
        %v3256 = vpack.c.b16 %v2794, %v2787
        %v3257 = vpack.c.b16 %v2795, %v2788
        %v3258 = vpack.c.b16 %v2803, %v2796
        %v3259 = vpack.c.b16 %v2804, %v2797
        %v3260 = vpack.c.b16 %v2805, %v2798
        %v3261 = vpack.c.b16 %v2806, %v2799
        %v3262 = vpack.c.b16 %v2807, %v2800
        %v3263 = vpack.c.b16 %v2808, %v2801
        %v3264 = vpack.c.b16 %v2809, %v2802
        %v3265 = vpack.c.b16 %v2817, %v2810
        %v3266 = vpack.c.b16 %v2818, %v2811
        %v3267 = vpack.c.b16 %v2819, %v2812
        %v3268 = vpack.c.b16 %v2820, %v2813
        %v3269 = vpack.c.b16 %v2821, %v2814
        %v3270 = vpack.c.b16 %v2822, %v2815
        %v3271 = vpack.c.b16 %v2823, %v2816
        %3720 = vmatpush.bf16.msra.mxu0 %v2873
        %3721 = vmatpush.bf16.msra.mxu0 %v2866
        %3722 = vmatpush.bf16.msra.mxu0 %v2859
        %3723 = vmatpush.bf16.msra.mxu0 %v2852
        %3724 = vmatpush.bf16.msra.mxu0 %v2845
        %3725 = vmatpush.bf16.msra.mxu0 %v2838
        %3726 = vmatpush.bf16.msra.mxu0 %v2831
        %3727 = vmatpush.bf16.msra.mxu0 %v2824
        %3728 = vmatmul.bf16.gmra.mxu0 %v1400
        %v3729 = vpop.f32.mrf.mxu0
        %v3730 = vadd.f32 0.0, %v3729
        %v3731 = vpop.f32.mrf.mxu0
        %3732 = vdwg.mxu0
        %3733 = vmatpush.bf16.msra.mxu0 %v2929
        %3734 = vmatpush.bf16.msra.mxu0 %v2922
        %3735 = vmatpush.bf16.msra.mxu0 %v2915
        %3736 = vmatpush.bf16.msra.mxu0 %v2908
        %3737 = vmatpush.bf16.msra.mxu0 %v2901
        %3738 = vmatpush.bf16.msra.mxu0 %v2894
        %3739 = vmatpush.bf16.msra.mxu0 %v2887
        %3740 = vmatpush.bf16.msra.mxu0 %v2880
        %3741 = vmatmul.bf16.gmra.mxu0 %v1401
        %v3742 = vpop.f32.mrf.mxu0
        %v3743 = vadd.f32 %v3730, %v3742
        %v3744 = vpop.f32.mrf.mxu0
        %3745 = vdwg.mxu0
        %3746 = vmatpush.bf16.msra.mxu0 %v2985
        %3747 = vmatpush.bf16.msra.mxu0 %v2978
        %3748 = vmatpush.bf16.msra.mxu0 %v2971
        %3749 = vmatpush.bf16.msra.mxu0 %v2964
        %3750 = vmatpush.bf16.msra.mxu0 %v2957
        %3751 = vmatpush.bf16.msra.mxu0 %v2950
        %3752 = vmatpush.bf16.msra.mxu0 %v2943
        %3753 = vmatpush.bf16.msra.mxu0 %v2936
        %3754 = vmatmul.bf16.gmra.mxu0 %v1402
        %v3755 = vpop.f32.mrf.mxu0
        %v3756 = vadd.f32 %v3743, %v3755
        %v3757 = vpop.f32.mrf.mxu0
        %3758 = vdwg.mxu0
        %3759 = vmatpush.bf16.msra.mxu0 %v3041
        %3760 = vmatpush.bf16.msra.mxu0 %v3034
        %3761 = vmatpush.bf16.msra.mxu0 %v3027
        %3762 = vmatpush.bf16.msra.mxu0 %v3020
        %3763 = vmatpush.bf16.msra.mxu0 %v3013
        %3764 = vmatpush.bf16.msra.mxu0 %v3006
        %3765 = vmatpush.bf16.msra.mxu0 %v2999
        %3766 = vmatpush.bf16.msra.mxu0 %v2992
        %3767 = vmatmul.bf16.gmra.mxu0 %v1403
        %v3768 = vpop.f32.mrf.mxu0
        %v3769 = vadd.f32 %v3756, %v3768
        %v3770 = vpop.f32.mrf.mxu0
        %3771 = vdwg.mxu0
        %3772 = vmatpush.bf16.msra.mxu0 %v3097
        %3773 = vmatpush.bf16.msra.mxu0 %v3090
        %3774 = vmatpush.bf16.msra.mxu0 %v3083
        %3775 = vmatpush.bf16.msra.mxu0 %v3076
        %3776 = vmatpush.bf16.msra.mxu0 %v3069
        %3777 = vmatpush.bf16.msra.mxu0 %v3062
        %3778 = vmatpush.bf16.msra.mxu0 %v3055
        %3779 = vmatpush.bf16.msra.mxu0 %v3048
        %3780 = vmatmul.bf16.gmra.mxu0 %v1404
        %v3781 = vpop.f32.mrf.mxu0
        %v3782 = vadd.f32 %v3769, %v3781
        %v3783 = vpop.f32.mrf.mxu0
        %3784 = vdwg.mxu0
        %3785 = vmatpush.bf16.msra.mxu0 %v3153
        %3786 = vmatpush.bf16.msra.mxu0 %v3146
        %3787 = vmatpush.bf16.msra.mxu0 %v3139
        %3788 = vmatpush.bf16.msra.mxu0 %v3132
        %3789 = vmatpush.bf16.msra.mxu0 %v3125
        %3790 = vmatpush.bf16.msra.mxu0 %v3118
        %3791 = vmatpush.bf16.msra.mxu0 %v3111
        %3792 = vmatpush.bf16.msra.mxu0 %v3104
        %3793 = vmatmul.bf16.gmra.mxu0 %v1405
        %v3794 = vpop.f32.mrf.mxu0
        %v3795 = vadd.f32 %v3782, %v3794
        %v3796 = vpop.f32.mrf.mxu0
        %3797 = vdwg.mxu0
        %3798 = vmatpush.bf16.msra.mxu0 %v3209
        %3799 = vmatpush.bf16.msra.mxu0 %v3202
        %3800 = vmatpush.bf16.msra.mxu0 %v3195
        %3801 = vmatpush.bf16.msra.mxu0 %v3188
        %3802 = vmatpush.bf16.msra.mxu0 %v3181
        %3803 = vmatpush.bf16.msra.mxu0 %v3174
        %3804 = vmatpush.bf16.msra.mxu0 %v3167
        %3805 = vmatpush.bf16.msra.mxu0 %v3160
        %3806 = vmatmul.bf16.gmra.mxu0 %v1406
        %v3807 = vpop.f32.mrf.mxu0
        %v3808 = vadd.f32 %v3795, %v3807
        %v3809 = vpop.f32.mrf.mxu0
        %3810 = vdwg.mxu0
        %3811 = vmatpush.bf16.msra.mxu0 %v3265
        %3812 = vmatpush.bf16.msra.mxu0 %v3258
        %3813 = vmatpush.bf16.msra.mxu0 %v3251
        %3814 = vmatpush.bf16.msra.mxu0 %v3244
        %3815 = vmatpush.bf16.msra.mxu0 %v3237
        %3816 = vmatpush.bf16.msra.mxu0 %v3230
        %3817 = vmatpush.bf16.msra.mxu0 %v3223
        %3818 = vmatpush.bf16.msra.mxu0 %v3216
        %3819 = vmatmul.bf16.gmra.mxu0 %v1407
        %v3820 = vpop.f32.mrf.mxu0
        %v3821 = vadd.f32 %v3808, %v3820
        %v3822 = vpop.f32.mrf.mxu0
        %3823 = vdwg.mxu0
        %3824 = vmatpush.bf16.msra.mxu0 %v2874
        %3825 = vmatpush.bf16.msra.mxu0 %v2867
        %3826 = vmatpush.bf16.msra.mxu0 %v2860
        %3827 = vmatpush.bf16.msra.mxu0 %v2853
        %3828 = vmatpush.bf16.msra.mxu0 %v2846
        %3829 = vmatpush.bf16.msra.mxu0 %v2839
        %3830 = vmatpush.bf16.msra.mxu0 %v2832
        %3831 = vmatpush.bf16.msra.mxu0 %v2825
        %3832 = vmatmul.bf16.gmra.mxu0 %v1400
        %v3833 = vpop.f32.mrf.mxu0
        %v3834 = vadd.f32 0.0, %v3833
        %v3835 = vpop.f32.mrf.mxu0
        %3836 = vdwg.mxu0
        %3837 = vmatpush.bf16.msra.mxu0 %v2930
        %3838 = vmatpush.bf16.msra.mxu0 %v2923
        %3839 = vmatpush.bf16.msra.mxu0 %v2916
        %3840 = vmatpush.bf16.msra.mxu0 %v2909
        %3841 = vmatpush.bf16.msra.mxu0 %v2902
        %3842 = vmatpush.bf16.msra.mxu0 %v2895
        %3843 = vmatpush.bf16.msra.mxu0 %v2888
        %3844 = vmatpush.bf16.msra.mxu0 %v2881
        %3845 = vmatmul.bf16.gmra.mxu0 %v1401
        %v3846 = vpop.f32.mrf.mxu0
        %v3847 = vadd.f32 %v3834, %v3846
        %v3848 = vpop.f32.mrf.mxu0
        %3849 = vdwg.mxu0
        %3850 = vmatpush.bf16.msra.mxu0 %v2986
        %3851 = vmatpush.bf16.msra.mxu0 %v2979
        %3852 = vmatpush.bf16.msra.mxu0 %v2972
        %3853 = vmatpush.bf16.msra.mxu0 %v2965
        %3854 = vmatpush.bf16.msra.mxu0 %v2958
        %3855 = vmatpush.bf16.msra.mxu0 %v2951
        %3856 = vmatpush.bf16.msra.mxu0 %v2944
        %3857 = vmatpush.bf16.msra.mxu0 %v2937
        %3858 = vmatmul.bf16.gmra.mxu0 %v1402
        %v3859 = vpop.f32.mrf.mxu0
        %v3860 = vadd.f32 %v3847, %v3859
        %v3861 = vpop.f32.mrf.mxu0
        %3862 = vdwg.mxu0
        %3863 = vmatpush.bf16.msra.mxu0 %v3042
        %3864 = vmatpush.bf16.msra.mxu0 %v3035
        %3865 = vmatpush.bf16.msra.mxu0 %v3028
        %3866 = vmatpush.bf16.msra.mxu0 %v3021
        %3867 = vmatpush.bf16.msra.mxu0 %v3014
        %3868 = vmatpush.bf16.msra.mxu0 %v3007
        %3869 = vmatpush.bf16.msra.mxu0 %v3000
        %3870 = vmatpush.bf16.msra.mxu0 %v2993
        %3871 = vmatmul.bf16.gmra.mxu0 %v1403
        %v3872 = vpop.f32.mrf.mxu0
        %v3873 = vadd.f32 %v3860, %v3872
        %v3874 = vpop.f32.mrf.mxu0
        %3875 = vdwg.mxu0
        %3876 = vmatpush.bf16.msra.mxu0 %v3098
        %3877 = vmatpush.bf16.msra.mxu0 %v3091
        %3878 = vmatpush.bf16.msra.mxu0 %v3084
        %3879 = vmatpush.bf16.msra.mxu0 %v3077
        %3880 = vmatpush.bf16.msra.mxu0 %v3070
        %3881 = vmatpush.bf16.msra.mxu0 %v3063
        %3882 = vmatpush.bf16.msra.mxu0 %v3056
        %3883 = vmatpush.bf16.msra.mxu0 %v3049
        %3884 = vmatmul.bf16.gmra.mxu0 %v1404
        %v3885 = vpop.f32.mrf.mxu0
        %v3886 = vadd.f32 %v3873, %v3885
        %v3887 = vpop.f32.mrf.mxu0
        %3888 = vdwg.mxu0
        %3889 = vmatpush.bf16.msra.mxu0 %v3154
        %3890 = vmatpush.bf16.msra.mxu0 %v3147
        %3891 = vmatpush.bf16.msra.mxu0 %v3140
        %3892 = vmatpush.bf16.msra.mxu0 %v3133
        %3893 = vmatpush.bf16.msra.mxu0 %v3126
        %3894 = vmatpush.bf16.msra.mxu0 %v3119
        %3895 = vmatpush.bf16.msra.mxu0 %v3112
        %3896 = vmatpush.bf16.msra.mxu0 %v3105
        %3897 = vmatmul.bf16.gmra.mxu0 %v1405
        %v3898 = vpop.f32.mrf.mxu0
        %v3899 = vadd.f32 %v3886, %v3898
        %v3900 = vpop.f32.mrf.mxu0
        %3901 = vdwg.mxu0
        %3902 = vmatpush.bf16.msra.mxu0 %v3210
        %3903 = vmatpush.bf16.msra.mxu0 %v3203
        %3904 = vmatpush.bf16.msra.mxu0 %v3196
        %3905 = vmatpush.bf16.msra.mxu0 %v3189
        %3906 = vmatpush.bf16.msra.mxu0 %v3182
        %3907 = vmatpush.bf16.msra.mxu0 %v3175
        %3908 = vmatpush.bf16.msra.mxu0 %v3168
        %3909 = vmatpush.bf16.msra.mxu0 %v3161
        %3910 = vmatmul.bf16.gmra.mxu0 %v1406
        %v3911 = vpop.f32.mrf.mxu0
        %v3912 = vadd.f32 %v3899, %v3911
        %v3913 = vpop.f32.mrf.mxu0
        %3914 = vdwg.mxu0
        %3915 = vmatpush.bf16.msra.mxu0 %v3266
        %3916 = vmatpush.bf16.msra.mxu0 %v3259
        %3917 = vmatpush.bf16.msra.mxu0 %v3252
        %3918 = vmatpush.bf16.msra.mxu0 %v3245
        %3919 = vmatpush.bf16.msra.mxu0 %v3238
        %3920 = vmatpush.bf16.msra.mxu0 %v3231
        %3921 = vmatpush.bf16.msra.mxu0 %v3224
        %3922 = vmatpush.bf16.msra.mxu0 %v3217
        %3923 = vmatmul.bf16.gmra.mxu0 %v1407
        %v3924 = vpop.f32.mrf.mxu0
        %v3925 = vadd.f32 %v3912, %v3924
        %v3926 = vpop.f32.mrf.mxu0
        %3927 = vdwg.mxu0
        %3928 = vmatpush.bf16.msra.mxu0 %v2875
        %3929 = vmatpush.bf16.msra.mxu0 %v2868
        %3930 = vmatpush.bf16.msra.mxu0 %v2861
        %3931 = vmatpush.bf16.msra.mxu0 %v2854
        %3932 = vmatpush.bf16.msra.mxu0 %v2847
        %3933 = vmatpush.bf16.msra.mxu0 %v2840
        %3934 = vmatpush.bf16.msra.mxu0 %v2833
        %3935 = vmatpush.bf16.msra.mxu0 %v2826
        %3936 = vmatmul.bf16.gmra.mxu0 %v1400
        %v3937 = vpop.f32.mrf.mxu0
        %v3938 = vadd.f32 0.0, %v3937
        %v3939 = vpop.f32.mrf.mxu0
        %3940 = vdwg.mxu0
        %3941 = vmatpush.bf16.msra.mxu0 %v2931
        %3942 = vmatpush.bf16.msra.mxu0 %v2924
        %3943 = vmatpush.bf16.msra.mxu0 %v2917
        %3944 = vmatpush.bf16.msra.mxu0 %v2910
        %3945 = vmatpush.bf16.msra.mxu0 %v2903
        %3946 = vmatpush.bf16.msra.mxu0 %v2896
        %3947 = vmatpush.bf16.msra.mxu0 %v2889
        %3948 = vmatpush.bf16.msra.mxu0 %v2882
        %3949 = vmatmul.bf16.gmra.mxu0 %v1401
        %v3950 = vpop.f32.mrf.mxu0
        %v3951 = vadd.f32 %v3938, %v3950
        %v3952 = vpop.f32.mrf.mxu0
        %3953 = vdwg.mxu0
        %3954 = vmatpush.bf16.msra.mxu0 %v2987
        %3955 = vmatpush.bf16.msra.mxu0 %v2980
        %3956 = vmatpush.bf16.msra.mxu0 %v2973
        %3957 = vmatpush.bf16.msra.mxu0 %v2966
        %3958 = vmatpush.bf16.msra.mxu0 %v2959
        %3959 = vmatpush.bf16.msra.mxu0 %v2952
        %3960 = vmatpush.bf16.msra.mxu0 %v2945
        %3961 = vmatpush.bf16.msra.mxu0 %v2938
        %3962 = vmatmul.bf16.gmra.mxu0 %v1402
        %v3963 = vpop.f32.mrf.mxu0
        %v3964 = vadd.f32 %v3951, %v3963
        %v3965 = vpop.f32.mrf.mxu0
        %3966 = vdwg.mxu0
        %3967 = vmatpush.bf16.msra.mxu0 %v3043
        %3968 = vmatpush.bf16.msra.mxu0 %v3036
        %3969 = vmatpush.bf16.msra.mxu0 %v3029
        %3970 = vmatpush.bf16.msra.mxu0 %v3022
        %3971 = vmatpush.bf16.msra.mxu0 %v3015
        %3972 = vmatpush.bf16.msra.mxu0 %v3008
        %3973 = vmatpush.bf16.msra.mxu0 %v3001
        %3974 = vmatpush.bf16.msra.mxu0 %v2994
        %3975 = vmatmul.bf16.gmra.mxu0 %v1403
        %v3976 = vpop.f32.mrf.mxu0
        %v3977 = vadd.f32 %v3964, %v3976
        %v3978 = vpop.f32.mrf.mxu0
        %3979 = vdwg.mxu0
        %3980 = vmatpush.bf16.msra.mxu0 %v3099
        %3981 = vmatpush.bf16.msra.mxu0 %v3092
        %3982 = vmatpush.bf16.msra.mxu0 %v3085
        %3983 = vmatpush.bf16.msra.mxu0 %v3078
        %3984 = vmatpush.bf16.msra.mxu0 %v3071
        %3985 = vmatpush.bf16.msra.mxu0 %v3064
        %3986 = vmatpush.bf16.msra.mxu0 %v3057
        %3987 = vmatpush.bf16.msra.mxu0 %v3050
        %3988 = vmatmul.bf16.gmra.mxu0 %v1404
        %v3989 = vpop.f32.mrf.mxu0
        %v3990 = vadd.f32 %v3977, %v3989
        %v3991 = vpop.f32.mrf.mxu0
        %3992 = vdwg.mxu0
        %3993 = vmatpush.bf16.msra.mxu0 %v3155
        %3994 = vmatpush.bf16.msra.mxu0 %v3148
        %3995 = vmatpush.bf16.msra.mxu0 %v3141
        %3996 = vmatpush.bf16.msra.mxu0 %v3134
        %3997 = vmatpush.bf16.msra.mxu0 %v3127
        %3998 = vmatpush.bf16.msra.mxu0 %v3120
        %3999 = vmatpush.bf16.msra.mxu0 %v3113
        %4000 = vmatpush.bf16.msra.mxu0 %v3106
        %4001 = vmatmul.bf16.gmra.mxu0 %v1405
        %v4002 = vpop.f32.mrf.mxu0
        %v4003 = vadd.f32 %v3990, %v4002
        %v4004 = vpop.f32.mrf.mxu0
        %4005 = vdwg.mxu0
        %4006 = vmatpush.bf16.msra.mxu0 %v3211
        %4007 = vmatpush.bf16.msra.mxu0 %v3204
        %4008 = vmatpush.bf16.msra.mxu0 %v3197
        %4009 = vmatpush.bf16.msra.mxu0 %v3190
        %4010 = vmatpush.bf16.msra.mxu0 %v3183
        %4011 = vmatpush.bf16.msra.mxu0 %v3176
        %4012 = vmatpush.bf16.msra.mxu0 %v3169
        %4013 = vmatpush.bf16.msra.mxu0 %v3162
        %4014 = vmatmul.bf16.gmra.mxu0 %v1406
        %v4015 = vpop.f32.mrf.mxu0
        %v4016 = vadd.f32 %v4003, %v4015
        %v4017 = vpop.f32.mrf.mxu0
        %4018 = vdwg.mxu0
        %4019 = vmatpush.bf16.msra.mxu0 %v3267
        %4020 = vmatpush.bf16.msra.mxu0 %v3260
        %4021 = vmatpush.bf16.msra.mxu0 %v3253
        %4022 = vmatpush.bf16.msra.mxu0 %v3246
        %4023 = vmatpush.bf16.msra.mxu0 %v3239
        %4024 = vmatpush.bf16.msra.mxu0 %v3232
        %4025 = vmatpush.bf16.msra.mxu0 %v3225
        %4026 = vmatpush.bf16.msra.mxu0 %v3218
        %4027 = vmatmul.bf16.gmra.mxu0 %v1407
        %v4028 = vpop.f32.mrf.mxu0
        %v4029 = vadd.f32 %v4016, %v4028
        %v4030 = vpop.f32.mrf.mxu0
        %4031 = vdwg.mxu0
        %4032 = vmatpush.bf16.msra.mxu0 %v2876
        %4033 = vmatpush.bf16.msra.mxu0 %v2869
        %4034 = vmatpush.bf16.msra.mxu0 %v2862
        %4035 = vmatpush.bf16.msra.mxu0 %v2855
        %4036 = vmatpush.bf16.msra.mxu0 %v2848
        %4037 = vmatpush.bf16.msra.mxu0 %v2841
        %4038 = vmatpush.bf16.msra.mxu0 %v2834
        %4039 = vmatpush.bf16.msra.mxu0 %v2827
        %4040 = vmatmul.bf16.gmra.mxu0 %v1400
        %v4041 = vpop.f32.mrf.mxu0
        %v4042 = vadd.f32 0.0, %v4041
        %v4043 = vpop.f32.mrf.mxu0
        %4044 = vdwg.mxu0
        %4045 = vmatpush.bf16.msra.mxu0 %v2932
        %4046 = vmatpush.bf16.msra.mxu0 %v2925
        %4047 = vmatpush.bf16.msra.mxu0 %v2918
        %4048 = vmatpush.bf16.msra.mxu0 %v2911
        %4049 = vmatpush.bf16.msra.mxu0 %v2904
        %4050 = vmatpush.bf16.msra.mxu0 %v2897
        %4051 = vmatpush.bf16.msra.mxu0 %v2890
        %4052 = vmatpush.bf16.msra.mxu0 %v2883
        %4053 = vmatmul.bf16.gmra.mxu0 %v1401
        %v4054 = vpop.f32.mrf.mxu0
        %v4055 = vadd.f32 %v4042, %v4054
        %v4056 = vpop.f32.mrf.mxu0
        %4057 = vdwg.mxu0
        %4058 = vmatpush.bf16.msra.mxu0 %v2988
        %4059 = vmatpush.bf16.msra.mxu0 %v2981
        %4060 = vmatpush.bf16.msra.mxu0 %v2974
        %4061 = vmatpush.bf16.msra.mxu0 %v2967
        %4062 = vmatpush.bf16.msra.mxu0 %v2960
        %4063 = vmatpush.bf16.msra.mxu0 %v2953
        %4064 = vmatpush.bf16.msra.mxu0 %v2946
        %4065 = vmatpush.bf16.msra.mxu0 %v2939
        %4066 = vmatmul.bf16.gmra.mxu0 %v1402
        %v4067 = vpop.f32.mrf.mxu0
        %v4068 = vadd.f32 %v4055, %v4067
        %v4069 = vpop.f32.mrf.mxu0
        %4070 = vdwg.mxu0
        %4071 = vmatpush.bf16.msra.mxu0 %v3044
        %4072 = vmatpush.bf16.msra.mxu0 %v3037
        %4073 = vmatpush.bf16.msra.mxu0 %v3030
        %4074 = vmatpush.bf16.msra.mxu0 %v3023
        %4075 = vmatpush.bf16.msra.mxu0 %v3016
        %4076 = vmatpush.bf16.msra.mxu0 %v3009
        %4077 = vmatpush.bf16.msra.mxu0 %v3002
        %4078 = vmatpush.bf16.msra.mxu0 %v2995
        %4079 = vmatmul.bf16.gmra.mxu0 %v1403
        %v4080 = vpop.f32.mrf.mxu0
        %v4081 = vadd.f32 %v4068, %v4080
        %v4082 = vpop.f32.mrf.mxu0
        %4083 = vdwg.mxu0
        %4084 = vmatpush.bf16.msra.mxu0 %v3100
        %4085 = vmatpush.bf16.msra.mxu0 %v3093
        %4086 = vmatpush.bf16.msra.mxu0 %v3086
        %4087 = vmatpush.bf16.msra.mxu0 %v3079
        %4088 = vmatpush.bf16.msra.mxu0 %v3072
        %4089 = vmatpush.bf16.msra.mxu0 %v3065
        %4090 = vmatpush.bf16.msra.mxu0 %v3058
        %4091 = vmatpush.bf16.msra.mxu0 %v3051
        %4092 = vmatmul.bf16.gmra.mxu0 %v1404
        %v4093 = vpop.f32.mrf.mxu0
        %v4094 = vadd.f32 %v4081, %v4093
        %v4095 = vpop.f32.mrf.mxu0
        %4096 = vdwg.mxu0
        %4097 = vmatpush.bf16.msra.mxu0 %v3156
        %4098 = vmatpush.bf16.msra.mxu0 %v3149
        %4099 = vmatpush.bf16.msra.mxu0 %v3142
        %4100 = vmatpush.bf16.msra.mxu0 %v3135
        %4101 = vmatpush.bf16.msra.mxu0 %v3128
        %4102 = vmatpush.bf16.msra.mxu0 %v3121
        %4103 = vmatpush.bf16.msra.mxu0 %v3114
        %4104 = vmatpush.bf16.msra.mxu0 %v3107
        %4105 = vmatmul.bf16.gmra.mxu0 %v1405
        %v4106 = vpop.f32.mrf.mxu0
        %v4107 = vadd.f32 %v4094, %v4106
        %v4108 = vpop.f32.mrf.mxu0
        %4109 = vdwg.mxu0
        %4110 = vmatpush.bf16.msra.mxu0 %v3212
        %4111 = vmatpush.bf16.msra.mxu0 %v3205
        %4112 = vmatpush.bf16.msra.mxu0 %v3198
        %4113 = vmatpush.bf16.msra.mxu0 %v3191
        %4114 = vmatpush.bf16.msra.mxu0 %v3184
        %4115 = vmatpush.bf16.msra.mxu0 %v3177
        %4116 = vmatpush.bf16.msra.mxu0 %v3170
        %4117 = vmatpush.bf16.msra.mxu0 %v3163
        %4118 = vmatmul.bf16.gmra.mxu0 %v1406
        %v4119 = vpop.f32.mrf.mxu0
        %v4120 = vadd.f32 %v4107, %v4119
        %v4121 = vpop.f32.mrf.mxu0
        %4122 = vdwg.mxu0
        %4123 = vmatpush.bf16.msra.mxu0 %v3268
        %4124 = vmatpush.bf16.msra.mxu0 %v3261
        %4125 = vmatpush.bf16.msra.mxu0 %v3254
        %4126 = vmatpush.bf16.msra.mxu0 %v3247
        %4127 = vmatpush.bf16.msra.mxu0 %v3240
        %4128 = vmatpush.bf16.msra.mxu0 %v3233
        %4129 = vmatpush.bf16.msra.mxu0 %v3226
        %4130 = vmatpush.bf16.msra.mxu0 %v3219
        %4131 = vmatmul.bf16.gmra.mxu0 %v1407
        %v4132 = vpop.f32.mrf.mxu0
        %v4133 = vadd.f32 %v4120, %v4132
        %v4134 = vpop.f32.mrf.mxu0
        %4135 = vdwg.mxu0
        %4136 = vmatpush.bf16.msra.mxu0 %v2877
        %4137 = vmatpush.bf16.msra.mxu0 %v2870
        %4138 = vmatpush.bf16.msra.mxu0 %v2863
        %4139 = vmatpush.bf16.msra.mxu0 %v2856
        %4140 = vmatpush.bf16.msra.mxu0 %v2849
        %4141 = vmatpush.bf16.msra.mxu0 %v2842
        %4142 = vmatpush.bf16.msra.mxu0 %v2835
        %4143 = vmatpush.bf16.msra.mxu0 %v2828
        %4144 = vmatmul.bf16.gmra.mxu0 %v1400
        %v4145 = vpop.f32.mrf.mxu0
        %v4146 = vadd.f32 0.0, %v4145
        %v4147 = vpop.f32.mrf.mxu0
        %4148 = vdwg.mxu0
        %4149 = vmatpush.bf16.msra.mxu0 %v2933
        %4150 = vmatpush.bf16.msra.mxu0 %v2926
        %4151 = vmatpush.bf16.msra.mxu0 %v2919
        %4152 = vmatpush.bf16.msra.mxu0 %v2912
        %4153 = vmatpush.bf16.msra.mxu0 %v2905
        %4154 = vmatpush.bf16.msra.mxu0 %v2898
        %4155 = vmatpush.bf16.msra.mxu0 %v2891
        %4156 = vmatpush.bf16.msra.mxu0 %v2884
        %4157 = vmatmul.bf16.gmra.mxu0 %v1401
        %v4158 = vpop.f32.mrf.mxu0
        %v4159 = vadd.f32 %v4146, %v4158
        %v4160 = vpop.f32.mrf.mxu0
        %4161 = vdwg.mxu0
        %4162 = vmatpush.bf16.msra.mxu0 %v2989
        %4163 = vmatpush.bf16.msra.mxu0 %v2982
        %4164 = vmatpush.bf16.msra.mxu0 %v2975
        %4165 = vmatpush.bf16.msra.mxu0 %v2968
        %4166 = vmatpush.bf16.msra.mxu0 %v2961
        %4167 = vmatpush.bf16.msra.mxu0 %v2954
        %4168 = vmatpush.bf16.msra.mxu0 %v2947
        %4169 = vmatpush.bf16.msra.mxu0 %v2940
        %4170 = vmatmul.bf16.gmra.mxu0 %v1402
        %v4171 = vpop.f32.mrf.mxu0
        %v4172 = vadd.f32 %v4159, %v4171
        %v4173 = vpop.f32.mrf.mxu0
        %4174 = vdwg.mxu0
        %4175 = vmatpush.bf16.msra.mxu0 %v3045
        %4176 = vmatpush.bf16.msra.mxu0 %v3038
        %4177 = vmatpush.bf16.msra.mxu0 %v3031
        %4178 = vmatpush.bf16.msra.mxu0 %v3024
        %4179 = vmatpush.bf16.msra.mxu0 %v3017
        %4180 = vmatpush.bf16.msra.mxu0 %v3010
        %4181 = vmatpush.bf16.msra.mxu0 %v3003
        %4182 = vmatpush.bf16.msra.mxu0 %v2996
        %4183 = vmatmul.bf16.gmra.mxu0 %v1403
        %v4184 = vpop.f32.mrf.mxu0
        %v4185 = vadd.f32 %v4172, %v4184
        %v4186 = vpop.f32.mrf.mxu0
        %4187 = vdwg.mxu0
        %4188 = vmatpush.bf16.msra.mxu0 %v3101
        %4189 = vmatpush.bf16.msra.mxu0 %v3094
        %4190 = vmatpush.bf16.msra.mxu0 %v3087
        %4191 = vmatpush.bf16.msra.mxu0 %v3080
        %4192 = vmatpush.bf16.msra.mxu0 %v3073
        %4193 = vmatpush.bf16.msra.mxu0 %v3066
        %4194 = vmatpush.bf16.msra.mxu0 %v3059
        %4195 = vmatpush.bf16.msra.mxu0 %v3052
        %4196 = vmatmul.bf16.gmra.mxu0 %v1404
        %v4197 = vpop.f32.mrf.mxu0
        %v4198 = vadd.f32 %v4185, %v4197
        %v4199 = vpop.f32.mrf.mxu0
        %4200 = vdwg.mxu0
        %4201 = vmatpush.bf16.msra.mxu0 %v3157
        %4202 = vmatpush.bf16.msra.mxu0 %v3150
        %4203 = vmatpush.bf16.msra.mxu0 %v3143
        %4204 = vmatpush.bf16.msra.mxu0 %v3136
        %4205 = vmatpush.bf16.msra.mxu0 %v3129
        %4206 = vmatpush.bf16.msra.mxu0 %v3122
        %4207 = vmatpush.bf16.msra.mxu0 %v3115
        %4208 = vmatpush.bf16.msra.mxu0 %v3108
        %4209 = vmatmul.bf16.gmra.mxu0 %v1405
        %v4210 = vpop.f32.mrf.mxu0
        %v4211 = vadd.f32 %v4198, %v4210
        %v4212 = vpop.f32.mrf.mxu0
        %4213 = vdwg.mxu0
        %4214 = vmatpush.bf16.msra.mxu0 %v3213
        %4215 = vmatpush.bf16.msra.mxu0 %v3206
        %4216 = vmatpush.bf16.msra.mxu0 %v3199
        %4217 = vmatpush.bf16.msra.mxu0 %v3192
        %4218 = vmatpush.bf16.msra.mxu0 %v3185
        %4219 = vmatpush.bf16.msra.mxu0 %v3178
        %4220 = vmatpush.bf16.msra.mxu0 %v3171
        %4221 = vmatpush.bf16.msra.mxu0 %v3164
        %4222 = vmatmul.bf16.gmra.mxu0 %v1406
        %v4223 = vpop.f32.mrf.mxu0
        %v4224 = vadd.f32 %v4211, %v4223
        %v4225 = vpop.f32.mrf.mxu0
        %4226 = vdwg.mxu0
        %4227 = vmatpush.bf16.msra.mxu0 %v3269
        %4228 = vmatpush.bf16.msra.mxu0 %v3262
        %4229 = vmatpush.bf16.msra.mxu0 %v3255
        %4230 = vmatpush.bf16.msra.mxu0 %v3248
        %4231 = vmatpush.bf16.msra.mxu0 %v3241
        %4232 = vmatpush.bf16.msra.mxu0 %v3234
        %4233 = vmatpush.bf16.msra.mxu0 %v3227
        %4234 = vmatpush.bf16.msra.mxu0 %v3220
        %4235 = vmatmul.bf16.gmra.mxu0 %v1407
        %v4236 = vpop.f32.mrf.mxu0
        %v4237 = vadd.f32 %v4224, %v4236
        %v4238 = vpop.f32.mrf.mxu0
        %4239 = vdwg.mxu0
        %4240 = vmatpush.bf16.msra.mxu0 %v2878
        %4241 = vmatpush.bf16.msra.mxu0 %v2871
        %4242 = vmatpush.bf16.msra.mxu0 %v2864
        %4243 = vmatpush.bf16.msra.mxu0 %v2857
        %4244 = vmatpush.bf16.msra.mxu0 %v2850
        %4245 = vmatpush.bf16.msra.mxu0 %v2843
        %4246 = vmatpush.bf16.msra.mxu0 %v2836
        %4247 = vmatpush.bf16.msra.mxu0 %v2829
        %4248 = vmatmul.bf16.gmra.mxu0 %v1400
        %v4249 = vpop.f32.mrf.mxu0
        %v4250 = vadd.f32 0.0, %v4249
        %v4251 = vpop.f32.mrf.mxu0
        %4252 = vdwg.mxu0
        %4253 = vmatpush.bf16.msra.mxu0 %v2934
        %4254 = vmatpush.bf16.msra.mxu0 %v2927
        %4255 = vmatpush.bf16.msra.mxu0 %v2920
        %4256 = vmatpush.bf16.msra.mxu0 %v2913
        %4257 = vmatpush.bf16.msra.mxu0 %v2906
        %4258 = vmatpush.bf16.msra.mxu0 %v2899
        %4259 = vmatpush.bf16.msra.mxu0 %v2892
        %4260 = vmatpush.bf16.msra.mxu0 %v2885
        %4261 = vmatmul.bf16.gmra.mxu0 %v1401
        %v4262 = vpop.f32.mrf.mxu0
        %v4263 = vadd.f32 %v4250, %v4262
        %v4264 = vpop.f32.mrf.mxu0
        %4265 = vdwg.mxu0
        %4266 = vmatpush.bf16.msra.mxu0 %v2990
        %4267 = vmatpush.bf16.msra.mxu0 %v2983
        %4268 = vmatpush.bf16.msra.mxu0 %v2976
        %4269 = vmatpush.bf16.msra.mxu0 %v2969
        %4270 = vmatpush.bf16.msra.mxu0 %v2962
        %4271 = vmatpush.bf16.msra.mxu0 %v2955
        %4272 = vmatpush.bf16.msra.mxu0 %v2948
        %4273 = vmatpush.bf16.msra.mxu0 %v2941
        %4274 = vmatmul.bf16.gmra.mxu0 %v1402
        %v4275 = vpop.f32.mrf.mxu0
        %v4276 = vadd.f32 %v4263, %v4275
        %v4277 = vpop.f32.mrf.mxu0
        %4278 = vdwg.mxu0
        %4279 = vmatpush.bf16.msra.mxu0 %v3046
        %4280 = vmatpush.bf16.msra.mxu0 %v3039
        %4281 = vmatpush.bf16.msra.mxu0 %v3032
        %4282 = vmatpush.bf16.msra.mxu0 %v3025
        %4283 = vmatpush.bf16.msra.mxu0 %v3018
        %4284 = vmatpush.bf16.msra.mxu0 %v3011
        %4285 = vmatpush.bf16.msra.mxu0 %v3004
        %4286 = vmatpush.bf16.msra.mxu0 %v2997
        %4287 = vmatmul.bf16.gmra.mxu0 %v1403
        %v4288 = vpop.f32.mrf.mxu0
        %v4289 = vadd.f32 %v4276, %v4288
        %v4290 = vpop.f32.mrf.mxu0
        %4291 = vdwg.mxu0
        %4292 = vmatpush.bf16.msra.mxu0 %v3102
        %4293 = vmatpush.bf16.msra.mxu0 %v3095
        %4294 = vmatpush.bf16.msra.mxu0 %v3088
        %4295 = vmatpush.bf16.msra.mxu0 %v3081
        %4296 = vmatpush.bf16.msra.mxu0 %v3074
        %4297 = vmatpush.bf16.msra.mxu0 %v3067
        %4298 = vmatpush.bf16.msra.mxu0 %v3060
        %4299 = vmatpush.bf16.msra.mxu0 %v3053
        %4300 = vmatmul.bf16.gmra.mxu0 %v1404
        %v4301 = vpop.f32.mrf.mxu0
        %v4302 = vadd.f32 %v4289, %v4301
        %v4303 = vpop.f32.mrf.mxu0
        %4304 = vdwg.mxu0
        %4305 = vmatpush.bf16.msra.mxu0 %v3158
        %4306 = vmatpush.bf16.msra.mxu0 %v3151
        %4307 = vmatpush.bf16.msra.mxu0 %v3144
        %4308 = vmatpush.bf16.msra.mxu0 %v3137
        %4309 = vmatpush.bf16.msra.mxu0 %v3130
        %4310 = vmatpush.bf16.msra.mxu0 %v3123
        %4311 = vmatpush.bf16.msra.mxu0 %v3116
        %4312 = vmatpush.bf16.msra.mxu0 %v3109
        %4313 = vmatmul.bf16.gmra.mxu0 %v1405
        %v4314 = vpop.f32.mrf.mxu0
        %v4315 = vadd.f32 %v4302, %v4314
        %v4316 = vpop.f32.mrf.mxu0
        %4317 = vdwg.mxu0
        %4318 = vmatpush.bf16.msra.mxu0 %v3214
        %4319 = vmatpush.bf16.msra.mxu0 %v3207
        %4320 = vmatpush.bf16.msra.mxu0 %v3200
        %4321 = vmatpush.bf16.msra.mxu0 %v3193
        %4322 = vmatpush.bf16.msra.mxu0 %v3186
        %4323 = vmatpush.bf16.msra.mxu0 %v3179
        %4324 = vmatpush.bf16.msra.mxu0 %v3172
        %4325 = vmatpush.bf16.msra.mxu0 %v3165
        %4326 = vmatmul.bf16.gmra.mxu0 %v1406
        %v4327 = vpop.f32.mrf.mxu0
        %v4328 = vadd.f32 %v4315, %v4327
        %v4329 = vpop.f32.mrf.mxu0
        %4330 = vdwg.mxu0
        %4331 = vmatpush.bf16.msra.mxu0 %v3270
        %4332 = vmatpush.bf16.msra.mxu0 %v3263
        %4333 = vmatpush.bf16.msra.mxu0 %v3256
        %4334 = vmatpush.bf16.msra.mxu0 %v3249
        %4335 = vmatpush.bf16.msra.mxu0 %v3242
        %4336 = vmatpush.bf16.msra.mxu0 %v3235
        %4337 = vmatpush.bf16.msra.mxu0 %v3228
        %4338 = vmatpush.bf16.msra.mxu0 %v3221
        %4339 = vmatmul.bf16.gmra.mxu0 %v1407
        %v4340 = vpop.f32.mrf.mxu0
        %v4341 = vadd.f32 %v4328, %v4340
        %v4342 = vpop.f32.mrf.mxu0
        %4343 = vdwg.mxu0
        %4344 = vmatpush.bf16.msra.mxu0 %v2879
        %4345 = vmatpush.bf16.msra.mxu0 %v2872
        %4346 = vmatpush.bf16.msra.mxu0 %v2865
        %4347 = vmatpush.bf16.msra.mxu0 %v2858
        %4348 = vmatpush.bf16.msra.mxu0 %v2851
        %4349 = vmatpush.bf16.msra.mxu0 %v2844
        %4350 = vmatpush.bf16.msra.mxu0 %v2837
        %4351 = vmatpush.bf16.msra.mxu0 %v2830
        %4352 = vmatmul.bf16.gmra.mxu0 %v1400
        %v4353 = vpop.f32.mrf.mxu0
        %v4354 = vadd.f32 0.0, %v4353
        %v4355 = vpop.f32.mrf.mxu0
        %4356 = vdwg.mxu0
        %4357 = vmatpush.bf16.msra.mxu0 %v2935
        %4358 = vmatpush.bf16.msra.mxu0 %v2928
        %4359 = vmatpush.bf16.msra.mxu0 %v2921
        %4360 = vmatpush.bf16.msra.mxu0 %v2914
        %4361 = vmatpush.bf16.msra.mxu0 %v2907
        %4362 = vmatpush.bf16.msra.mxu0 %v2900
        %4363 = vmatpush.bf16.msra.mxu0 %v2893
        %4364 = vmatpush.bf16.msra.mxu0 %v2886
        %4365 = vmatmul.bf16.gmra.mxu0 %v1401
        %v4366 = vpop.f32.mrf.mxu0
        %v4367 = vadd.f32 %v4354, %v4366
        %v4368 = vpop.f32.mrf.mxu0
        %4369 = vdwg.mxu0
        %4370 = vmatpush.bf16.msra.mxu0 %v2991
        %4371 = vmatpush.bf16.msra.mxu0 %v2984
        %4372 = vmatpush.bf16.msra.mxu0 %v2977
        %4373 = vmatpush.bf16.msra.mxu0 %v2970
        %4374 = vmatpush.bf16.msra.mxu0 %v2963
        %4375 = vmatpush.bf16.msra.mxu0 %v2956
        %4376 = vmatpush.bf16.msra.mxu0 %v2949
        %4377 = vmatpush.bf16.msra.mxu0 %v2942
        %4378 = vmatmul.bf16.gmra.mxu0 %v1402
        %v4379 = vpop.f32.mrf.mxu0
        %v4380 = vadd.f32 %v4367, %v4379
        %v4381 = vpop.f32.mrf.mxu0
        %4382 = vdwg.mxu0
        %4383 = vmatpush.bf16.msra.mxu0 %v3047
        %4384 = vmatpush.bf16.msra.mxu0 %v3040
        %4385 = vmatpush.bf16.msra.mxu0 %v3033
        %4386 = vmatpush.bf16.msra.mxu0 %v3026
        %4387 = vmatpush.bf16.msra.mxu0 %v3019
        %4388 = vmatpush.bf16.msra.mxu0 %v3012
        %4389 = vmatpush.bf16.msra.mxu0 %v3005
        %4390 = vmatpush.bf16.msra.mxu0 %v2998
        %4391 = vmatmul.bf16.gmra.mxu0 %v1403
        %v4392 = vpop.f32.mrf.mxu0
        %v4393 = vadd.f32 %v4380, %v4392
        %v4394 = vpop.f32.mrf.mxu0
        %4395 = vdwg.mxu0
        %4396 = vmatpush.bf16.msra.mxu0 %v3103
        %4397 = vmatpush.bf16.msra.mxu0 %v3096
        %4398 = vmatpush.bf16.msra.mxu0 %v3089
        %4399 = vmatpush.bf16.msra.mxu0 %v3082
        %4400 = vmatpush.bf16.msra.mxu0 %v3075
        %4401 = vmatpush.bf16.msra.mxu0 %v3068
        %4402 = vmatpush.bf16.msra.mxu0 %v3061
        %4403 = vmatpush.bf16.msra.mxu0 %v3054
        %4404 = vmatmul.bf16.gmra.mxu0 %v1404
        %v4405 = vpop.f32.mrf.mxu0
        %v4406 = vadd.f32 %v4393, %v4405
        %v4407 = vpop.f32.mrf.mxu0
        %4408 = vdwg.mxu0
        %4409 = vmatpush.bf16.msra.mxu0 %v3159
        %4410 = vmatpush.bf16.msra.mxu0 %v3152
        %4411 = vmatpush.bf16.msra.mxu0 %v3145
        %4412 = vmatpush.bf16.msra.mxu0 %v3138
        %4413 = vmatpush.bf16.msra.mxu0 %v3131
        %4414 = vmatpush.bf16.msra.mxu0 %v3124
        %4415 = vmatpush.bf16.msra.mxu0 %v3117
        %4416 = vmatpush.bf16.msra.mxu0 %v3110
        %4417 = vmatmul.bf16.gmra.mxu0 %v1405
        %v4418 = vpop.f32.mrf.mxu0
        %v4419 = vadd.f32 %v4406, %v4418
        %v4420 = vpop.f32.mrf.mxu0
        %4421 = vdwg.mxu0
        %4422 = vmatpush.bf16.msra.mxu0 %v3215
        %4423 = vmatpush.bf16.msra.mxu0 %v3208
        %4424 = vmatpush.bf16.msra.mxu0 %v3201
        %4425 = vmatpush.bf16.msra.mxu0 %v3194
        %4426 = vmatpush.bf16.msra.mxu0 %v3187
        %4427 = vmatpush.bf16.msra.mxu0 %v3180
        %4428 = vmatpush.bf16.msra.mxu0 %v3173
        %4429 = vmatpush.bf16.msra.mxu0 %v3166
        %4430 = vmatmul.bf16.gmra.mxu0 %v1406
        %v4431 = vpop.f32.mrf.mxu0
        %v4432 = vadd.f32 %v4419, %v4431
        %v4433 = vpop.f32.mrf.mxu0
        %4434 = vdwg.mxu0
        %4435 = vmatpush.bf16.msra.mxu0 %v3271
        %4436 = vmatpush.bf16.msra.mxu0 %v3264
        %4437 = vmatpush.bf16.msra.mxu0 %v3257
        %4438 = vmatpush.bf16.msra.mxu0 %v3250
        %4439 = vmatpush.bf16.msra.mxu0 %v3243
        %4440 = vmatpush.bf16.msra.mxu0 %v3236
        %4441 = vmatpush.bf16.msra.mxu0 %v3229
        %4442 = vmatpush.bf16.msra.mxu0 %v3222
        %4443 = vmatmul.bf16.gmra.mxu0 %v1407
        %v4444 = vpop.f32.mrf.mxu0
        %v4445 = vadd.f32 %v4432, %v4444
        %v4446 = vpop.f32.mrf.mxu0
        %4447 = vdwg.mxu0
        %v4448 = vpack.c.bf16 %v3925, %v3821
        %v4449 = vpack.c.bf16 %v4133, %v4029
        %v4450 = vpack.c.bf16 %v4341, %v4237
        %v4451 = vpack.c.bf16 %v4445, %v4445
        %v4456 = vrot.slane %v4448, 3
        %v4457 = vrot.slane %v4449, 6
        %v4458 = vrot.slane %v4449, 1
        %v4459 = vrot.slane %v4450, 4
        %v4460 = vrot.slane %v4450, 7
        %v4461 = vrot.slane %v4451, 2
        %v4462 = vrot.slane %v4451, 5
        %vm4463 = vcmask 1040384
        %v4466 = vsel %vm4463, %v4448, %v4456
        %vm4467 = vcmask 1042434
        %v4470 = vsel %vm4467, %v4457, %v4458
        %vm4471 = vcmask 1041408
        %v4472 = vsel %vm4471, %v4466, %v4470
        %vm4473 = vcmask 1044484
        %v4476 = vsel %vm4473, %v4459, %v4460
        %vm4477 = vcmask 1046534
        %v4480 = vsel %vm4477, %v4461, %v4462
        %vm4481 = vcmask 1045508
        %v4482 = vsel %vm4481, %v4476, %v4480
        %vm4483 = vcmask 1043456
        %v4484 = vsel %vm4483, %v4472, %v4482
        %4486 = vst [vmem:[%s357] sm:$0x7f] %v4484
        %v4487 = vsel %vm4471, %v3821, 0.0
        %v4488 = vrot.slane %v4487, 4
        %v4489 = vadd.f32 %v4487, %v4488
        %v4490 = vrot.slane %v4489, 2
        %v4491 = vadd.f32 %v4489, %v4490
        %v4492 = vrot.slane %v4491, 1
        %v4493 = vadd.f32 %v4491, %v4492
        %v4494 = vsel %vm4471, %v3925, 0.0
        %v4495 = vrot.slane %v4494, 4
        %v4496 = vadd.f32 %v4494, %v4495
        %v4497 = vrot.slane %v4496, 2
        %v4498 = vadd.f32 %v4496, %v4497
        %v4499 = vrot.slane %v4498, 1
        %v4500 = vadd.f32 %v4498, %v4499
        %v4501 = vsel %vm4471, %v4029, 0.0
        %v4502 = vrot.slane %v4501, 4
        %v4503 = vadd.f32 %v4501, %v4502
        %v4504 = vrot.slane %v4503, 2
        %v4505 = vadd.f32 %v4503, %v4504
        %v4506 = vrot.slane %v4505, 1
        %v4507 = vadd.f32 %v4505, %v4506
        %v4508 = vsel %vm4471, %v4133, 0.0
        %v4509 = vrot.slane %v4508, 4
        %v4510 = vadd.f32 %v4508, %v4509
        %v4511 = vrot.slane %v4510, 2
        %v4512 = vadd.f32 %v4510, %v4511
        %v4513 = vrot.slane %v4512, 1
        %v4514 = vadd.f32 %v4512, %v4513
        %v4515 = vsel %vm4471, %v4237, 0.0
        %v4516 = vrot.slane %v4515, 4
        %v4517 = vadd.f32 %v4515, %v4516
        %v4518 = vrot.slane %v4517, 2
        %v4519 = vadd.f32 %v4517, %v4518
        %v4520 = vrot.slane %v4519, 1
        %v4521 = vadd.f32 %v4519, %v4520
        %v4522 = vsel %vm4471, %v4341, 0.0
        %v4523 = vrot.slane %v4522, 4
        %v4524 = vadd.f32 %v4522, %v4523
        %v4525 = vrot.slane %v4524, 2
        %v4526 = vadd.f32 %v4524, %v4525
        %v4527 = vrot.slane %v4526, 1
        %v4528 = vadd.f32 %v4526, %v4527
        %v4529 = vsel %vm4471, %v4445, 0.0
        %v4530 = vrot.slane %v4529, 4
        %v4531 = vadd.f32 %v4529, %v4530
        %v4532 = vrot.slane %v4531, 2
        %v4533 = vadd.f32 %v4531, %v4532
        %v4534 = vrot.slane %v4533, 1
        %v4535 = vadd.f32 %v4533, %v4534
        %v4543 = vrot.slane %v4500, 7
        %v4544 = vrot.slane %v4507, 6
        %v4545 = vrot.slane %v4514, 5
        %v4546 = vrot.slane %v4521, 4
        %v4547 = vrot.slane %v4528, 3
        %v4548 = vrot.slane %v4535, 2
        %v4549 = vsel %vm4463, %v4493, %v4543
        %v4550 = vsel %vm4467, %v4544, %v4545
        %v4551 = vsel %vm4471, %v4549, %v4550
        %v4552 = vsel %vm4473, %v4546, %v4547
        %v4553 = vsel %vm4481, %v4552, %v4548
        %v4554 = vsel %vm4483, %v4551, %v4553
        %v4556 = vlaneseq
        %vm4557 = vcmp.ge.s32.totalorder %v4556, 0
        %vm4558 = vcmp.lt.s32.totalorder %v4556, 896
        %vm4559 = vmand %vm4557, %vm4558
        %4560 = vst.msk [vmem:[%s362] sm:$0x7f] %vm4559, %v4554
        %v4561 = vmul.f32 %v3821, %v3821
        %v4562 = vmul.f32 %v3925, %v3925
        %v4563 = vmul.f32 %v4029, %v4029
        %v4564 = vmul.f32 %v4133, %v4133
        %v4565 = vmul.f32 %v4237, %v4237
        %v4566 = vmul.f32 %v4341, %v4341
        %v4567 = vmul.f32 %v4445, %v4445
        %v4568 = vsel %vm4471, %v4561, 0.0
        %v4569 = vrot.slane %v4568, 4
        %v4570 = vadd.f32 %v4568, %v4569
        %v4571 = vrot.slane %v4570, 2
        %v4572 = vadd.f32 %v4570, %v4571
        %v4573 = vrot.slane %v4572, 1
        %v4574 = vadd.f32 %v4572, %v4573
        %v4575 = vsel %vm4471, %v4562, 0.0
        %v4576 = vrot.slane %v4575, 4
        %v4577 = vadd.f32 %v4575, %v4576
        %v4578 = vrot.slane %v4577, 2
        %v4579 = vadd.f32 %v4577, %v4578
        %v4580 = vrot.slane %v4579, 1
        %v4581 = vadd.f32 %v4579, %v4580
        %v4582 = vsel %vm4471, %v4563, 0.0
        %v4583 = vrot.slane %v4582, 4
        %v4584 = vadd.f32 %v4582, %v4583
        %v4585 = vrot.slane %v4584, 2
        %v4586 = vadd.f32 %v4584, %v4585
        %v4587 = vrot.slane %v4586, 1
        %v4588 = vadd.f32 %v4586, %v4587
        %v4589 = vsel %vm4471, %v4564, 0.0
        %v4590 = vrot.slane %v4589, 4
        %v4591 = vadd.f32 %v4589, %v4590
        %v4592 = vrot.slane %v4591, 2
        %v4593 = vadd.f32 %v4591, %v4592
        %v4594 = vrot.slane %v4593, 1
        %v4595 = vadd.f32 %v4593, %v4594
        %v4596 = vsel %vm4471, %v4565, 0.0
        %v4597 = vrot.slane %v4596, 4
        %v4598 = vadd.f32 %v4596, %v4597
        %v4599 = vrot.slane %v4598, 2
        %v4600 = vadd.f32 %v4598, %v4599
        %v4601 = vrot.slane %v4600, 1
        %v4602 = vadd.f32 %v4600, %v4601
        %v4603 = vsel %vm4471, %v4566, 0.0
        %v4604 = vrot.slane %v4603, 4
        %v4605 = vadd.f32 %v4603, %v4604
        %v4606 = vrot.slane %v4605, 2
        %v4607 = vadd.f32 %v4605, %v4606
        %v4608 = vrot.slane %v4607, 1
        %v4609 = vadd.f32 %v4607, %v4608
        %v4610 = vsel %vm4471, %v4567, 0.0
        %v4611 = vrot.slane %v4610, 4
        %v4612 = vadd.f32 %v4610, %v4611
        %v4613 = vrot.slane %v4612, 2
        %v4614 = vadd.f32 %v4612, %v4613
        %v4615 = vrot.slane %v4614, 1
        %v4616 = vadd.f32 %v4614, %v4615
        %v4624 = vrot.slane %v4581, 7
        %v4625 = vrot.slane %v4588, 6
        %v4626 = vrot.slane %v4595, 5
        %v4627 = vrot.slane %v4602, 4
        %v4628 = vrot.slane %v4609, 3
        %v4629 = vrot.slane %v4616, 2
        %v4630 = vsel %vm4463, %v4574, %v4624
        %v4631 = vsel %vm4467, %v4625, %v4626
        %v4632 = vsel %vm4471, %v4630, %v4631
        %v4633 = vsel %vm4473, %v4627, %v4628
        %v4634 = vsel %vm4481, %v4633, %v4629
        %v4635 = vsel %vm4483, %v4632, %v4634
        %4637 = vst.msk [vmem:[%s366] sm:$0x7f] %vm4559, %v4635
        %s4638 = smul.u32 7, %s24
        %p4639 = scmp.lt.s32.totalorder %s4638, 48
        %s4640 = scalar_select %p4639, %s4638, 48
        %s4641 = scalar_lea.vmem %s5, %s4640
        %p4642 = scmp.lt.s32.totalorder %s24, 6
        %s4643 = scalar_select %p4642, %s24, 6
        %s4644 = smul.addr %s4643, 7
        %s4645 = scalar_lea.vmem %s6, %s4644
        %p4646 = scmp.lt.s32.totalorder %s24, 6
        %s4647 = scalar_select %p4646, %s24, 6
        %s4648 = smul.addr %s4647, 7
        %s4649 = scalar_lea.vmem %s7, %s4648
        // Predicated region
        $region61: #{p_net_forward.5} parent=39 // pred_check
          %p4650 = pneg %p152
        $region62: #{p_net_forward.5} parent=39 // pred_check_branch
          %4652 = sbr.rel (%p4650) target = $region64
        $region63: #{p_net_forward.5} parent=39 // pred_region
          %s4653 = smul.u32 7, %s24
        $region64: #{p_net_forward.5} parent=39 // pred_fallthru
          _
        // Predicated region
        $region65: #{p_net_forward.5} parent=39 // pred_check
          %p4654 = pneg %p178
        $region66: #{p_net_forward.5} parent=39 // pred_check_branch
          %4656 = sbr.rel (%p4654) target = $region68
        $region67: #{p_net_forward.5} parent=39 // pred_region
          _
        $region68: #{p_net_forward.5} parent=39 // pred_fallthru
          _
        // Predicated region
        $region69: #{p_net_forward.5} parent=39 // pred_check
          %p4657 = pneg %p204
        $region70: #{p_net_forward.5} parent=39 // pred_check_branch
          %4659 = sbr.rel (%p4657) target = $region72
        $region71: #{p_net_forward.5} parent=39 // pred_region
          _
        $region72: #{p_net_forward.5} parent=39 // pred_fallthru
          _
      $region40: #{p_net_forward.5} parent=5 // pred_fallthru
        _
      %p4660 = scmp.le.s32.totalorder 2, %s19
      // Predicated region
      $region73: #{p_net_forward.5} parent=5 // pred_check
        %p4661 = pneg %p4660
      $region74: #{p_net_forward.5} parent=5 // pred_check_branch
        %4663 = sbr.rel (%p4661) target = $region76
      $region75: #{p_net_forward.5} parent=5 // pred_region
        %s4664 = ssub.s32 %s19, 2
        // Predicated region
        $region77: #{p_net_forward.5} parent=75 // pred_check
          %p4665 = pneg %p158
        $region78: #{p_net_forward.5} parent=75 // pred_check_branch
          %4667 = sbr.rel (%p4665) target = $region80
        $region79: #{p_net_forward.5} parent=75 // pred_region
          %s4668 = smul.u32 7, %s25
          %p4669 = scmp.lt.s32.totalorder %s4668, 48
          %s4670 = scalar_select %p4669, %s4668, 48
          %s4671 = scalar_lea.vmem %s5, %s4670
        $region80: #{p_net_forward.5} parent=75 // pred_fallthru
          _
        // Predicated region
        $region81: #{p_net_forward.5} parent=75 // pred_check
          %p4672 = pneg %p184
        $region82: #{p_net_forward.5} parent=75 // pred_check_branch
          %4674 = sbr.rel (%p4672) target = $region84
        $region83: #{p_net_forward.5} parent=75 // pred_region
          %p4675 = scmp.lt.s32.totalorder %s25, 6
          %s4676 = scalar_select %p4675, %s25, 6
          %s4677 = smul.addr %s4676, 7
          %s4678 = scalar_lea.vmem %s6, %s4677
        $region84: #{p_net_forward.5} parent=75 // pred_fallthru
          _
        // Predicated region
        $region85: #{p_net_forward.5} parent=75 // pred_check
          %p4679 = pneg %p210
        $region86: #{p_net_forward.5} parent=75 // pred_check_branch
          %4681 = sbr.rel (%p4679) target = $region88
        $region87: #{p_net_forward.5} parent=75 // pred_region
          %p4682 = scmp.lt.s32.totalorder %s25, 6
          %s4683 = scalar_select %p4682, %s25, 6
          %s4684 = smul.addr %s4683, 7
          %s4685 = scalar_lea.vmem %s7, %s4684
        $region88: #{p_net_forward.5} parent=75 // pred_fallthru
          _
      $region76: #{p_net_forward.5} parent=5 // pred_fallthru
        _
    $region6: #{p_net_forward.5} parent=1 // loop_footer
      %s23 = sadd.s32 1, %s19
    $region7: #{p_net_forward.5} parent=1 // loop_footer_branch
      %18 = sbr.rel target = $region3
    $region8: #{p_net_forward.5} parent=1 // loop_exit
      _
    %4686 = vsyncpa [#allocation4], 1
    %s4687 = scalar_lea.sflag [#allocation4], 1
    %4688 = vsyncpa %s4687, 1
    %4689 = vsyncpa [#allocation6], 1
    %4690 = vsyncpa [#allocation9], 1
    %s4691 = scalar_lea.sflag [#allocation9], 1
    %4692 = vsyncpa %s4691, 1

// kernel: p_net_forward.9
$region0: #{p_net_forward.9}
  #allocation0 [shape = 'u32[]', space=smem, size = 0x4, offset = 0x4, fixed_abs, tag = 'smem constant byte address 0x4 - core index']
  #allocation1 [shape = 'u32[72,128]{1,0:T(1,128)}', space=vmem, size = 0x9000, scoped, tag = 'internal scratch']
  %s0 = inlined_call_operand.vmem [shape: bf16[392,576], index: 0, kind: input, shape index: {}]
  %s1 = inlined_call_operand.hbm [shape: bf16[576,128], index: 1, kind: input, shape index: {}]
  %s2 = inlined_call_operand.vmem [shape: f32[392,4], index: 2, kind: output, shape index: {}]
  %s3 = sld [smem:[#allocation0]]
  $region22: #{p_net_forward.9} parent=0
    _
  %s5 = ssub.s32 1, %s3
  %s6 = scalar_select 0, %s5, %s3
  $region1: #{p_net_forward.9} parent=0
    #allocation2 [shape = 'u8[147456]{0}', space=vmem, size = 0x24000, scoped, tag = 'input window, operand 1, single buffered']
    #allocation3 [shape = 's32[1]{0}', space=sflag, size = 0x4, scoped, tag = 'scoped memory for p_net_forward.9']
    %7 = vsyncpa [#allocation3], 0
    // Predicated region
    $region2: #{p_net_forward.9} parent=1 // pred_check
      _
    $region3: #{p_net_forward.9} parent=1 // pred_check_branch
      %9 = sbr.rel (0) target = $region5
    $region4: #{p_net_forward.9} parent=1 // pred_region
      _
    $region5: #{p_net_forward.9} parent=1 // pred_fallthru
      _
    // Predicated region
    $region6: #{p_net_forward.9} parent=1 // pred_check
      _
    $region7: #{p_net_forward.9} parent=1 // pred_check_branch
      %11 = sbr.rel (0) target = $region9
    $region8: #{p_net_forward.9} parent=1 // pred_region
      %13 = vsyncadd [#allocation3], 0
      %s14 = sshll.u32 %s1, 4
      %s15 = int_to_ptr.hbm [resolvable:$true] %s14
      %s16 = sshll.u32 [#allocation2], 4
      %s17 = int_to_ptr.vmem [resolvable:$true] %s16
      %22 = dma.hbm_to_vmem [thread:$0]  %s15, 4608, %s17, [#allocation3], 64, 64, 4
    $region9: #{p_net_forward.9} parent=1 // pred_fallthru
      _
    // Predicated region
    $region10: #{p_net_forward.9} parent=1 // pred_check
      _
    $region11: #{p_net_forward.9} parent=1 // pred_check_branch
      %24 = sbr.rel (0) target = $region13
    $region12: #{p_net_forward.9} parent=1 // pred_region
      %26 = dma.done [#allocation3], 4608
    $region13: #{p_net_forward.9} parent=1 // pred_fallthru
      _
    %v28 = vld [vmem:[%s0] sm:$0xff]
    %v29 = vld [vmem:[%s0 + $0x8] sm:$0xff]
    %v30 = vld [vmem:[%s0 + $0x10] sm:$0xf]
    %v31 = vld [vmem:[%s0 + $0x14] sm:$0xff]
    %v32 = vld [vmem:[%s0 + $0x1c] sm:$0xff]
    %v33 = vld [vmem:[%s0 + $0x24] sm:$0xf]
    %v34 = vld [vmem:[%s0 + $0x28] sm:$0xff]
    %v35 = vld [vmem:[%s0 + $0x30] sm:$0xff]
    %v36 = vld [vmem:[%s0 + $0x38] sm:$0xf]
    %v37 = vld [vmem:[%s0 + $0x3c] sm:$0xff]
    %v38 = vld [vmem:[%s0 + $0x44] sm:$0xff]
    %v39 = vld [vmem:[%s0 + $0x4c] sm:$0xf]
    %v40 = vld [vmem:[%s0 + $0x50] sm:$0xff]
    %v41 = vld [vmem:[%s0 + $0x58] sm:$0xff]
    %v42 = vld [vmem:[%s0 + $0x60] sm:$0xf]
    %v43 = vld [vmem:[%s0 + $0x64] sm:$0xff]
    %v44 = vld [vmem:[%s0 + $0x6c] sm:$0xff]
    %v45 = vld [vmem:[%s0 + $0x74] sm:$0xf]
    %v46 = vld [vmem:[%s0 + $0x78] sm:$0xff]
    %v47 = vld [vmem:[%s0 + $0x80] sm:$0xff]
    %v48 = vld [vmem:[%s0 + $0x88] sm:$0xf]
    %v49 = vld [vmem:[%s0 + $0x8c] sm:$0xff]
    %v50 = vld [vmem:[%s0 + $0x94] sm:$0xff]
    %v51 = vld [vmem:[%s0 + $0x9c] sm:$0xf]
    %v52 = vld [vmem:[%s0 + $0xa0] sm:$0xff]
    %v53 = vld [vmem:[%s0 + $0xa8] sm:$0xff]
    %v54 = vld [vmem:[%s0 + $0xb0] sm:$0xf]
    %v55 = vld [vmem:[%s0 + $0xb4] sm:$0xff]
    %v56 = vld [vmem:[%s0 + $0xbc] sm:$0xff]
    %v57 = vld [vmem:[%s0 + $0xc4] sm:$0xf]
    %v58 = vld [vmem:[%s0 + $0xc8] sm:$0xff]
    %v59 = vld [vmem:[%s0 + $0xd0] sm:$0xff]
    %v60 = vld [vmem:[%s0 + $0xd8] sm:$0xf]
    %v61 = vld [vmem:[%s0 + $0xdc] sm:$0xff]
    %v62 = vld [vmem:[%s0 + $0xe4] sm:$0xff]
    %v63 = vld [vmem:[%s0 + $0xec] sm:$0xf]
    %v64 = vld [vmem:[%s0 + $0xf0] sm:$0xff]
    %v65 = vld [vmem:[%s0 + $0xf8] sm:$0xff]
    %v66 = vld [vmem:[%s0 + $0x100] sm:$0xf]
    %v67 = vld [vmem:[%s0 + $0x104] sm:$0xff]
    %v68 = vld [vmem:[%s0 + $0x10c] sm:$0xff]
    %v69 = vld [vmem:[%s0 + $0x114] sm:$0xf]
    %v70 = vld [vmem:[%s0 + $0x118] sm:$0xff]
    %v71 = vld [vmem:[%s0 + $0x120] sm:$0xff]
    %v72 = vld [vmem:[%s0 + $0x128] sm:$0xf]
    %v73 = vld [vmem:[%s0 + $0x12c] sm:$0xff]
    %v74 = vld [vmem:[%s0 + $0x134] sm:$0xff]
    %v75 = vld [vmem:[%s0 + $0x13c] sm:$0xf]
    %v76 = vld [vmem:[%s0 + $0x140] sm:$0xff]
    %v77 = vld [vmem:[%s0 + $0x148] sm:$0xff]
    %v78 = vld [vmem:[%s0 + $0x150] sm:$0xf]
    %v79 = vld [vmem:[%s0 + $0x154] sm:$0xff]
    %v80 = vld [vmem:[%s0 + $0x15c] sm:$0xff]
    %v81 = vld [vmem:[%s0 + $0x164] sm:$0xf]
    %v82 = vld [vmem:[%s0 + $0x168] sm:$0xff]
    %v83 = vld [vmem:[%s0 + $0x170] sm:$0xff]
    %v84 = vld [vmem:[%s0 + $0x178] sm:$0xf]
    %v85 = vld [vmem:[%s0 + $0x17c] sm:$0xff]
    %v86 = vld [vmem:[%s0 + $0x184] sm:$0xff]
    %v87 = vld [vmem:[%s0 + $0x18c] sm:$0xf]
    %v88 = vld [vmem:[%s0 + $0x190] sm:$0xff]
    %v89 = vld [vmem:[%s0 + $0x198] sm:$0xff]
    %v90 = vld [vmem:[%s0 + $0x1a0] sm:$0xf]
    %v91 = vld [vmem:[%s0 + $0x1a4] sm:$0xff]
    %v92 = vld [vmem:[%s0 + $0x1ac] sm:$0xff]
    %v93 = vld [vmem:[%s0 + $0x1b4] sm:$0xf]
    %v94 = vld [vmem:[%s0 + $0x1b8] sm:$0xff]
    %v95 = vld [vmem:[%s0 + $0x1c0] sm:$0xff]
    %v96 = vld [vmem:[%s0 + $0x1c8] sm:$0xf]
    %v97 = vld [vmem:[%s0 + $0x1cc] sm:$0xff]
    %v98 = vld [vmem:[%s0 + $0x1d4] sm:$0xff]
    %v99 = vld [vmem:[%s0 + $0x1dc] sm:$0xf]
    %v100 = vld [vmem:[%s0 + $0x1e0] sm:$0xff]
    %v101 = vld [vmem:[%s0 + $0x1e8] sm:$0xff]
    %v102 = vld [vmem:[%s0 + $0x1f0] sm:$0xf]
    %v103 = vld [vmem:[%s0 + $0x1f4] sm:$0xff]
    %v104 = vld [vmem:[%s0 + $0x1fc] sm:$0xff]
    %v105 = vld [vmem:[%s0 + $0x204] sm:$0xf]
    %v106 = vld [vmem:[%s0 + $0x208] sm:$0xff]
    %v107 = vld [vmem:[%s0 + $0x210] sm:$0xff]
    %v108 = vld [vmem:[%s0 + $0x218] sm:$0xf]
    %v109 = vld [vmem:[%s0 + $0x21c] sm:$0xff]
    %v110 = vld [vmem:[%s0 + $0x224] sm:$0xff]
    %v111 = vld [vmem:[%s0 + $0x22c] sm:$0xf]
    %v112 = vld [vmem:[%s0 + $0x230] sm:$0xff]
    %v113 = vld [vmem:[%s0 + $0x238] sm:$0xff]
    %v114 = vld [vmem:[%s0 + $0x240] sm:$0xf]
    %v115 = vld [vmem:[%s0 + $0x244] sm:$0xff]
    %v116 = vld [vmem:[%s0 + $0x24c] sm:$0xff]
    %v117 = vld [vmem:[%s0 + $0x254] sm:$0xf]
    %v118 = vld [vmem:[%s0 + $0x258] sm:$0xff]
    %v119 = vld [vmem:[%s0 + $0x260] sm:$0xff]
    %v120 = vld [vmem:[%s0 + $0x268] sm:$0xf]
    %v121 = vld [vmem:[%s0 + $0x26c] sm:$0xff]
    %v122 = vld [vmem:[%s0 + $0x274] sm:$0xff]
    %v123 = vld [vmem:[%s0 + $0x27c] sm:$0xf]
    %v124 = vld [vmem:[%s0 + $0x280] sm:$0xff]
    %v125 = vld [vmem:[%s0 + $0x288] sm:$0xff]
    %v126 = vld [vmem:[%s0 + $0x290] sm:$0xf]
    %v127 = vld [vmem:[%s0 + $0x294] sm:$0xff]
    %v128 = vld [vmem:[%s0 + $0x29c] sm:$0xff]
    %v129 = vld [vmem:[%s0 + $0x2a4] sm:$0xf]
    %v130 = vld [vmem:[%s0 + $0x2a8] sm:$0xff]
    %v131 = vld [vmem:[%s0 + $0x2b0] sm:$0xff]
    %v132 = vld [vmem:[%s0 + $0x2b8] sm:$0xf]
    %v133 = vld [vmem:[%s0 + $0x2bc] sm:$0xff]
    %v134 = vld [vmem:[%s0 + $0x2c4] sm:$0xff]
    %v135 = vld [vmem:[%s0 + $0x2cc] sm:$0xf]
    %v136 = vld [vmem:[%s0 + $0x2d0] sm:$0xff]
    %v137 = vld [vmem:[%s0 + $0x2d8] sm:$0xff]
    %v138 = vld [vmem:[%s0 + $0x2e0] sm:$0xf]
    %v139 = vld [vmem:[%s0 + $0x2e4] sm:$0xff]
    %v140 = vld [vmem:[%s0 + $0x2ec] sm:$0xff]
    %v141 = vld [vmem:[%s0 + $0x2f4] sm:$0xf]
    %v142 = vld [vmem:[%s0 + $0x2f8] sm:$0xff]
    %v143 = vld [vmem:[%s0 + $0x300] sm:$0xff]
    %v144 = vld [vmem:[%s0 + $0x308] sm:$0xf]
    %v145 = vld [vmem:[%s0 + $0x30c] sm:$0xff]
    %v146 = vld [vmem:[%s0 + $0x314] sm:$0xff]
    %v147 = vld [vmem:[%s0 + $0x31c] sm:$0xf]
    %v148 = vld [vmem:[%s0 + $0x320] sm:$0xff]
    %v149 = vld [vmem:[%s0 + $0x328] sm:$0xff]
    %v150 = vld [vmem:[%s0 + $0x330] sm:$0xf]
    %v151 = vld [vmem:[%s0 + $0x334] sm:$0xff]
    %v152 = vld [vmem:[%s0 + $0x33c] sm:$0xff]
    %v153 = vld [vmem:[%s0 + $0x344] sm:$0xf]
    %v154 = vld [vmem:[%s0 + $0x348] sm:$0xff]
    %v155 = vld [vmem:[%s0 + $0x350] sm:$0xff]
    %v156 = vld [vmem:[%s0 + $0x358] sm:$0xf]
    %v157 = vld [vmem:[%s0 + $0x35c] sm:$0xff]
    %v158 = vld [vmem:[%s0 + $0x364] sm:$0xff]
    %v159 = vld [vmem:[%s0 + $0x36c] sm:$0xf]
    %v160 = vld [vmem:[%s0 + $0x370] sm:$0xff]
    %v161 = vld [vmem:[%s0 + $0x378] sm:$0xff]
    %v162 = vld [vmem:[%s0 + $0x380] sm:$0xf]
    %v163 = vld [vmem:[%s0 + $0x384] sm:$0xff]
    %v164 = vld [vmem:[%s0 + $0x38c] sm:$0xff]
    %v165 = vld [vmem:[%s0 + $0x394] sm:$0xf]
    %v166 = vld [vmem:[%s0 + $0x398] sm:$0xff]
    %v167 = vld [vmem:[%s0 + $0x3a0] sm:$0xff]
    %v168 = vld [vmem:[%s0 + $0x3a8] sm:$0xf]
    %v169 = vld [vmem:[%s0 + $0x3ac] sm:$0xff]
    %v170 = vld [vmem:[%s0 + $0x3b4] sm:$0xff]
    %v171 = vld [vmem:[%s0 + $0x3bc] sm:$0xf]
    %v172 = vld [vmem:[%s0 + $0x3c0] sm:$0xff]
    %v173 = vld [vmem:[%s0 + $0x3c8] sm:$0xff]
    %v174 = vld [vmem:[%s0 + $0x3d0] sm:$0xf]
    %v175 = vld [vmem:[#allocation2] sm:$0xf]
    %v176 = vld [vmem:[#allocation2 + $0x4] sm:$0xf]
    %v177 = vld [vmem:[#allocation2 + $0x8] sm:$0xf]
    %v178 = vld [vmem:[#allocation2 + $0xc] sm:$0xf]
    %v179 = vld [vmem:[#allocation2 + $0x10] sm:$0xf]
    %v180 = vld [vmem:[#allocation2 + $0x14] sm:$0xf]
    %v181 = vld [vmem:[#allocation2 + $0x18] sm:$0xf]
    %v182 = vld [vmem:[#allocation2 + $0x1c] sm:$0xf]
    %v183 = vld [vmem:[#allocation2 + $0x20] sm:$0xf]
    %v184 = vld [vmem:[#allocation2 + $0x24] sm:$0xf]
    %v185 = vld [vmem:[#allocation2 + $0x28] sm:$0xf]
    %v186 = vld [vmem:[#allocation2 + $0x2c] sm:$0xf]
    %v187 = vld [vmem:[#allocation2 + $0x30] sm:$0xf]
    %v188 = vld [vmem:[#allocation2 + $0x34] sm:$0xf]
    %v189 = vld [vmem:[#allocation2 + $0x38] sm:$0xf]
    %v190 = vld [vmem:[#allocation2 + $0x3c] sm:$0xf]
    %v191 = vld [vmem:[#allocation2 + $0x40] sm:$0xf]
    %v192 = vld [vmem:[#allocation2 + $0x44] sm:$0xf]
    %v193 = vld [vmem:[#allocation2 + $0x48] sm:$0xf]
    %v194 = vld [vmem:[#allocation2 + $0x4c] sm:$0xf]
    %v195 = vld [vmem:[#allocation2 + $0x50] sm:$0xf]
    %v196 = vld [vmem:[#allocation2 + $0x54] sm:$0xf]
    %v197 = vld [vmem:[#allocation2 + $0x58] sm:$0xf]
    %v198 = vld [vmem:[#allocation2 + $0x5c] sm:$0xf]
    %v199 = vld [vmem:[#allocation2 + $0x60] sm:$0xf]
    %v200 = vld [vmem:[#allocation2 + $0x64] sm:$0xf]
    %v201 = vld [vmem:[#allocation2 + $0x68] sm:$0xf]
    %v202 = vld [vmem:[#allocation2 + $0x6c] sm:$0xf]
    %v203 = vld [vmem:[#allocation2 + $0x70] sm:$0xf]
    %v204 = vld [vmem:[#allocation2 + $0x74] sm:$0xf]
    %v205 = vld [vmem:[#allocation2 + $0x78] sm:$0xf]
    %v206 = vld [vmem:[#allocation2 + $0x7c] sm:$0xf]
    %v207 = vld [vmem:[#allocation2 + $0x80] sm:$0xf]
    %v208 = vld [vmem:[#allocation2 + $0x84] sm:$0xf]
    %v209 = vld [vmem:[#allocation2 + $0x88] sm:$0xf]
    %v210 = vld [vmem:[#allocation2 + $0x8c] sm:$0xf]
    %v211 = vld [vmem:[#allocation2 + $0x90] sm:$0xf]
    %v212 = vld [vmem:[#allocation2 + $0x94] sm:$0xf]
    %v213 = vld [vmem:[#allocation2 + $0x98] sm:$0xf]
    %v214 = vld [vmem:[#allocation2 + $0x9c] sm:$0xf]
    %v215 = vld [vmem:[#allocation2 + $0xa0] sm:$0xf]
    %v216 = vld [vmem:[#allocation2 + $0xa4] sm:$0xf]
    %v217 = vld [vmem:[#allocation2 + $0xa8] sm:$0xf]
    %v218 = vld [vmem:[#allocation2 + $0xac] sm:$0xf]
    %v219 = vld [vmem:[#allocation2 + $0xb0] sm:$0xf]
    %v220 = vld [vmem:[#allocation2 + $0xb4] sm:$0xf]
    %v221 = vld [vmem:[#allocation2 + $0xb8] sm:$0xf]
    %v222 = vld [vmem:[#allocation2 + $0xbc] sm:$0xf]
    %v223 = vld [vmem:[#allocation2 + $0xc0] sm:$0xf]
    %v224 = vld [vmem:[#allocation2 + $0xc4] sm:$0xf]
    %v225 = vld [vmem:[#allocation2 + $0xc8] sm:$0xf]
    %v226 = vld [vmem:[#allocation2 + $0xcc] sm:$0xf]
    %v227 = vld [vmem:[#allocation2 + $0xd0] sm:$0xf]
    %v228 = vld [vmem:[#allocation2 + $0xd4] sm:$0xf]
    %v229 = vld [vmem:[#allocation2 + $0xd8] sm:$0xf]
    %v230 = vld [vmem:[#allocation2 + $0xdc] sm:$0xf]
    %v231 = vld [vmem:[#allocation2 + $0xe0] sm:$0xf]
    %v232 = vld [vmem:[#allocation2 + $0xe4] sm:$0xf]
    %v233 = vld [vmem:[#allocation2 + $0xe8] sm:$0xf]
    %v234 = vld [vmem:[#allocation2 + $0xec] sm:$0xf]
    %v235 = vld [vmem:[#allocation2 + $0xf0] sm:$0xf]
    %v236 = vld [vmem:[#allocation2 + $0xf4] sm:$0xf]
    %v237 = vld [vmem:[#allocation2 + $0xf8] sm:$0xf]
    %v238 = vld [vmem:[#allocation2 + $0xfc] sm:$0xf]
    %v239 = vld [vmem:[#allocation2 + $0x100] sm:$0xf]
    %v240 = vld [vmem:[#allocation2 + $0x104] sm:$0xf]
    %v241 = vld [vmem:[#allocation2 + $0x108] sm:$0xf]
    %v242 = vld [vmem:[#allocation2 + $0x10c] sm:$0xf]
    %v243 = vld [vmem:[#allocation2 + $0x110] sm:$0xf]
    %v244 = vld [vmem:[#allocation2 + $0x114] sm:$0xf]
    %v245 = vld [vmem:[#allocation2 + $0x118] sm:$0xf]
    %v246 = vld [vmem:[#allocation2 + $0x11c] sm:$0xf]
    %v394 = vunpack.c.l.b16 %v28
    %v395 = vunpack.c.h.b16 %v28
    %v396 = vunpack.c.l.b16 %v29
    %v397 = vunpack.c.h.b16 %v29
    %v398 = vunpack.c.l.b16 %v30
    %v399 = vunpack.c.l.b16 %v31
    %v400 = vunpack.c.h.b16 %v31
    %v401 = vunpack.c.l.b16 %v32
    %v402 = vunpack.c.h.b16 %v32
    %v403 = vunpack.c.l.b16 %v33
    %v404 = vunpack.c.l.b16 %v34
    %v405 = vunpack.c.h.b16 %v34
    %v406 = vunpack.c.l.b16 %v35
    %v407 = vunpack.c.h.b16 %v35
    %v408 = vunpack.c.l.b16 %v36
    %v409 = vunpack.c.l.b16 %v37
    %v410 = vunpack.c.h.b16 %v37
    %v411 = vunpack.c.l.b16 %v38
    %v412 = vunpack.c.h.b16 %v38
    %v413 = vunpack.c.l.b16 %v39
    %v414 = vunpack.c.l.b16 %v40
    %v415 = vunpack.c.h.b16 %v40
    %v416 = vunpack.c.l.b16 %v41
    %v417 = vunpack.c.h.b16 %v41
    %v418 = vunpack.c.l.b16 %v42
    %v419 = vunpack.c.l.b16 %v43
    %v420 = vunpack.c.h.b16 %v43
    %v421 = vunpack.c.l.b16 %v44
    %v422 = vunpack.c.h.b16 %v44
    %v423 = vunpack.c.l.b16 %v45
    %v424 = vunpack.c.l.b16 %v46
    %v425 = vunpack.c.h.b16 %v46
    %v426 = vunpack.c.l.b16 %v47
    %v427 = vunpack.c.h.b16 %v47
    %v428 = vunpack.c.l.b16 %v48
    %v429 = vunpack.c.l.b16 %v49
    %v430 = vunpack.c.h.b16 %v49
    %v431 = vunpack.c.l.b16 %v50
    %v432 = vunpack.c.h.b16 %v50
    %v433 = vunpack.c.l.b16 %v51
    %v434 = vunpack.c.l.b16 %v52
    %v435 = vunpack.c.h.b16 %v52
    %v436 = vunpack.c.l.b16 %v53
    %v437 = vunpack.c.h.b16 %v53
    %v438 = vunpack.c.l.b16 %v54
    %v439 = vunpack.c.l.b16 %v55
    %v440 = vunpack.c.h.b16 %v55
    %v441 = vunpack.c.l.b16 %v56
    %v442 = vunpack.c.h.b16 %v56
    %v443 = vunpack.c.l.b16 %v57
    %v444 = vunpack.c.l.b16 %v58
    %v445 = vunpack.c.h.b16 %v58
    %v446 = vunpack.c.l.b16 %v59
    %v447 = vunpack.c.h.b16 %v59
    %v448 = vunpack.c.l.b16 %v60
    %v449 = vunpack.c.l.b16 %v61
    %v450 = vunpack.c.h.b16 %v61
    %v451 = vunpack.c.l.b16 %v62
    %v452 = vunpack.c.h.b16 %v62
    %v453 = vunpack.c.l.b16 %v63
    %v454 = vunpack.c.l.b16 %v64
    %v455 = vunpack.c.h.b16 %v64
    %v456 = vunpack.c.l.b16 %v65
    %v457 = vunpack.c.h.b16 %v65
    %v458 = vunpack.c.l.b16 %v66
    %v459 = vunpack.c.l.b16 %v67
    %v460 = vunpack.c.h.b16 %v67
    %v461 = vunpack.c.l.b16 %v68
    %v462 = vunpack.c.h.b16 %v68
    %v463 = vunpack.c.l.b16 %v69
    %v464 = vunpack.c.l.b16 %v70
    %v465 = vunpack.c.h.b16 %v70
    %v466 = vunpack.c.l.b16 %v71
    %v467 = vunpack.c.h.b16 %v71
    %v468 = vunpack.c.l.b16 %v72
    %v469 = vunpack.c.l.b16 %v73
    %v470 = vunpack.c.h.b16 %v73
    %v471 = vunpack.c.l.b16 %v74
    %v472 = vunpack.c.h.b16 %v74
    %v473 = vunpack.c.l.b16 %v75
    %v474 = vunpack.c.l.b16 %v76
    %v475 = vunpack.c.h.b16 %v76
    %v476 = vunpack.c.l.b16 %v77
    %v477 = vunpack.c.h.b16 %v77
    %v478 = vunpack.c.l.b16 %v78
    %v479 = vunpack.c.l.b16 %v79
    %v480 = vunpack.c.h.b16 %v79
    %v481 = vunpack.c.l.b16 %v80
    %v482 = vunpack.c.h.b16 %v80
    %v483 = vunpack.c.l.b16 %v81
    %v484 = vunpack.c.l.b16 %v82
    %v485 = vunpack.c.h.b16 %v82
    %v486 = vunpack.c.l.b16 %v83
    %v487 = vunpack.c.h.b16 %v83
    %v488 = vunpack.c.l.b16 %v84
    %v489 = vunpack.c.l.b16 %v85
    %v490 = vunpack.c.h.b16 %v85
    %v491 = vunpack.c.l.b16 %v86
    %v492 = vunpack.c.h.b16 %v86
    %v493 = vunpack.c.l.b16 %v87
    %v494 = vunpack.c.l.b16 %v88
    %v495 = vunpack.c.h.b16 %v88
    %v496 = vunpack.c.l.b16 %v89
    %v497 = vunpack.c.h.b16 %v89
    %v498 = vunpack.c.l.b16 %v90
    %v499 = vunpack.c.l.b16 %v91
    %v500 = vunpack.c.h.b16 %v91
    %v501 = vunpack.c.l.b16 %v92
    %v502 = vunpack.c.h.b16 %v92
    %v503 = vunpack.c.l.b16 %v93
    %v504 = vunpack.c.l.b16 %v94
    %v505 = vunpack.c.h.b16 %v94
    %v506 = vunpack.c.l.b16 %v95
    %v507 = vunpack.c.h.b16 %v95
    %v508 = vunpack.c.l.b16 %v96
    %v509 = vunpack.c.l.b16 %v97
    %v510 = vunpack.c.h.b16 %v97
    %v511 = vunpack.c.l.b16 %v98
    %v512 = vunpack.c.h.b16 %v98
    %v513 = vunpack.c.l.b16 %v99
    %v514 = vunpack.c.l.b16 %v100
    %v515 = vunpack.c.h.b16 %v100
    %v516 = vunpack.c.l.b16 %v101
    %v517 = vunpack.c.h.b16 %v101
    %v518 = vunpack.c.l.b16 %v102
    %v519 = vunpack.c.l.b16 %v103
    %v520 = vunpack.c.h.b16 %v103
    %v521 = vunpack.c.l.b16 %v104
    %v522 = vunpack.c.h.b16 %v104
    %v523 = vunpack.c.l.b16 %v105
    %v524 = vunpack.c.l.b16 %v106
    %v525 = vunpack.c.h.b16 %v106
    %v526 = vunpack.c.l.b16 %v107
    %v527 = vunpack.c.h.b16 %v107
    %v528 = vunpack.c.l.b16 %v108
    %v529 = vunpack.c.l.b16 %v109
    %v530 = vunpack.c.h.b16 %v109
    %v531 = vunpack.c.l.b16 %v110
    %v532 = vunpack.c.h.b16 %v110
    %v533 = vunpack.c.l.b16 %v111
    %v534 = vunpack.c.l.b16 %v112
    %v535 = vunpack.c.h.b16 %v112
    %v536 = vunpack.c.l.b16 %v113
    %v537 = vunpack.c.h.b16 %v113
    %v538 = vunpack.c.l.b16 %v114
    %v539 = vunpack.c.l.b16 %v115
    %v540 = vunpack.c.h.b16 %v115
    %v541 = vunpack.c.l.b16 %v116
    %v542 = vunpack.c.h.b16 %v116
    %v543 = vunpack.c.l.b16 %v117
    %v544 = vunpack.c.l.b16 %v118
    %v545 = vunpack.c.h.b16 %v118
    %v546 = vunpack.c.l.b16 %v119
    %v547 = vunpack.c.h.b16 %v119
    %v548 = vunpack.c.l.b16 %v120
    %v549 = vunpack.c.l.b16 %v121
    %v550 = vunpack.c.h.b16 %v121
    %v551 = vunpack.c.l.b16 %v122
    %v552 = vunpack.c.h.b16 %v122
    %v553 = vunpack.c.l.b16 %v123
    %v554 = vunpack.c.l.b16 %v124
    %v555 = vunpack.c.h.b16 %v124
    %v556 = vunpack.c.l.b16 %v125
    %v557 = vunpack.c.h.b16 %v125
    %v558 = vunpack.c.l.b16 %v126
    %v559 = vunpack.c.l.b16 %v127
    %v560 = vunpack.c.h.b16 %v127
    %v561 = vunpack.c.l.b16 %v128
    %v562 = vunpack.c.h.b16 %v128
    %v563 = vunpack.c.l.b16 %v129
    %v564 = vunpack.c.l.b16 %v130
    %v565 = vunpack.c.h.b16 %v130
    %v566 = vunpack.c.l.b16 %v131
    %v567 = vunpack.c.h.b16 %v131
    %v568 = vunpack.c.l.b16 %v132
    %v569 = vunpack.c.l.b16 %v133
    %v570 = vunpack.c.h.b16 %v133
    %v571 = vunpack.c.l.b16 %v134
    %v572 = vunpack.c.h.b16 %v134
    %v573 = vunpack.c.l.b16 %v135
    %v574 = vunpack.c.l.b16 %v136
    %v575 = vunpack.c.h.b16 %v136
    %v576 = vunpack.c.l.b16 %v137
    %v577 = vunpack.c.h.b16 %v137
    %v578 = vunpack.c.l.b16 %v138
    %v579 = vunpack.c.l.b16 %v139
    %v580 = vunpack.c.h.b16 %v139
    %v581 = vunpack.c.l.b16 %v140
    %v582 = vunpack.c.h.b16 %v140
    %v583 = vunpack.c.l.b16 %v141
    %v584 = vunpack.c.l.b16 %v142
    %v585 = vunpack.c.h.b16 %v142
    %v586 = vunpack.c.l.b16 %v143
    %v587 = vunpack.c.h.b16 %v143
    %v588 = vunpack.c.l.b16 %v144
    %v589 = vunpack.c.l.b16 %v145
    %v590 = vunpack.c.h.b16 %v145
    %v591 = vunpack.c.l.b16 %v146
    %v592 = vunpack.c.h.b16 %v146
    %v593 = vunpack.c.l.b16 %v147
    %v594 = vunpack.c.l.b16 %v148
    %v595 = vunpack.c.h.b16 %v148
    %v596 = vunpack.c.l.b16 %v149
    %v597 = vunpack.c.h.b16 %v149
    %v598 = vunpack.c.l.b16 %v150
    %v599 = vunpack.c.l.b16 %v151
    %v600 = vunpack.c.h.b16 %v151
    %v601 = vunpack.c.l.b16 %v152
    %v602 = vunpack.c.h.b16 %v152
    %v603 = vunpack.c.l.b16 %v153
    %v604 = vunpack.c.l.b16 %v154
    %v605 = vunpack.c.h.b16 %v154
    %v606 = vunpack.c.l.b16 %v155
    %v607 = vunpack.c.h.b16 %v155
    %v608 = vunpack.c.l.b16 %v156
    %v609 = vunpack.c.l.b16 %v157
    %v610 = vunpack.c.h.b16 %v157
    %v611 = vunpack.c.l.b16 %v158
    %v612 = vunpack.c.h.b16 %v158
    %v613 = vunpack.c.l.b16 %v159
    %v614 = vunpack.c.l.b16 %v160
    %v615 = vunpack.c.h.b16 %v160
    %v616 = vunpack.c.l.b16 %v161
    %v617 = vunpack.c.h.b16 %v161
    %v618 = vunpack.c.l.b16 %v162
    %v619 = vunpack.c.l.b16 %v163
    %v620 = vunpack.c.h.b16 %v163
    %v621 = vunpack.c.l.b16 %v164
    %v622 = vunpack.c.h.b16 %v164
    %v623 = vunpack.c.l.b16 %v165
    %v624 = vunpack.c.l.b16 %v166
    %v625 = vunpack.c.h.b16 %v166
    %v626 = vunpack.c.l.b16 %v167
    %v627 = vunpack.c.h.b16 %v167
    %v628 = vunpack.c.l.b16 %v168
    %v629 = vunpack.c.l.b16 %v169
    %v630 = vunpack.c.h.b16 %v169
    %v631 = vunpack.c.l.b16 %v170
    %v632 = vunpack.c.h.b16 %v170
    %v633 = vunpack.c.l.b16 %v171
    %v634 = vunpack.c.l.b16 %v172
    %v635 = vunpack.c.h.b16 %v172
    %v636 = vunpack.c.l.b16 %v173
    %v637 = vunpack.c.h.b16 %v173
    %v638 = vunpack.c.l.b16 %v174
    %v639 = vpack.c.b16 %v399, %v394
    %v640 = vpack.c.b16 %v400, %v395
    %v641 = vpack.c.b16 %v401, %v396
    %v642 = vpack.c.b16 %v402, %v397
    %v643 = vpack.c.b16 %v403, %v398
    %v644 = vpack.c.b16 %v409, %v404
    %v645 = vpack.c.b16 %v410, %v405
    %v646 = vpack.c.b16 %v411, %v406
    %v647 = vpack.c.b16 %v412, %v407
    %v648 = vpack.c.b16 %v413, %v408
    %v649 = vpack.c.b16 %v419, %v414
    %v650 = vpack.c.b16 %v420, %v415
    %v651 = vpack.c.b16 %v421, %v416
    %v652 = vpack.c.b16 %v422, %v417
    %v653 = vpack.c.b16 %v423, %v418
    %v654 = vpack.c.b16 %v429, %v424
    %v655 = vpack.c.b16 %v430, %v425
    %v656 = vpack.c.b16 %v431, %v426
    %v657 = vpack.c.b16 %v432, %v427
    %v658 = vpack.c.b16 %v433, %v428
    %v659 = vpack.c.b16 %v439, %v434
    %v660 = vpack.c.b16 %v440, %v435
    %v661 = vpack.c.b16 %v441, %v436
    %v662 = vpack.c.b16 %v442, %v437
    %v663 = vpack.c.b16 %v443, %v438
    %v664 = vpack.c.b16 %v449, %v444
    %v665 = vpack.c.b16 %v450, %v445
    %v666 = vpack.c.b16 %v451, %v446
    %v667 = vpack.c.b16 %v452, %v447
    %v668 = vpack.c.b16 %v453, %v448
    %v669 = vpack.c.b16 %v459, %v454
    %v670 = vpack.c.b16 %v460, %v455
    %v671 = vpack.c.b16 %v461, %v456
    %v672 = vpack.c.b16 %v462, %v457
    %v673 = vpack.c.b16 %v463, %v458
    %v674 = vpack.c.b16 %v469, %v464
    %v675 = vpack.c.b16 %v470, %v465
    %v676 = vpack.c.b16 %v471, %v466
    %v677 = vpack.c.b16 %v472, %v467
    %v678 = vpack.c.b16 %v473, %v468
    %v679 = vpack.c.b16 %v479, %v474
    %v680 = vpack.c.b16 %v480, %v475
    %v681 = vpack.c.b16 %v481, %v476
    %v682 = vpack.c.b16 %v482, %v477
    %v683 = vpack.c.b16 %v483, %v478
    %v684 = vpack.c.b16 %v489, %v484
    %v685 = vpack.c.b16 %v490, %v485
    %v686 = vpack.c.b16 %v491, %v486
    %v687 = vpack.c.b16 %v492, %v487
    %v688 = vpack.c.b16 %v493, %v488
    %v689 = vpack.c.b16 %v499, %v494
    %v690 = vpack.c.b16 %v500, %v495
    %v691 = vpack.c.b16 %v501, %v496
    %v692 = vpack.c.b16 %v502, %v497
    %v693 = vpack.c.b16 %v503, %v498
    %v694 = vpack.c.b16 %v509, %v504
    %v695 = vpack.c.b16 %v510, %v505
    %v696 = vpack.c.b16 %v511, %v506
    %v697 = vpack.c.b16 %v512, %v507
    %v698 = vpack.c.b16 %v513, %v508
    %v699 = vpack.c.b16 %v519, %v514
    %v700 = vpack.c.b16 %v520, %v515
    %v701 = vpack.c.b16 %v521, %v516
    %v702 = vpack.c.b16 %v522, %v517
    %v703 = vpack.c.b16 %v523, %v518
    %v704 = vpack.c.b16 %v529, %v524
    %v705 = vpack.c.b16 %v530, %v525
    %v706 = vpack.c.b16 %v531, %v526
    %v707 = vpack.c.b16 %v532, %v527
    %v708 = vpack.c.b16 %v533, %v528
    %v709 = vpack.c.b16 %v539, %v534
    %v710 = vpack.c.b16 %v540, %v535
    %v711 = vpack.c.b16 %v541, %v536
    %v712 = vpack.c.b16 %v542, %v537
    %v713 = vpack.c.b16 %v543, %v538
    %v714 = vpack.c.b16 %v549, %v544
    %v715 = vpack.c.b16 %v550, %v545
    %v716 = vpack.c.b16 %v551, %v546
    %v717 = vpack.c.b16 %v552, %v547
    %v718 = vpack.c.b16 %v553, %v548
    %v719 = vpack.c.b16 %v559, %v554
    %v720 = vpack.c.b16 %v560, %v555
    %v721 = vpack.c.b16 %v561, %v556
    %v722 = vpack.c.b16 %v562, %v557
    %v723 = vpack.c.b16 %v563, %v558
    %v724 = vpack.c.b16 %v569, %v564
    %v725 = vpack.c.b16 %v570, %v565
    %v726 = vpack.c.b16 %v571, %v566
    %v727 = vpack.c.b16 %v572, %v567
    %v728 = vpack.c.b16 %v573, %v568
    %v729 = vpack.c.b16 %v579, %v574
    %v730 = vpack.c.b16 %v580, %v575
    %v731 = vpack.c.b16 %v581, %v576
    %v732 = vpack.c.b16 %v582, %v577
    %v733 = vpack.c.b16 %v583, %v578
    %v734 = vpack.c.b16 %v589, %v584
    %v735 = vpack.c.b16 %v590, %v585
    %v736 = vpack.c.b16 %v591, %v586
    %v737 = vpack.c.b16 %v592, %v587
    %v738 = vpack.c.b16 %v593, %v588
    %v739 = vpack.c.b16 %v599, %v594
    %v740 = vpack.c.b16 %v600, %v595
    %v741 = vpack.c.b16 %v601, %v596
    %v742 = vpack.c.b16 %v602, %v597
    %v743 = vpack.c.b16 %v603, %v598
    %v744 = vpack.c.b16 %v609, %v604
    %v745 = vpack.c.b16 %v610, %v605
    %v746 = vpack.c.b16 %v611, %v606
    %v747 = vpack.c.b16 %v612, %v607
    %v748 = vpack.c.b16 %v613, %v608
    %v749 = vpack.c.b16 %v619, %v614
    %v750 = vpack.c.b16 %v620, %v615
    %v751 = vpack.c.b16 %v621, %v616
    %v752 = vpack.c.b16 %v622, %v617
    %v753 = vpack.c.b16 %v623, %v618
    %v754 = vpack.c.b16 %v629, %v624
    %v755 = vpack.c.b16 %v630, %v625
    %v756 = vpack.c.b16 %v631, %v626
    %v757 = vpack.c.b16 %v632, %v627
    %v758 = vpack.c.b16 %v633, %v628
    %v759 = vpack.c.b16 %v634, %v634
    %v760 = vpack.c.b16 %v635, %v635
    %v761 = vpack.c.b16 %v636, %v636
    %v762 = vpack.c.b16 %v637, %v637
    %v763 = vpack.c.b16 %v638, %v638
    %v936 = vunpack.c.l.b16 %v175
    %v937 = vunpack.c.l.b16 %v176
    %v938 = vunpack.c.l.b16 %v177
    %v939 = vunpack.c.l.b16 %v178
    %v940 = vunpack.c.l.b16 %v179
    %v941 = vunpack.c.l.b16 %v180
    %v942 = vunpack.c.l.b16 %v181
    %v943 = vunpack.c.l.b16 %v182
    %v944 = vunpack.c.l.b16 %v183
    %v945 = vunpack.c.l.b16 %v184
    %v946 = vunpack.c.l.b16 %v185
    %v947 = vunpack.c.l.b16 %v186
    %v948 = vunpack.c.l.b16 %v187
    %v949 = vunpack.c.l.b16 %v188
    %v950 = vunpack.c.l.b16 %v189
    %v951 = vunpack.c.l.b16 %v190
    %v952 = vunpack.c.l.b16 %v191
    %v953 = vunpack.c.l.b16 %v192
    %v954 = vunpack.c.l.b16 %v193
    %v955 = vunpack.c.l.b16 %v194
    %v956 = vunpack.c.l.b16 %v195
    %v957 = vunpack.c.l.b16 %v196
    %v958 = vunpack.c.l.b16 %v197
    %v959 = vunpack.c.l.b16 %v198
    %v960 = vunpack.c.l.b16 %v199
    %v961 = vunpack.c.l.b16 %v200
    %v962 = vunpack.c.l.b16 %v201
    %v963 = vunpack.c.l.b16 %v202
    %v964 = vunpack.c.l.b16 %v203
    %v965 = vunpack.c.l.b16 %v204
    %v966 = vunpack.c.l.b16 %v205
    %v967 = vunpack.c.l.b16 %v206
    %v968 = vunpack.c.l.b16 %v207
    %v969 = vunpack.c.l.b16 %v208
    %v970 = vunpack.c.l.b16 %v209
    %v971 = vunpack.c.l.b16 %v210
    %v972 = vunpack.c.l.b16 %v211
    %v973 = vunpack.c.l.b16 %v212
    %v974 = vunpack.c.l.b16 %v213
    %v975 = vunpack.c.l.b16 %v214
    %v976 = vunpack.c.l.b16 %v215
    %v977 = vunpack.c.l.b16 %v216
    %v978 = vunpack.c.l.b16 %v217
    %v979 = vunpack.c.l.b16 %v218
    %v980 = vunpack.c.l.b16 %v219
    %v981 = vunpack.c.l.b16 %v220
    %v982 = vunpack.c.l.b16 %v221
    %v983 = vunpack.c.l.b16 %v222
    %v984 = vunpack.c.l.b16 %v223
    %v985 = vunpack.c.l.b16 %v224
    %v986 = vunpack.c.l.b16 %v225
    %v987 = vunpack.c.l.b16 %v226
    %v988 = vunpack.c.l.b16 %v227
    %v989 = vunpack.c.l.b16 %v228
    %v990 = vunpack.c.l.b16 %v229
    %v991 = vunpack.c.l.b16 %v230
    %v992 = vunpack.c.l.b16 %v231
    %v993 = vunpack.c.l.b16 %v232
    %v994 = vunpack.c.l.b16 %v233
    %v995 = vunpack.c.l.b16 %v234
    %v996 = vunpack.c.l.b16 %v235
    %v997 = vunpack.c.l.b16 %v236
    %v998 = vunpack.c.l.b16 %v237
    %v999 = vunpack.c.l.b16 %v238
    %v1000 = vunpack.c.l.b16 %v239
    %v1001 = vunpack.c.l.b16 %v240
    %v1002 = vunpack.c.l.b16 %v241
    %v1003 = vunpack.c.l.b16 %v242
    %v1004 = vunpack.c.l.b16 %v243
    %v1005 = vunpack.c.l.b16 %v244
    %v1006 = vunpack.c.l.b16 %v245
    %v1007 = vunpack.c.l.b16 %v246
    %v1008 = vpack.c.b16 %v937, %v936
    %v1009 = vpack.c.b16 %v939, %v938
    %v1010 = vpack.c.b16 %v941, %v940
    %v1011 = vpack.c.b16 %v943, %v942
    %v1012 = vpack.c.b16 %v945, %v944
    %v1013 = vpack.c.b16 %v947, %v946
    %v1014 = vpack.c.b16 %v949, %v948
    %v1015 = vpack.c.b16 %v951, %v950
    %v1016 = vpack.c.b16 %v953, %v952
    %v1017 = vpack.c.b16 %v955, %v954
    %v1018 = vpack.c.b16 %v957, %v956
    %v1019 = vpack.c.b16 %v959, %v958
    %v1020 = vpack.c.b16 %v961, %v960
    %v1021 = vpack.c.b16 %v963, %v962
    %v1022 = vpack.c.b16 %v965, %v964
    %v1023 = vpack.c.b16 %v967, %v966
    %v1024 = vpack.c.b16 %v969, %v968
    %v1025 = vpack.c.b16 %v971, %v970
    %v1026 = vpack.c.b16 %v973, %v972
    %v1027 = vpack.c.b16 %v975, %v974
    %v1028 = vpack.c.b16 %v977, %v976
    %v1029 = vpack.c.b16 %v979, %v978
    %v1030 = vpack.c.b16 %v981, %v980
    %v1031 = vpack.c.b16 %v983, %v982
    %v1032 = vpack.c.b16 %v985, %v984
    %v1033 = vpack.c.b16 %v987, %v986
    %v1034 = vpack.c.b16 %v989, %v988
    %v1035 = vpack.c.b16 %v991, %v990
    %v1036 = vpack.c.b16 %v993, %v992
    %v1037 = vpack.c.b16 %v995, %v994
    %v1038 = vpack.c.b16 %v997, %v996
    %v1039 = vpack.c.b16 %v999, %v998
    %v1040 = vpack.c.b16 %v1001, %v1000
    %v1041 = vpack.c.b16 %v1003, %v1002
    %v1042 = vpack.c.b16 %v1005, %v1004
    %v1043 = vpack.c.b16 %v1007, %v1006
    %vm1080 = vcmask 523264
    %v1082 = vsel %vm1080, %v643, 0
    %v1085 = vsel %vm1080, %v648, 0
    %v1088 = vsel %vm1080, %v653, 0
    %v1091 = vsel %vm1080, %v658, 0
    %v1094 = vsel %vm1080, %v663, 0
    %v1097 = vsel %vm1080, %v668, 0
    %v1100 = vsel %vm1080, %v673, 0
    %v1103 = vsel %vm1080, %v678, 0
    %v1106 = vsel %vm1080, %v683, 0
    %v1109 = vsel %vm1080, %v688, 0
    %v1112 = vsel %vm1080, %v693, 0
    %v1115 = vsel %vm1080, %v698, 0
    %v1118 = vsel %vm1080, %v703, 0
    %v1121 = vsel %vm1080, %v708, 0
    %v1124 = vsel %vm1080, %v713, 0
    %v1127 = vsel %vm1080, %v718, 0
    %v1130 = vsel %vm1080, %v723, 0
    %v1133 = vsel %vm1080, %v728, 0
    %v1136 = vsel %vm1080, %v733, 0
    %v1139 = vsel %vm1080, %v738, 0
    %v1142 = vsel %vm1080, %v743, 0
    %v1145 = vsel %vm1080, %v748, 0
    %v1148 = vsel %vm1080, %v753, 0
    %v1151 = vsel %vm1080, %v758, 0
    %v1154 = vsel %vm1080, %v763, 0
    %1156 = vmatpush.bf16.msra.mxu0 %v1015
    %1157 = vmatpush.bf16.msra.mxu0 %v1014
    %1158 = vmatpush.bf16.msra.mxu0 %v1013
    %1159 = vmatpush.bf16.msra.mxu0 %v1012
    %1160 = vmatpush.bf16.msra.mxu0 %v1011
    %1161 = vmatpush.bf16.msra.mxu0 %v1010
    %1162 = vmatpush.bf16.msra.mxu0 %v1009
    %1163 = vmatpush.bf16.msra.mxu0 %v1008
    %1164 = vmatmul.bf16.gmra.mxu0 %v639
    %v1165 = vpop.f32.mrf.mxu0
    %v1166 = vadd.f32 0.0, %v1165
    %v1167 = vpop.f32.mrf.mxu0
    %v1168 = vadd.f32 0.0, %v1167
    %1169 = vmatmul.bf16.gmra.mxu0 %v644
    %v1170 = vpop.f32.mrf.mxu0
    %v1171 = vadd.f32 0.0, %v1170
    %v1172 = vpop.f32.mrf.mxu0
    %v1173 = vadd.f32 0.0, %v1172
    %1174 = vmatmul.bf16.gmra.mxu0 %v649
    %v1175 = vpop.f32.mrf.mxu0
    %v1176 = vadd.f32 0.0, %v1175
    %v1177 = vpop.f32.mrf.mxu0
    %v1178 = vadd.f32 0.0, %v1177
    %1179 = vmatmul.bf16.gmra.mxu0 %v654
    %v1180 = vpop.f32.mrf.mxu0
    %v1181 = vadd.f32 0.0, %v1180
    %v1182 = vpop.f32.mrf.mxu0
    %v1183 = vadd.f32 0.0, %v1182
    %1184 = vmatmul.bf16.gmra.mxu0 %v659
    %v1185 = vpop.f32.mrf.mxu0
    %v1186 = vadd.f32 0.0, %v1185
    %v1187 = vpop.f32.mrf.mxu0
    %v1188 = vadd.f32 0.0, %v1187
    %1189 = vmatmul.bf16.gmra.mxu0 %v664
    %v1190 = vpop.f32.mrf.mxu0
    %v1191 = vadd.f32 0.0, %v1190
    %v1192 = vpop.f32.mrf.mxu0
    %v1193 = vadd.f32 0.0, %v1192
    %1194 = vmatmul.bf16.gmra.mxu0 %v669
    %v1195 = vpop.f32.mrf.mxu0
    %v1196 = vadd.f32 0.0, %v1195
    %v1197 = vpop.f32.mrf.mxu0
    %v1198 = vadd.f32 0.0, %v1197
    %1199 = vmatmul.bf16.gmra.mxu0 %v674
    %v1200 = vpop.f32.mrf.mxu0
    %v1201 = vadd.f32 0.0, %v1200
    %v1202 = vpop.f32.mrf.mxu0
    %v1203 = vadd.f32 0.0, %v1202
    %1204 = vmatmul.bf16.gmra.mxu0 %v679
    %v1205 = vpop.f32.mrf.mxu0
    %v1206 = vadd.f32 0.0, %v1205
    %v1207 = vpop.f32.mrf.mxu0
    %v1208 = vadd.f32 0.0, %v1207
    %1209 = vmatmul.bf16.gmra.mxu0 %v684
    %v1210 = vpop.f32.mrf.mxu0
    %v1211 = vadd.f32 0.0, %v1210
    %v1212 = vpop.f32.mrf.mxu0
    %v1213 = vadd.f32 0.0, %v1212
    %1214 = vmatmul.bf16.gmra.mxu0 %v689
    %v1215 = vpop.f32.mrf.mxu0
    %v1216 = vadd.f32 0.0, %v1215
    %v1217 = vpop.f32.mrf.mxu0
    %v1218 = vadd.f32 0.0, %v1217
    %1219 = vmatmul.bf16.gmra.mxu0 %v694
    %v1220 = vpop.f32.mrf.mxu0
    %v1221 = vadd.f32 0.0, %v1220
    %v1222 = vpop.f32.mrf.mxu0
    %v1223 = vadd.f32 0.0, %v1222
    %1224 = vmatmul.bf16.gmra.mxu0 %v699
    %v1225 = vpop.f32.mrf.mxu0
    %v1226 = vadd.f32 0.0, %v1225
    %v1227 = vpop.f32.mrf.mxu0
    %v1228 = vadd.f32 0.0, %v1227
    %1229 = vmatmul.bf16.gmra.mxu0 %v704
    %v1230 = vpop.f32.mrf.mxu0
    %v1231 = vadd.f32 0.0, %v1230
    %v1232 = vpop.f32.mrf.mxu0
    %v1233 = vadd.f32 0.0, %v1232
    %1234 = vmatmul.bf16.gmra.mxu0 %v709
    %v1235 = vpop.f32.mrf.mxu0
    %v1236 = vadd.f32 0.0, %v1235
    %v1237 = vpop.f32.mrf.mxu0
    %v1238 = vadd.f32 0.0, %v1237
    %1239 = vmatmul.bf16.gmra.mxu0 %v714
    %v1240 = vpop.f32.mrf.mxu0
    %v1241 = vadd.f32 0.0, %v1240
    %v1242 = vpop.f32.mrf.mxu0
    %v1243 = vadd.f32 0.0, %v1242
    %1244 = vmatmul.bf16.gmra.mxu0 %v719
    %v1245 = vpop.f32.mrf.mxu0
    %v1246 = vadd.f32 0.0, %v1245
    %v1247 = vpop.f32.mrf.mxu0
    %v1248 = vadd.f32 0.0, %v1247
    %1249 = vmatmul.bf16.gmra.mxu0 %v724
    %v1250 = vpop.f32.mrf.mxu0
    %v1251 = vadd.f32 0.0, %v1250
    %v1252 = vpop.f32.mrf.mxu0
    %v1253 = vadd.f32 0.0, %v1252
    %1254 = vmatmul.bf16.gmra.mxu0 %v729
    %v1255 = vpop.f32.mrf.mxu0
    %v1256 = vadd.f32 0.0, %v1255
    %v1257 = vpop.f32.mrf.mxu0
    %v1258 = vadd.f32 0.0, %v1257
    %1259 = vmatmul.bf16.gmra.mxu0 %v734
    %v1260 = vpop.f32.mrf.mxu0
    %v1261 = vadd.f32 0.0, %v1260
    %v1262 = vpop.f32.mrf.mxu0
    %v1263 = vadd.f32 0.0, %v1262
    %1264 = vmatmul.bf16.gmra.mxu0 %v739
    %v1265 = vpop.f32.mrf.mxu0
    %v1266 = vadd.f32 0.0, %v1265
    %v1267 = vpop.f32.mrf.mxu0
    %v1268 = vadd.f32 0.0, %v1267
    %1269 = vmatmul.bf16.gmra.mxu0 %v744
    %v1270 = vpop.f32.mrf.mxu0
    %v1271 = vadd.f32 0.0, %v1270
    %v1272 = vpop.f32.mrf.mxu0
    %v1273 = vadd.f32 0.0, %v1272
    %1274 = vmatmul.bf16.gmra.mxu0 %v749
    %v1275 = vpop.f32.mrf.mxu0
    %v1276 = vadd.f32 0.0, %v1275
    %v1277 = vpop.f32.mrf.mxu0
    %v1278 = vadd.f32 0.0, %v1277
    %1279 = vmatmul.bf16.gmra.mxu0 %v754
    %v1280 = vpop.f32.mrf.mxu0
    %v1281 = vadd.f32 0.0, %v1280
    %v1282 = vpop.f32.mrf.mxu0
    %v1283 = vadd.f32 0.0, %v1282
    %1284 = vmatmul.bf16.gmra.mxu0 %v759
    %v1285 = vpop.f32.mrf.mxu0
    %v1286 = vadd.f32 0.0, %v1285
    %v1287 = vpop.f32.mrf.mxu0
    %1288 = vdwg.mxu0
    %1289 = vmatpush.bf16.msra.mxu0 %v1023
    %1290 = vmatpush.bf16.msra.mxu0 %v1022
    %1291 = vmatpush.bf16.msra.mxu0 %v1021
    %1292 = vmatpush.bf16.msra.mxu0 %v1020
    %1293 = vmatpush.bf16.msra.mxu0 %v1019
    %1294 = vmatpush.bf16.msra.mxu0 %v1018
    %1295 = vmatpush.bf16.msra.mxu0 %v1017
    %1296 = vmatpush.bf16.msra.mxu0 %v1016
    %1297 = vmatmul.bf16.gmra.mxu0 %v640
    %v1298 = vpop.f32.mrf.mxu0
    %v1299 = vadd.f32 %v1166, %v1298
    %v1300 = vpop.f32.mrf.mxu0
    %v1301 = vadd.f32 %v1168, %v1300
    %1302 = vmatmul.bf16.gmra.mxu0 %v645
    %v1303 = vpop.f32.mrf.mxu0
    %v1304 = vadd.f32 %v1171, %v1303
    %v1305 = vpop.f32.mrf.mxu0
    %v1306 = vadd.f32 %v1173, %v1305
    %1307 = vmatmul.bf16.gmra.mxu0 %v650
    %v1308 = vpop.f32.mrf.mxu0
    %v1309 = vadd.f32 %v1176, %v1308
    %v1310 = vpop.f32.mrf.mxu0
    %v1311 = vadd.f32 %v1178, %v1310
    %1312 = vmatmul.bf16.gmra.mxu0 %v655
    %v1313 = vpop.f32.mrf.mxu0
    %v1314 = vadd.f32 %v1181, %v1313
    %v1315 = vpop.f32.mrf.mxu0
    %v1316 = vadd.f32 %v1183, %v1315
    %1317 = vmatmul.bf16.gmra.mxu0 %v660
    %v1318 = vpop.f32.mrf.mxu0
    %v1319 = vadd.f32 %v1186, %v1318
    %v1320 = vpop.f32.mrf.mxu0
    %v1321 = vadd.f32 %v1188, %v1320
    %1322 = vmatmul.bf16.gmra.mxu0 %v665
    %v1323 = vpop.f32.mrf.mxu0
    %v1324 = vadd.f32 %v1191, %v1323
    %v1325 = vpop.f32.mrf.mxu0
    %v1326 = vadd.f32 %v1193, %v1325
    %1327 = vmatmul.bf16.gmra.mxu0 %v670
    %v1328 = vpop.f32.mrf.mxu0
    %v1329 = vadd.f32 %v1196, %v1328
    %v1330 = vpop.f32.mrf.mxu0
    %v1331 = vadd.f32 %v1198, %v1330
    %1332 = vmatmul.bf16.gmra.mxu0 %v675
    %v1333 = vpop.f32.mrf.mxu0
    %v1334 = vadd.f32 %v1201, %v1333
    %v1335 = vpop.f32.mrf.mxu0
    %v1336 = vadd.f32 %v1203, %v1335
    %1337 = vmatmul.bf16.gmra.mxu0 %v680
    %v1338 = vpop.f32.mrf.mxu0
    %v1339 = vadd.f32 %v1206, %v1338
    %v1340 = vpop.f32.mrf.mxu0
    %v1341 = vadd.f32 %v1208, %v1340
    %1342 = vmatmul.bf16.gmra.mxu0 %v685
    %v1343 = vpop.f32.mrf.mxu0
    %v1344 = vadd.f32 %v1211, %v1343
    %v1345 = vpop.f32.mrf.mxu0
    %v1346 = vadd.f32 %v1213, %v1345
    %1347 = vmatmul.bf16.gmra.mxu0 %v690
    %v1348 = vpop.f32.mrf.mxu0
    %v1349 = vadd.f32 %v1216, %v1348
    %v1350 = vpop.f32.mrf.mxu0
    %v1351 = vadd.f32 %v1218, %v1350
    %1352 = vmatmul.bf16.gmra.mxu0 %v695
    %v1353 = vpop.f32.mrf.mxu0
    %v1354 = vadd.f32 %v1221, %v1353
    %v1355 = vpop.f32.mrf.mxu0
    %v1356 = vadd.f32 %v1223, %v1355
    %1357 = vmatmul.bf16.gmra.mxu0 %v700
    %v1358 = vpop.f32.mrf.mxu0
    %v1359 = vadd.f32 %v1226, %v1358
    %v1360 = vpop.f32.mrf.mxu0
    %v1361 = vadd.f32 %v1228, %v1360
    %1362 = vmatmul.bf16.gmra.mxu0 %v705
    %v1363 = vpop.f32.mrf.mxu0
    %v1364 = vadd.f32 %v1231, %v1363
    %v1365 = vpop.f32.mrf.mxu0
    %v1366 = vadd.f32 %v1233, %v1365
    %1367 = vmatmul.bf16.gmra.mxu0 %v710
    %v1368 = vpop.f32.mrf.mxu0
    %v1369 = vadd.f32 %v1236, %v1368
    %v1370 = vpop.f32.mrf.mxu0
    %v1371 = vadd.f32 %v1238, %v1370
    %1372 = vmatmul.bf16.gmra.mxu0 %v715
    %v1373 = vpop.f32.mrf.mxu0
    %v1374 = vadd.f32 %v1241, %v1373
    %v1375 = vpop.f32.mrf.mxu0
    %v1376 = vadd.f32 %v1243, %v1375
    %1377 = vmatmul.bf16.gmra.mxu0 %v720
    %v1378 = vpop.f32.mrf.mxu0
    %v1379 = vadd.f32 %v1246, %v1378
    %v1380 = vpop.f32.mrf.mxu0
    %v1381 = vadd.f32 %v1248, %v1380
    %1382 = vmatmul.bf16.gmra.mxu0 %v725
    %v1383 = vpop.f32.mrf.mxu0
    %v1384 = vadd.f32 %v1251, %v1383
    %v1385 = vpop.f32.mrf.mxu0
    %v1386 = vadd.f32 %v1253, %v1385
    %1387 = vmatmul.bf16.gmra.mxu0 %v730
    %v1388 = vpop.f32.mrf.mxu0
    %v1389 = vadd.f32 %v1256, %v1388
    %v1390 = vpop.f32.mrf.mxu0
    %v1391 = vadd.f32 %v1258, %v1390
    %1392 = vmatmul.bf16.gmra.mxu0 %v735
    %v1393 = vpop.f32.mrf.mxu0
    %v1394 = vadd.f32 %v1261, %v1393
    %v1395 = vpop.f32.mrf.mxu0
    %v1396 = vadd.f32 %v1263, %v1395
    %1397 = vmatmul.bf16.gmra.mxu0 %v740
    %v1398 = vpop.f32.mrf.mxu0
    %v1399 = vadd.f32 %v1266, %v1398
    %v1400 = vpop.f32.mrf.mxu0
    %v1401 = vadd.f32 %v1268, %v1400
    %1402 = vmatmul.bf16.gmra.mxu0 %v745
    %v1403 = vpop.f32.mrf.mxu0
    %v1404 = vadd.f32 %v1271, %v1403
    %v1405 = vpop.f32.mrf.mxu0
    %v1406 = vadd.f32 %v1273, %v1405
    %1407 = vmatmul.bf16.gmra.mxu0 %v750
    %v1408 = vpop.f32.mrf.mxu0
    %v1409 = vadd.f32 %v1276, %v1408
    %v1410 = vpop.f32.mrf.mxu0
    %v1411 = vadd.f32 %v1278, %v1410
    %1412 = vmatmul.bf16.gmra.mxu0 %v755
    %v1413 = vpop.f32.mrf.mxu0
    %v1414 = vadd.f32 %v1281, %v1413
    %v1415 = vpop.f32.mrf.mxu0
    %v1416 = vadd.f32 %v1283, %v1415
    %1417 = vmatmul.bf16.gmra.mxu0 %v760
    %v1418 = vpop.f32.mrf.mxu0
    %v1419 = vadd.f32 %v1286, %v1418
    %v1420 = vpop.f32.mrf.mxu0
    %1421 = vdwg.mxu0
    %1422 = vmatpush.bf16.msra.mxu0 %v1031
    %1423 = vmatpush.bf16.msra.mxu0 %v1030
    %1424 = vmatpush.bf16.msra.mxu0 %v1029
    %1425 = vmatpush.bf16.msra.mxu0 %v1028
    %1426 = vmatpush.bf16.msra.mxu0 %v1027
    %1427 = vmatpush.bf16.msra.mxu0 %v1026
    %1428 = vmatpush.bf16.msra.mxu0 %v1025
    %1429 = vmatpush.bf16.msra.mxu0 %v1024
    %1430 = vmatmul.bf16.gmra.mxu0 %v641
    %v1431 = vpop.f32.mrf.mxu0
    %v1432 = vadd.f32 %v1299, %v1431
    %v1433 = vpop.f32.mrf.mxu0
    %v1434 = vadd.f32 %v1301, %v1433
    %1435 = vmatmul.bf16.gmra.mxu0 %v646
    %v1436 = vpop.f32.mrf.mxu0
    %v1437 = vadd.f32 %v1304, %v1436
    %v1438 = vpop.f32.mrf.mxu0
    %v1439 = vadd.f32 %v1306, %v1438
    %1440 = vmatmul.bf16.gmra.mxu0 %v651
    %v1441 = vpop.f32.mrf.mxu0
    %v1442 = vadd.f32 %v1309, %v1441
    %v1443 = vpop.f32.mrf.mxu0
    %v1444 = vadd.f32 %v1311, %v1443
    %1445 = vmatmul.bf16.gmra.mxu0 %v656
    %v1446 = vpop.f32.mrf.mxu0
    %v1447 = vadd.f32 %v1314, %v1446
    %v1448 = vpop.f32.mrf.mxu0
    %v1449 = vadd.f32 %v1316, %v1448
    %1450 = vmatmul.bf16.gmra.mxu0 %v661
    %v1451 = vpop.f32.mrf.mxu0
    %v1452 = vadd.f32 %v1319, %v1451
    %v1453 = vpop.f32.mrf.mxu0
    %v1454 = vadd.f32 %v1321, %v1453
    %1455 = vmatmul.bf16.gmra.mxu0 %v666
    %v1456 = vpop.f32.mrf.mxu0
    %v1457 = vadd.f32 %v1324, %v1456
    %v1458 = vpop.f32.mrf.mxu0
    %v1459 = vadd.f32 %v1326, %v1458
    %1460 = vmatmul.bf16.gmra.mxu0 %v671
    %v1461 = vpop.f32.mrf.mxu0
    %v1462 = vadd.f32 %v1329, %v1461
    %v1463 = vpop.f32.mrf.mxu0
    %v1464 = vadd.f32 %v1331, %v1463
    %1465 = vmatmul.bf16.gmra.mxu0 %v676
    %v1466 = vpop.f32.mrf.mxu0
    %v1467 = vadd.f32 %v1334, %v1466
    %v1468 = vpop.f32.mrf.mxu0
    %v1469 = vadd.f32 %v1336, %v1468
    %1470 = vmatmul.bf16.gmra.mxu0 %v681
    %v1471 = vpop.f32.mrf.mxu0
    %v1472 = vadd.f32 %v1339, %v1471
    %v1473 = vpop.f32.mrf.mxu0
    %v1474 = vadd.f32 %v1341, %v1473
    %1475 = vmatmul.bf16.gmra.mxu0 %v686
    %v1476 = vpop.f32.mrf.mxu0
    %v1477 = vadd.f32 %v1344, %v1476
    %v1478 = vpop.f32.mrf.mxu0
    %v1479 = vadd.f32 %v1346, %v1478
    %1480 = vmatmul.bf16.gmra.mxu0 %v691
    %v1481 = vpop.f32.mrf.mxu0
    %v1482 = vadd.f32 %v1349, %v1481
    %v1483 = vpop.f32.mrf.mxu0
    %v1484 = vadd.f32 %v1351, %v1483
    %1485 = vmatmul.bf16.gmra.mxu0 %v696
    %v1486 = vpop.f32.mrf.mxu0
    %v1487 = vadd.f32 %v1354, %v1486
    %v1488 = vpop.f32.mrf.mxu0
    %v1489 = vadd.f32 %v1356, %v1488
    %1490 = vmatmul.bf16.gmra.mxu0 %v701
    %v1491 = vpop.f32.mrf.mxu0
    %v1492 = vadd.f32 %v1359, %v1491
    %v1493 = vpop.f32.mrf.mxu0
    %v1494 = vadd.f32 %v1361, %v1493
    %1495 = vmatmul.bf16.gmra.mxu0 %v706
    %v1496 = vpop.f32.mrf.mxu0
    %v1497 = vadd.f32 %v1364, %v1496
    %v1498 = vpop.f32.mrf.mxu0
    %v1499 = vadd.f32 %v1366, %v1498
    %1500 = vmatmul.bf16.gmra.mxu0 %v711
    %v1501 = vpop.f32.mrf.mxu0
    %v1502 = vadd.f32 %v1369, %v1501
    %v1503 = vpop.f32.mrf.mxu0
    %v1504 = vadd.f32 %v1371, %v1503
    %1505 = vmatmul.bf16.gmra.mxu0 %v716
    %v1506 = vpop.f32.mrf.mxu0
    %v1507 = vadd.f32 %v1374, %v1506
    %v1508 = vpop.f32.mrf.mxu0
    %v1509 = vadd.f32 %v1376, %v1508
    %1510 = vmatmul.bf16.gmra.mxu0 %v721
    %v1511 = vpop.f32.mrf.mxu0
    %v1512 = vadd.f32 %v1379, %v1511
    %v1513 = vpop.f32.mrf.mxu0
    %v1514 = vadd.f32 %v1381, %v1513
    %1515 = vmatmul.bf16.gmra.mxu0 %v726
    %v1516 = vpop.f32.mrf.mxu0
    %v1517 = vadd.f32 %v1384, %v1516
    %v1518 = vpop.f32.mrf.mxu0
    %v1519 = vadd.f32 %v1386, %v1518
    %1520 = vmatmul.bf16.gmra.mxu0 %v731
    %v1521 = vpop.f32.mrf.mxu0
    %v1522 = vadd.f32 %v1389, %v1521
    %v1523 = vpop.f32.mrf.mxu0
    %v1524 = vadd.f32 %v1391, %v1523
    %1525 = vmatmul.bf16.gmra.mxu0 %v736
    %v1526 = vpop.f32.mrf.mxu0
    %v1527 = vadd.f32 %v1394, %v1526
    %v1528 = vpop.f32.mrf.mxu0
    %v1529 = vadd.f32 %v1396, %v1528
    %1530 = vmatmul.bf16.gmra.mxu0 %v741
    %v1531 = vpop.f32.mrf.mxu0
    %v1532 = vadd.f32 %v1399, %v1531
    %v1533 = vpop.f32.mrf.mxu0
    %v1534 = vadd.f32 %v1401, %v1533
    %1535 = vmatmul.bf16.gmra.mxu0 %v746
    %v1536 = vpop.f32.mrf.mxu0
    %v1537 = vadd.f32 %v1404, %v1536
    %v1538 = vpop.f32.mrf.mxu0
    %v1539 = vadd.f32 %v1406, %v1538
    %1540 = vmatmul.bf16.gmra.mxu0 %v751
    %v1541 = vpop.f32.mrf.mxu0
    %v1542 = vadd.f32 %v1409, %v1541
    %v1543 = vpop.f32.mrf.mxu0
    %v1544 = vadd.f32 %v1411, %v1543
    %1545 = vmatmul.bf16.gmra.mxu0 %v756
    %v1546 = vpop.f32.mrf.mxu0
    %v1547 = vadd.f32 %v1414, %v1546
    %v1548 = vpop.f32.mrf.mxu0
    %v1549 = vadd.f32 %v1416, %v1548
    %1550 = vmatmul.bf16.gmra.mxu0 %v761
    %v1551 = vpop.f32.mrf.mxu0
    %v1552 = vadd.f32 %v1419, %v1551
    %v1553 = vpop.f32.mrf.mxu0
    %1554 = vdwg.mxu0
    %1555 = vmatpush.bf16.msra.mxu0 %v1039
    %1556 = vmatpush.bf16.msra.mxu0 %v1038
    %1557 = vmatpush.bf16.msra.mxu0 %v1037
    %1558 = vmatpush.bf16.msra.mxu0 %v1036
    %1559 = vmatpush.bf16.msra.mxu0 %v1035
    %1560 = vmatpush.bf16.msra.mxu0 %v1034
    %1561 = vmatpush.bf16.msra.mxu0 %v1033
    %1562 = vmatpush.bf16.msra.mxu0 %v1032
    %1563 = vmatmul.bf16.gmra.mxu0 %v642
    %v1564 = vpop.f32.mrf.mxu0
    %v1565 = vadd.f32 %v1432, %v1564
    %v1566 = vpop.f32.mrf.mxu0
    %v1567 = vadd.f32 %v1434, %v1566
    %1568 = vmatmul.bf16.gmra.mxu0 %v647
    %v1569 = vpop.f32.mrf.mxu0
    %v1570 = vadd.f32 %v1437, %v1569
    %v1571 = vpop.f32.mrf.mxu0
    %v1572 = vadd.f32 %v1439, %v1571
    %1573 = vmatmul.bf16.gmra.mxu0 %v652
    %v1574 = vpop.f32.mrf.mxu0
    %v1575 = vadd.f32 %v1442, %v1574
    %v1576 = vpop.f32.mrf.mxu0
    %v1577 = vadd.f32 %v1444, %v1576
    %1578 = vmatmul.bf16.gmra.mxu0 %v657
    %v1579 = vpop.f32.mrf.mxu0
    %v1580 = vadd.f32 %v1447, %v1579
    %v1581 = vpop.f32.mrf.mxu0
    %v1582 = vadd.f32 %v1449, %v1581
    %1583 = vmatmul.bf16.gmra.mxu0 %v662
    %v1584 = vpop.f32.mrf.mxu0
    %v1585 = vadd.f32 %v1452, %v1584
    %v1586 = vpop.f32.mrf.mxu0
    %v1587 = vadd.f32 %v1454, %v1586
    %1588 = vmatmul.bf16.gmra.mxu0 %v667
    %v1589 = vpop.f32.mrf.mxu0
    %v1590 = vadd.f32 %v1457, %v1589
    %v1591 = vpop.f32.mrf.mxu0
    %v1592 = vadd.f32 %v1459, %v1591
    %1593 = vmatmul.bf16.gmra.mxu0 %v672
    %v1594 = vpop.f32.mrf.mxu0
    %v1595 = vadd.f32 %v1462, %v1594
    %v1596 = vpop.f32.mrf.mxu0
    %v1597 = vadd.f32 %v1464, %v1596
    %1598 = vmatmul.bf16.gmra.mxu0 %v677
    %v1599 = vpop.f32.mrf.mxu0
    %v1600 = vadd.f32 %v1467, %v1599
    %v1601 = vpop.f32.mrf.mxu0
    %v1602 = vadd.f32 %v1469, %v1601
    %1603 = vmatmul.bf16.gmra.mxu0 %v682
    %v1604 = vpop.f32.mrf.mxu0
    %v1605 = vadd.f32 %v1472, %v1604
    %v1606 = vpop.f32.mrf.mxu0
    %v1607 = vadd.f32 %v1474, %v1606
    %1608 = vmatmul.bf16.gmra.mxu0 %v687
    %v1609 = vpop.f32.mrf.mxu0
    %v1610 = vadd.f32 %v1477, %v1609
    %v1611 = vpop.f32.mrf.mxu0
    %v1612 = vadd.f32 %v1479, %v1611
    %1613 = vmatmul.bf16.gmra.mxu0 %v692
    %v1614 = vpop.f32.mrf.mxu0
    %v1615 = vadd.f32 %v1482, %v1614
    %v1616 = vpop.f32.mrf.mxu0
    %v1617 = vadd.f32 %v1484, %v1616
    %1618 = vmatmul.bf16.gmra.mxu0 %v697
    %v1619 = vpop.f32.mrf.mxu0
    %v1620 = vadd.f32 %v1487, %v1619
    %v1621 = vpop.f32.mrf.mxu0
    %v1622 = vadd.f32 %v1489, %v1621
    %1623 = vmatmul.bf16.gmra.mxu0 %v702
    %v1624 = vpop.f32.mrf.mxu0
    %v1625 = vadd.f32 %v1492, %v1624
    %v1626 = vpop.f32.mrf.mxu0
    %v1627 = vadd.f32 %v1494, %v1626
    %1628 = vmatmul.bf16.gmra.mxu0 %v707
    %v1629 = vpop.f32.mrf.mxu0
    %v1630 = vadd.f32 %v1497, %v1629
    %v1631 = vpop.f32.mrf.mxu0
    %v1632 = vadd.f32 %v1499, %v1631
    %1633 = vmatmul.bf16.gmra.mxu0 %v712
    %v1634 = vpop.f32.mrf.mxu0
    %v1635 = vadd.f32 %v1502, %v1634
    %v1636 = vpop.f32.mrf.mxu0
    %v1637 = vadd.f32 %v1504, %v1636
    %1638 = vmatmul.bf16.gmra.mxu0 %v717
    %v1639 = vpop.f32.mrf.mxu0
    %v1640 = vadd.f32 %v1507, %v1639
    %v1641 = vpop.f32.mrf.mxu0
    %v1642 = vadd.f32 %v1509, %v1641
    %1643 = vmatmul.bf16.gmra.mxu0 %v722
    %v1644 = vpop.f32.mrf.mxu0
    %v1645 = vadd.f32 %v1512, %v1644
    %v1646 = vpop.f32.mrf.mxu0
    %v1647 = vadd.f32 %v1514, %v1646
    %1648 = vmatmul.bf16.gmra.mxu0 %v727
    %v1649 = vpop.f32.mrf.mxu0
    %v1650 = vadd.f32 %v1517, %v1649
    %v1651 = vpop.f32.mrf.mxu0
    %v1652 = vadd.f32 %v1519, %v1651
    %1653 = vmatmul.bf16.gmra.mxu0 %v732
    %v1654 = vpop.f32.mrf.mxu0
    %v1655 = vadd.f32 %v1522, %v1654
    %v1656 = vpop.f32.mrf.mxu0
    %v1657 = vadd.f32 %v1524, %v1656
    %1658 = vmatmul.bf16.gmra.mxu0 %v737
    %v1659 = vpop.f32.mrf.mxu0
    %v1660 = vadd.f32 %v1527, %v1659
    %v1661 = vpop.f32.mrf.mxu0
    %v1662 = vadd.f32 %v1529, %v1661
    %1663 = vmatmul.bf16.gmra.mxu0 %v742
    %v1664 = vpop.f32.mrf.mxu0
    %v1665 = vadd.f32 %v1532, %v1664
    %v1666 = vpop.f32.mrf.mxu0
    %v1667 = vadd.f32 %v1534, %v1666
    %1668 = vmatmul.bf16.gmra.mxu0 %v747
    %v1669 = vpop.f32.mrf.mxu0
    %v1670 = vadd.f32 %v1537, %v1669
    %v1671 = vpop.f32.mrf.mxu0
    %v1672 = vadd.f32 %v1539, %v1671
    %1673 = vmatmul.bf16.gmra.mxu0 %v752
    %v1674 = vpop.f32.mrf.mxu0
    %v1675 = vadd.f32 %v1542, %v1674
    %v1676 = vpop.f32.mrf.mxu0
    %v1677 = vadd.f32 %v1544, %v1676
    %1678 = vmatmul.bf16.gmra.mxu0 %v757
    %v1679 = vpop.f32.mrf.mxu0
    %v1680 = vadd.f32 %v1547, %v1679
    %v1681 = vpop.f32.mrf.mxu0
    %v1682 = vadd.f32 %v1549, %v1681
    %1683 = vmatmul.bf16.gmra.mxu0 %v762
    %v1684 = vpop.f32.mrf.mxu0
    %v1685 = vadd.f32 %v1552, %v1684
    %v1686 = vpop.f32.mrf.mxu0
    %1687 = vdwg.mxu0
    %1688 = vmatpush.bf16.msra.mxu0 0
    %1689 = vmatpush.bf16.msra.mxu0 0
    %1690 = vmatpush.bf16.msra.mxu0 0
    %1691 = vmatpush.bf16.msra.mxu0 0
    %1692 = vmatpush.bf16.msra.mxu0 %v1043
    %1693 = vmatpush.bf16.msra.mxu0 %v1042
    %1694 = vmatpush.bf16.msra.mxu0 %v1041
    %1695 = vmatpush.bf16.msra.mxu0 %v1040
    %1696 = vmatmul.bf16.gmra.mxu0 %v1082
    %v1697 = vpop.f32.mrf.mxu0
    %v1698 = vadd.f32 %v1565, %v1697
    %v1699 = vpop.f32.mrf.mxu0
    %v1700 = vadd.f32 %v1567, %v1699
    %1701 = vmatmul.bf16.gmra.mxu0 %v1085
    %v1702 = vpop.f32.mrf.mxu0
    %v1703 = vadd.f32 %v1570, %v1702
    %v1704 = vpop.f32.mrf.mxu0
    %v1705 = vadd.f32 %v1572, %v1704
    %1706 = vmatmul.bf16.gmra.mxu0 %v1088
    %v1707 = vpop.f32.mrf.mxu0
    %v1708 = vadd.f32 %v1575, %v1707
    %v1709 = vpop.f32.mrf.mxu0
    %v1710 = vadd.f32 %v1577, %v1709
    %1711 = vmatmul.bf16.gmra.mxu0 %v1091
    %v1712 = vpop.f32.mrf.mxu0
    %v1713 = vadd.f32 %v1580, %v1712
    %v1714 = vpop.f32.mrf.mxu0
    %v1715 = vadd.f32 %v1582, %v1714
    %1716 = vmatmul.bf16.gmra.mxu0 %v1094
    %v1717 = vpop.f32.mrf.mxu0
    %v1718 = vadd.f32 %v1585, %v1717
    %v1719 = vpop.f32.mrf.mxu0
    %v1720 = vadd.f32 %v1587, %v1719
    %1721 = vmatmul.bf16.gmra.mxu0 %v1097
    %v1722 = vpop.f32.mrf.mxu0
    %v1723 = vadd.f32 %v1590, %v1722
    %v1724 = vpop.f32.mrf.mxu0
    %v1725 = vadd.f32 %v1592, %v1724
    %1726 = vmatmul.bf16.gmra.mxu0 %v1100
    %v1727 = vpop.f32.mrf.mxu0
    %v1728 = vadd.f32 %v1595, %v1727
    %v1729 = vpop.f32.mrf.mxu0
    %v1730 = vadd.f32 %v1597, %v1729
    %1731 = vmatmul.bf16.gmra.mxu0 %v1103
    %v1732 = vpop.f32.mrf.mxu0
    %v1733 = vadd.f32 %v1600, %v1732
    %v1734 = vpop.f32.mrf.mxu0
    %v1735 = vadd.f32 %v1602, %v1734
    %1736 = vmatmul.bf16.gmra.mxu0 %v1106
    %v1737 = vpop.f32.mrf.mxu0
    %v1738 = vadd.f32 %v1605, %v1737
    %v1739 = vpop.f32.mrf.mxu0
    %v1740 = vadd.f32 %v1607, %v1739
    %1741 = vmatmul.bf16.gmra.mxu0 %v1109
    %v1742 = vpop.f32.mrf.mxu0
    %v1743 = vadd.f32 %v1610, %v1742
    %v1744 = vpop.f32.mrf.mxu0
    %v1745 = vadd.f32 %v1612, %v1744
    %1746 = vmatmul.bf16.gmra.mxu0 %v1112
    %v1747 = vpop.f32.mrf.mxu0
    %v1748 = vadd.f32 %v1615, %v1747
    %v1749 = vpop.f32.mrf.mxu0
    %v1750 = vadd.f32 %v1617, %v1749
    %1751 = vmatmul.bf16.gmra.mxu0 %v1115
    %v1752 = vpop.f32.mrf.mxu0
    %v1753 = vadd.f32 %v1620, %v1752
    %v1754 = vpop.f32.mrf.mxu0
    %v1755 = vadd.f32 %v1622, %v1754
    %1756 = vmatmul.bf16.gmra.mxu0 %v1118
    %v1757 = vpop.f32.mrf.mxu0
    %v1758 = vadd.f32 %v1625, %v1757
    %v1759 = vpop.f32.mrf.mxu0
    %v1760 = vadd.f32 %v1627, %v1759
    %1761 = vmatmul.bf16.gmra.mxu0 %v1121
    %v1762 = vpop.f32.mrf.mxu0
    %v1763 = vadd.f32 %v1630, %v1762
    %v1764 = vpop.f32.mrf.mxu0
    %v1765 = vadd.f32 %v1632, %v1764
    %1766 = vmatmul.bf16.gmra.mxu0 %v1124
    %v1767 = vpop.f32.mrf.mxu0
    %v1768 = vadd.f32 %v1635, %v1767
    %v1769 = vpop.f32.mrf.mxu0
    %v1770 = vadd.f32 %v1637, %v1769
    %1771 = vmatmul.bf16.gmra.mxu0 %v1127
    %v1772 = vpop.f32.mrf.mxu0
    %v1773 = vadd.f32 %v1640, %v1772
    %v1774 = vpop.f32.mrf.mxu0
    %v1775 = vadd.f32 %v1642, %v1774
    %1776 = vmatmul.bf16.gmra.mxu0 %v1130
    %v1777 = vpop.f32.mrf.mxu0
    %v1778 = vadd.f32 %v1645, %v1777
    %v1779 = vpop.f32.mrf.mxu0
    %v1780 = vadd.f32 %v1647, %v1779
    %1781 = vmatmul.bf16.gmra.mxu0 %v1133
    %v1782 = vpop.f32.mrf.mxu0
    %v1783 = vadd.f32 %v1650, %v1782
    %v1784 = vpop.f32.mrf.mxu0
    %v1785 = vadd.f32 %v1652, %v1784
    %1786 = vmatmul.bf16.gmra.mxu0 %v1136
    %v1787 = vpop.f32.mrf.mxu0
    %v1788 = vadd.f32 %v1655, %v1787
    %v1789 = vpop.f32.mrf.mxu0
    %v1790 = vadd.f32 %v1657, %v1789
    %1791 = vmatmul.bf16.gmra.mxu0 %v1139
    %v1792 = vpop.f32.mrf.mxu0
    %v1793 = vadd.f32 %v1660, %v1792
    %v1794 = vpop.f32.mrf.mxu0
    %v1795 = vadd.f32 %v1662, %v1794
    %1796 = vmatmul.bf16.gmra.mxu0 %v1142
    %v1797 = vpop.f32.mrf.mxu0
    %v1798 = vadd.f32 %v1665, %v1797
    %v1799 = vpop.f32.mrf.mxu0
    %v1800 = vadd.f32 %v1667, %v1799
    %1801 = vmatmul.bf16.gmra.mxu0 %v1145
    %v1802 = vpop.f32.mrf.mxu0
    %v1803 = vadd.f32 %v1670, %v1802
    %v1804 = vpop.f32.mrf.mxu0
    %v1805 = vadd.f32 %v1672, %v1804
    %1806 = vmatmul.bf16.gmra.mxu0 %v1148
    %v1807 = vpop.f32.mrf.mxu0
    %v1808 = vadd.f32 %v1675, %v1807
    %v1809 = vpop.f32.mrf.mxu0
    %v1810 = vadd.f32 %v1677, %v1809
    %1811 = vmatmul.bf16.gmra.mxu0 %v1151
    %v1812 = vpop.f32.mrf.mxu0
    %v1813 = vadd.f32 %v1680, %v1812
    %v1814 = vpop.f32.mrf.mxu0
    %v1815 = vadd.f32 %v1682, %v1814
    %1816 = vmatmul.bf16.gmra.mxu0 %v1154
    %v1817 = vpop.f32.mrf.mxu0
    %v1818 = vadd.f32 %v1685, %v1817
    %v1819 = vpop.f32.mrf.mxu0
    %1820 = vdwg.mxu0
    %v1821 = vxor.u32 %v1698, 2147483648
    %v1822 = vxor.u32 %v1700, 2147483648
    %v1823 = vxor.u32 %v1703, 2147483648
    %v1824 = vxor.u32 %v1705, 2147483648
    %v1825 = vxor.u32 %v1708, 2147483648
    %v1826 = vxor.u32 %v1710, 2147483648
    %v1827 = vxor.u32 %v1713, 2147483648
    %v1828 = vxor.u32 %v1715, 2147483648
    %v1829 = vxor.u32 %v1718, 2147483648
    %v1830 = vxor.u32 %v1720, 2147483648
    %v1831 = vxor.u32 %v1723, 2147483648
    %v1832 = vxor.u32 %v1725, 2147483648
    %v1833 = vxor.u32 %v1728, 2147483648
    %v1834 = vxor.u32 %v1730, 2147483648
    %v1835 = vxor.u32 %v1733, 2147483648
    %v1836 = vxor.u32 %v1735, 2147483648
    %v1837 = vxor.u32 %v1738, 2147483648
    %v1838 = vxor.u32 %v1740, 2147483648
    %v1839 = vxor.u32 %v1743, 2147483648
    %v1840 = vxor.u32 %v1745, 2147483648
    %v1841 = vxor.u32 %v1748, 2147483648
    %v1842 = vxor.u32 %v1750, 2147483648
    %v1843 = vxor.u32 %v1753, 2147483648
    %v1844 = vxor.u32 %v1755, 2147483648
    %v1845 = vxor.u32 %v1758, 2147483648
    %v1846 = vxor.u32 %v1760, 2147483648
    %v1847 = vxor.u32 %v1763, 2147483648
    %v1848 = vxor.u32 %v1765, 2147483648
    %v1849 = vxor.u32 %v1768, 2147483648
    %v1850 = vxor.u32 %v1770, 2147483648
    %v1851 = vxor.u32 %v1773, 2147483648
    %v1852 = vxor.u32 %v1775, 2147483648
    %v1853 = vxor.u32 %v1778, 2147483648
    %v1854 = vxor.u32 %v1780, 2147483648
    %v1855 = vxor.u32 %v1783, 2147483648
    %v1856 = vxor.u32 %v1785, 2147483648
    %v1857 = vxor.u32 %v1788, 2147483648
    %v1858 = vxor.u32 %v1790, 2147483648
    %v1859 = vxor.u32 %v1793, 2147483648
    %v1860 = vxor.u32 %v1795, 2147483648
    %v1861 = vxor.u32 %v1798, 2147483648
    %v1862 = vxor.u32 %v1800, 2147483648
    %v1863 = vxor.u32 %v1803, 2147483648
    %v1864 = vxor.u32 %v1805, 2147483648
    %v1865 = vxor.u32 %v1808, 2147483648
    %v1866 = vxor.u32 %v1810, 2147483648
    %v1867 = vxor.u32 %v1813, 2147483648
    %v1868 = vxor.u32 %v1815, 2147483648
    %v1869 = vxor.u32 %v1818, 2147483648
    %v1870 = vmul.f32 %v1821, 1.442695
    %v1871 = vpow.pop %v1870
    %v1872 = vmul.f32 %v1822, 1.442695
    %v1873 = vpow.pop %v1872
    %v1874 = vmul.f32 %v1823, 1.442695
    %v1875 = vpow.pop %v1874
    %v1876 = vmul.f32 %v1824, 1.442695
    %v1877 = vpow.pop %v1876
    %v1878 = vmul.f32 %v1825, 1.442695
    %v1879 = vpow.pop %v1878
    %v1880 = vmul.f32 %v1826, 1.442695
    %v1881 = vpow.pop %v1880
    %v1882 = vmul.f32 %v1827, 1.442695
    %v1883 = vpow.pop %v1882
    %v1884 = vmul.f32 %v1828, 1.442695
    %v1885 = vpow.pop %v1884
    %v1886 = vmul.f32 %v1829, 1.442695
    %v1887 = vpow.pop %v1886
    %v1888 = vmul.f32 %v1830, 1.442695
    %v1889 = vpow.pop %v1888
    %v1890 = vmul.f32 %v1831, 1.442695
    %v1891 = vpow.pop %v1890
    %v1892 = vmul.f32 %v1832, 1.442695
    %v1893 = vpow.pop %v1892
    %v1894 = vmul.f32 %v1833, 1.442695
    %v1895 = vpow.pop %v1894
    %v1896 = vmul.f32 %v1834, 1.442695
    %v1897 = vpow.pop %v1896
    %v1898 = vmul.f32 %v1835, 1.442695
    %v1899 = vpow.pop %v1898
    %v1900 = vmul.f32 %v1836, 1.442695
    %v1901 = vpow.pop %v1900
    %v1902 = vmul.f32 %v1837, 1.442695
    %v1903 = vpow.pop %v1902
    %v1904 = vmul.f32 %v1838, 1.442695
    %v1905 = vpow.pop %v1904
    %v1906 = vmul.f32 %v1839, 1.442695
    %v1907 = vpow.pop %v1906
    %v1908 = vmul.f32 %v1840, 1.442695
    %v1909 = vpow.pop %v1908
    %v1910 = vmul.f32 %v1841, 1.442695
    %v1911 = vpow.pop %v1910
    %v1912 = vmul.f32 %v1842, 1.442695
    %v1913 = vpow.pop %v1912
    %v1914 = vmul.f32 %v1843, 1.442695
    %v1915 = vpow.pop %v1914
    %v1916 = vmul.f32 %v1844, 1.442695
    %v1917 = vpow.pop %v1916
    %v1918 = vmul.f32 %v1845, 1.442695
    %v1919 = vpow.pop %v1918
    %v1920 = vmul.f32 %v1846, 1.442695
    %v1921 = vpow.pop %v1920
    %v1922 = vmul.f32 %v1847, 1.442695
    %v1923 = vpow.pop %v1922
    %v1924 = vmul.f32 %v1848, 1.442695
    %v1925 = vpow.pop %v1924
    %v1926 = vmul.f32 %v1849, 1.442695
    %v1927 = vpow.pop %v1926
    %v1928 = vmul.f32 %v1850, 1.442695
    %v1929 = vpow.pop %v1928
    %v1930 = vmul.f32 %v1851, 1.442695
    %v1931 = vpow.pop %v1930
    %v1932 = vmul.f32 %v1852, 1.442695
    %v1933 = vpow.pop %v1932
    %v1934 = vmul.f32 %v1853, 1.442695
    %v1935 = vpow.pop %v1934
    %v1936 = vmul.f32 %v1854, 1.442695
    %v1937 = vpow.pop %v1936
    %v1938 = vmul.f32 %v1855, 1.442695
    %v1939 = vpow.pop %v1938
    %v1940 = vmul.f32 %v1856, 1.442695
    %v1941 = vpow.pop %v1940
    %v1942 = vmul.f32 %v1857, 1.442695
    %v1943 = vpow.pop %v1942
    %v1944 = vmul.f32 %v1858, 1.442695
    %v1945 = vpow.pop %v1944
    %v1946 = vmul.f32 %v1859, 1.442695
    %v1947 = vpow.pop %v1946
    %v1948 = vmul.f32 %v1860, 1.442695
    %v1949 = vpow.pop %v1948
    %v1950 = vmul.f32 %v1861, 1.442695
    %v1951 = vpow.pop %v1950
    %v1952 = vmul.f32 %v1862, 1.442695
    %v1953 = vpow.pop %v1952
    %v1954 = vmul.f32 %v1863, 1.442695
    %v1955 = vpow.pop %v1954
    %v1956 = vmul.f32 %v1864, 1.442695
    %v1957 = vpow.pop %v1956
    %v1958 = vmul.f32 %v1865, 1.442695
    %v1959 = vpow.pop %v1958
    %v1960 = vmul.f32 %v1866, 1.442695
    %v1961 = vpow.pop %v1960
    %v1962 = vmul.f32 %v1867, 1.442695
    %v1963 = vpow.pop %v1962
    %v1964 = vmul.f32 %v1868, 1.442695
    %v1965 = vpow.pop %v1964
    %v1966 = vmul.f32 %v1869, 1.442695
    %v1967 = vpow.pop %v1966
    %v1968 = vadd.f32 %v1871, 1.0
    %v1969 = vadd.f32 %v1873, 1.0
    %v1970 = vadd.f32 %v1875, 1.0
    %v1971 = vadd.f32 %v1877, 1.0
    %v1972 = vadd.f32 %v1879, 1.0
    %v1973 = vadd.f32 %v1881, 1.0
    %v1974 = vadd.f32 %v1883, 1.0
    %v1975 = vadd.f32 %v1885, 1.0
    %v1976 = vadd.f32 %v1887, 1.0
    %v1977 = vadd.f32 %v1889, 1.0
    %v1978 = vadd.f32 %v1891, 1.0
    %v1979 = vadd.f32 %v1893, 1.0
    %v1980 = vadd.f32 %v1895, 1.0
    %v1981 = vadd.f32 %v1897, 1.0
    %v1982 = vadd.f32 %v1899, 1.0
    %v1983 = vadd.f32 %v1901, 1.0
    %v1984 = vadd.f32 %v1903, 1.0
    %v1985 = vadd.f32 %v1905, 1.0
    %v1986 = vadd.f32 %v1907, 1.0
    %v1987 = vadd.f32 %v1909, 1.0
    %v1988 = vadd.f32 %v1911, 1.0
    %v1989 = vadd.f32 %v1913, 1.0
    %v1990 = vadd.f32 %v1915, 1.0
    %v1991 = vadd.f32 %v1917, 1.0
    %v1992 = vadd.f32 %v1919, 1.0
    %v1993 = vadd.f32 %v1921, 1.0
    %v1994 = vadd.f32 %v1923, 1.0
    %v1995 = vadd.f32 %v1925, 1.0
    %v1996 = vadd.f32 %v1927, 1.0
    %v1997 = vadd.f32 %v1929, 1.0
    %v1998 = vadd.f32 %v1931, 1.0
    %v1999 = vadd.f32 %v1933, 1.0
    %v2000 = vadd.f32 %v1935, 1.0
    %v2001 = vadd.f32 %v1937, 1.0
    %v2002 = vadd.f32 %v1939, 1.0
    %v2003 = vadd.f32 %v1941, 1.0
    %v2004 = vadd.f32 %v1943, 1.0
    %v2005 = vadd.f32 %v1945, 1.0
    %v2006 = vadd.f32 %v1947, 1.0
    %v2007 = vadd.f32 %v1949, 1.0
    %v2008 = vadd.f32 %v1951, 1.0
    %v2009 = vadd.f32 %v1953, 1.0
    %v2010 = vadd.f32 %v1955, 1.0
    %v2011 = vadd.f32 %v1957, 1.0
    %v2012 = vadd.f32 %v1959, 1.0
    %v2013 = vadd.f32 %v1961, 1.0
    %v2014 = vadd.f32 %v1963, 1.0
    %v2015 = vadd.f32 %v1965, 1.0
    %v2016 = vadd.f32 %v1967, 1.0
    %v2017 = vrcp.pop %v1968
    %v2018 = vmul.f32 %v1968, %v2017
    %v2019 = vsub.f32 1.0, %v2018
    %v2020 = vmul.f32 %v2017, %v2019
    %v2021 = vadd.f32 %v2017, %v2020
    %vm2022 = vweird.f32 %v1968
    %vm2023 = vweird.f32 %v2017
    %vm2024 = vmor %vm2022, %vm2023
    %v2025 = vsel %vm2024, %v2017, %v2021
    %v2026 = vand.u32 2147483647, %v1968
    %vm2027 = vcmp.eq.f32.partialorder %v2026, 8.507059e+37
    %v2028 = vand.u32 %v1968, 2147483648
    %v2029 = vor.u32 1.1754944e-38, %v2028
    %v2030 = vsel %vm2027, %v2029, %v2025
    %v2031 = vmul.f32 1.0, %v2030
    %v2032 = vrcp.pop %v1969
    %v2033 = vmul.f32 %v1969, %v2032
    %v2034 = vsub.f32 1.0, %v2033
    %v2035 = vmul.f32 %v2032, %v2034
    %v2036 = vadd.f32 %v2032, %v2035
    %vm2037 = vweird.f32 %v1969
    %vm2038 = vweird.f32 %v2032
    %vm2039 = vmor %vm2037, %vm2038
    %v2040 = vsel %vm2039, %v2032, %v2036
    %v2041 = vand.u32 2147483647, %v1969
    %vm2042 = vcmp.eq.f32.partialorder %v2041, 8.507059e+37
    %v2043 = vand.u32 %v1969, 2147483648
    %v2044 = vor.u32 1.1754944e-38, %v2043
    %v2045 = vsel %vm2042, %v2044, %v2040
    %v2046 = vmul.f32 1.0, %v2045
    %v2047 = vrcp.pop %v1970
    %v2048 = vmul.f32 %v1970, %v2047
    %v2049 = vsub.f32 1.0, %v2048
    %v2050 = vmul.f32 %v2047, %v2049
    %v2051 = vadd.f32 %v2047, %v2050
    %vm2052 = vweird.f32 %v1970
    %vm2053 = vweird.f32 %v2047
    %vm2054 = vmor %vm2052, %vm2053
    %v2055 = vsel %vm2054, %v2047, %v2051
    %v2056 = vand.u32 2147483647, %v1970
    %vm2057 = vcmp.eq.f32.partialorder %v2056, 8.507059e+37
    %v2058 = vand.u32 %v1970, 2147483648
    %v2059 = vor.u32 1.1754944e-38, %v2058
    %v2060 = vsel %vm2057, %v2059, %v2055
    %v2061 = vmul.f32 1.0, %v2060
    %v2062 = vrcp.pop %v1971
    %v2063 = vmul.f32 %v1971, %v2062
    %v2064 = vsub.f32 1.0, %v2063
    %v2065 = vmul.f32 %v2062, %v2064
    %v2066 = vadd.f32 %v2062, %v2065
    %vm2067 = vweird.f32 %v1971
    %vm2068 = vweird.f32 %v2062
    %vm2069 = vmor %vm2067, %vm2068
    %v2070 = vsel %vm2069, %v2062, %v2066
    %v2071 = vand.u32 2147483647, %v1971
    %vm2072 = vcmp.eq.f32.partialorder %v2071, 8.507059e+37
    %v2073 = vand.u32 %v1971, 2147483648
    %v2074 = vor.u32 1.1754944e-38, %v2073
    %v2075 = vsel %vm2072, %v2074, %v2070
    %v2076 = vmul.f32 1.0, %v2075
    %v2077 = vrcp.pop %v1972
    %v2078 = vmul.f32 %v1972, %v2077
    %v2079 = vsub.f32 1.0, %v2078
    %v2080 = vmul.f32 %v2077, %v2079
    %v2081 = vadd.f32 %v2077, %v2080
    %vm2082 = vweird.f32 %v1972
    %vm2083 = vweird.f32 %v2077
    %vm2084 = vmor %vm2082, %vm2083
    %v2085 = vsel %vm2084, %v2077, %v2081
    %v2086 = vand.u32 2147483647, %v1972
    %vm2087 = vcmp.eq.f32.partialorder %v2086, 8.507059e+37
    %v2088 = vand.u32 %v1972, 2147483648
    %v2089 = vor.u32 1.1754944e-38, %v2088
    %v2090 = vsel %vm2087, %v2089, %v2085
    %v2091 = vmul.f32 1.0, %v2090
    %v2092 = vrcp.pop %v1973
    %v2093 = vmul.f32 %v1973, %v2092
    %v2094 = vsub.f32 1.0, %v2093
    %v2095 = vmul.f32 %v2092, %v2094
    %v2096 = vadd.f32 %v2092, %v2095
    %vm2097 = vweird.f32 %v1973
    %vm2098 = vweird.f32 %v2092
    %vm2099 = vmor %vm2097, %vm2098
    %v2100 = vsel %vm2099, %v2092, %v2096
    %v2101 = vand.u32 2147483647, %v1973
    %vm2102 = vcmp.eq.f32.partialorder %v2101, 8.507059e+37
    %v2103 = vand.u32 %v1973, 2147483648
    %v2104 = vor.u32 1.1754944e-38, %v2103
    %v2105 = vsel %vm2102, %v2104, %v2100
    %v2106 = vmul.f32 1.0, %v2105
    %v2107 = vrcp.pop %v1974
    %v2108 = vmul.f32 %v1974, %v2107
    %v2109 = vsub.f32 1.0, %v2108
    %v2110 = vmul.f32 %v2107, %v2109
    %v2111 = vadd.f32 %v2107, %v2110
    %vm2112 = vweird.f32 %v1974
    %vm2113 = vweird.f32 %v2107
    %vm2114 = vmor %vm2112, %vm2113
    %v2115 = vsel %vm2114, %v2107, %v2111
    %v2116 = vand.u32 2147483647, %v1974
    %vm2117 = vcmp.eq.f32.partialorder %v2116, 8.507059e+37
    %v2118 = vand.u32 %v1974, 2147483648
    %v2119 = vor.u32 1.1754944e-38, %v2118
    %v2120 = vsel %vm2117, %v2119, %v2115
    %v2121 = vmul.f32 1.0, %v2120
    %v2122 = vrcp.pop %v1975
    %v2123 = vmul.f32 %v1975, %v2122
    %v2124 = vsub.f32 1.0, %v2123
    %v2125 = vmul.f32 %v2122, %v2124
    %v2126 = vadd.f32 %v2122, %v2125
    %vm2127 = vweird.f32 %v1975
    %vm2128 = vweird.f32 %v2122
    %vm2129 = vmor %vm2127, %vm2128
    %v2130 = vsel %vm2129, %v2122, %v2126
    %v2131 = vand.u32 2147483647, %v1975
    %vm2132 = vcmp.eq.f32.partialorder %v2131, 8.507059e+37
    %v2133 = vand.u32 %v1975, 2147483648
    %v2134 = vor.u32 1.1754944e-38, %v2133
    %v2135 = vsel %vm2132, %v2134, %v2130
    %v2136 = vmul.f32 1.0, %v2135
    %v2137 = vrcp.pop %v1976
    %v2138 = vmul.f32 %v1976, %v2137
    %v2139 = vsub.f32 1.0, %v2138
    %v2140 = vmul.f32 %v2137, %v2139
    %v2141 = vadd.f32 %v2137, %v2140
    %vm2142 = vweird.f32 %v1976
    %vm2143 = vweird.f32 %v2137
    %vm2144 = vmor %vm2142, %vm2143
    %v2145 = vsel %vm2144, %v2137, %v2141
    %v2146 = vand.u32 2147483647, %v1976
    %vm2147 = vcmp.eq.f32.partialorder %v2146, 8.507059e+37
    %v2148 = vand.u32 %v1976, 2147483648
    %v2149 = vor.u32 1.1754944e-38, %v2148
    %v2150 = vsel %vm2147, %v2149, %v2145
    %v2151 = vmul.f32 1.0, %v2150
    %v2152 = vrcp.pop %v1977
    %v2153 = vmul.f32 %v1977, %v2152
    %v2154 = vsub.f32 1.0, %v2153
    %v2155 = vmul.f32 %v2152, %v2154
    %v2156 = vadd.f32 %v2152, %v2155
    %vm2157 = vweird.f32 %v1977
    %vm2158 = vweird.f32 %v2152
    %vm2159 = vmor %vm2157, %vm2158
    %v2160 = vsel %vm2159, %v2152, %v2156
    %v2161 = vand.u32 2147483647, %v1977
    %vm2162 = vcmp.eq.f32.partialorder %v2161, 8.507059e+37
    %v2163 = vand.u32 %v1977, 2147483648
    %v2164 = vor.u32 1.1754944e-38, %v2163
    %v2165 = vsel %vm2162, %v2164, %v2160
    %v2166 = vmul.f32 1.0, %v2165
    %v2167 = vrcp.pop %v1978
    %v2168 = vmul.f32 %v1978, %v2167
    %v2169 = vsub.f32 1.0, %v2168
    %v2170 = vmul.f32 %v2167, %v2169
    %v2171 = vadd.f32 %v2167, %v2170
    %vm2172 = vweird.f32 %v1978
    %vm2173 = vweird.f32 %v2167
    %vm2174 = vmor %vm2172, %vm2173
    %v2175 = vsel %vm2174, %v2167, %v2171
    %v2176 = vand.u32 2147483647, %v1978
    %vm2177 = vcmp.eq.f32.partialorder %v2176, 8.507059e+37
    %v2178 = vand.u32 %v1978, 2147483648
    %v2179 = vor.u32 1.1754944e-38, %v2178
    %v2180 = vsel %vm2177, %v2179, %v2175
    %v2181 = vmul.f32 1.0, %v2180
    %v2182 = vrcp.pop %v1979
    %v2183 = vmul.f32 %v1979, %v2182
    %v2184 = vsub.f32 1.0, %v2183
    %v2185 = vmul.f32 %v2182, %v2184
    %v2186 = vadd.f32 %v2182, %v2185
    %vm2187 = vweird.f32 %v1979
    %vm2188 = vweird.f32 %v2182
    %vm2189 = vmor %vm2187, %vm2188
    %v2190 = vsel %vm2189, %v2182, %v2186
    %v2191 = vand.u32 2147483647, %v1979
    %vm2192 = vcmp.eq.f32.partialorder %v2191, 8.507059e+37
    %v2193 = vand.u32 %v1979, 2147483648
    %v2194 = vor.u32 1.1754944e-38, %v2193
    %v2195 = vsel %vm2192, %v2194, %v2190
    %v2196 = vmul.f32 1.0, %v2195
    %v2197 = vrcp.pop %v1980
    %v2198 = vmul.f32 %v1980, %v2197
    %v2199 = vsub.f32 1.0, %v2198
    %v2200 = vmul.f32 %v2197, %v2199
    %v2201 = vadd.f32 %v2197, %v2200
    %vm2202 = vweird.f32 %v1980
    %vm2203 = vweird.f32 %v2197
    %vm2204 = vmor %vm2202, %vm2203
    %v2205 = vsel %vm2204, %v2197, %v2201
    %v2206 = vand.u32 2147483647, %v1980
    %vm2207 = vcmp.eq.f32.partialorder %v2206, 8.507059e+37
    %v2208 = vand.u32 %v1980, 2147483648
    %v2209 = vor.u32 1.1754944e-38, %v2208
    %v2210 = vsel %vm2207, %v2209, %v2205
    %v2211 = vmul.f32 1.0, %v2210
    %v2212 = vrcp.pop %v1981
    %v2213 = vmul.f32 %v1981, %v2212
    %v2214 = vsub.f32 1.0, %v2213
    %v2215 = vmul.f32 %v2212, %v2214
    %v2216 = vadd.f32 %v2212, %v2215
    %vm2217 = vweird.f32 %v1981
    %vm2218 = vweird.f32 %v2212
    %vm2219 = vmor %vm2217, %vm2218
    %v2220 = vsel %vm2219, %v2212, %v2216
    %v2221 = vand.u32 2147483647, %v1981
    %vm2222 = vcmp.eq.f32.partialorder %v2221, 8.507059e+37
    %v2223 = vand.u32 %v1981, 2147483648
    %v2224 = vor.u32 1.1754944e-38, %v2223
    %v2225 = vsel %vm2222, %v2224, %v2220
    %v2226 = vmul.f32 1.0, %v2225
    %v2227 = vrcp.pop %v1982
    %v2228 = vmul.f32 %v1982, %v2227
    %v2229 = vsub.f32 1.0, %v2228
    %v2230 = vmul.f32 %v2227, %v2229
    %v2231 = vadd.f32 %v2227, %v2230
    %vm2232 = vweird.f32 %v1982
    %vm2233 = vweird.f32 %v2227
    %vm2234 = vmor %vm2232, %vm2233
    %v2235 = vsel %vm2234, %v2227, %v2231
    %v2236 = vand.u32 2147483647, %v1982
    %vm2237 = vcmp.eq.f32.partialorder %v2236, 8.507059e+37
    %v2238 = vand.u32 %v1982, 2147483648
    %v2239 = vor.u32 1.1754944e-38, %v2238
    %v2240 = vsel %vm2237, %v2239, %v2235
    %v2241 = vmul.f32 1.0, %v2240
    %v2242 = vrcp.pop %v1983
    %v2243 = vmul.f32 %v1983, %v2242
    %v2244 = vsub.f32 1.0, %v2243
    %v2245 = vmul.f32 %v2242, %v2244
    %v2246 = vadd.f32 %v2242, %v2245
    %vm2247 = vweird.f32 %v1983
    %vm2248 = vweird.f32 %v2242
    %vm2249 = vmor %vm2247, %vm2248
    %v2250 = vsel %vm2249, %v2242, %v2246
    %v2251 = vand.u32 2147483647, %v1983
    %vm2252 = vcmp.eq.f32.partialorder %v2251, 8.507059e+37
    %v2253 = vand.u32 %v1983, 2147483648
    %v2254 = vor.u32 1.1754944e-38, %v2253
    %v2255 = vsel %vm2252, %v2254, %v2250
    %v2256 = vmul.f32 1.0, %v2255
    %v2257 = vrcp.pop %v1984
    %v2258 = vmul.f32 %v1984, %v2257
    %v2259 = vsub.f32 1.0, %v2258
    %v2260 = vmul.f32 %v2257, %v2259
    %v2261 = vadd.f32 %v2257, %v2260
    %vm2262 = vweird.f32 %v1984
    %vm2263 = vweird.f32 %v2257
    %vm2264 = vmor %vm2262, %vm2263
    %v2265 = vsel %vm2264, %v2257, %v2261
    %v2266 = vand.u32 2147483647, %v1984
    %vm2267 = vcmp.eq.f32.partialorder %v2266, 8.507059e+37
    %v2268 = vand.u32 %v1984, 2147483648
    %v2269 = vor.u32 1.1754944e-38, %v2268
    %v2270 = vsel %vm2267, %v2269, %v2265
    %v2271 = vmul.f32 1.0, %v2270
    %v2272 = vrcp.pop %v1985
    %v2273 = vmul.f32 %v1985, %v2272
    %v2274 = vsub.f32 1.0, %v2273
    %v2275 = vmul.f32 %v2272, %v2274
    %v2276 = vadd.f32 %v2272, %v2275
    %vm2277 = vweird.f32 %v1985
    %vm2278 = vweird.f32 %v2272
    %vm2279 = vmor %vm2277, %vm2278
    %v2280 = vsel %vm2279, %v2272, %v2276
    %v2281 = vand.u32 2147483647, %v1985
    %vm2282 = vcmp.eq.f32.partialorder %v2281, 8.507059e+37
    %v2283 = vand.u32 %v1985, 2147483648
    %v2284 = vor.u32 1.1754944e-38, %v2283
    %v2285 = vsel %vm2282, %v2284, %v2280
    %v2286 = vmul.f32 1.0, %v2285
    %v2287 = vrcp.pop %v1986
    %v2288 = vmul.f32 %v1986, %v2287
    %v2289 = vsub.f32 1.0, %v2288
    %v2290 = vmul.f32 %v2287, %v2289
    %v2291 = vadd.f32 %v2287, %v2290
    %vm2292 = vweird.f32 %v1986
    %vm2293 = vweird.f32 %v2287
    %vm2294 = vmor %vm2292, %vm2293
    %v2295 = vsel %vm2294, %v2287, %v2291
    %v2296 = vand.u32 2147483647, %v1986
    %vm2297 = vcmp.eq.f32.partialorder %v2296, 8.507059e+37
    %v2298 = vand.u32 %v1986, 2147483648
    %v2299 = vor.u32 1.1754944e-38, %v2298
    %v2300 = vsel %vm2297, %v2299, %v2295
    %v2301 = vmul.f32 1.0, %v2300
    %v2302 = vrcp.pop %v1987
    %v2303 = vmul.f32 %v1987, %v2302
    %v2304 = vsub.f32 1.0, %v2303
    %v2305 = vmul.f32 %v2302, %v2304
    %v2306 = vadd.f32 %v2302, %v2305
    %vm2307 = vweird.f32 %v1987
    %vm2308 = vweird.f32 %v2302
    %vm2309 = vmor %vm2307, %vm2308
    %v2310 = vsel %vm2309, %v2302, %v2306
    %v2311 = vand.u32 2147483647, %v1987
    %vm2312 = vcmp.eq.f32.partialorder %v2311, 8.507059e+37
    %v2313 = vand.u32 %v1987, 2147483648
    %v2314 = vor.u32 1.1754944e-38, %v2313
    %v2315 = vsel %vm2312, %v2314, %v2310
    %v2316 = vmul.f32 1.0, %v2315
    %v2317 = vrcp.pop %v1988
    %v2318 = vmul.f32 %v1988, %v2317
    %v2319 = vsub.f32 1.0, %v2318
    %v2320 = vmul.f32 %v2317, %v2319
    %v2321 = vadd.f32 %v2317, %v2320
    %vm2322 = vweird.f32 %v1988
    %vm2323 = vweird.f32 %v2317
    %vm2324 = vmor %vm2322, %vm2323
    %v2325 = vsel %vm2324, %v2317, %v2321
    %v2326 = vand.u32 2147483647, %v1988
    %vm2327 = vcmp.eq.f32.partialorder %v2326, 8.507059e+37
    %v2328 = vand.u32 %v1988, 2147483648
    %v2329 = vor.u32 1.1754944e-38, %v2328
    %v2330 = vsel %vm2327, %v2329, %v2325
    %v2331 = vmul.f32 1.0, %v2330
    %v2332 = vrcp.pop %v1989
    %v2333 = vmul.f32 %v1989, %v2332
    %v2334 = vsub.f32 1.0, %v2333
    %v2335 = vmul.f32 %v2332, %v2334
    %v2336 = vadd.f32 %v2332, %v2335
    %vm2337 = vweird.f32 %v1989
    %vm2338 = vweird.f32 %v2332
    %vm2339 = vmor %vm2337, %vm2338
    %v2340 = vsel %vm2339, %v2332, %v2336
    %v2341 = vand.u32 2147483647, %v1989
    %vm2342 = vcmp.eq.f32.partialorder %v2341, 8.507059e+37
    %v2343 = vand.u32 %v1989, 2147483648
    %v2344 = vor.u32 1.1754944e-38, %v2343
    %v2345 = vsel %vm2342, %v2344, %v2340
    %v2346 = vmul.f32 1.0, %v2345
    %v2347 = vrcp.pop %v1990
    %v2348 = vmul.f32 %v1990, %v2347
    %v2349 = vsub.f32 1.0, %v2348
    %v2350 = vmul.f32 %v2347, %v2349
    %v2351 = vadd.f32 %v2347, %v2350
    %vm2352 = vweird.f32 %v1990
    %vm2353 = vweird.f32 %v2347
    %vm2354 = vmor %vm2352, %vm2353
    %v2355 = vsel %vm2354, %v2347, %v2351
    %v2356 = vand.u32 2147483647, %v1990
    %vm2357 = vcmp.eq.f32.partialorder %v2356, 8.507059e+37
    %v2358 = vand.u32 %v1990, 2147483648
    %v2359 = vor.u32 1.1754944e-38, %v2358
    %v2360 = vsel %vm2357, %v2359, %v2355
    %v2361 = vmul.f32 1.0, %v2360
    %v2362 = vrcp.pop %v1991
    %v2363 = vmul.f32 %v1991, %v2362
    %v2364 = vsub.f32 1.0, %v2363
    %v2365 = vmul.f32 %v2362, %v2364
    %v2366 = vadd.f32 %v2362, %v2365
    %vm2367 = vweird.f32 %v1991
    %vm2368 = vweird.f32 %v2362
    %vm2369 = vmor %vm2367, %vm2368
    %v2370 = vsel %vm2369, %v2362, %v2366
    %v2371 = vand.u32 2147483647, %v1991
    %vm2372 = vcmp.eq.f32.partialorder %v2371, 8.507059e+37
    %v2373 = vand.u32 %v1991, 2147483648
    %v2374 = vor.u32 1.1754944e-38, %v2373
    %v2375 = vsel %vm2372, %v2374, %v2370
    %v2376 = vmul.f32 1.0, %v2375
    %v2377 = vrcp.pop %v1992
    %v2378 = vmul.f32 %v1992, %v2377
    %v2379 = vsub.f32 1.0, %v2378
    %v2380 = vmul.f32 %v2377, %v2379
    %v2381 = vadd.f32 %v2377, %v2380
    %vm2382 = vweird.f32 %v1992
    %vm2383 = vweird.f32 %v2377
    %vm2384 = vmor %vm2382, %vm2383
    %v2385 = vsel %vm2384, %v2377, %v2381
    %v2386 = vand.u32 2147483647, %v1992
    %vm2387 = vcmp.eq.f32.partialorder %v2386, 8.507059e+37
    %v2388 = vand.u32 %v1992, 2147483648
    %v2389 = vor.u32 1.1754944e-38, %v2388
    %v2390 = vsel %vm2387, %v2389, %v2385
    %v2391 = vmul.f32 1.0, %v2390
    %v2392 = vrcp.pop %v1993
    %v2393 = vmul.f32 %v1993, %v2392
    %v2394 = vsub.f32 1.0, %v2393
    %v2395 = vmul.f32 %v2392, %v2394
    %v2396 = vadd.f32 %v2392, %v2395
    %vm2397 = vweird.f32 %v1993
    %vm2398 = vweird.f32 %v2392
    %vm2399 = vmor %vm2397, %vm2398
    %v2400 = vsel %vm2399, %v2392, %v2396
    %v2401 = vand.u32 2147483647, %v1993
    %vm2402 = vcmp.eq.f32.partialorder %v2401, 8.507059e+37
    %v2403 = vand.u32 %v1993, 2147483648
    %v2404 = vor.u32 1.1754944e-38, %v2403
    %v2405 = vsel %vm2402, %v2404, %v2400
    %v2406 = vmul.f32 1.0, %v2405
    %v2407 = vrcp.pop %v1994
    %v2408 = vmul.f32 %v1994, %v2407
    %v2409 = vsub.f32 1.0, %v2408
    %v2410 = vmul.f32 %v2407, %v2409
    %v2411 = vadd.f32 %v2407, %v2410
    %vm2412 = vweird.f32 %v1994
    %vm2413 = vweird.f32 %v2407
    %vm2414 = vmor %vm2412, %vm2413
    %v2415 = vsel %vm2414, %v2407, %v2411
    %v2416 = vand.u32 2147483647, %v1994
    %vm2417 = vcmp.eq.f32.partialorder %v2416, 8.507059e+37
    %v2418 = vand.u32 %v1994, 2147483648
    %v2419 = vor.u32 1.1754944e-38, %v2418
    %v2420 = vsel %vm2417, %v2419, %v2415
    %v2421 = vmul.f32 1.0, %v2420
    %v2422 = vrcp.pop %v1995
    %v2423 = vmul.f32 %v1995, %v2422
    %v2424 = vsub.f32 1.0, %v2423
    %v2425 = vmul.f32 %v2422, %v2424
    %v2426 = vadd.f32 %v2422, %v2425
    %vm2427 = vweird.f32 %v1995
    %vm2428 = vweird.f32 %v2422
    %vm2429 = vmor %vm2427, %vm2428
    %v2430 = vsel %vm2429, %v2422, %v2426
    %v2431 = vand.u32 2147483647, %v1995
    %vm2432 = vcmp.eq.f32.partialorder %v2431, 8.507059e+37
    %v2433 = vand.u32 %v1995, 2147483648
    %v2434 = vor.u32 1.1754944e-38, %v2433
    %v2435 = vsel %vm2432, %v2434, %v2430
    %v2436 = vmul.f32 1.0, %v2435
    %v2437 = vrcp.pop %v1996
    %v2438 = vmul.f32 %v1996, %v2437
    %v2439 = vsub.f32 1.0, %v2438
    %v2440 = vmul.f32 %v2437, %v2439
    %v2441 = vadd.f32 %v2437, %v2440
    %vm2442 = vweird.f32 %v1996
    %vm2443 = vweird.f32 %v2437
    %vm2444 = vmor %vm2442, %vm2443
    %v2445 = vsel %vm2444, %v2437, %v2441
    %v2446 = vand.u32 2147483647, %v1996
    %vm2447 = vcmp.eq.f32.partialorder %v2446, 8.507059e+37
    %v2448 = vand.u32 %v1996, 2147483648
    %v2449 = vor.u32 1.1754944e-38, %v2448
    %v2450 = vsel %vm2447, %v2449, %v2445
    %v2451 = vmul.f32 1.0, %v2450
    %v2452 = vrcp.pop %v1997
    %v2453 = vmul.f32 %v1997, %v2452
    %v2454 = vsub.f32 1.0, %v2453
    %v2455 = vmul.f32 %v2452, %v2454
    %v2456 = vadd.f32 %v2452, %v2455
    %vm2457 = vweird.f32 %v1997
    %vm2458 = vweird.f32 %v2452
    %vm2459 = vmor %vm2457, %vm2458
    %v2460 = vsel %vm2459, %v2452, %v2456
    %v2461 = vand.u32 2147483647, %v1997
    %vm2462 = vcmp.eq.f32.partialorder %v2461, 8.507059e+37
    %v2463 = vand.u32 %v1997, 2147483648
    %v2464 = vor.u32 1.1754944e-38, %v2463
    %v2465 = vsel %vm2462, %v2464, %v2460
    %v2466 = vmul.f32 1.0, %v2465
    %v2467 = vrcp.pop %v1998
    %v2468 = vmul.f32 %v1998, %v2467
    %v2469 = vsub.f32 1.0, %v2468
    %v2470 = vmul.f32 %v2467, %v2469
    %v2471 = vadd.f32 %v2467, %v2470
    %vm2472 = vweird.f32 %v1998
    %vm2473 = vweird.f32 %v2467
    %vm2474 = vmor %vm2472, %vm2473
    %v2475 = vsel %vm2474, %v2467, %v2471
    %v2476 = vand.u32 2147483647, %v1998
    %vm2477 = vcmp.eq.f32.partialorder %v2476, 8.507059e+37
    %v2478 = vand.u32 %v1998, 2147483648
    %v2479 = vor.u32 1.1754944e-38, %v2478
    %v2480 = vsel %vm2477, %v2479, %v2475
    %v2481 = vmul.f32 1.0, %v2480
    %v2482 = vrcp.pop %v1999
    %v2483 = vmul.f32 %v1999, %v2482
    %v2484 = vsub.f32 1.0, %v2483
    %v2485 = vmul.f32 %v2482, %v2484
    %v2486 = vadd.f32 %v2482, %v2485
    %vm2487 = vweird.f32 %v1999
    %vm2488 = vweird.f32 %v2482
    %vm2489 = vmor %vm2487, %vm2488
    %v2490 = vsel %vm2489, %v2482, %v2486
    %v2491 = vand.u32 2147483647, %v1999
    %vm2492 = vcmp.eq.f32.partialorder %v2491, 8.507059e+37
    %v2493 = vand.u32 %v1999, 2147483648
    %v2494 = vor.u32 1.1754944e-38, %v2493
    %v2495 = vsel %vm2492, %v2494, %v2490
    %v2496 = vmul.f32 1.0, %v2495
    %v2497 = vrcp.pop %v2000
    %v2498 = vmul.f32 %v2000, %v2497
    %v2499 = vsub.f32 1.0, %v2498
    %v2500 = vmul.f32 %v2497, %v2499
    %v2501 = vadd.f32 %v2497, %v2500
    %vm2502 = vweird.f32 %v2000
    %vm2503 = vweird.f32 %v2497
    %vm2504 = vmor %vm2502, %vm2503
    %v2505 = vsel %vm2504, %v2497, %v2501
    %v2506 = vand.u32 2147483647, %v2000
    %vm2507 = vcmp.eq.f32.partialorder %v2506, 8.507059e+37
    %v2508 = vand.u32 %v2000, 2147483648
    %v2509 = vor.u32 1.1754944e-38, %v2508
    %v2510 = vsel %vm2507, %v2509, %v2505
    %v2511 = vmul.f32 1.0, %v2510
    %v2512 = vrcp.pop %v2001
    %v2513 = vmul.f32 %v2001, %v2512
    %v2514 = vsub.f32 1.0, %v2513
    %v2515 = vmul.f32 %v2512, %v2514
    %v2516 = vadd.f32 %v2512, %v2515
    %vm2517 = vweird.f32 %v2001
    %vm2518 = vweird.f32 %v2512
    %vm2519 = vmor %vm2517, %vm2518
    %v2520 = vsel %vm2519, %v2512, %v2516
    %v2521 = vand.u32 2147483647, %v2001
    %vm2522 = vcmp.eq.f32.partialorder %v2521, 8.507059e+37
    %v2523 = vand.u32 %v2001, 2147483648
    %v2524 = vor.u32 1.1754944e-38, %v2523
    %v2525 = vsel %vm2522, %v2524, %v2520
    %v2526 = vmul.f32 1.0, %v2525
    %v2527 = vrcp.pop %v2002
    %v2528 = vmul.f32 %v2002, %v2527
    %v2529 = vsub.f32 1.0, %v2528
    %v2530 = vmul.f32 %v2527, %v2529
    %v2531 = vadd.f32 %v2527, %v2530
    %vm2532 = vweird.f32 %v2002
    %vm2533 = vweird.f32 %v2527
    %vm2534 = vmor %vm2532, %vm2533
    %v2535 = vsel %vm2534, %v2527, %v2531
    %v2536 = vand.u32 2147483647, %v2002
    %vm2537 = vcmp.eq.f32.partialorder %v2536, 8.507059e+37
    %v2538 = vand.u32 %v2002, 2147483648
    %v2539 = vor.u32 1.1754944e-38, %v2538
    %v2540 = vsel %vm2537, %v2539, %v2535
    %v2541 = vmul.f32 1.0, %v2540
    %v2542 = vrcp.pop %v2003
    %v2543 = vmul.f32 %v2003, %v2542
    %v2544 = vsub.f32 1.0, %v2543
    %v2545 = vmul.f32 %v2542, %v2544
    %v2546 = vadd.f32 %v2542, %v2545
    %vm2547 = vweird.f32 %v2003
    %vm2548 = vweird.f32 %v2542
    %vm2549 = vmor %vm2547, %vm2548
    %v2550 = vsel %vm2549, %v2542, %v2546
    %v2551 = vand.u32 2147483647, %v2003
    %vm2552 = vcmp.eq.f32.partialorder %v2551, 8.507059e+37
    %v2553 = vand.u32 %v2003, 2147483648
    %v2554 = vor.u32 1.1754944e-38, %v2553
    %v2555 = vsel %vm2552, %v2554, %v2550
    %v2556 = vmul.f32 1.0, %v2555
    %v2557 = vrcp.pop %v2004
    %v2558 = vmul.f32 %v2004, %v2557
    %v2559 = vsub.f32 1.0, %v2558
    %v2560 = vmul.f32 %v2557, %v2559
    %v2561 = vadd.f32 %v2557, %v2560
    %vm2562 = vweird.f32 %v2004
    %vm2563 = vweird.f32 %v2557
    %vm2564 = vmor %vm2562, %vm2563
    %v2565 = vsel %vm2564, %v2557, %v2561
    %v2566 = vand.u32 2147483647, %v2004
    %vm2567 = vcmp.eq.f32.partialorder %v2566, 8.507059e+37
    %v2568 = vand.u32 %v2004, 2147483648
    %v2569 = vor.u32 1.1754944e-38, %v2568
    %v2570 = vsel %vm2567, %v2569, %v2565
    %v2571 = vmul.f32 1.0, %v2570
    %v2572 = vrcp.pop %v2005
    %v2573 = vmul.f32 %v2005, %v2572
    %v2574 = vsub.f32 1.0, %v2573
    %v2575 = vmul.f32 %v2572, %v2574
    %v2576 = vadd.f32 %v2572, %v2575
    %vm2577 = vweird.f32 %v2005
    %vm2578 = vweird.f32 %v2572
    %vm2579 = vmor %vm2577, %vm2578
    %v2580 = vsel %vm2579, %v2572, %v2576
    %v2581 = vand.u32 2147483647, %v2005
    %vm2582 = vcmp.eq.f32.partialorder %v2581, 8.507059e+37
    %v2583 = vand.u32 %v2005, 2147483648
    %v2584 = vor.u32 1.1754944e-38, %v2583
    %v2585 = vsel %vm2582, %v2584, %v2580
    %v2586 = vmul.f32 1.0, %v2585
    %v2587 = vrcp.pop %v2006
    %v2588 = vmul.f32 %v2006, %v2587
    %v2589 = vsub.f32 1.0, %v2588
    %v2590 = vmul.f32 %v2587, %v2589
    %v2591 = vadd.f32 %v2587, %v2590
    %vm2592 = vweird.f32 %v2006
    %vm2593 = vweird.f32 %v2587
    %vm2594 = vmor %vm2592, %vm2593
    %v2595 = vsel %vm2594, %v2587, %v2591
    %v2596 = vand.u32 2147483647, %v2006
    %vm2597 = vcmp.eq.f32.partialorder %v2596, 8.507059e+37
    %v2598 = vand.u32 %v2006, 2147483648
    %v2599 = vor.u32 1.1754944e-38, %v2598
    %v2600 = vsel %vm2597, %v2599, %v2595
    %v2601 = vmul.f32 1.0, %v2600
    %v2602 = vrcp.pop %v2007
    %v2603 = vmul.f32 %v2007, %v2602
    %v2604 = vsub.f32 1.0, %v2603
    %v2605 = vmul.f32 %v2602, %v2604
    %v2606 = vadd.f32 %v2602, %v2605
    %vm2607 = vweird.f32 %v2007
    %vm2608 = vweird.f32 %v2602
    %vm2609 = vmor %vm2607, %vm2608
    %v2610 = vsel %vm2609, %v2602, %v2606
    %v2611 = vand.u32 2147483647, %v2007
    %vm2612 = vcmp.eq.f32.partialorder %v2611, 8.507059e+37
    %v2613 = vand.u32 %v2007, 2147483648
    %v2614 = vor.u32 1.1754944e-38, %v2613
    %v2615 = vsel %vm2612, %v2614, %v2610
    %v2616 = vmul.f32 1.0, %v2615
    %v2617 = vrcp.pop %v2008
    %v2618 = vmul.f32 %v2008, %v2617
    %v2619 = vsub.f32 1.0, %v2618
    %v2620 = vmul.f32 %v2617, %v2619
    %v2621 = vadd.f32 %v2617, %v2620
    %vm2622 = vweird.f32 %v2008
    %vm2623 = vweird.f32 %v2617
    %vm2624 = vmor %vm2622, %vm2623
    %v2625 = vsel %vm2624, %v2617, %v2621
    %v2626 = vand.u32 2147483647, %v2008
    %vm2627 = vcmp.eq.f32.partialorder %v2626, 8.507059e+37
    %v2628 = vand.u32 %v2008, 2147483648
    %v2629 = vor.u32 1.1754944e-38, %v2628
    %v2630 = vsel %vm2627, %v2629, %v2625
    %v2631 = vmul.f32 1.0, %v2630
    %v2632 = vrcp.pop %v2009
    %v2633 = vmul.f32 %v2009, %v2632
    %v2634 = vsub.f32 1.0, %v2633
    %v2635 = vmul.f32 %v2632, %v2634
    %v2636 = vadd.f32 %v2632, %v2635
    %vm2637 = vweird.f32 %v2009
    %vm2638 = vweird.f32 %v2632
    %vm2639 = vmor %vm2637, %vm2638
    %v2640 = vsel %vm2639, %v2632, %v2636
    %v2641 = vand.u32 2147483647, %v2009
    %vm2642 = vcmp.eq.f32.partialorder %v2641, 8.507059e+37
    %v2643 = vand.u32 %v2009, 2147483648
    %v2644 = vor.u32 1.1754944e-38, %v2643
    %v2645 = vsel %vm2642, %v2644, %v2640
    %v2646 = vmul.f32 1.0, %v2645
    %v2647 = vrcp.pop %v2010
    %v2648 = vmul.f32 %v2010, %v2647
    %v2649 = vsub.f32 1.0, %v2648
    %v2650 = vmul.f32 %v2647, %v2649
    %v2651 = vadd.f32 %v2647, %v2650
    %vm2652 = vweird.f32 %v2010
    %vm2653 = vweird.f32 %v2647
    %vm2654 = vmor %vm2652, %vm2653
    %v2655 = vsel %vm2654, %v2647, %v2651
    %v2656 = vand.u32 2147483647, %v2010
    %vm2657 = vcmp.eq.f32.partialorder %v2656, 8.507059e+37
    %v2658 = vand.u32 %v2010, 2147483648
    %v2659 = vor.u32 1.1754944e-38, %v2658
    %v2660 = vsel %vm2657, %v2659, %v2655
    %v2661 = vmul.f32 1.0, %v2660
    %v2662 = vrcp.pop %v2011
    %v2663 = vmul.f32 %v2011, %v2662
    %v2664 = vsub.f32 1.0, %v2663
    %v2665 = vmul.f32 %v2662, %v2664
    %v2666 = vadd.f32 %v2662, %v2665
    %vm2667 = vweird.f32 %v2011
    %vm2668 = vweird.f32 %v2662
    %vm2669 = vmor %vm2667, %vm2668
    %v2670 = vsel %vm2669, %v2662, %v2666
    %v2671 = vand.u32 2147483647, %v2011
    %vm2672 = vcmp.eq.f32.partialorder %v2671, 8.507059e+37
    %v2673 = vand.u32 %v2011, 2147483648
    %v2674 = vor.u32 1.1754944e-38, %v2673
    %v2675 = vsel %vm2672, %v2674, %v2670
    %v2676 = vmul.f32 1.0, %v2675
    %v2677 = vrcp.pop %v2012
    %v2678 = vmul.f32 %v2012, %v2677
    %v2679 = vsub.f32 1.0, %v2678
    %v2680 = vmul.f32 %v2677, %v2679
    %v2681 = vadd.f32 %v2677, %v2680
    %vm2682 = vweird.f32 %v2012
    %vm2683 = vweird.f32 %v2677
    %vm2684 = vmor %vm2682, %vm2683
    %v2685 = vsel %vm2684, %v2677, %v2681
    %v2686 = vand.u32 2147483647, %v2012
    %vm2687 = vcmp.eq.f32.partialorder %v2686, 8.507059e+37
    %v2688 = vand.u32 %v2012, 2147483648
    %v2689 = vor.u32 1.1754944e-38, %v2688
    %v2690 = vsel %vm2687, %v2689, %v2685
    %v2691 = vmul.f32 1.0, %v2690
    %v2692 = vrcp.pop %v2013
    %v2693 = vmul.f32 %v2013, %v2692
    %v2694 = vsub.f32 1.0, %v2693
    %v2695 = vmul.f32 %v2692, %v2694
    %v2696 = vadd.f32 %v2692, %v2695
    %vm2697 = vweird.f32 %v2013
    %vm2698 = vweird.f32 %v2692
    %vm2699 = vmor %vm2697, %vm2698
    %v2700 = vsel %vm2699, %v2692, %v2696
    %v2701 = vand.u32 2147483647, %v2013
    %vm2702 = vcmp.eq.f32.partialorder %v2701, 8.507059e+37
    %v2703 = vand.u32 %v2013, 2147483648
    %v2704 = vor.u32 1.1754944e-38, %v2703
    %v2705 = vsel %vm2702, %v2704, %v2700
    %v2706 = vmul.f32 1.0, %v2705
    %v2707 = vrcp.pop %v2014
    %v2708 = vmul.f32 %v2014, %v2707
    %v2709 = vsub.f32 1.0, %v2708
    %v2710 = vmul.f32 %v2707, %v2709
    %v2711 = vadd.f32 %v2707, %v2710
    %vm2712 = vweird.f32 %v2014
    %vm2713 = vweird.f32 %v2707
    %vm2714 = vmor %vm2712, %vm2713
    %v2715 = vsel %vm2714, %v2707, %v2711
    %v2716 = vand.u32 2147483647, %v2014
    %vm2717 = vcmp.eq.f32.partialorder %v2716, 8.507059e+37
    %v2718 = vand.u32 %v2014, 2147483648
    %v2719 = vor.u32 1.1754944e-38, %v2718
    %v2720 = vsel %vm2717, %v2719, %v2715
    %v2721 = vmul.f32 1.0, %v2720
    %v2722 = vrcp.pop %v2015
    %v2723 = vmul.f32 %v2015, %v2722
    %v2724 = vsub.f32 1.0, %v2723
    %v2725 = vmul.f32 %v2722, %v2724
    %v2726 = vadd.f32 %v2722, %v2725
    %vm2727 = vweird.f32 %v2015
    %vm2728 = vweird.f32 %v2722
    %vm2729 = vmor %vm2727, %vm2728
    %v2730 = vsel %vm2729, %v2722, %v2726
    %v2731 = vand.u32 2147483647, %v2015
    %vm2732 = vcmp.eq.f32.partialorder %v2731, 8.507059e+37
    %v2733 = vand.u32 %v2015, 2147483648
    %v2734 = vor.u32 1.1754944e-38, %v2733
    %v2735 = vsel %vm2732, %v2734, %v2730
    %v2736 = vmul.f32 1.0, %v2735
    %v2737 = vrcp.pop %v2016
    %v2738 = vmul.f32 %v2016, %v2737
    %v2739 = vsub.f32 1.0, %v2738
    %v2740 = vmul.f32 %v2737, %v2739
    %v2741 = vadd.f32 %v2737, %v2740
    %vm2742 = vweird.f32 %v2016
    %vm2743 = vweird.f32 %v2737
    %vm2744 = vmor %vm2742, %vm2743
    %v2745 = vsel %vm2744, %v2737, %v2741
    %v2746 = vand.u32 2147483647, %v2016
    %vm2747 = vcmp.eq.f32.partialorder %v2746, 8.507059e+37
    %v2748 = vand.u32 %v2016, 2147483648
    %v2749 = vor.u32 1.1754944e-38, %v2748
    %v2750 = vsel %vm2747, %v2749, %v2745
    %v2751 = vmul.f32 1.0, %v2750
    %vm2752 = vcmask 31744
    %2753 = vst.msk [vmem:[%s2] sm:$0xff] %vm2752, %v2031
    %2754 = vst.msk [vmem:[%s2 + $0x8] sm:$0xff] %vm2752, %v2046
    %2755 = vst.msk [vmem:[%s2 + $0x10] sm:$0xff] %vm2752, %v2061
    %2756 = vst.msk [vmem:[%s2 + $0x18] sm:$0xff] %vm2752, %v2076
    %2757 = vst.msk [vmem:[%s2 + $0x20] sm:$0xff] %vm2752, %v2091
    %2758 = vst.msk [vmem:[%s2 + $0x28] sm:$0xff] %vm2752, %v2106
    %2759 = vst.msk [vmem:[%s2 + $0x30] sm:$0xff] %vm2752, %v2121
    %2760 = vst.msk [vmem:[%s2 + $0x38] sm:$0xff] %vm2752, %v2136
    %2761 = vst.msk [vmem:[%s2 + $0x40] sm:$0xff] %vm2752, %v2151
    %2762 = vst.msk [vmem:[%s2 + $0x48] sm:$0xff] %vm2752, %v2166
    %2763 = vst.msk [vmem:[%s2 + $0x50] sm:$0xff] %vm2752, %v2181
    %2764 = vst.msk [vmem:[%s2 + $0x58] sm:$0xff] %vm2752, %v2196
    %2765 = vst.msk [vmem:[%s2 + $0x60] sm:$0xff] %vm2752, %v2211
    %2766 = vst.msk [vmem:[%s2 + $0x68] sm:$0xff] %vm2752, %v2226
    %2767 = vst.msk [vmem:[%s2 + $0x70] sm:$0xff] %vm2752, %v2241
    %2768 = vst.msk [vmem:[%s2 + $0x78] sm:$0xff] %vm2752, %v2256
    %2769 = vst.msk [vmem:[%s2 + $0x80] sm:$0xff] %vm2752, %v2271
    %2770 = vst.msk [vmem:[%s2 + $0x88] sm:$0xff] %vm2752, %v2286
    %2771 = vst.msk [vmem:[%s2 + $0x90] sm:$0xff] %vm2752, %v2301
    %2772 = vst.msk [vmem:[%s2 + $0x98] sm:$0xff] %vm2752, %v2316
    %2773 = vst.msk [vmem:[%s2 + $0xa0] sm:$0xff] %vm2752, %v2331
    %2774 = vst.msk [vmem:[%s2 + $0xa8] sm:$0xff] %vm2752, %v2346
    %2775 = vst.msk [vmem:[%s2 + $0xb0] sm:$0xff] %vm2752, %v2361
    %2776 = vst.msk [vmem:[%s2 + $0xb8] sm:$0xff] %vm2752, %v2376
    %2777 = vst.msk [vmem:[%s2 + $0xc0] sm:$0xff] %vm2752, %v2391
    %2778 = vst.msk [vmem:[%s2 + $0xc8] sm:$0xff] %vm2752, %v2406
    %2779 = vst.msk [vmem:[%s2 + $0xd0] sm:$0xff] %vm2752, %v2421
    %2780 = vst.msk [vmem:[%s2 + $0xd8] sm:$0xff] %vm2752, %v2436
    %2781 = vst.msk [vmem:[%s2 + $0xe0] sm:$0xff] %vm2752, %v2451
    %2782 = vst.msk [vmem:[%s2 + $0xe8] sm:$0xff] %vm2752, %v2466
    %2783 = vst.msk [vmem:[%s2 + $0xf0] sm:$0xff] %vm2752, %v2481
    %2784 = vst.msk [vmem:[%s2 + $0xf8] sm:$0xff] %vm2752, %v2496
    %2785 = vst.msk [vmem:[%s2 + $0x100] sm:$0xff] %vm2752, %v2511
    %2786 = vst.msk [vmem:[%s2 + $0x108] sm:$0xff] %vm2752, %v2526
    %2787 = vst.msk [vmem:[%s2 + $0x110] sm:$0xff] %vm2752, %v2541
    %2788 = vst.msk [vmem:[%s2 + $0x118] sm:$0xff] %vm2752, %v2556
    %2789 = vst.msk [vmem:[%s2 + $0x120] sm:$0xff] %vm2752, %v2571
    %2790 = vst.msk [vmem:[%s2 + $0x128] sm:$0xff] %vm2752, %v2586
    %2791 = vst.msk [vmem:[%s2 + $0x130] sm:$0xff] %vm2752, %v2601
    %2792 = vst.msk [vmem:[%s2 + $0x138] sm:$0xff] %vm2752, %v2616
    %2793 = vst.msk [vmem:[%s2 + $0x140] sm:$0xff] %vm2752, %v2631
    %2794 = vst.msk [vmem:[%s2 + $0x148] sm:$0xff] %vm2752, %v2646
    %2795 = vst.msk [vmem:[%s2 + $0x150] sm:$0xff] %vm2752, %v2661
    %2796 = vst.msk [vmem:[%s2 + $0x158] sm:$0xff] %vm2752, %v2676
    %2797 = vst.msk [vmem:[%s2 + $0x160] sm:$0xff] %vm2752, %v2691
    %2798 = vst.msk [vmem:[%s2 + $0x168] sm:$0xff] %vm2752, %v2706
    %2799 = vst.msk [vmem:[%s2 + $0x170] sm:$0xff] %vm2752, %v2721
    %2800 = vst.msk [vmem:[%s2 + $0x178] sm:$0xff] %vm2752, %v2736
    %2801 = vst.msk [vmem:[%s2 + $0x180] sm:$0xff] %vm2752, %v2751
    // Predicated region
    $region14: #{p_net_forward.9} parent=1 // pred_check
      _
    $region15: #{p_net_forward.9} parent=1 // pred_check_branch
      %2803 = sbr.rel (0) target = $region17
    $region16: #{p_net_forward.9} parent=1 // pred_region
      _
    $region17: #{p_net_forward.9} parent=1 // pred_fallthru
      _
    // Predicated region
    $region18: #{p_net_forward.9} parent=1 // pred_check
      _
    $region19: #{p_net_forward.9} parent=1 // pred_check_branch
      %2805 = sbr.rel (0) target = $region21
    $region20: #{p_net_forward.9} parent=1 // pred_region
      _
    $region21: #{p_net_forward.9} parent=1 // pred_fallthru
      _
    %2806 = vsyncpa [#allocation3], 1

</llo_original>
